<compile_context>
chip_gen: v5e
topology: v5e:2x2
jax: 0.10.0
libtpu: 0.0.40
codegen_flags: <defaults>
</compile_context>

<pallas_src>
import functools

import numpy as np

import jax
import jax.numpy as jnp
from jax.experimental import pallas as pl
from jax.experimental.pallas import tpu as pltpu


# ---------------------------------------------------------------------------
# Host-side (numpy) builders for the 0/1 gather / scatter selection matrices
# ---------------------------------------------------------------------------
def _conv_select(h, w, kh, kw, stride, pad):
    """Per-tap selection S[t, g_in, m_out] = 1 iff input pixel g_in feeds output
    pixel m_out through kernel tap t of a Conv2d/MaxPool2d window."""
    oh = (h + 2 * pad - kh) // stride + 1
    ow = (w + 2 * pad - kw) // stride + 1
    s = np.zeros((kh * kw, h * w, oh * ow), np.float32)
    for i in range(kh):
        for j in range(kw):
            t = i * kw + j
            for y in range(oh):
                gi = stride * y + i - pad
                if gi < 0 or gi >= h:
                    continue
                for x in range(ow):
                    gj = stride * x + j - pad
                    if gj < 0 or gj >= w:
                        continue
                    s[t, gi * w + gj, y * ow + x] = 1.0
    return s, oh, ow


def _conv_transpose_select(h, w, kh, kw, stride, pad):
    """Per-tap scatter S[t, g_in, m_out] = 1 iff input pixel g_in contributes to
    output pixel m_out through kernel tap t of a ConvTranspose2d."""
    oh = (h - 1) * stride + kh - 2 * pad
    ow = (w - 1) * stride + kw - 2 * pad
    s = np.zeros((kh * kw, h * w, oh * ow), np.float32)
    for i in range(kh):
        for j in range(kw):
            t = i * kw + j
            for yy in range(h):
                y = stride * yy + i - pad
                if y < 0 or y >= oh:
                    continue
                for xx in range(w):
                    x = stride * xx + j - pad
                    if x < 0 or x >= ow:
                        continue
                    s[t, yy * w + xx, y * ow + x] = 1.0
    return s, oh, ow


# ---------------------------------------------------------------------------
# The single fused kernel: one image (grid step) = whole forward pass
# ---------------------------------------------------------------------------
def _autoencoder_kernel(x_ref,
                        w1_ref, b1_ref, s1_ref, p1_ref,
                        w2_ref, b2_ref, s2_ref, p2_ref,
                        w3_ref, b3_ref, s3_ref,
                        w4_ref, b4_ref, s4_ref,
                        w5_ref, b5_ref, s5_ref,
                        o_ref):
    """Activations are (C, H*W) f32 with the spatial axis on the 128 lanes."""

    def conv_like(h, w_ref, b_ref, s_ref, act):
        # Works for both Conv2d and ConvTranspose2d — only the packed weights
        # and the selection matrices differ (built in pack_params()).
        taps = s_ref.shape[0]
        cout = b_ref.shape[0]
        # One matmul applies every tap's (Cout, Cin) weight block at once.
        u = jnp.dot(w_ref[...], h, preferred_element_type=jnp.float32)
        acc = None
        for t in range(taps):                         # static unroll
            sel = s_ref[t].astype(jnp.float32)        # exact 0/1 gather/scatter
            part = jnp.dot(u[t * cout:(t + 1) * cout, :], sel,
                           preferred_element_type=jnp.float32)
            acc = part if acc is None else acc + part
        acc = acc + b_ref[...]                        # (Cout, 1) lane broadcast
        if act == "relu":
            return jnp.maximum(acc, 0.0)
        if act == "tanh":
            return jnp.tanh(acc)
        return acc

    def max_pool(h, sp_ref):
        # Running max over exact 0/1 gathers of the (post-ReLU) activation;
        # every pool tap is in-bounds for this net, so this is exact pooling.
        out = None
        for t in range(sp_ref.shape[0]):              # static unroll
            v = jnp.dot(h, sp_ref[t].astype(jnp.float32),
                        preferred_element_type=jnp.float32)
            out = v if out is None else jnp.maximum(out, v)
        return out

    h = x_ref[0]                                                          # (3, 784)
    h = max_pool(conv_like(h, w1_ref, b1_ref, s1_ref, "relu"), p1_ref)    # (16, 25)
    h = max_pool(conv_like(h, w2_ref, b2_ref, s2_ref, "relu"), p2_ref)    # (8, 4)
    h = conv_like(h, w3_ref, b3_ref, s3_ref, "relu")                      # (16, 25)
    h = conv_like(h, w4_ref, b4_ref, s4_ref, "relu")                      # (8, 225)
    h = conv_like(h, w5_ref, b5_ref, s5_ref, "tanh")                      # (3, 784)
    o_ref[0] = h


def _resident_spec(arr):
    """Full-array block with a constant index map: DMA'd once, VMEM-resident."""
    zeros = (0,) * arr.ndim
    return pl.BlockSpec(arr.shape, lambda b, _z=zeros: _z)


# ---------------------------------------------------------------------------
# One-time parameter packing (host side, outside the jitted forward)
# ---------------------------------------------------------------------------
def pack_params(params, height=28, width=28):
    """Returns (operands, (out_h, out_w)) for the fused kernel."""
    f32, bf16 = jnp.float32, jnp.bfloat16

    def conv_pack(w, b):      # PyTorch Conv2d weight (Cout, Cin, kh, kw)
        cout, cin, kh, kw = w.shape
        wcat = jnp.transpose(w, (2, 3, 0, 1)).reshape(kh * kw * cout, cin)
        return wcat.astype(f32), b.reshape(cout, 1).astype(f32)

    def convt_pack(w, b):     # PyTorch ConvTranspose2d weight (Cin, Cout, kh, kw)
        cin, cout, kh, kw = w.shape
        wcat = jnp.transpose(w, (2, 3, 1, 0)).reshape(kh * kw * cout, cin)
        return wcat.astype(f32), b.reshape(cout, 1).astype(f32)

    h, w = height, width
    s1, h, w = _conv_select(h, w, 3, 3, 3, 1)             # Conv2d(3,16,3,s3,p1)
    sp1, h, w = _conv_select(h, w, 2, 2, 2, 0)            # MaxPool2d(2,s2)
    s2, h, w = _conv_select(h, w, 3, 3, 2, 1)             # Conv2d(16,8,3,s2,p1)
    sp2, h, w = _conv_select(h, w, 2, 2, 1, 0)            # MaxPool2d(2,s1)
    sd1, h, w = _conv_transpose_select(h, w, 3, 3, 2, 0)  # ConvT(8,16,3,s2)
    sd2, h, w = _conv_transpose_select(h, w, 5, 5, 3, 1)  # ConvT(16,8,5,s3,p1)
    sd3, h, w = _conv_transpose_select(h, w, 2, 2, 2, 1)  # ConvT(8,3,2,s2,p1)

    w1, b1 = conv_pack(params["enc_w1"], params["enc_b1"])
    w2, b2 = conv_pack(params["enc_w2"], params["enc_b2"])
    w3, b3 = convt_pack(params["dec_w1"], params["dec_b1"])
    w4, b4 = convt_pack(params["dec_w2"], params["dec_b2"])
    w5, b5 = convt_pack(params["dec_w3"], params["dec_b3"])

    operands = (
        w1, b1, jnp.asarray(s1, bf16), jnp.asarray(sp1, bf16),
        w2, b2, jnp.asarray(s2, bf16), jnp.asarray(sp2, bf16),
        w3, b3, jnp.asarray(sd1, bf16),
        w4, b4, jnp.asarray(sd2, bf16),
        w5, b5, jnp.asarray(sd3, bf16),
    )
    return operands, (h, w)


# ---------------------------------------------------------------------------
# Forward pass: one pallas_call, batch on a parallel grid
# ---------------------------------------------------------------------------
def autoencoder_forward(x_nchw, packed, out_hw):
    n, c, h, w = x_nchw.shape
    oh, ow = out_hw
    cout = packed[-2].shape[0]                      # final bias rows (= 3)
    x2 = x_nchw.reshape(n, c, h * w)                # NCHW -> (N, C, HW): free

    in_specs = [pl.BlockSpec((1, c, h * w), lambda b: (b, 0, 0))]
    in_specs += [_resident_spec(op) for op in packed]

    out = pl.pallas_call(
        _autoencoder_kernel,
        out_shape=jax.ShapeDtypeStruct((n, cout, oh * ow), jnp.float32),
        grid_spec=pltpu.PrefetchScalarGridSpec(
            num_scalar_prefetch=0,
            grid=(n,),                              # one image per grid step
            in_specs=in_specs,
            out_specs=pl.BlockSpec((1, cout, oh * ow), lambda b: (b, 0, 0)),
        ),
        compiler_params=pltpu.CompilerParams(
            dimension_semantics=("parallel",),      # v7x: one image per TensorCore
            vmem_limit_bytes=32 * 1024 * 1024,
        ),
    )(x2, *packed)
    return out.reshape(n, cout, oh, ow)


# ---------------------------------------------------------------------------
# Parameters (deterministic init, PyTorch-style uniform bounds)
# ---------------------------------------------------------------------------
def init_params(key):
    def u(k, shape, fan_in):
        bound = 1.0 / (fan_in ** 0.5)
        return jax.random.uniform(k, shape, jnp.float32, -bound, bound)

    ks = jax.random.split(key, 10)
    return {
        # encoder: Conv2d weights are (Cout, Cin, kh, kw)
        "enc_w1": u(ks[0], (16, 3, 3, 3), 3 * 3 * 3),
        "enc_b1": u(ks[1], (16,), 3 * 3 * 3),
        "enc_w2": u(ks[2], (8, 16, 3, 3), 16 * 3 * 3),
        "enc_b2": u(ks[3], (8,), 16 * 3 * 3),
        # decoder: ConvTranspose2d weights are (Cin, Cout, kh, kw)
        "dec_w1": u(ks[4], (8, 16, 3, 3), 16 * 3 * 3),
        "dec_b1": u(ks[5], (16,), 16 * 3 * 3),
        "dec_w2": u(ks[6], (16, 8, 5, 5), 8 * 5 * 5),
        "dec_b2": u(ks[7], (8,), 8 * 5 * 5),
        "dec_w3": u(ks[8], (8, 3, 2, 2), 3 * 2 * 2),
        "dec_b3": u(ks[9], (3,), 3 * 2 * 2),
    }


# ---------------------------------------------------------------------------
# Pure-JAX f32 reference (independent zero-dilation / strided-slice formulation)
# ---------------------------------------------------------------------------
def _ref_conv2d(x, w, b, stride, padding):
    cout, cin, kh, kw = w.shape
    n, h, wd, _ = x.shape
    oh = (h + 2 * padding - kh) // stride + 1
    ow = (wd + 2 * padding - kw) // stride + 1
    xp = jnp.pad(x, ((0, 0), (padding, padding), (padding, padding), (0, 0)))
    out = jnp.zeros((n, oh, ow, cout), jnp.float32)
    for i in range(kh):
        for j in range(kw):
            patch = xp[:, i:i + stride * oh:stride, j:j + stride * ow:stride, :]
            out = out + jnp.einsum("nhwc,oc->nhwo", patch, w[:, :, i, j])
    return out + b.reshape(1, 1, 1, cout)


def _ref_maxpool(x, k, stride):
    n, h, wd, _ = x.shape
    oh = (h - k) // stride + 1
    ow = (wd - k) // stride + 1
    out = None
    for dy in range(k):
        for dx in range(k):
            v = x[:, dy:dy + stride * oh:stride, dx:dx + stride * ow:stride, :]
            out = v if out is None else jnp.maximum(out, v)
    return out


def _ref_conv_transpose2d(x, w, b, stride, padding):
    cin, cout, kh, kw = w.shape
    n, h, wd, _ = x.shape
    xd = jnp.zeros((n, (h - 1) * stride + 1, (wd - 1) * stride + 1, cin), x.dtype)
    xd = xd.at[:, ::stride, ::stride, :].set(x)
    w_conv = jnp.flip(w, axis=(2, 3)).transpose(1, 0, 2, 3)
    return _ref_conv2d(xd, w_conv, b, 1, kh - 1 - padding)


def reference_forward(params, x_nchw):
    x = jnp.transpose(x_nchw, (0, 2, 3, 1))
    x = jnp.maximum(_ref_conv2d(x, params["enc_w1"], params["enc_b1"], 3, 1), 0.0)
    x = _ref_maxpool(x, 2, 2)
    x = jnp.maximum(_ref_conv2d(x, params["enc_w2"], params["enc_b2"], 2, 1), 0.0)
    x = _ref_maxpool(x, 2, 1)
    x = jnp.maximum(_ref_conv_transpose2d(x, params["dec_w1"], params["dec_b1"], 2, 0), 0.0)
    x = jnp.maximum(_ref_conv_transpose2d(x, params["dec_w2"], params["dec_b2"], 3, 1), 0.0)
    x = jnp.tanh(_ref_conv_transpose2d(x, params["dec_w3"], params["dec_b3"], 2, 1))
    return jnp.transpose(x, (0, 3, 1, 2))


if __name__ == "__main__":
    key = jax.random.PRNGKey(0)
    pkey, xkey = jax.random.split(key)
    params = init_params(pkey)
    # 28x28 input (MNIST-style) -> decoder reconstructs 28x28.
    x = jax.random.normal(xkey, (2, 3, 28, 28), jnp.float32)

    packed, out_hw = pack_params(params, 28, 28)          # once, outside the jit
    fwd = jax.jit(functools.partial(autoencoder_forward, out_hw=out_hw))
    y = jax.block_until_ready(fwd(x, packed))
    assert y.shape == (2, 3, 28, 28), y.shape
    assert bool(jnp.all(jnp.isfinite(y)))

    # cross-check against the independent pure-f32 JAX reference
    y_ref = jax.block_until_ready(jax.jit(reference_forward)(params, x))
    err = float(jnp.max(jnp.abs(y - y_ref)))
    assert err < 3e-2, f"mismatch vs reference: {err}"

    print("KERNEL_OK")
</pallas_src>

<mosaic_0001>
module attributes {stable_mosaic.version = 11 : i64} {
  func.func @_autoencoder_kernel(%arg0: i32, %arg1: memref<1x3x784xf32, #tpu.memory_space<vmem>>, %arg2: memref<144x3xf32, #tpu.memory_space<vmem>>, %arg3: memref<16x1xf32, #tpu.memory_space<vmem>>, %arg4: memref<9x784x100xbf16, #tpu.memory_space<vmem>>, %arg5: memref<4x100x25xbf16, #tpu.memory_space<vmem>>, %arg6: memref<72x16xf32, #tpu.memory_space<vmem>>, %arg7: memref<8x1xf32, #tpu.memory_space<vmem>>, %arg8: memref<9x25x9xbf16, #tpu.memory_space<vmem>>, %arg9: memref<4x9x4xbf16, #tpu.memory_space<vmem>>, %arg10: memref<144x8xf32, #tpu.memory_space<vmem>>, %arg11: memref<16x1xf32, #tpu.memory_space<vmem>>, %arg12: memref<9x4x25xbf16, #tpu.memory_space<vmem>>, %arg13: memref<200x16xf32, #tpu.memory_space<vmem>>, %arg14: memref<8x1xf32, #tpu.memory_space<vmem>>, %arg15: memref<25x25x225xbf16, #tpu.memory_space<vmem>>, %arg16: memref<12x8xf32, #tpu.memory_space<vmem>>, %arg17: memref<3x1xf32, #tpu.memory_space<vmem>>, %arg18: memref<4x225x784xbf16, #tpu.memory_space<vmem>>, %arg19: memref<1x3x784xf32, #tpu.memory_space<vmem>>) attributes {dimension_semantics = [#tpu.dimension_semantics<parallel>], iteration_bounds = array<i64: 2>, scalar_prefetch = 0 : i64, scratch_operands = 0 : i64, tpu.core_type = #tpu.core_type<tc>, window_params = [{transform_indices = @transform_0, window_bounds = array<i64: 1, 3, 784>}, {pipeline_mode = #tpu.pipeline_mode<synchronous>, transform_indices = @transform_1, window_bounds = array<i64: 144, 3>}, {pipeline_mode = #tpu.pipeline_mode<synchronous>, transform_indices = @transform_2, window_bounds = array<i64: 16, 1>}, {pipeline_mode = #tpu.pipeline_mode<synchronous>, transform_indices = @transform_3, window_bounds = array<i64: 9, 784, 100>}, {pipeline_mode = #tpu.pipeline_mode<synchronous>, transform_indices = @transform_4, window_bounds = array<i64: 4, 100, 25>}, {pipeline_mode = #tpu.pipeline_mode<synchronous>, transform_indices = @transform_5, window_bounds = array<i64: 72, 16>}, {pipeline_mode = #tpu.pipeline_mode<synchronous>, transform_indices = @transform_6, window_bounds = array<i64: 8, 1>}, {pipeline_mode = #tpu.pipeline_mode<synchronous>, transform_indices = @transform_7, window_bounds = array<i64: 9, 25, 9>}, {pipeline_mode = #tpu.pipeline_mode<synchronous>, transform_indices = @transform_8, window_bounds = array<i64: 4, 9, 4>}, {pipeline_mode = #tpu.pipeline_mode<synchronous>, transform_indices = @transform_9, window_bounds = array<i64: 144, 8>}, {pipeline_mode = #tpu.pipeline_mode<synchronous>, transform_indices = @transform_10, window_bounds = array<i64: 16, 1>}, {pipeline_mode = #tpu.pipeline_mode<synchronous>, transform_indices = @transform_11, window_bounds = array<i64: 9, 4, 25>}, {pipeline_mode = #tpu.pipeline_mode<synchronous>, transform_indices = @transform_12, window_bounds = array<i64: 200, 16>}, {pipeline_mode = #tpu.pipeline_mode<synchronous>, transform_indices = @transform_13, window_bounds = array<i64: 8, 1>}, {pipeline_mode = #tpu.pipeline_mode<synchronous>, transform_indices = @transform_14, window_bounds = array<i64: 25, 25, 225>}, {pipeline_mode = #tpu.pipeline_mode<synchronous>, transform_indices = @transform_15, window_bounds = array<i64: 12, 8>}, {pipeline_mode = #tpu.pipeline_mode<synchronous>, transform_indices = @transform_16, window_bounds = array<i64: 3, 1>}, {pipeline_mode = #tpu.pipeline_mode<synchronous>, transform_indices = @transform_17, window_bounds = array<i64: 4, 225, 784>}, {transform_indices = @transform_18, window_bounds = array<i64: 1, 3, 784>}]} {
    %c0 = arith.constant 0 : index
    %c0_0 = arith.constant 0 : index
    %c0_1 = arith.constant 0 : index
    %0 = vector.load %arg1[%c0, %c0_0, %c0_1] : memref<1x3x784xf32, #tpu.memory_space<vmem>>, vector<1x3x784xf32>
    %1 = vector.shape_cast %0 : vector<1x3x784xf32> to vector<3x784xf32>
    %c0_2 = arith.constant 0 : index
    %c0_3 = arith.constant 0 : index
    %2 = vector.load %arg2[%c0_2, %c0_3] : memref<144x3xf32, #tpu.memory_space<vmem>>, vector<144x3xf32>
    %cst = arith.constant dense<0.000000e+00> : vector<144x784xf32>
    %3 = tpu.matmul %2, %1, %cst {dimension_numbers = #tpu.dot_dimension_numbers<[1], [0], [0], [1], [0, 0, 1, 1], [], []>} : vector<144x3xf32>, vector<3x784xf32>, vector<144x784xf32> -> vector<144x784xf32>
    %c0_4 = arith.constant 0 : index
    %c0_5 = arith.constant 0 : index
    %c0_6 = arith.constant 0 : index
    %4 = vector.load %arg4[%c0_4, %c0_5, %c0_6] : memref<9x784x100xbf16, #tpu.memory_space<vmem>>, vector<1x784x100xbf16>
    %5 = vector.shape_cast %4 : vector<1x784x100xbf16> to vector<784x100xbf16>
    %6 = arith.extf %5 : vector<784x100xbf16> to vector<784x100xf32>
    %7 = vector.extract_strided_slice %3 {offsets = [0, 0], sizes = [16, 784], strides = [1, 1]} : vector<144x784xf32> to vector<16x784xf32>
    %cst_7 = arith.constant dense<0.000000e+00> : vector<16x100xf32>
    %8 = tpu.matmul %7, %6, %cst_7 {dimension_numbers = #tpu.dot_dimension_numbers<[1], [0], [0], [1], [0, 0, 1, 1], [], []>} : vector<16x784xf32>, vector<784x100xf32>, vector<16x100xf32> -> vector<16x100xf32>
    %c1 = arith.constant 1 : index
    %c0_8 = arith.constant 0 : index
    %c0_9 = arith.constant 0 : index
    %9 = vector.load %arg4[%c1, %c0_8, %c0_9] : memref<9x784x100xbf16, #tpu.memory_space<vmem>>, vector<1x784x100xbf16>
    %10 = vector.shape_cast %9 : vector<1x784x100xbf16> to vector<784x100xbf16>
    %11 = arith.extf %10 : vector<784x100xbf16> to vector<784x100xf32>
    %12 = vector.extract_strided_slice %3 {offsets = [16, 0], sizes = [16, 784], strides = [1, 1]} : vector<144x784xf32> to vector<16x784xf32>
    %cst_10 = arith.constant dense<0.000000e+00> : vector<16x100xf32>
    %13 = tpu.matmul %12, %11, %cst_10 {dimension_numbers = #tpu.dot_dimension_numbers<[1], [0], [0], [1], [0, 0, 1, 1], [], []>} : vector<16x784xf32>, vector<784x100xf32>, vector<16x100xf32> -> vector<16x100xf32>
    %14 = arith.addf %8, %13 : vector<16x100xf32>
    %c2 = arith.constant 2 : index
    %c0_11 = arith.constant 0 : index
    %c0_12 = arith.constant 0 : index
    %15 = vector.load %arg4[%c2, %c0_11, %c0_12] : memref<9x784x100xbf16, #tpu.memory_space<vmem>>, vector<1x784x100xbf16>
    %16 = vector.shape_cast %15 : vector<1x784x100xbf16> to vector<784x100xbf16>
    %17 = arith.extf %16 : vector<784x100xbf16> to vector<784x100xf32>
    %18 = vector.extract_strided_slice %3 {offsets = [32, 0], sizes = [16, 784], strides = [1, 1]} : vector<144x784xf32> to vector<16x784xf32>
    %cst_13 = arith.constant dense<0.000000e+00> : vector<16x100xf32>
    %19 = tpu.matmul %18, %17, %cst_13 {dimension_numbers = #tpu.dot_dimension_numbers<[1], [0], [0], [1], [0, 0, 1, 1], [], []>} : vector<16x784xf32>, vector<784x100xf32>, vector<16x100xf32> -> vector<16x100xf32>
    %20 = arith.addf %14, %19 : vector<16x100xf32>
    %c3 = arith.constant 3 : index
    %c0_14 = arith.constant 0 : index
    %c0_15 = arith.constant 0 : index
    %21 = vector.load %arg4[%c3, %c0_14, %c0_15] : memref<9x784x100xbf16, #tpu.memory_space<vmem>>, vector<1x784x100xbf16>
    %22 = vector.shape_cast %21 : vector<1x784x100xbf16> to vector<784x100xbf16>
    %23 = arith.extf %22 : vector<784x100xbf16> to vector<784x100xf32>
    %24 = vector.extract_strided_slice %3 {offsets = [48, 0], sizes = [16, 784], strides = [1, 1]} : vector<144x784xf32> to vector<16x784xf32>
    %cst_16 = arith.constant dense<0.000000e+00> : vector<16x100xf32>
    %25 = tpu.matmul %24, %23, %cst_16 {dimension_numbers = #tpu.dot_dimension_numbers<[1], [0], [0], [1], [0, 0, 1, 1], [], []>} : vector<16x784xf32>, vector<784x100xf32>, vector<16x100xf32> -> vector<16x100xf32>
    %26 = arith.addf %20, %25 : vector<16x100xf32>
    %c4 = arith.constant 4 : index
    %c0_17 = arith.constant 0 : index
    %c0_18 = arith.constant 0 : index
    %27 = vector.load %arg4[%c4, %c0_17, %c0_18] : memref<9x784x100xbf16, #tpu.memory_space<vmem>>, vector<1x784x100xbf16>
    %28 = vector.shape_cast %27 : vector<1x784x100xbf16> to vector<784x100xbf16>
    %29 = arith.extf %28 : vector<784x100xbf16> to vector<784x100xf32>
    %30 = vector.extract_strided_slice %3 {offsets = [64, 0], sizes = [16, 784], strides = [1, 1]} : vector<144x784xf32> to vector<16x784xf32>
    %cst_19 = arith.constant dense<0.000000e+00> : vector<16x100xf32>
    %31 = tpu.matmul %30, %29, %cst_19 {dimension_numbers = #tpu.dot_dimension_numbers<[1], [0], [0], [1], [0, 0, 1, 1], [], []>} : vector<16x784xf32>, vector<784x100xf32>, vector<16x100xf32> -> vector<16x100xf32>
    %32 = arith.addf %26, %31 : vector<16x100xf32>
    %c5 = arith.constant 5 : index
    %c0_20 = arith.constant 0 : index
    %c0_21 = arith.constant 0 : index
    %33 = vector.load %arg4[%c5, %c0_20, %c0_21] : memref<9x784x100xbf16, #tpu.memory_space<vmem>>, vector<1x784x100xbf16>
    %34 = vector.shape_cast %33 : vector<1x784x100xbf16> to vector<784x100xbf16>
    %35 = arith.extf %34 : vector<784x100xbf16> to vector<784x100xf32>
    %36 = vector.extract_strided_slice %3 {offsets = [80, 0], sizes = [16, 784], strides = [1, 1]} : vector<144x784xf32> to vector<16x784xf32>
    %cst_22 = arith.constant dense<0.000000e+00> : vector<16x100xf32>
    %37 = tpu.matmul %36, %35, %cst_22 {dimension_numbers = #tpu.dot_dimension_numbers<[1], [0], [0], [1], [0, 0, 1, 1], [], []>} : vector<16x784xf32>, vector<784x100xf32>, vector<16x100xf32> -> vector<16x100xf32>
    %38 = arith.addf %32, %37 : vector<16x100xf32>
    %c6 = arith.constant 6 : index
    %c0_23 = arith.constant 0 : index
    %c0_24 = arith.constant 0 : index
    %39 = vector.load %arg4[%c6, %c0_23, %c0_24] : memref<9x784x100xbf16, #tpu.memory_space<vmem>>, vector<1x784x100xbf16>
    %40 = vector.shape_cast %39 : vector<1x784x100xbf16> to vector<784x100xbf16>
    %41 = arith.extf %40 : vector<784x100xbf16> to vector<784x100xf32>
    %42 = vector.extract_strided_slice %3 {offsets = [96, 0], sizes = [16, 784], strides = [1, 1]} : vector<144x784xf32> to vector<16x784xf32>
    %cst_25 = arith.constant dense<0.000000e+00> : vector<16x100xf32>
    %43 = tpu.matmul %42, %41, %cst_25 {dimension_numbers = #tpu.dot_dimension_numbers<[1], [0], [0], [1], [0, 0, 1, 1], [], []>} : vector<16x784xf32>, vector<784x100xf32>, vector<16x100xf32> -> vector<16x100xf32>
    %44 = arith.addf %38, %43 : vector<16x100xf32>
    %c7 = arith.constant 7 : index
    %c0_26 = arith.constant 0 : index
    %c0_27 = arith.constant 0 : index
    %45 = vector.load %arg4[%c7, %c0_26, %c0_27] : memref<9x784x100xbf16, #tpu.memory_space<vmem>>, vector<1x784x100xbf16>
    %46 = vector.shape_cast %45 : vector<1x784x100xbf16> to vector<784x100xbf16>
    %47 = arith.extf %46 : vector<784x100xbf16> to vector<784x100xf32>
    %48 = vector.extract_strided_slice %3 {offsets = [112, 0], sizes = [16, 784], strides = [1, 1]} : vector<144x784xf32> to vector<16x784xf32>
    %cst_28 = arith.constant dense<0.000000e+00> : vector<16x100xf32>
    %49 = tpu.matmul %48, %47, %cst_28 {dimension_numbers = #tpu.dot_dimension_numbers<[1], [0], [0], [1], [0, 0, 1, 1], [], []>} : vector<16x784xf32>, vector<784x100xf32>, vector<16x100xf32> -> vector<16x100xf32>
    %50 = arith.addf %44, %49 : vector<16x100xf32>
    %c8 = arith.constant 8 : index
    %c0_29 = arith.constant 0 : index
    %c0_30 = arith.constant 0 : index
    %51 = vector.load %arg4[%c8, %c0_29, %c0_30] : memref<9x784x100xbf16, #tpu.memory_space<vmem>>, vector<1x784x100xbf16>
    %52 = vector.shape_cast %51 : vector<1x784x100xbf16> to vector<784x100xbf16>
    %53 = arith.extf %52 : vector<784x100xbf16> to vector<784x100xf32>
    %54 = vector.extract_strided_slice %3 {offsets = [128, 0], sizes = [16, 784], strides = [1, 1]} : vector<144x784xf32> to vector<16x784xf32>
    %cst_31 = arith.constant dense<0.000000e+00> : vector<16x100xf32>
    %55 = tpu.matmul %54, %53, %cst_31 {dimension_numbers = #tpu.dot_dimension_numbers<[1], [0], [0], [1], [0, 0, 1, 1], [], []>} : vector<16x784xf32>, vector<784x100xf32>, vector<16x100xf32> -> vector<16x100xf32>
    %56 = arith.addf %50, %55 : vector<16x100xf32>
    %c0_32 = arith.constant 0 : index
    %c0_33 = arith.constant 0 : index
    %57 = vector.load %arg3[%c0_32, %c0_33] : memref<16x1xf32, #tpu.memory_space<vmem>>, vector<16x1xf32>
    %58 = vector.broadcast %57 : vector<16x1xf32> to vector<16x100xf32>
    %59 = arith.addf %56, %58 : vector<16x100xf32>
    %cst_34 = arith.constant 0.000000e+00 : f32
    %60 = vector.broadcast %cst_34 : f32 to vector<16x100xf32>
    %61 = arith.maximumf %59, %60 : vector<16x100xf32>
    %c0_35 = arith.constant 0 : index
    %c0_36 = arith.constant 0 : index
    %c0_37 = arith.constant 0 : index
    %62 = vector.load %arg5[%c0_35, %c0_36, %c0_37] : memref<4x100x25xbf16, #tpu.memory_space<vmem>>, vector<1x100x25xbf16>
    %63 = vector.shape_cast %62 : vector<1x100x25xbf16> to vector<100x25xbf16>
    %64 = arith.extf %63 : vector<100x25xbf16> to vector<100x25xf32>
    %cst_38 = arith.constant dense<0.000000e+00> : vector<16x25xf32>
    %65 = tpu.matmul %61, %64, %cst_38 {dimension_numbers = #tpu.dot_dimension_numbers<[1], [0], [0], [1], [0, 0, 1, 1], [], []>} : vector<16x100xf32>, vector<100x25xf32>, vector<16x25xf32> -> vector<16x25xf32>
    %c1_39 = arith.constant 1 : index
    %c0_40 = arith.constant 0 : index
    %c0_41 = arith.constant 0 : index
    %66 = vector.load %arg5[%c1_39, %c0_40, %c0_41] : memref<4x100x25xbf16, #tpu.memory_space<vmem>>, vector<1x100x25xbf16>
    %67 = vector.shape_cast %66 : vector<1x100x25xbf16> to vector<100x25xbf16>
    %68 = arith.extf %67 : vector<100x25xbf16> to vector<100x25xf32>
    %cst_42 = arith.constant dense<0.000000e+00> : vector<16x25xf32>
    %69 = tpu.matmul %61, %68, %cst_42 {dimension_numbers = #tpu.dot_dimension_numbers<[1], [0], [0], [1], [0, 0, 1, 1], [], []>} : vector<16x100xf32>, vector<100x25xf32>, vector<16x25xf32> -> vector<16x25xf32>
    %70 = arith.maximumf %65, %69 : vector<16x25xf32>
    %c2_43 = arith.constant 2 : index
    %c0_44 = arith.constant 0 : index
    %c0_45 = arith.constant 0 : index
    %71 = vector.load %arg5[%c2_43, %c0_44, %c0_45] : memref<4x100x25xbf16, #tpu.memory_space<vmem>>, vector<1x100x25xbf16>
    %72 = vector.shape_cast %71 : vector<1x100x25xbf16> to vector<100x25xbf16>
    %73 = arith.extf %72 : vector<100x25xbf16> to vector<100x25xf32>
    %cst_46 = arith.constant dense<0.000000e+00> : vector<16x25xf32>
    %74 = tpu.matmul %61, %73, %cst_46 {dimension_numbers = #tpu.dot_dimension_numbers<[1], [0], [0], [1], [0, 0, 1, 1], [], []>} : vector<16x100xf32>, vector<100x25xf32>, vector<16x25xf32> -> vector<16x25xf32>
    %75 = arith.maximumf %70, %74 : vector<16x25xf32>
    %c3_47 = arith.constant 3 : index
    %c0_48 = arith.constant 0 : index
    %c0_49 = arith.constant 0 : index
    %76 = vector.load %arg5[%c3_47, %c0_48, %c0_49] : memref<4x100x25xbf16, #tpu.memory_space<vmem>>, vector<1x100x25xbf16>
    %77 = vector.shape_cast %76 : vector<1x100x25xbf16> to vector<100x25xbf16>
    %78 = arith.extf %77 : vector<100x25xbf16> to vector<100x25xf32>
    %cst_50 = arith.constant dense<0.000000e+00> : vector<16x25xf32>
    %79 = tpu.matmul %61, %78, %cst_50 {dimension_numbers = #tpu.dot_dimension_numbers<[1], [0], [0], [1], [0, 0, 1, 1], [], []>} : vector<16x100xf32>, vector<100x25xf32>, vector<16x25xf32> -> vector<16x25xf32>
    %80 = arith.maximumf %75, %79 : vector<16x25xf32>
    %c0_51 = arith.constant 0 : index
    %c0_52 = arith.constant 0 : index
    %81 = vector.load %arg6[%c0_51, %c0_52] : memref<72x16xf32, #tpu.memory_space<vmem>>, vector<72x16xf32>
    %cst_53 = arith.constant dense<0.000000e+00> : vector<72x25xf32>
    %82 = tpu.matmul %81, %80, %cst_53 {dimension_numbers = #tpu.dot_dimension_numbers<[1], [0], [0], [1], [0, 0, 1, 1], [], []>} : vector<72x16xf32>, vector<16x25xf32>, vector<72x25xf32> -> vector<72x25xf32>
    %c0_54 = arith.constant 0 : index
    %c0_55 = arith.constant 0 : index
    %c0_56 = arith.constant 0 : index
    %83 = vector.load %arg8[%c0_54, %c0_55, %c0_56] : memref<9x25x9xbf16, #tpu.memory_space<vmem>>, vector<1x25x9xbf16>
    %84 = vector.shape_cast %83 : vector<1x25x9xbf16> to vector<25x9xbf16>
    %85 = arith.extf %84 : vector<25x9xbf16> to vector<25x9xf32>
    %86 = vector.extract_strided_slice %82 {offsets = [0, 0], sizes = [8, 25], strides = [1, 1]} : vector<72x25xf32> to vector<8x25xf32>
    %cst_57 = arith.constant dense<0.000000e+00> : vector<8x9xf32>
    %87 = tpu.matmul %86, %85, %cst_57 {dimension_numbers = #tpu.dot_dimension_numbers<[1], [0], [0], [1], [0, 0, 1, 1], [], []>} : vector<8x25xf32>, vector<25x9xf32>, vector<8x9xf32> -> vector<8x9xf32>
    %c1_58 = arith.constant 1 : index
    %c0_59 = arith.constant 0 : index
    %c0_60 = arith.constant 0 : index
    %88 = vector.load %arg8[%c1_58, %c0_59, %c0_60] : memref<9x25x9xbf16, #tpu.memory_space<vmem>>, vector<1x25x9xbf16>
    %89 = vector.shape_cast %88 : vector<1x25x9xbf16> to vector<25x9xbf16>
    %90 = arith.extf %89 : vector<25x9xbf16> to vector<25x9xf32>
    %91 = vector.extract_strided_slice %82 {offsets = [8, 0], sizes = [8, 25], strides = [1, 1]} : vector<72x25xf32> to vector<8x25xf32>
    %cst_61 = arith.constant dense<0.000000e+00> : vector<8x9xf32>
    %92 = tpu.matmul %91, %90, %cst_61 {dimension_numbers = #tpu.dot_dimension_numbers<[1], [0], [0], [1], [0, 0, 1, 1], [], []>} : vector<8x25xf32>, vector<25x9xf32>, vector<8x9xf32> -> vector<8x9xf32>
    %93 = arith.addf %87, %92 : vector<8x9xf32>
    %c2_62 = arith.constant 2 : index
    %c0_63 = arith.constant 0 : index
    %c0_64 = arith.constant 0 : index
    %94 = vector.load %arg8[%c2_62, %c0_63, %c0_64] : memref<9x25x9xbf16, #tpu.memory_space<vmem>>, vector<1x25x9xbf16>
    %95 = vector.shape_cast %94 : vector<1x25x9xbf16> to vector<25x9xbf16>
    %96 = arith.extf %95 : vector<25x9xbf16> to vector<25x9xf32>
    %97 = vector.extract_strided_slice %82 {offsets = [16, 0], sizes = [8, 25], strides = [1, 1]} : vector<72x25xf32> to vector<8x25xf32>
    %cst_65 = arith.constant dense<0.000000e+00> : vector<8x9xf32>
    %98 = tpu.matmul %97, %96, %cst_65 {dimension_numbers = #tpu.dot_dimension_numbers<[1], [0], [0], [1], [0, 0, 1, 1], [], []>} : vector<8x25xf32>, vector<25x9xf32>, vector<8x9xf32> -> vector<8x9xf32>
    %99 = arith.addf %93, %98 : vector<8x9xf32>
    %c3_66 = arith.constant 3 : index
    %c0_67 = arith.constant 0 : index
    %c0_68 = arith.constant 0 : index
    %100 = vector.load %arg8[%c3_66, %c0_67, %c0_68] : memref<9x25x9xbf16, #tpu.memory_space<vmem>>, vector<1x25x9xbf16>
    %101 = vector.shape_cast %100 : vector<1x25x9xbf16> to vector<25x9xbf16>
    %102 = arith.extf %101 : vector<25x9xbf16> to vector<25x9xf32>
    %103 = vector.extract_strided_slice %82 {offsets = [24, 0], sizes = [8, 25], strides = [1, 1]} : vector<72x25xf32> to vector<8x25xf32>
    %cst_69 = arith.constant dense<0.000000e+00> : vector<8x9xf32>
    %104 = tpu.matmul %103, %102, %cst_69 {dimension_numbers = #tpu.dot_dimension_numbers<[1], [0], [0], [1], [0, 0, 1, 1], [], []>} : vector<8x25xf32>, vector<25x9xf32>, vector<8x9xf32> -> vector<8x9xf32>
    %105 = arith.addf %99, %104 : vector<8x9xf32>
    %c4_70 = arith.constant 4 : index
    %c0_71 = arith.constant 0 : index
    %c0_72 = arith.constant 0 : index
    %106 = vector.load %arg8[%c4_70, %c0_71, %c0_72] : memref<9x25x9xbf16, #tpu.memory_space<vmem>>, vector<1x25x9xbf16>
    %107 = vector.shape_cast %106 : vector<1x25x9xbf16> to vector<25x9xbf16>
    %108 = arith.extf %107 : vector<25x9xbf16> to vector<25x9xf32>
    %109 = vector.extract_strided_slice %82 {offsets = [32, 0], sizes = [8, 25], strides = [1, 1]} : vector<72x25xf32> to vector<8x25xf32>
    %cst_73 = arith.constant dense<0.000000e+00> : vector<8x9xf32>
    %110 = tpu.matmul %109, %108, %cst_73 {dimension_numbers = #tpu.dot_dimension_numbers<[1], [0], [0], [1], [0, 0, 1, 1], [], []>} : vector<8x25xf32>, vector<25x9xf32>, vector<8x9xf32> -> vector<8x9xf32>
    %111 = arith.addf %105, %110 : vector<8x9xf32>
    %c5_74 = arith.constant 5 : index
    %c0_75 = arith.constant 0 : index
    %c0_76 = arith.constant 0 : index
    %112 = vector.load %arg8[%c5_74, %c0_75, %c0_76] : memref<9x25x9xbf16, #tpu.memory_space<vmem>>, vector<1x25x9xbf16>
    %113 = vector.shape_cast %112 : vector<1x25x9xbf16> to vector<25x9xbf16>
    %114 = arith.extf %113 : vector<25x9xbf16> to vector<25x9xf32>
    %115 = vector.extract_strided_slice %82 {offsets = [40, 0], sizes = [8, 25], strides = [1, 1]} : vector<72x25xf32> to vector<8x25xf32>
    %cst_77 = arith.constant dense<0.000000e+00> : vector<8x9xf32>
    %116 = tpu.matmul %115, %114, %cst_77 {dimension_numbers = #tpu.dot_dimension_numbers<[1], [0], [0], [1], [0, 0, 1, 1], [], []>} : vector<8x25xf32>, vector<25x9xf32>, vector<8x9xf32> -> vector<8x9xf32>
    %117 = arith.addf %111, %116 : vector<8x9xf32>
    %c6_78 = arith.constant 6 : index
    %c0_79 = arith.constant 0 : index
    %c0_80 = arith.constant 0 : index
    %118 = vector.load %arg8[%c6_78, %c0_79, %c0_80] : memref<9x25x9xbf16, #tpu.memory_space<vmem>>, vector<1x25x9xbf16>
    %119 = vector.shape_cast %118 : vector<1x25x9xbf16> to vector<25x9xbf16>
    %120 = arith.extf %119 : vector<25x9xbf16> to vector<25x9xf32>
    %121 = vector.extract_strided_slice %82 {offsets = [48, 0], sizes = [8, 25], strides = [1, 1]} : vector<72x25xf32> to vector<8x25xf32>
    %cst_81 = arith.constant dense<0.000000e+00> : vector<8x9xf32>
    %122 = tpu.matmul %121, %120, %cst_81 {dimension_numbers = #tpu.dot_dimension_numbers<[1], [0], [0], [1], [0, 0, 1, 1], [], []>} : vector<8x25xf32>, vector<25x9xf32>, vector<8x9xf32> -> vector<8x9xf32>
    %123 = arith.addf %117, %122 : vector<8x9xf32>
    %c7_82 = arith.constant 7 : index
    %c0_83 = arith.constant 0 : index
    %c0_84 = arith.constant 0 : index
    %124 = vector.load %arg8[%c7_82, %c0_83, %c0_84] : memref<9x25x9xbf16, #tpu.memory_space<vmem>>, vector<1x25x9xbf16>
    %125 = vector.shape_cast %124 : vector<1x25x9xbf16> to vector<25x9xbf16>
    %126 = arith.extf %125 : vector<25x9xbf16> to vector<25x9xf32>
    %127 = vector.extract_strided_slice %82 {offsets = [56, 0], sizes = [8, 25], strides = [1, 1]} : vector<72x25xf32> to vector<8x25xf32>
    %cst_85 = arith.constant dense<0.000000e+00> : vector<8x9xf32>
    %128 = tpu.matmul %127, %126, %cst_85 {dimension_numbers = #tpu.dot_dimension_numbers<[1], [0], [0], [1], [0, 0, 1, 1], [], []>} : vector<8x25xf32>, vector<25x9xf32>, vector<8x9xf32> -> vector<8x9xf32>
    %129 = arith.addf %123, %128 : vector<8x9xf32>
    %c8_86 = arith.constant 8 : index
    %c0_87 = arith.constant 0 : index
    %c0_88 = arith.constant 0 : index
    %130 = vector.load %arg8[%c8_86, %c0_87, %c0_88] : memref<9x25x9xbf16, #tpu.memory_space<vmem>>, vector<1x25x9xbf16>
    %131 = vector.shape_cast %130 : vector<1x25x9xbf16> to vector<25x9xbf16>
    %132 = arith.extf %131 : vector<25x9xbf16> to vector<25x9xf32>
    %133 = vector.extract_strided_slice %82 {offsets = [64, 0], sizes = [8, 25], strides = [1, 1]} : vector<72x25xf32> to vector<8x25xf32>
    %cst_89 = arith.constant dense<0.000000e+00> : vector<8x9xf32>
    %134 = tpu.matmul %133, %132, %cst_89 {dimension_numbers = #tpu.dot_dimension_numbers<[1], [0], [0], [1], [0, 0, 1, 1], [], []>} : vector<8x25xf32>, vector<25x9xf32>, vector<8x9xf32> -> vector<8x9xf32>
    %135 = arith.addf %129, %134 : vector<8x9xf32>
    %c0_90 = arith.constant 0 : index
    %c0_91 = arith.constant 0 : index
    %136 = vector.load %arg7[%c0_90, %c0_91] : memref<8x1xf32, #tpu.memory_space<vmem>>, vector<8x1xf32>
    %137 = vector.broadcast %136 : vector<8x1xf32> to vector<8x9xf32>
    %138 = arith.addf %135, %137 : vector<8x9xf32>
    %cst_92 = arith.constant 0.000000e+00 : f32
    %139 = vector.broadcast %cst_92 : f32 to vector<8x9xf32>
    %140 = arith.maximumf %138, %139 : vector<8x9xf32>
    %c0_93 = arith.constant 0 : index
    %c0_94 = arith.constant 0 : index
    %c0_95 = arith.constant 0 : index
    %141 = vector.load %arg9[%c0_93, %c0_94, %c0_95] : memref<4x9x4xbf16, #tpu.memory_space<vmem>>, vector<1x9x4xbf16>
    %142 = vector.shape_cast %141 : vector<1x9x4xbf16> to vector<9x4xbf16>
    %143 = arith.extf %142 : vector<9x4xbf16> to vector<9x4xf32>
    %cst_96 = arith.constant dense<0.000000e+00> : vector<8x4xf32>
    %144 = tpu.matmul %140, %143, %cst_96 {dimension_numbers = #tpu.dot_dimension_numbers<[1], [0], [0], [1], [0, 0, 1, 1], [], []>} : vector<8x9xf32>, vector<9x4xf32>, vector<8x4xf32> -> vector<8x4xf32>
    %c1_97 = arith.constant 1 : index
    %c0_98 = arith.constant 0 : index
    %c0_99 = arith.constant 0 : index
    %145 = vector.load %arg9[%c1_97, %c0_98, %c0_99] : memref<4x9x4xbf16, #tpu.memory_space<vmem>>, vector<1x9x4xbf16>
    %146 = vector.shape_cast %145 : vector<1x9x4xbf16> to vector<9x4xbf16>
    %147 = arith.extf %146 : vector<9x4xbf16> to vector<9x4xf32>
    %cst_100 = arith.constant dense<0.000000e+00> : vector<8x4xf32>
    %148 = tpu.matmul %140, %147, %cst_100 {dimension_numbers = #tpu.dot_dimension_numbers<[1], [0], [0], [1], [0, 0, 1, 1], [], []>} : vector<8x9xf32>, vector<9x4xf32>, vector<8x4xf32> -> vector<8x4xf32>
    %149 = arith.maximumf %144, %148 : vector<8x4xf32>
    %c2_101 = arith.constant 2 : index
    %c0_102 = arith.constant 0 : index
    %c0_103 = arith.constant 0 : index
    %150 = vector.load %arg9[%c2_101, %c0_102, %c0_103] : memref<4x9x4xbf16, #tpu.memory_space<vmem>>, vector<1x9x4xbf16>
    %151 = vector.shape_cast %150 : vector<1x9x4xbf16> to vector<9x4xbf16>
    %152 = arith.extf %151 : vector<9x4xbf16> to vector<9x4xf32>
    %cst_104 = arith.constant dense<0.000000e+00> : vector<8x4xf32>
    %153 = tpu.matmul %140, %152, %cst_104 {dimension_numbers = #tpu.dot_dimension_numbers<[1], [0], [0], [1], [0, 0, 1, 1], [], []>} : vector<8x9xf32>, vector<9x4xf32>, vector<8x4xf32> -> vector<8x4xf32>
    %154 = arith.maximumf %149, %153 : vector<8x4xf32>
    %c3_105 = arith.constant 3 : index
    %c0_106 = arith.constant 0 : index
    %c0_107 = arith.constant 0 : index
    %155 = vector.load %arg9[%c3_105, %c0_106, %c0_107] : memref<4x9x4xbf16, #tpu.memory_space<vmem>>, vector<1x9x4xbf16>
    %156 = vector.shape_cast %155 : vector<1x9x4xbf16> to vector<9x4xbf16>
    %157 = arith.extf %156 : vector<9x4xbf16> to vector<9x4xf32>
    %cst_108 = arith.constant dense<0.000000e+00> : vector<8x4xf32>
    %158 = tpu.matmul %140, %157, %cst_108 {dimension_numbers = #tpu.dot_dimension_numbers<[1], [0], [0], [1], [0, 0, 1, 1], [], []>} : vector<8x9xf32>, vector<9x4xf32>, vector<8x4xf32> -> vector<8x4xf32>
    %159 = arith.maximumf %154, %158 : vector<8x4xf32>
    %c0_109 = arith.constant 0 : index
    %c0_110 = arith.constant 0 : index
    %160 = vector.load %arg10[%c0_109, %c0_110] : memref<144x8xf32, #tpu.memory_space<vmem>>, vector<144x8xf32>
    %cst_111 = arith.constant dense<0.000000e+00> : vector<144x4xf32>
    %161 = tpu.matmul %160, %159, %cst_111 {dimension_numbers = #tpu.dot_dimension_numbers<[1], [0], [0], [1], [0, 0, 1, 1], [], []>} : vector<144x8xf32>, vector<8x4xf32>, vector<144x4xf32> -> vector<144x4xf32>
    %c0_112 = arith.constant 0 : index
    %c0_113 = arith.constant 0 : index
    %c0_114 = arith.constant 0 : index
    %162 = vector.load %arg12[%c0_112, %c0_113, %c0_114] : memref<9x4x25xbf16, #tpu.memory_space<vmem>>, vector<1x4x25xbf16>
    %163 = vector.shape_cast %162 : vector<1x4x25xbf16> to vector<4x25xbf16>
    %164 = arith.extf %163 : vector<4x25xbf16> to vector<4x25xf32>
    %165 = vector.extract_strided_slice %161 {offsets = [0, 0], sizes = [16, 4], strides = [1, 1]} : vector<144x4xf32> to vector<16x4xf32>
    %cst_115 = arith.constant dense<0.000000e+00> : vector<16x25xf32>
    %166 = tpu.matmul %165, %164, %cst_115 {dimension_numbers = #tpu.dot_dimension_numbers<[1], [0], [0], [1], [0, 0, 1, 1], [], []>} : vector<16x4xf32>, vector<4x25xf32>, vector<16x25xf32> -> vector<16x25xf32>
    %c1_116 = arith.constant 1 : index
    %c0_117 = arith.constant 0 : index
    %c0_118 = arith.constant 0 : index
    %167 = vector.load %arg12[%c1_116, %c0_117, %c0_118] : memref<9x4x25xbf16, #tpu.memory_space<vmem>>, vector<1x4x25xbf16>
    %168 = vector.shape_cast %167 : vector<1x4x25xbf16> to vector<4x25xbf16>
    %169 = arith.extf %168 : vector<4x25xbf16> to vector<4x25xf32>
    %170 = vector.extract_strided_slice %161 {offsets = [16, 0], sizes = [16, 4], strides = [1, 1]} : vector<144x4xf32> to vector<16x4xf32>
    %cst_119 = arith.constant dense<0.000000e+00> : vector<16x25xf32>
    %171 = tpu.matmul %170, %169, %cst_119 {dimension_numbers = #tpu.dot_dimension_numbers<[1], [0], [0], [1], [0, 0, 1, 1], [], []>} : vector<16x4xf32>, vector<4x25xf32>, vector<16x25xf32> -> vector<16x25xf32>
    %172 = arith.addf %166, %171 : vector<16x25xf32>
    %c2_120 = arith.constant 2 : index
    %c0_121 = arith.constant 0 : index
    %c0_122 = arith.constant 0 : index
    %173 = vector.load %arg12[%c2_120, %c0_121, %c0_122] : memref<9x4x25xbf16, #tpu.memory_space<vmem>>, vector<1x4x25xbf16>
    %174 = vector.shape_cast %173 : vector<1x4x25xbf16> to vector<4x25xbf16>
    %175 = arith.extf %174 : vector<4x25xbf16> to vector<4x25xf32>
    %176 = vector.extract_strided_slice %161 {offsets = [32, 0], sizes = [16, 4], strides = [1, 1]} : vector<144x4xf32> to vector<16x4xf32>
    %cst_123 = arith.constant dense<0.000000e+00> : vector<16x25xf32>
    %177 = tpu.matmul %176, %175, %cst_123 {dimension_numbers = #tpu.dot_dimension_numbers<[1], [0], [0], [1], [0, 0, 1, 1], [], []>} : vector<16x4xf32>, vector<4x25xf32>, vector<16x25xf32> -> vector<16x25xf32>
    %178 = arith.addf %172, %177 : vector<16x25xf32>
    %c3_124 = arith.constant 3 : index
    %c0_125 = arith.constant 0 : index
    %c0_126 = arith.constant 0 : index
    %179 = vector.load %arg12[%c3_124, %c0_125, %c0_126] : memref<9x4x25xbf16, #tpu.memory_space<vmem>>, vector<1x4x25xbf16>
    %180 = vector.shape_cast %179 : vector<1x4x25xbf16> to vector<4x25xbf16>
    %181 = arith.extf %180 : vector<4x25xbf16> to vector<4x25xf32>
    %182 = vector.extract_strided_slice %161 {offsets = [48, 0], sizes = [16, 4], strides = [1, 1]} : vector<144x4xf32> to vector<16x4xf32>
    %cst_127 = arith.constant dense<0.000000e+00> : vector<16x25xf32>
    %183 = tpu.matmul %182, %181, %cst_127 {dimension_numbers = #tpu.dot_dimension_numbers<[1], [0], [0], [1], [0, 0, 1, 1], [], []>} : vector<16x4xf32>, vector<4x25xf32>, vector<16x25xf32> -> vector<16x25xf32>
    %184 = arith.addf %178, %183 : vector<16x25xf32>
    %c4_128 = arith.constant 4 : index
    %c0_129 = arith.constant 0 : index
    %c0_130 = arith.constant 0 : index
    %185 = vector.load %arg12[%c4_128, %c0_129, %c0_130] : memref<9x4x25xbf16, #tpu.memory_space<vmem>>, vector<1x4x25xbf16>
    %186 = vector.shape_cast %185 : vector<1x4x25xbf16> to vector<4x25xbf16>
    %187 = arith.extf %186 : vector<4x25xbf16> to vector<4x25xf32>
    %188 = vector.extract_strided_slice %161 {offsets = [64, 0], sizes = [16, 4], strides = [1, 1]} : vector<144x4xf32> to vector<16x4xf32>
    %cst_131 = arith.constant dense<0.000000e+00> : vector<16x25xf32>
    %189 = tpu.matmul %188, %187, %cst_131 {dimension_numbers = #tpu.dot_dimension_numbers<[1], [0], [0], [1], [0, 0, 1, 1], [], []>} : vector<16x4xf32>, vector<4x25xf32>, vector<16x25xf32> -> vector<16x25xf32>
    %190 = arith.addf %184, %189 : vector<16x25xf32>
    %c5_132 = arith.constant 5 : index
    %c0_133 = arith.constant 0 : index
    %c0_134 = arith.constant 0 : index
    %191 = vector.load %arg12[%c5_132, %c0_133, %c0_134] : memref<9x4x25xbf16, #tpu.memory_space<vmem>>, vector<1x4x25xbf16>
    %192 = vector.shape_cast %191 : vector<1x4x25xbf16> to vector<4x25xbf16>
    %193 = arith.extf %192 : vector<4x25xbf16> to vector<4x25xf32>
    %194 = vector.extract_strided_slice %161 {offsets = [80, 0], sizes = [16, 4], strides = [1, 1]} : vector<144x4xf32> to vector<16x4xf32>
    %cst_135 = arith.constant dense<0.000000e+00> : vector<16x25xf32>
    %195 = tpu.matmul %194, %193, %cst_135 {dimension_numbers = #tpu.dot_dimension_numbers<[1], [0], [0], [1], [0, 0, 1, 1], [], []>} : vector<16x4xf32>, vector<4x25xf32>, vector<16x25xf32> -> vector<16x25xf32>
    %196 = arith.addf %190, %195 : vector<16x25xf32>
    %c6_136 = arith.constant 6 : index
    %c0_137 = arith.constant 0 : index
    %c0_138 = arith.constant 0 : index
    %197 = vector.load %arg12[%c6_136, %c0_137, %c0_138] : memref<9x4x25xbf16, #tpu.memory_space<vmem>>, vector<1x4x25xbf16>
    %198 = vector.shape_cast %197 : vector<1x4x25xbf16> to vector<4x25xbf16>
    %199 = arith.extf %198 : vector<4x25xbf16> to vector<4x25xf32>
    %200 = vector.extract_strided_slice %161 {offsets = [96, 0], sizes = [16, 4], strides = [1, 1]} : vector<144x4xf32> to vector<16x4xf32>
    %cst_139 = arith.constant dense<0.000000e+00> : vector<16x25xf32>
    %201 = tpu.matmul %200, %199, %cst_139 {dimension_numbers = #tpu.dot_dimension_numbers<[1], [0], [0], [1], [0, 0, 1, 1], [], []>} : vector<16x4xf32>, vector<4x25xf32>, vector<16x25xf32> -> vector<16x25xf32>
    %202 = arith.addf %196, %201 : vector<16x25xf32>
    %c7_140 = arith.constant 7 : index
    %c0_141 = arith.constant 0 : index
    %c0_142 = arith.constant 0 : index
    %203 = vector.load %arg12[%c7_140, %c0_141, %c0_142] : memref<9x4x25xbf16, #tpu.memory_space<vmem>>, vector<1x4x25xbf16>
    %204 = vector.shape_cast %203 : vector<1x4x25xbf16> to vector<4x25xbf16>
    %205 = arith.extf %204 : vector<4x25xbf16> to vector<4x25xf32>
    %206 = vector.extract_strided_slice %161 {offsets = [112, 0], sizes = [16, 4], strides = [1, 1]} : vector<144x4xf32> to vector<16x4xf32>
    %cst_143 = arith.constant dense<0.000000e+00> : vector<16x25xf32>
    %207 = tpu.matmul %206, %205, %cst_143 {dimension_numbers = #tpu.dot_dimension_numbers<[1], [0], [0], [1], [0, 0, 1, 1], [], []>} : vector<16x4xf32>, vector<4x25xf32>, vector<16x25xf32> -> vector<16x25xf32>
    %208 = arith.addf %202, %207 : vector<16x25xf32>
    %c8_144 = arith.constant 8 : index
    %c0_145 = arith.constant 0 : index
    %c0_146 = arith.constant 0 : index
    %209 = vector.load %arg12[%c8_144, %c0_145, %c0_146] : memref<9x4x25xbf16, #tpu.memory_space<vmem>>, vector<1x4x25xbf16>
    %210 = vector.shape_cast %209 : vector<1x4x25xbf16> to vector<4x25xbf16>
    %211 = arith.extf %210 : vector<4x25xbf16> to vector<4x25xf32>
    %212 = vector.extract_strided_slice %161 {offsets = [128, 0], sizes = [16, 4], strides = [1, 1]} : vector<144x4xf32> to vector<16x4xf32>
    %cst_147 = arith.constant dense<0.000000e+00> : vector<16x25xf32>
    %213 = tpu.matmul %212, %211, %cst_147 {dimension_numbers = #tpu.dot_dimension_numbers<[1], [0], [0], [1], [0, 0, 1, 1], [], []>} : vector<16x4xf32>, vector<4x25xf32>, vector<16x25xf32> -> vector<16x25xf32>
    %214 = arith.addf %208, %213 : vector<16x25xf32>
    %c0_148 = arith.constant 0 : index
    %c0_149 = arith.constant 0 : index
    %215 = vector.load %arg11[%c0_148, %c0_149] : memref<16x1xf32, #tpu.memory_space<vmem>>, vector<16x1xf32>
    %216 = vector.broadcast %215 : vector<16x1xf32> to vector<16x25xf32>
    %217 = arith.addf %214, %216 : vector<16x25xf32>
    %cst_150 = arith.constant 0.000000e+00 : f32
    %218 = vector.broadcast %cst_150 : f32 to vector<16x25xf32>
    %219 = arith.maximumf %217, %218 : vector<16x25xf32>
    %c0_151 = arith.constant 0 : index
    %c0_152 = arith.constant 0 : index
    %220 = vector.load %arg13[%c0_151, %c0_152] : memref<200x16xf32, #tpu.memory_space<vmem>>, vector<200x16xf32>
    %cst_153 = arith.constant dense<0.000000e+00> : vector<200x25xf32>
    %221 = tpu.matmul %220, %219, %cst_153 {dimension_numbers = #tpu.dot_dimension_numbers<[1], [0], [0], [1], [0, 0, 1, 1], [], []>} : vector<200x16xf32>, vector<16x25xf32>, vector<200x25xf32> -> vector<200x25xf32>
    %c0_154 = arith.constant 0 : index
    %c0_155 = arith.constant 0 : index
    %c0_156 = arith.constant 0 : index
    %222 = vector.load %arg15[%c0_154, %c0_155, %c0_156] : memref<25x25x225xbf16, #tpu.memory_space<vmem>>, vector<1x25x225xbf16>
    %223 = vector.shape_cast %222 : vector<1x25x225xbf16> to vector<25x225xbf16>
    %224 = arith.extf %223 : vector<25x225xbf16> to vector<25x225xf32>
    %225 = vector.extract_strided_slice %221 {offsets = [0, 0], sizes = [8, 25], strides = [1, 1]} : vector<200x25xf32> to vector<8x25xf32>
    %cst_157 = arith.constant dense<0.000000e+00> : vector<8x225xf32>
    %226 = tpu.matmul %225, %224, %cst_157 {dimension_numbers = #tpu.dot_dimension_numbers<[1], [0], [0], [1], [0, 0, 1, 1], [], []>} : vector<8x25xf32>, vector<25x225xf32>, vector<8x225xf32> -> vector<8x225xf32>
    %c1_158 = arith.constant 1 : index
    %c0_159 = arith.constant 0 : index
    %c0_160 = arith.constant 0 : index
    %227 = vector.load %arg15[%c1_158, %c0_159, %c0_160] : memref<25x25x225xbf16, #tpu.memory_space<vmem>>, vector<1x25x225xbf16>
    %228 = vector.shape_cast %227 : vector<1x25x225xbf16> to vector<25x225xbf16>
    %229 = arith.extf %228 : vector<25x225xbf16> to vector<25x225xf32>
    %230 = vector.extract_strided_slice %221 {offsets = [8, 0], sizes = [8, 25], strides = [1, 1]} : vector<200x25xf32> to vector<8x25xf32>
    %cst_161 = arith.constant dense<0.000000e+00> : vector<8x225xf32>
    %231 = tpu.matmul %230, %229, %cst_161 {dimension_numbers = #tpu.dot_dimension_numbers<[1], [0], [0], [1], [0, 0, 1, 1], [], []>} : vector<8x25xf32>, vector<25x225xf32>, vector<8x225xf32> -> vector<8x225xf32>
    %232 = arith.addf %226, %231 : vector<8x225xf32>
    %c2_162 = arith.constant 2 : index
    %c0_163 = arith.constant 0 : index
    %c0_164 = arith.constant 0 : index
    %233 = vector.load %arg15[%c2_162, %c0_163, %c0_164] : memref<25x25x225xbf16, #tpu.memory_space<vmem>>, vector<1x25x225xbf16>
    %234 = vector.shape_cast %233 : vector<1x25x225xbf16> to vector<25x225xbf16>
    %235 = arith.extf %234 : vector<25x225xbf16> to vector<25x225xf32>
    %236 = vector.extract_strided_slice %221 {offsets = [16, 0], sizes = [8, 25], strides = [1, 1]} : vector<200x25xf32> to vector<8x25xf32>
    %cst_165 = arith.constant dense<0.000000e+00> : vector<8x225xf32>
    %237 = tpu.matmul %236, %235, %cst_165 {dimension_numbers = #tpu.dot_dimension_numbers<[1], [0], [0], [1], [0, 0, 1, 1], [], []>} : vector<8x25xf32>, vector<25x225xf32>, vector<8x225xf32> -> vector<8x225xf32>
    %238 = arith.addf %232, %237 : vector<8x225xf32>
    %c3_166 = arith.constant 3 : index
    %c0_167 = arith.constant 0 : index
    %c0_168 = arith.constant 0 : index
    %239 = vector.load %arg15[%c3_166, %c0_167, %c0_168] : memref<25x25x225xbf16, #tpu.memory_space<vmem>>, vector<1x25x225xbf16>
    %240 = vector.shape_cast %239 : vector<1x25x225xbf16> to vector<25x225xbf16>
    %241 = arith.extf %240 : vector<25x225xbf16> to vector<25x225xf32>
    %242 = vector.extract_strided_slice %221 {offsets = [24, 0], sizes = [8, 25], strides = [1, 1]} : vector<200x25xf32> to vector<8x25xf32>
    %cst_169 = arith.constant dense<0.000000e+00> : vector<8x225xf32>
    %243 = tpu.matmul %242, %241, %cst_169 {dimension_numbers = #tpu.dot_dimension_numbers<[1], [0], [0], [1], [0, 0, 1, 1], [], []>} : vector<8x25xf32>, vector<25x225xf32>, vector<8x225xf32> -> vector<8x225xf32>
    %244 = arith.addf %238, %243 : vector<8x225xf32>
    %c4_170 = arith.constant 4 : index
    %c0_171 = arith.constant 0 : index
    %c0_172 = arith.constant 0 : index
    %245 = vector.load %arg15[%c4_170, %c0_171, %c0_172] : memref<25x25x225xbf16, #tpu.memory_space<vmem>>, vector<1x25x225xbf16>
    %246 = vector.shape_cast %245 : vector<1x25x225xbf16> to vector<25x225xbf16>
    %247 = arith.extf %246 : vector<25x225xbf16> to vector<25x225xf32>
    %248 = vector.extract_strided_slice %221 {offsets = [32, 0], sizes = [8, 25], strides = [1, 1]} : vector<200x25xf32> to vector<8x25xf32>
    %cst_173 = arith.constant dense<0.000000e+00> : vector<8x225xf32>
    %249 = tpu.matmul %248, %247, %cst_173 {dimension_numbers = #tpu.dot_dimension_numbers<[1], [0], [0], [1], [0, 0, 1, 1], [], []>} : vector<8x25xf32>, vector<25x225xf32>, vector<8x225xf32> -> vector<8x225xf32>
    %250 = arith.addf %244, %249 : vector<8x225xf32>
    %c5_174 = arith.constant 5 : index
    %c0_175 = arith.constant 0 : index
    %c0_176 = arith.constant 0 : index
    %251 = vector.load %arg15[%c5_174, %c0_175, %c0_176] : memref<25x25x225xbf16, #tpu.memory_space<vmem>>, vector<1x25x225xbf16>
    %252 = vector.shape_cast %251 : vector<1x25x225xbf16> to vector<25x225xbf16>
    %253 = arith.extf %252 : vector<25x225xbf16> to vector<25x225xf32>
    %254 = vector.extract_strided_slice %221 {offsets = [40, 0], sizes = [8, 25], strides = [1, 1]} : vector<200x25xf32> to vector<8x25xf32>
    %cst_177 = arith.constant dense<0.000000e+00> : vector<8x225xf32>
    %255 = tpu.matmul %254, %253, %cst_177 {dimension_numbers = #tpu.dot_dimension_numbers<[1], [0], [0], [1], [0, 0, 1, 1], [], []>} : vector<8x25xf32>, vector<25x225xf32>, vector<8x225xf32> -> vector<8x225xf32>
    %256 = arith.addf %250, %255 : vector<8x225xf32>
    %c6_178 = arith.constant 6 : index
    %c0_179 = arith.constant 0 : index
    %c0_180 = arith.constant 0 : index
    %257 = vector.load %arg15[%c6_178, %c0_179, %c0_180] : memref<25x25x225xbf16, #tpu.memory_space<vmem>>, vector<1x25x225xbf16>
    %258 = vector.shape_cast %257 : vector<1x25x225xbf16> to vector<25x225xbf16>
    %259 = arith.extf %258 : vector<25x225xbf16> to vector<25x225xf32>
    %260 = vector.extract_strided_slice %221 {offsets = [48, 0], sizes = [8, 25], strides = [1, 1]} : vector<200x25xf32> to vector<8x25xf32>
    %cst_181 = arith.constant dense<0.000000e+00> : vector<8x225xf32>
    %261 = tpu.matmul %260, %259, %cst_181 {dimension_numbers = #tpu.dot_dimension_numbers<[1], [0], [0], [1], [0, 0, 1, 1], [], []>} : vector<8x25xf32>, vector<25x225xf32>, vector<8x225xf32> -> vector<8x225xf32>
    %262 = arith.addf %256, %261 : vector<8x225xf32>
    %c7_182 = arith.constant 7 : index
    %c0_183 = arith.constant 0 : index
    %c0_184 = arith.constant 0 : index
    %263 = vector.load %arg15[%c7_182, %c0_183, %c0_184] : memref<25x25x225xbf16, #tpu.memory_space<vmem>>, vector<1x25x225xbf16>
    %264 = vector.shape_cast %263 : vector<1x25x225xbf16> to vector<25x225xbf16>
    %265 = arith.extf %264 : vector<25x225xbf16> to vector<25x225xf32>
    %266 = vector.extract_strided_slice %221 {offsets = [56, 0], sizes = [8, 25], strides = [1, 1]} : vector<200x25xf32> to vector<8x25xf32>
    %cst_185 = arith.constant dense<0.000000e+00> : vector<8x225xf32>
    %267 = tpu.matmul %266, %265, %cst_185 {dimension_numbers = #tpu.dot_dimension_numbers<[1], [0], [0], [1], [0, 0, 1, 1], [], []>} : vector<8x25xf32>, vector<25x225xf32>, vector<8x225xf32> -> vector<8x225xf32>
    %268 = arith.addf %262, %267 : vector<8x225xf32>
    %c8_186 = arith.constant 8 : index
    %c0_187 = arith.constant 0 : index
    %c0_188 = arith.constant 0 : index
    %269 = vector.load %arg15[%c8_186, %c0_187, %c0_188] : memref<25x25x225xbf16, #tpu.memory_space<vmem>>, vector<1x25x225xbf16>
    %270 = vector.shape_cast %269 : vector<1x25x225xbf16> to vector<25x225xbf16>
    %271 = arith.extf %270 : vector<25x225xbf16> to vector<25x225xf32>
    %272 = vector.extract_strided_slice %221 {offsets = [64, 0], sizes = [8, 25], strides = [1, 1]} : vector<200x25xf32> to vector<8x25xf32>
    %cst_189 = arith.constant dense<0.000000e+00> : vector<8x225xf32>
    %273 = tpu.matmul %272, %271, %cst_189 {dimension_numbers = #tpu.dot_dimension_numbers<[1], [0], [0], [1], [0, 0, 1, 1], [], []>} : vector<8x25xf32>, vector<25x225xf32>, vector<8x225xf32> -> vector<8x225xf32>
    %274 = arith.addf %268, %273 : vector<8x225xf32>
    %c9 = arith.constant 9 : index
    %c0_190 = arith.constant 0 : index
    %c0_191 = arith.constant 0 : index
    %275 = vector.load %arg15[%c9, %c0_190, %c0_191] : memref<25x25x225xbf16, #tpu.memory_space<vmem>>, vector<1x25x225xbf16>
    %276 = vector.shape_cast %275 : vector<1x25x225xbf16> to vector<25x225xbf16>
    %277 = arith.extf %276 : vector<25x225xbf16> to vector<25x225xf32>
    %278 = vector.extract_strided_slice %221 {offsets = [72, 0], sizes = [8, 25], strides = [1, 1]} : vector<200x25xf32> to vector<8x25xf32>
    %cst_192 = arith.constant dense<0.000000e+00> : vector<8x225xf32>
    %279 = tpu.matmul %278, %277, %cst_192 {dimension_numbers = #tpu.dot_dimension_numbers<[1], [0], [0], [1], [0, 0, 1, 1], [], []>} : vector<8x25xf32>, vector<25x225xf32>, vector<8x225xf32> -> vector<8x225xf32>
    %280 = arith.addf %274, %279 : vector<8x225xf32>
    %c10 = arith.constant 10 : index
    %c0_193 = arith.constant 0 : index
    %c0_194 = arith.constant 0 : index
    %281 = vector.load %arg15[%c10, %c0_193, %c0_194] : memref<25x25x225xbf16, #tpu.memory_space<vmem>>, vector<1x25x225xbf16>
    %282 = vector.shape_cast %281 : vector<1x25x225xbf16> to vector<25x225xbf16>
    %283 = arith.extf %282 : vector<25x225xbf16> to vector<25x225xf32>
    %284 = vector.extract_strided_slice %221 {offsets = [80, 0], sizes = [8, 25], strides = [1, 1]} : vector<200x25xf32> to vector<8x25xf32>
    %cst_195 = arith.constant dense<0.000000e+00> : vector<8x225xf32>
    %285 = tpu.matmul %284, %283, %cst_195 {dimension_numbers = #tpu.dot_dimension_numbers<[1], [0], [0], [1], [0, 0, 1, 1], [], []>} : vector<8x25xf32>, vector<25x225xf32>, vector<8x225xf32> -> vector<8x225xf32>
    %286 = arith.addf %280, %285 : vector<8x225xf32>
    %c11 = arith.constant 11 : index
    %c0_196 = arith.constant 0 : index
    %c0_197 = arith.constant 0 : index
    %287 = vector.load %arg15[%c11, %c0_196, %c0_197] : memref<25x25x225xbf16, #tpu.memory_space<vmem>>, vector<1x25x225xbf16>
    %288 = vector.shape_cast %287 : vector<1x25x225xbf16> to vector<25x225xbf16>
    %289 = arith.extf %288 : vector<25x225xbf16> to vector<25x225xf32>
    %290 = vector.extract_strided_slice %221 {offsets = [88, 0], sizes = [8, 25], strides = [1, 1]} : vector<200x25xf32> to vector<8x25xf32>
    %cst_198 = arith.constant dense<0.000000e+00> : vector<8x225xf32>
    %291 = tpu.matmul %290, %289, %cst_198 {dimension_numbers = #tpu.dot_dimension_numbers<[1], [0], [0], [1], [0, 0, 1, 1], [], []>} : vector<8x25xf32>, vector<25x225xf32>, vector<8x225xf32> -> vector<8x225xf32>
    %292 = arith.addf %286, %291 : vector<8x225xf32>
    %c12 = arith.constant 12 : index
    %c0_199 = arith.constant 0 : index
    %c0_200 = arith.constant 0 : index
    %293 = vector.load %arg15[%c12, %c0_199, %c0_200] : memref<25x25x225xbf16, #tpu.memory_space<vmem>>, vector<1x25x225xbf16>
    %294 = vector.shape_cast %293 : vector<1x25x225xbf16> to vector<25x225xbf16>
    %295 = arith.extf %294 : vector<25x225xbf16> to vector<25x225xf32>
    %296 = vector.extract_strided_slice %221 {offsets = [96, 0], sizes = [8, 25], strides = [1, 1]} : vector<200x25xf32> to vector<8x25xf32>
    %cst_201 = arith.constant dense<0.000000e+00> : vector<8x225xf32>
    %297 = tpu.matmul %296, %295, %cst_201 {dimension_numbers = #tpu.dot_dimension_numbers<[1], [0], [0], [1], [0, 0, 1, 1], [], []>} : vector<8x25xf32>, vector<25x225xf32>, vector<8x225xf32> -> vector<8x225xf32>
    %298 = arith.addf %292, %297 : vector<8x225xf32>
    %c13 = arith.constant 13 : index
    %c0_202 = arith.constant 0 : index
    %c0_203 = arith.constant 0 : index
    %299 = vector.load %arg15[%c13, %c0_202, %c0_203] : memref<25x25x225xbf16, #tpu.memory_space<vmem>>, vector<1x25x225xbf16>
    %300 = vector.shape_cast %299 : vector<1x25x225xbf16> to vector<25x225xbf16>
    %301 = arith.extf %300 : vector<25x225xbf16> to vector<25x225xf32>
    %302 = vector.extract_strided_slice %221 {offsets = [104, 0], sizes = [8, 25], strides = [1, 1]} : vector<200x25xf32> to vector<8x25xf32>
    %cst_204 = arith.constant dense<0.000000e+00> : vector<8x225xf32>
    %303 = tpu.matmul %302, %301, %cst_204 {dimension_numbers = #tpu.dot_dimension_numbers<[1], [0], [0], [1], [0, 0, 1, 1], [], []>} : vector<8x25xf32>, vector<25x225xf32>, vector<8x225xf32> -> vector<8x225xf32>
    %304 = arith.addf %298, %303 : vector<8x225xf32>
    %c14 = arith.constant 14 : index
    %c0_205 = arith.constant 0 : index
    %c0_206 = arith.constant 0 : index
    %305 = vector.load %arg15[%c14, %c0_205, %c0_206] : memref<25x25x225xbf16, #tpu.memory_space<vmem>>, vector<1x25x225xbf16>
    %306 = vector.shape_cast %305 : vector<1x25x225xbf16> to vector<25x225xbf16>
    %307 = arith.extf %306 : vector<25x225xbf16> to vector<25x225xf32>
    %308 = vector.extract_strided_slice %221 {offsets = [112, 0], sizes = [8, 25], strides = [1, 1]} : vector<200x25xf32> to vector<8x25xf32>
    %cst_207 = arith.constant dense<0.000000e+00> : vector<8x225xf32>
    %309 = tpu.matmul %308, %307, %cst_207 {dimension_numbers = #tpu.dot_dimension_numbers<[1], [0], [0], [1], [0, 0, 1, 1], [], []>} : vector<8x25xf32>, vector<25x225xf32>, vector<8x225xf32> -> vector<8x225xf32>
    %310 = arith.addf %304, %309 : vector<8x225xf32>
    %c15 = arith.constant 15 : index
    %c0_208 = arith.constant 0 : index
    %c0_209 = arith.constant 0 : index
    %311 = vector.load %arg15[%c15, %c0_208, %c0_209] : memref<25x25x225xbf16, #tpu.memory_space<vmem>>, vector<1x25x225xbf16>
    %312 = vector.shape_cast %311 : vector<1x25x225xbf16> to vector<25x225xbf16>
    %313 = arith.extf %312 : vector<25x225xbf16> to vector<25x225xf32>
    %314 = vector.extract_strided_slice %221 {offsets = [120, 0], sizes = [8, 25], strides = [1, 1]} : vector<200x25xf32> to vector<8x25xf32>
    %cst_210 = arith.constant dense<0.000000e+00> : vector<8x225xf32>
    %315 = tpu.matmul %314, %313, %cst_210 {dimension_numbers = #tpu.dot_dimension_numbers<[1], [0], [0], [1], [0, 0, 1, 1], [], []>} : vector<8x25xf32>, vector<25x225xf32>, vector<8x225xf32> -> vector<8x225xf32>
    %316 = arith.addf %310, %315 : vector<8x225xf32>
    %c16 = arith.constant 16 : index
    %c0_211 = arith.constant 0 : index
    %c0_212 = arith.constant 0 : index
    %317 = vector.load %arg15[%c16, %c0_211, %c0_212] : memref<25x25x225xbf16, #tpu.memory_space<vmem>>, vector<1x25x225xbf16>
    %318 = vector.shape_cast %317 : vector<1x25x225xbf16> to vector<25x225xbf16>
    %319 = arith.extf %318 : vector<25x225xbf16> to vector<25x225xf32>
    %320 = vector.extract_strided_slice %221 {offsets = [128, 0], sizes = [8, 25], strides = [1, 1]} : vector<200x25xf32> to vector<8x25xf32>
    %cst_213 = arith.constant dense<0.000000e+00> : vector<8x225xf32>
    %321 = tpu.matmul %320, %319, %cst_213 {dimension_numbers = #tpu.dot_dimension_numbers<[1], [0], [0], [1], [0, 0, 1, 1], [], []>} : vector<8x25xf32>, vector<25x225xf32>, vector<8x225xf32> -> vector<8x225xf32>
    %322 = arith.addf %316, %321 : vector<8x225xf32>
    %c17 = arith.constant 17 : index
    %c0_214 = arith.constant 0 : index
    %c0_215 = arith.constant 0 : index
    %323 = vector.load %arg15[%c17, %c0_214, %c0_215] : memref<25x25x225xbf16, #tpu.memory_space<vmem>>, vector<1x25x225xbf16>
    %324 = vector.shape_cast %323 : vector<1x25x225xbf16> to vector<25x225xbf16>
    %325 = arith.extf %324 : vector<25x225xbf16> to vector<25x225xf32>
    %326 = vector.extract_strided_slice %221 {offsets = [136, 0], sizes = [8, 25], strides = [1, 1]} : vector<200x25xf32> to vector<8x25xf32>
    %cst_216 = arith.constant dense<0.000000e+00> : vector<8x225xf32>
    %327 = tpu.matmul %326, %325, %cst_216 {dimension_numbers = #tpu.dot_dimension_numbers<[1], [0], [0], [1], [0, 0, 1, 1], [], []>} : vector<8x25xf32>, vector<25x225xf32>, vector<8x225xf32> -> vector<8x225xf32>
    %328 = arith.addf %322, %327 : vector<8x225xf32>
    %c18 = arith.constant 18 : index
    %c0_217 = arith.constant 0 : index
    %c0_218 = arith.constant 0 : index
    %329 = vector.load %arg15[%c18, %c0_217, %c0_218] : memref<25x25x225xbf16, #tpu.memory_space<vmem>>, vector<1x25x225xbf16>
    %330 = vector.shape_cast %329 : vector<1x25x225xbf16> to vector<25x225xbf16>
    %331 = arith.extf %330 : vector<25x225xbf16> to vector<25x225xf32>
    %332 = vector.extract_strided_slice %221 {offsets = [144, 0], sizes = [8, 25], strides = [1, 1]} : vector<200x25xf32> to vector<8x25xf32>
    %cst_219 = arith.constant dense<0.000000e+00> : vector<8x225xf32>
    %333 = tpu.matmul %332, %331, %cst_219 {dimension_numbers = #tpu.dot_dimension_numbers<[1], [0], [0], [1], [0, 0, 1, 1], [], []>} : vector<8x25xf32>, vector<25x225xf32>, vector<8x225xf32> -> vector<8x225xf32>
    %334 = arith.addf %328, %333 : vector<8x225xf32>
    %c19 = arith.constant 19 : index
    %c0_220 = arith.constant 0 : index
    %c0_221 = arith.constant 0 : index
    %335 = vector.load %arg15[%c19, %c0_220, %c0_221] : memref<25x25x225xbf16, #tpu.memory_space<vmem>>, vector<1x25x225xbf16>
    %336 = vector.shape_cast %335 : vector<1x25x225xbf16> to vector<25x225xbf16>
    %337 = arith.extf %336 : vector<25x225xbf16> to vector<25x225xf32>
    %338 = vector.extract_strided_slice %221 {offsets = [152, 0], sizes = [8, 25], strides = [1, 1]} : vector<200x25xf32> to vector<8x25xf32>
    %cst_222 = arith.constant dense<0.000000e+00> : vector<8x225xf32>
    %339 = tpu.matmul %338, %337, %cst_222 {dimension_numbers = #tpu.dot_dimension_numbers<[1], [0], [0], [1], [0, 0, 1, 1], [], []>} : vector<8x25xf32>, vector<25x225xf32>, vector<8x225xf32> -> vector<8x225xf32>
    %340 = arith.addf %334, %339 : vector<8x225xf32>
    %c20 = arith.constant 20 : index
    %c0_223 = arith.constant 0 : index
    %c0_224 = arith.constant 0 : index
    %341 = vector.load %arg15[%c20, %c0_223, %c0_224] : memref<25x25x225xbf16, #tpu.memory_space<vmem>>, vector<1x25x225xbf16>
    %342 = vector.shape_cast %341 : vector<1x25x225xbf16> to vector<25x225xbf16>
    %343 = arith.extf %342 : vector<25x225xbf16> to vector<25x225xf32>
    %344 = vector.extract_strided_slice %221 {offsets = [160, 0], sizes = [8, 25], strides = [1, 1]} : vector<200x25xf32> to vector<8x25xf32>
    %cst_225 = arith.constant dense<0.000000e+00> : vector<8x225xf32>
    %345 = tpu.matmul %344, %343, %cst_225 {dimension_numbers = #tpu.dot_dimension_numbers<[1], [0], [0], [1], [0, 0, 1, 1], [], []>} : vector<8x25xf32>, vector<25x225xf32>, vector<8x225xf32> -> vector<8x225xf32>
    %346 = arith.addf %340, %345 : vector<8x225xf32>
    %c21 = arith.constant 21 : index
    %c0_226 = arith.constant 0 : index
    %c0_227 = arith.constant 0 : index
    %347 = vector.load %arg15[%c21, %c0_226, %c0_227] : memref<25x25x225xbf16, #tpu.memory_space<vmem>>, vector<1x25x225xbf16>
    %348 = vector.shape_cast %347 : vector<1x25x225xbf16> to vector<25x225xbf16>
    %349 = arith.extf %348 : vector<25x225xbf16> to vector<25x225xf32>
    %350 = vector.extract_strided_slice %221 {offsets = [168, 0], sizes = [8, 25], strides = [1, 1]} : vector<200x25xf32> to vector<8x25xf32>
    %cst_228 = arith.constant dense<0.000000e+00> : vector<8x225xf32>
    %351 = tpu.matmul %350, %349, %cst_228 {dimension_numbers = #tpu.dot_dimension_numbers<[1], [0], [0], [1], [0, 0, 1, 1], [], []>} : vector<8x25xf32>, vector<25x225xf32>, vector<8x225xf32> -> vector<8x225xf32>
    %352 = arith.addf %346, %351 : vector<8x225xf32>
    %c22 = arith.constant 22 : index
    %c0_229 = arith.constant 0 : index
    %c0_230 = arith.constant 0 : index
    %353 = vector.load %arg15[%c22, %c0_229, %c0_230] : memref<25x25x225xbf16, #tpu.memory_space<vmem>>, vector<1x25x225xbf16>
    %354 = vector.shape_cast %353 : vector<1x25x225xbf16> to vector<25x225xbf16>
    %355 = arith.extf %354 : vector<25x225xbf16> to vector<25x225xf32>
    %356 = vector.extract_strided_slice %221 {offsets = [176, 0], sizes = [8, 25], strides = [1, 1]} : vector<200x25xf32> to vector<8x25xf32>
    %cst_231 = arith.constant dense<0.000000e+00> : vector<8x225xf32>
    %357 = tpu.matmul %356, %355, %cst_231 {dimension_numbers = #tpu.dot_dimension_numbers<[1], [0], [0], [1], [0, 0, 1, 1], [], []>} : vector<8x25xf32>, vector<25x225xf32>, vector<8x225xf32> -> vector<8x225xf32>
    %358 = arith.addf %352, %357 : vector<8x225xf32>
    %c23 = arith.constant 23 : index
    %c0_232 = arith.constant 0 : index
    %c0_233 = arith.constant 0 : index
    %359 = vector.load %arg15[%c23, %c0_232, %c0_233] : memref<25x25x225xbf16, #tpu.memory_space<vmem>>, vector<1x25x225xbf16>
    %360 = vector.shape_cast %359 : vector<1x25x225xbf16> to vector<25x225xbf16>
    %361 = arith.extf %360 : vector<25x225xbf16> to vector<25x225xf32>
    %362 = vector.extract_strided_slice %221 {offsets = [184, 0], sizes = [8, 25], strides = [1, 1]} : vector<200x25xf32> to vector<8x25xf32>
    %cst_234 = arith.constant dense<0.000000e+00> : vector<8x225xf32>
    %363 = tpu.matmul %362, %361, %cst_234 {dimension_numbers = #tpu.dot_dimension_numbers<[1], [0], [0], [1], [0, 0, 1, 1], [], []>} : vector<8x25xf32>, vector<25x225xf32>, vector<8x225xf32> -> vector<8x225xf32>
    %364 = arith.addf %358, %363 : vector<8x225xf32>
    %c24 = arith.constant 24 : index
    %c0_235 = arith.constant 0 : index
    %c0_236 = arith.constant 0 : index
    %365 = vector.load %arg15[%c24, %c0_235, %c0_236] : memref<25x25x225xbf16, #tpu.memory_space<vmem>>, vector<1x25x225xbf16>
    %366 = vector.shape_cast %365 : vector<1x25x225xbf16> to vector<25x225xbf16>
    %367 = arith.extf %366 : vector<25x225xbf16> to vector<25x225xf32>
    %368 = vector.extract_strided_slice %221 {offsets = [192, 0], sizes = [8, 25], strides = [1, 1]} : vector<200x25xf32> to vector<8x25xf32>
    %cst_237 = arith.constant dense<0.000000e+00> : vector<8x225xf32>
    %369 = tpu.matmul %368, %367, %cst_237 {dimension_numbers = #tpu.dot_dimension_numbers<[1], [0], [0], [1], [0, 0, 1, 1], [], []>} : vector<8x25xf32>, vector<25x225xf32>, vector<8x225xf32> -> vector<8x225xf32>
    %370 = arith.addf %364, %369 : vector<8x225xf32>
    %c0_238 = arith.constant 0 : index
    %c0_239 = arith.constant 0 : index
    %371 = vector.load %arg14[%c0_238, %c0_239] : memref<8x1xf32, #tpu.memory_space<vmem>>, vector<8x1xf32>
    %372 = vector.broadcast %371 : vector<8x1xf32> to vector<8x225xf32>
    %373 = arith.addf %370, %372 : vector<8x225xf32>
    %cst_240 = arith.constant 0.000000e+00 : f32
    %374 = vector.broadcast %cst_240 : f32 to vector<8x225xf32>
    %375 = arith.maximumf %373, %374 : vector<8x225xf32>
    %c0_241 = arith.constant 0 : index
    %c0_242 = arith.constant 0 : index
    %376 = vector.load %arg16[%c0_241, %c0_242] : memref<12x8xf32, #tpu.memory_space<vmem>>, vector<12x8xf32>
    %cst_243 = arith.constant dense<0.000000e+00> : vector<12x225xf32>
    %377 = tpu.matmul %376, %375, %cst_243 {dimension_numbers = #tpu.dot_dimension_numbers<[1], [0], [0], [1], [0, 0, 1, 1], [], []>} : vector<12x8xf32>, vector<8x225xf32>, vector<12x225xf32> -> vector<12x225xf32>
    %c0_244 = arith.constant 0 : index
    %c0_245 = arith.constant 0 : index
    %c0_246 = arith.constant 0 : index
    %378 = vector.load %arg18[%c0_244, %c0_245, %c0_246] : memref<4x225x784xbf16, #tpu.memory_space<vmem>>, vector<1x225x784xbf16>
    %379 = vector.shape_cast %378 : vector<1x225x784xbf16> to vector<225x784xbf16>
    %380 = arith.extf %379 : vector<225x784xbf16> to vector<225x784xf32>
    %381 = vector.extract_strided_slice %377 {offsets = [0, 0], sizes = [3, 225], strides = [1, 1]} : vector<12x225xf32> to vector<3x225xf32>
    %cst_247 = arith.constant dense<0.000000e+00> : vector<3x784xf32>
    %382 = tpu.matmul %381, %380, %cst_247 {dimension_numbers = #tpu.dot_dimension_numbers<[1], [0], [0], [1], [0, 0, 1, 1], [], []>} : vector<3x225xf32>, vector<225x784xf32>, vector<3x784xf32> -> vector<3x784xf32>
    %c1_248 = arith.constant 1 : index
    %c0_249 = arith.constant 0 : index
    %c0_250 = arith.constant 0 : index
    %383 = vector.load %arg18[%c1_248, %c0_249, %c0_250] : memref<4x225x784xbf16, #tpu.memory_space<vmem>>, vector<1x225x784xbf16>
    %384 = vector.shape_cast %383 : vector<1x225x784xbf16> to vector<225x784xbf16>
    %385 = arith.extf %384 : vector<225x784xbf16> to vector<225x784xf32>
    %386 = vector.extract_strided_slice %377 {offsets = [3, 0], sizes = [3, 225], strides = [1, 1]} : vector<12x225xf32> to vector<3x225xf32>
    %cst_251 = arith.constant dense<0.000000e+00> : vector<3x784xf32>
    %387 = tpu.matmul %386, %385, %cst_251 {dimension_numbers = #tpu.dot_dimension_numbers<[1], [0], [0], [1], [0, 0, 1, 1], [], []>} : vector<3x225xf32>, vector<225x784xf32>, vector<3x784xf32> -> vector<3x784xf32>
    %388 = arith.addf %382, %387 : vector<3x784xf32>
    %c2_252 = arith.constant 2 : index
    %c0_253 = arith.constant 0 : index
    %c0_254 = arith.constant 0 : index
    %389 = vector.load %arg18[%c2_252, %c0_253, %c0_254] : memref<4x225x784xbf16, #tpu.memory_space<vmem>>, vector<1x225x784xbf16>
    %390 = vector.shape_cast %389 : vector<1x225x784xbf16> to vector<225x784xbf16>
    %391 = arith.extf %390 : vector<225x784xbf16> to vector<225x784xf32>
    %392 = vector.extract_strided_slice %377 {offsets = [6, 0], sizes = [3, 225], strides = [1, 1]} : vector<12x225xf32> to vector<3x225xf32>
    %cst_255 = arith.constant dense<0.000000e+00> : vector<3x784xf32>
    %393 = tpu.matmul %392, %391, %cst_255 {dimension_numbers = #tpu.dot_dimension_numbers<[1], [0], [0], [1], [0, 0, 1, 1], [], []>} : vector<3x225xf32>, vector<225x784xf32>, vector<3x784xf32> -> vector<3x784xf32>
    %394 = arith.addf %388, %393 : vector<3x784xf32>
    %c3_256 = arith.constant 3 : index
    %c0_257 = arith.constant 0 : index
    %c0_258 = arith.constant 0 : index
    %395 = vector.load %arg18[%c3_256, %c0_257, %c0_258] : memref<4x225x784xbf16, #tpu.memory_space<vmem>>, vector<1x225x784xbf16>
    %396 = vector.shape_cast %395 : vector<1x225x784xbf16> to vector<225x784xbf16>
    %397 = arith.extf %396 : vector<225x784xbf16> to vector<225x784xf32>
    %398 = vector.extract_strided_slice %377 {offsets = [9, 0], sizes = [3, 225], strides = [1, 1]} : vector<12x225xf32> to vector<3x225xf32>
    %cst_259 = arith.constant dense<0.000000e+00> : vector<3x784xf32>
    %399 = tpu.matmul %398, %397, %cst_259 {dimension_numbers = #tpu.dot_dimension_numbers<[1], [0], [0], [1], [0, 0, 1, 1], [], []>} : vector<3x225xf32>, vector<225x784xf32>, vector<3x784xf32> -> vector<3x784xf32>
    %400 = arith.addf %394, %399 : vector<3x784xf32>
    %c0_260 = arith.constant 0 : index
    %c0_261 = arith.constant 0 : index
    %401 = vector.load %arg17[%c0_260, %c0_261] : memref<3x1xf32, #tpu.memory_space<vmem>>, vector<3x1xf32>
    %402 = vector.broadcast %401 : vector<3x1xf32> to vector<3x784xf32>
    %403 = arith.addf %400, %402 : vector<3x784xf32>
    %404 = math.tanh %403 : vector<3x784xf32>
    %c0_262 = arith.constant 0 : index
    %c0_263 = arith.constant 0 : index
    %c0_264 = arith.constant 0 : index
    %405 = vector.load %arg19[%c0_262, %c0_263, %c0_264] : memref<1x3x784xf32, #tpu.memory_space<vmem>>, vector<1x3x784xf32>
    %406 = vector.shape_cast %405 : vector<1x3x784xf32> to vector<3x784xf32>
    %407 = vector.shape_cast %404 : vector<3x784xf32> to vector<1x3x784xf32>
    tpu.vector_store %arg19[%c0_262, %c0_263, %c0_264], %407 {strides = array<i32>} : memref<1x3x784xf32, #tpu.memory_space<vmem>>, vector<1x3x784xf32>,
    return
  }
  func.func @transform_0(%arg0: i32) -> (i32, i32, i32) {
    %c0_i32 = arith.constant 0 : i32
    %c0_i32_0 = arith.constant 0 : i32
    %c0_i32_1 = arith.constant 0 : i32
    return %arg0, %c0_i32, %c0_i32_0 : i32, i32, i32
  }
  func.func @transform_1(%arg0: i32) -> (i32, i32) {
    %c0_i32 = arith.constant 0 : i32
    %c0_i32_0 = arith.constant 0 : i32
    %c0_i32_1 = arith.constant 0 : i32
    return %c0_i32, %c0_i32_0 : i32, i32
  }
  func.func @transform_2(%arg0: i32) -> (i32, i32) {
    %c0_i32 = arith.constant 0 : i32
    %c0_i32_0 = arith.constant 0 : i32
    %c0_i32_1 = arith.constant 0 : i32
    return %c0_i32, %c0_i32_0 : i32, i32
  }
  func.func @transform_3(%arg0: i32) -> (i32, i32, i32) {
    %c0_i32 = arith.constant 0 : i32
    %c0_i32_0 = arith.constant 0 : i32
    %c0_i32_1 = arith.constant 0 : i32
    %c0_i32_2 = arith.constant 0 : i32
    return %c0_i32, %c0_i32_0, %c0_i32_1 : i32, i32, i32
  }
  func.func @transform_4(%arg0: i32) -> (i32, i32, i32) {
    %c0_i32 = arith.constant 0 : i32
    %c0_i32_0 = arith.constant 0 : i32
    %c0_i32_1 = arith.constant 0 : i32
    %c0_i32_2 = arith.constant 0 : i32
    return %c0_i32, %c0_i32_0, %c0_i32_1 : i32, i32, i32
  }
  func.func @transform_5(%arg0: i32) -> (i32, i32) {
    %c0_i32 = arith.constant 0 : i32
    %c0_i32_0 = arith.constant 0 : i32
    %c0_i32_1 = arith.constant 0 : i32
    return %c0_i32, %c0_i32_0 : i32, i32
  }
  func.func @transform_6(%arg0: i32) -> (i32, i32) {
    %c0_i32 = arith.constant 0 : i32
    %c0_i32_0 = arith.constant 0 : i32
    %c0_i32_1 = arith.constant 0 : i32
    return %c0_i32, %c0_i32_0 : i32, i32
  }
  func.func @transform_7(%arg0: i32) -> (i32, i32, i32) {
    %c0_i32 = arith.constant 0 : i32
    %c0_i32_0 = arith.constant 0 : i32
    %c0_i32_1 = arith.constant 0 : i32
    %c0_i32_2 = arith.constant 0 : i32
    return %c0_i32, %c0_i32_0, %c0_i32_1 : i32, i32, i32
  }
  func.func @transform_8(%arg0: i32) -> (i32, i32, i32) {
    %c0_i32 = arith.constant 0 : i32
    %c0_i32_0 = arith.constant 0 : i32
    %c0_i32_1 = arith.constant 0 : i32
    %c0_i32_2 = arith.constant 0 : i32
    return %c0_i32, %c0_i32_0, %c0_i32_1 : i32, i32, i32
  }
  func.func @transform_9(%arg0: i32) -> (i32, i32) {
    %c0_i32 = arith.constant 0 : i32
    %c0_i32_0 = arith.constant 0 : i32
    %c0_i32_1 = arith.constant 0 : i32
    return %c0_i32, %c0_i32_0 : i32, i32
  }
  func.func @transform_10(%arg0: i32) -> (i32, i32) {
    %c0_i32 = arith.constant 0 : i32
    %c0_i32_0 = arith.constant 0 : i32
    %c0_i32_1 = arith.constant 0 : i32
    return %c0_i32, %c0_i32_0 : i32, i32
  }
  func.func @transform_11(%arg0: i32) -> (i32, i32, i32) {
    %c0_i32 = arith.constant 0 : i32
    %c0_i32_0 = arith.constant 0 : i32
    %c0_i32_1 = arith.constant 0 : i32
    %c0_i32_2 = arith.constant 0 : i32
    return %c0_i32, %c0_i32_0, %c0_i32_1 : i32, i32, i32
  }
  func.func @transform_12(%arg0: i32) -> (i32, i32) {
    %c0_i32 = arith.constant 0 : i32
    %c0_i32_0 = arith.constant 0 : i32
    %c0_i32_1 = arith.constant 0 : i32
    return %c0_i32, %c0_i32_0 : i32, i32
  }
  func.func @transform_13(%arg0: i32) -> (i32, i32) {
    %c0_i32 = arith.constant 0 : i32
    %c0_i32_0 = arith.constant 0 : i32
    %c0_i32_1 = arith.constant 0 : i32
    return %c0_i32, %c0_i32_0 : i32, i32
  }
  func.func @transform_14(%arg0: i32) -> (i32, i32, i32) {
    %c0_i32 = arith.constant 0 : i32
    %c0_i32_0 = arith.constant 0 : i32
    %c0_i32_1 = arith.constant 0 : i32
    %c0_i32_2 = arith.constant 0 : i32
    return %c0_i32, %c0_i32_0, %c0_i32_1 : i32, i32, i32
  }
  func.func @transform_15(%arg0: i32) -> (i32, i32) {
    %c0_i32 = arith.constant 0 : i32
    %c0_i32_0 = arith.constant 0 : i32
    %c0_i32_1 = arith.constant 0 : i32
    return %c0_i32, %c0_i32_0 : i32, i32
  }
  func.func @transform_16(%arg0: i32) -> (i32, i32) {
    %c0_i32 = arith.constant 0 : i32
    %c0_i32_0 = arith.constant 0 : i32
    %c0_i32_1 = arith.constant 0 : i32
    return %c0_i32, %c0_i32_0 : i32, i32
  }
  func.func @transform_17(%arg0: i32) -> (i32, i32, i32) {
    %c0_i32 = arith.constant 0 : i32
    %c0_i32_0 = arith.constant 0 : i32
    %c0_i32_1 = arith.constant 0 : i32
    %c0_i32_2 = arith.constant 0 : i32
    return %c0_i32, %c0_i32_0, %c0_i32_1 : i32, i32, i32
  }
  func.func @transform_18(%arg0: i32) -> (i32, i32, i32) {
    %c0_i32 = arith.constant 0 : i32
    %c0_i32_0 = arith.constant 0 : i32
    %c0_i32_1 = arith.constant 0 : i32
    return %arg0, %c0_i32, %c0_i32_0 : i32, i32, i32
  }
}

</mosaic_0001>

<llo_original>
// kernel: autoencoder_forward.1
$region0: #{autoencoder_forward.1}
  #allocation0 [shape = 'u32[]', space=smem, size = 0x4, offset = 0x4, fixed_abs, tag = 'smem constant byte address 0x4 - core index']
  #allocation1 [shape = 'u32[72,128]{1,0:T(1,128)}', space=vmem, size = 0x9000, scoped, tag = 'internal scratch']
  %s0 = inlined_call_operand.vmem [shape: f32[2,3,784], index: 0, kind: input, shape index: {}]
  %s1 = inlined_call_operand.vmem [shape: f32[144,3], index: 1, kind: input, shape index: {}]
  %s2 = inlined_call_operand.vmem [shape: f32[16,1], index: 2, kind: input, shape index: {}]
  %s3 = inlined_call_operand.vmem [shape: bf16[9,784,100], index: 3, kind: input, shape index: {}]
  %s4 = inlined_call_operand.vmem [shape: bf16[4,100,25], index: 4, kind: input, shape index: {}]
  %s5 = inlined_call_operand.vmem [shape: f32[72,16], index: 5, kind: input, shape index: {}]
  %s6 = inlined_call_operand.vmem [shape: f32[8,1], index: 6, kind: input, shape index: {}]
  %s7 = inlined_call_operand.vmem [shape: bf16[9,25,9], index: 7, kind: input, shape index: {}]
  %s8 = inlined_call_operand.vmem [shape: bf16[4,9,4], index: 8, kind: input, shape index: {}]
  %s9 = inlined_call_operand.vmem [shape: f32[144,8], index: 9, kind: input, shape index: {}]
  %s10 = inlined_call_operand.vmem [shape: f32[16,1], index: 10, kind: input, shape index: {}]
  %s11 = inlined_call_operand.vmem [shape: bf16[9,4,25], index: 11, kind: input, shape index: {}]
  %s12 = inlined_call_operand.vmem [shape: f32[200,16], index: 12, kind: input, shape index: {}]
  %s13 = inlined_call_operand.vmem [shape: f32[8,1], index: 13, kind: input, shape index: {}]
  %s14 = inlined_call_operand.vmem [shape: bf16[25,25,225], index: 14, kind: input, shape index: {}]
  %s15 = inlined_call_operand.vmem [shape: f32[12,8], index: 15, kind: input, shape index: {}]
  %s16 = inlined_call_operand.vmem [shape: f32[3,1], index: 16, kind: input, shape index: {}]
  %s17 = inlined_call_operand.vmem [shape: bf16[4,225,784], index: 17, kind: input, shape index: {}]
  %s18 = inlined_call_operand.vmem [shape: f32[2,3,784], index: 18, kind: output, shape index: {}]
  %s19 = sld [smem:[#allocation0]]
  $region105: #{autoencoder_forward.1} parent=0
    _
  %s21 = ssub.s32 1, %s19
  %s22 = scalar_select 0, %s21, %s19
  loop: start=0, step=1, limit=4
  $region2: #{autoencoder_forward.1} parent=0 // loop_pre_header
    _
  $region3: #{autoencoder_forward.1} parent=0 // loop_header
    %s24 = sphi 0, %s28
    %p25 = scmp.ge.s32.totalorder %s24, 4
    %s34 = sphi 0, %s36
    %s37 = sphi 0, %s34
    %s38 = sphi 0, %s37
    %s54 = sphi 0, %s38
    %s58 = sphi 0, %s58
    %s60 = sphi 0, %s58
    %s61 = sphi 0, %s60
    %s75 = sphi 0, %s61
    %s79 = sphi 0, %s79
    %s81 = sphi 0, %s79
    %s82 = sphi 0, %s81
    %s96 = sphi 0, %s82
    %s100 = sphi 0, %s100
    %s102 = sphi 0, %s100
    %s103 = sphi 0, %s102
    %s117 = sphi 0, %s103
    %s121 = sphi 0, %s121
    %s123 = sphi 0, %s121
    %s124 = sphi 0, %s123
    %s138 = sphi 0, %s124
    %s142 = sphi 0, %s142
    %s144 = sphi 0, %s142
    %s145 = sphi 0, %s144
    %s159 = sphi 0, %s145
    %s163 = sphi 0, %s163
    %s165 = sphi 0, %s163
    %s166 = sphi 0, %s165
    %s180 = sphi 0, %s166
    %s184 = sphi 0, %s184
    %s186 = sphi 0, %s184
    %s187 = sphi 0, %s186
    %s201 = sphi 0, %s187
    %s205 = sphi 0, %s205
    %s207 = sphi 0, %s205
    %s208 = sphi 0, %s207
    %s222 = sphi 0, %s208
    %s226 = sphi 0, %s226
    %s228 = sphi 0, %s226
    %s229 = sphi 0, %s228
    %s243 = sphi 0, %s229
    %s247 = sphi 0, %s247
    %s249 = sphi 0, %s247
    %s250 = sphi 0, %s249
    %s264 = sphi 0, %s250
    %s268 = sphi 0, %s268
    %s270 = sphi 0, %s268
    %s271 = sphi 0, %s270
    %s285 = sphi 0, %s271
    %s289 = sphi 0, %s289
    %s291 = sphi 0, %s289
    %s292 = sphi 0, %s291
    %s306 = sphi 0, %s292
    %s310 = sphi 0, %s310
    %s312 = sphi 0, %s310
    %s313 = sphi 0, %s312
    %s327 = sphi 0, %s313
    %s331 = sphi 0, %s331
    %s333 = sphi 0, %s331
    %s334 = sphi 0, %s333
    %s348 = sphi 0, %s334
    %s352 = sphi 0, %s352
    %s354 = sphi 0, %s352
    %s355 = sphi 0, %s354
    %s369 = sphi 0, %s355
    %s373 = sphi 0, %s373
    %s375 = sphi 0, %s373
    %s376 = sphi 0, %s375
    %s390 = sphi 0, %s376
    %s394 = sphi 0, %s394
    %s396 = sphi 0, %s394
    %s397 = sphi 0, %s396
    %s411 = sphi 0, %s397
    %s417 = sphi 0, %s419
    %s420 = sphi 0, %s417
    %s421 = sphi 0, %s420
    %s437 = sphi 0, %s421
  $region4: #{autoencoder_forward.1} parent=0 // loop_header_branch
    %27 = sbr.rel (%p25) target = $region8
  $region5: #{autoencoder_forward.1} parent=0 // loop_body
    %s29 = ssub.s32 %s24, 1
    %s30 = ssub.s32 %s24, 2
    %s31 = sadd.s32 %s24, 1
    %s32 = ssub.s32 %s24, %s31
    %p33 = scmp.eq.s32.totalorder %s32, 0
    %s35 = sadd.s32 %s34, 1
    %s36 = scalar_select %p33, %s34, %s35
    %p39 = pneg %p33
    %p40 = scmp.eq.s32.totalorder %s24, 1
    %p41 = por %p39, %p40
    %p42 = scmp.ne.s32.totalorder %s34, %s37
    %p43 = scmp.eq.s32.totalorder %s24, 0
    %p44 = por %p42, %p43
    %p45 = scmp.ne.s32.totalorder %s34, %s37
    %p46 = scmp.eq.s32.totalorder %s29, 1
    %p47 = por %p45, %p46
    %p48 = scmp.ne.s32.totalorder %s37, %s38
    %p49 = scmp.eq.s32.totalorder %s29, 0
    %p50 = por %p48, %p49
    %p51 = scmp.ne.s32.totalorder %s37, %s38
    %p52 = scmp.eq.s32.totalorder %s30, 1
    %p53 = por %p51, %p52
    %p55 = scmp.ne.s32.totalorder %s38, %s54
    %p56 = scmp.eq.s32.totalorder %s30, 0
    %p57 = por %p55, %p56
    %s59 = sadd.s32 %s58, 1
    %p62 = scmp.eq.s32.totalorder %s24, 1
    %p63 = scmp.ne.s32.totalorder %s58, %s60
    %p64 = scmp.eq.s32.totalorder %s24, 0
    %p65 = por %p63, %p64
    %p66 = scmp.ne.s32.totalorder %s58, %s60
    %p67 = scmp.eq.s32.totalorder %s29, 1
    %p68 = por %p66, %p67
    %p69 = scmp.ne.s32.totalorder %s60, %s61
    %p70 = scmp.eq.s32.totalorder %s29, 0
    %p71 = por %p69, %p70
    %p72 = scmp.ne.s32.totalorder %s60, %s61
    %p73 = scmp.eq.s32.totalorder %s30, 1
    %p74 = por %p72, %p73
    %p76 = scmp.ne.s32.totalorder %s61, %s75
    %p77 = scmp.eq.s32.totalorder %s30, 0
    %p78 = por %p76, %p77
    %s80 = sadd.s32 %s79, 1
    %p83 = scmp.eq.s32.totalorder %s24, 1
    %p84 = scmp.ne.s32.totalorder %s79, %s81
    %p85 = scmp.eq.s32.totalorder %s24, 0
    %p86 = por %p84, %p85
    %p87 = scmp.ne.s32.totalorder %s79, %s81
    %p88 = scmp.eq.s32.totalorder %s29, 1
    %p89 = por %p87, %p88
    %p90 = scmp.ne.s32.totalorder %s81, %s82
    %p91 = scmp.eq.s32.totalorder %s29, 0
    %p92 = por %p90, %p91
    %p93 = scmp.ne.s32.totalorder %s81, %s82
    %p94 = scmp.eq.s32.totalorder %s30, 1
    %p95 = por %p93, %p94
    %p97 = scmp.ne.s32.totalorder %s82, %s96
    %p98 = scmp.eq.s32.totalorder %s30, 0
    %p99 = por %p97, %p98
    %s101 = sadd.s32 %s100, 1
    %p104 = scmp.eq.s32.totalorder %s24, 1
    %p105 = scmp.ne.s32.totalorder %s100, %s102
    %p106 = scmp.eq.s32.totalorder %s24, 0
    %p107 = por %p105, %p106
    %p108 = scmp.ne.s32.totalorder %s100, %s102
    %p109 = scmp.eq.s32.totalorder %s29, 1
    %p110 = por %p108, %p109
    %p111 = scmp.ne.s32.totalorder %s102, %s103
    %p112 = scmp.eq.s32.totalorder %s29, 0
    %p113 = por %p111, %p112
    %p114 = scmp.ne.s32.totalorder %s102, %s103
    %p115 = scmp.eq.s32.totalorder %s30, 1
    %p116 = por %p114, %p115
    %p118 = scmp.ne.s32.totalorder %s103, %s117
    %p119 = scmp.eq.s32.totalorder %s30, 0
    %p120 = por %p118, %p119
    %s122 = sadd.s32 %s121, 1
    %p125 = scmp.eq.s32.totalorder %s24, 1
    %p126 = scmp.ne.s32.totalorder %s121, %s123
    %p127 = scmp.eq.s32.totalorder %s24, 0
    %p128 = por %p126, %p127
    %p129 = scmp.ne.s32.totalorder %s121, %s123
    %p130 = scmp.eq.s32.totalorder %s29, 1
    %p131 = por %p129, %p130
    %p132 = scmp.ne.s32.totalorder %s123, %s124
    %p133 = scmp.eq.s32.totalorder %s29, 0
    %p134 = por %p132, %p133
    %p135 = scmp.ne.s32.totalorder %s123, %s124
    %p136 = scmp.eq.s32.totalorder %s30, 1
    %p137 = por %p135, %p136
    %p139 = scmp.ne.s32.totalorder %s124, %s138
    %p140 = scmp.eq.s32.totalorder %s30, 0
    %p141 = por %p139, %p140
    %s143 = sadd.s32 %s142, 1
    %p146 = scmp.eq.s32.totalorder %s24, 1
    %p147 = scmp.ne.s32.totalorder %s142, %s144
    %p148 = scmp.eq.s32.totalorder %s24, 0
    %p149 = por %p147, %p148
    %p150 = scmp.ne.s32.totalorder %s142, %s144
    %p151 = scmp.eq.s32.totalorder %s29, 1
    %p152 = por %p150, %p151
    %p153 = scmp.ne.s32.totalorder %s144, %s145
    %p154 = scmp.eq.s32.totalorder %s29, 0
    %p155 = por %p153, %p154
    %p156 = scmp.ne.s32.totalorder %s144, %s145
    %p157 = scmp.eq.s32.totalorder %s30, 1
    %p158 = por %p156, %p157
    %p160 = scmp.ne.s32.totalorder %s145, %s159
    %p161 = scmp.eq.s32.totalorder %s30, 0
    %p162 = por %p160, %p161
    %s164 = sadd.s32 %s163, 1
    %p167 = scmp.eq.s32.totalorder %s24, 1
    %p168 = scmp.ne.s32.totalorder %s163, %s165
    %p169 = scmp.eq.s32.totalorder %s24, 0
    %p170 = por %p168, %p169
    %p171 = scmp.ne.s32.totalorder %s163, %s165
    %p172 = scmp.eq.s32.totalorder %s29, 1
    %p173 = por %p171, %p172
    %p174 = scmp.ne.s32.totalorder %s165, %s166
    %p175 = scmp.eq.s32.totalorder %s29, 0
    %p176 = por %p174, %p175
    %p177 = scmp.ne.s32.totalorder %s165, %s166
    %p178 = scmp.eq.s32.totalorder %s30, 1
    %p179 = por %p177, %p178
    %p181 = scmp.ne.s32.totalorder %s166, %s180
    %p182 = scmp.eq.s32.totalorder %s30, 0
    %p183 = por %p181, %p182
    %s185 = sadd.s32 %s184, 1
    %p188 = scmp.eq.s32.totalorder %s24, 1
    %p189 = scmp.ne.s32.totalorder %s184, %s186
    %p190 = scmp.eq.s32.totalorder %s24, 0
    %p191 = por %p189, %p190
    %p192 = scmp.ne.s32.totalorder %s184, %s186
    %p193 = scmp.eq.s32.totalorder %s29, 1
    %p194 = por %p192, %p193
    %p195 = scmp.ne.s32.totalorder %s186, %s187
    %p196 = scmp.eq.s32.totalorder %s29, 0
    %p197 = por %p195, %p196
    %p198 = scmp.ne.s32.totalorder %s186, %s187
    %p199 = scmp.eq.s32.totalorder %s30, 1
    %p200 = por %p198, %p199
    %p202 = scmp.ne.s32.totalorder %s187, %s201
    %p203 = scmp.eq.s32.totalorder %s30, 0
    %p204 = por %p202, %p203
    %s206 = sadd.s32 %s205, 1
    %p209 = scmp.eq.s32.totalorder %s24, 1
    %p210 = scmp.ne.s32.totalorder %s205, %s207
    %p211 = scmp.eq.s32.totalorder %s24, 0
    %p212 = por %p210, %p211
    %p213 = scmp.ne.s32.totalorder %s205, %s207
    %p214 = scmp.eq.s32.totalorder %s29, 1
    %p215 = por %p213, %p214
    %p216 = scmp.ne.s32.totalorder %s207, %s208
    %p217 = scmp.eq.s32.totalorder %s29, 0
    %p218 = por %p216, %p217
    %p219 = scmp.ne.s32.totalorder %s207, %s208
    %p220 = scmp.eq.s32.totalorder %s30, 1
    %p221 = por %p219, %p220
    %p223 = scmp.ne.s32.totalorder %s208, %s222
    %p224 = scmp.eq.s32.totalorder %s30, 0
    %p225 = por %p223, %p224
    %s227 = sadd.s32 %s226, 1
    %p230 = scmp.eq.s32.totalorder %s24, 1
    %p231 = scmp.ne.s32.totalorder %s226, %s228
    %p232 = scmp.eq.s32.totalorder %s24, 0
    %p233 = por %p231, %p232
    %p234 = scmp.ne.s32.totalorder %s226, %s228
    %p235 = scmp.eq.s32.totalorder %s29, 1
    %p236 = por %p234, %p235
    %p237 = scmp.ne.s32.totalorder %s228, %s229
    %p238 = scmp.eq.s32.totalorder %s29, 0
    %p239 = por %p237, %p238
    %p240 = scmp.ne.s32.totalorder %s228, %s229
    %p241 = scmp.eq.s32.totalorder %s30, 1
    %p242 = por %p240, %p241
    %p244 = scmp.ne.s32.totalorder %s229, %s243
    %p245 = scmp.eq.s32.totalorder %s30, 0
    %p246 = por %p244, %p245
    %s248 = sadd.s32 %s247, 1
    %p251 = scmp.eq.s32.totalorder %s24, 1
    %p252 = scmp.ne.s32.totalorder %s247, %s249
    %p253 = scmp.eq.s32.totalorder %s24, 0
    %p254 = por %p252, %p253
    %p255 = scmp.ne.s32.totalorder %s247, %s249
    %p256 = scmp.eq.s32.totalorder %s29, 1
    %p257 = por %p255, %p256
    %p258 = scmp.ne.s32.totalorder %s249, %s250
    %p259 = scmp.eq.s32.totalorder %s29, 0
    %p260 = por %p258, %p259
    %p261 = scmp.ne.s32.totalorder %s249, %s250
    %p262 = scmp.eq.s32.totalorder %s30, 1
    %p263 = por %p261, %p262
    %p265 = scmp.ne.s32.totalorder %s250, %s264
    %p266 = scmp.eq.s32.totalorder %s30, 0
    %p267 = por %p265, %p266
    %s269 = sadd.s32 %s268, 1
    %p272 = scmp.eq.s32.totalorder %s24, 1
    %p273 = scmp.ne.s32.totalorder %s268, %s270
    %p274 = scmp.eq.s32.totalorder %s24, 0
    %p275 = por %p273, %p274
    %p276 = scmp.ne.s32.totalorder %s268, %s270
    %p277 = scmp.eq.s32.totalorder %s29, 1
    %p278 = por %p276, %p277
    %p279 = scmp.ne.s32.totalorder %s270, %s271
    %p280 = scmp.eq.s32.totalorder %s29, 0
    %p281 = por %p279, %p280
    %p282 = scmp.ne.s32.totalorder %s270, %s271
    %p283 = scmp.eq.s32.totalorder %s30, 1
    %p284 = por %p282, %p283
    %p286 = scmp.ne.s32.totalorder %s271, %s285
    %p287 = scmp.eq.s32.totalorder %s30, 0
    %p288 = por %p286, %p287
    %s290 = sadd.s32 %s289, 1
    %p293 = scmp.eq.s32.totalorder %s24, 1
    %p294 = scmp.ne.s32.totalorder %s289, %s291
    %p295 = scmp.eq.s32.totalorder %s24, 0
    %p296 = por %p294, %p295
    %p297 = scmp.ne.s32.totalorder %s289, %s291
    %p298 = scmp.eq.s32.totalorder %s29, 1
    %p299 = por %p297, %p298
    %p300 = scmp.ne.s32.totalorder %s291, %s292
    %p301 = scmp.eq.s32.totalorder %s29, 0
    %p302 = por %p300, %p301
    %p303 = scmp.ne.s32.totalorder %s291, %s292
    %p304 = scmp.eq.s32.totalorder %s30, 1
    %p305 = por %p303, %p304
    %p307 = scmp.ne.s32.totalorder %s292, %s306
    %p308 = scmp.eq.s32.totalorder %s30, 0
    %p309 = por %p307, %p308
    %s311 = sadd.s32 %s310, 1
    %p314 = scmp.eq.s32.totalorder %s24, 1
    %p315 = scmp.ne.s32.totalorder %s310, %s312
    %p316 = scmp.eq.s32.totalorder %s24, 0
    %p317 = por %p315, %p316
    %p318 = scmp.ne.s32.totalorder %s310, %s312
    %p319 = scmp.eq.s32.totalorder %s29, 1
    %p320 = por %p318, %p319
    %p321 = scmp.ne.s32.totalorder %s312, %s313
    %p322 = scmp.eq.s32.totalorder %s29, 0
    %p323 = por %p321, %p322
    %p324 = scmp.ne.s32.totalorder %s312, %s313
    %p325 = scmp.eq.s32.totalorder %s30, 1
    %p326 = por %p324, %p325
    %p328 = scmp.ne.s32.totalorder %s313, %s327
    %p329 = scmp.eq.s32.totalorder %s30, 0
    %p330 = por %p328, %p329
    %s332 = sadd.s32 %s331, 1
    %p335 = scmp.eq.s32.totalorder %s24, 1
    %p336 = scmp.ne.s32.totalorder %s331, %s333
    %p337 = scmp.eq.s32.totalorder %s24, 0
    %p338 = por %p336, %p337
    %p339 = scmp.ne.s32.totalorder %s331, %s333
    %p340 = scmp.eq.s32.totalorder %s29, 1
    %p341 = por %p339, %p340
    %p342 = scmp.ne.s32.totalorder %s333, %s334
    %p343 = scmp.eq.s32.totalorder %s29, 0
    %p344 = por %p342, %p343
    %p345 = scmp.ne.s32.totalorder %s333, %s334
    %p346 = scmp.eq.s32.totalorder %s30, 1
    %p347 = por %p345, %p346
    %p349 = scmp.ne.s32.totalorder %s334, %s348
    %p350 = scmp.eq.s32.totalorder %s30, 0
    %p351 = por %p349, %p350
    %s353 = sadd.s32 %s352, 1
    %p356 = scmp.eq.s32.totalorder %s24, 1
    %p357 = scmp.ne.s32.totalorder %s352, %s354
    %p358 = scmp.eq.s32.totalorder %s24, 0
    %p359 = por %p357, %p358
    %p360 = scmp.ne.s32.totalorder %s352, %s354
    %p361 = scmp.eq.s32.totalorder %s29, 1
    %p362 = por %p360, %p361
    %p363 = scmp.ne.s32.totalorder %s354, %s355
    %p364 = scmp.eq.s32.totalorder %s29, 0
    %p365 = por %p363, %p364
    %p366 = scmp.ne.s32.totalorder %s354, %s355
    %p367 = scmp.eq.s32.totalorder %s30, 1
    %p368 = por %p366, %p367
    %p370 = scmp.ne.s32.totalorder %s355, %s369
    %p371 = scmp.eq.s32.totalorder %s30, 0
    %p372 = por %p370, %p371
    %s374 = sadd.s32 %s373, 1
    %p377 = scmp.eq.s32.totalorder %s24, 1
    %p378 = scmp.ne.s32.totalorder %s373, %s375
    %p379 = scmp.eq.s32.totalorder %s24, 0
    %p380 = por %p378, %p379
    %p381 = scmp.ne.s32.totalorder %s373, %s375
    %p382 = scmp.eq.s32.totalorder %s29, 1
    %p383 = por %p381, %p382
    %p384 = scmp.ne.s32.totalorder %s375, %s376
    %p385 = scmp.eq.s32.totalorder %s29, 0
    %p386 = por %p384, %p385
    %p387 = scmp.ne.s32.totalorder %s375, %s376
    %p388 = scmp.eq.s32.totalorder %s30, 1
    %p389 = por %p387, %p388
    %p391 = scmp.ne.s32.totalorder %s376, %s390
    %p392 = scmp.eq.s32.totalorder %s30, 0
    %p393 = por %p391, %p392
    %s395 = sadd.s32 %s394, 1
    %p398 = scmp.eq.s32.totalorder %s24, 1
    %p399 = scmp.ne.s32.totalorder %s394, %s396
    %p400 = scmp.eq.s32.totalorder %s24, 0
    %p401 = por %p399, %p400
    %p402 = scmp.ne.s32.totalorder %s394, %s396
    %p403 = scmp.eq.s32.totalorder %s29, 1
    %p404 = por %p402, %p403
    %p405 = scmp.ne.s32.totalorder %s396, %s397
    %p406 = scmp.eq.s32.totalorder %s29, 0
    %p407 = por %p405, %p406
    %p408 = scmp.ne.s32.totalorder %s396, %s397
    %p409 = scmp.eq.s32.totalorder %s30, 1
    %p410 = por %p408, %p409
    %p412 = scmp.ne.s32.totalorder %s397, %s411
    %p413 = scmp.eq.s32.totalorder %s30, 0
    %p414 = por %p412, %p413
    %s415 = ssub.s32 %s24, %s31
    %p416 = scmp.eq.s32.totalorder %s415, 0
    %s418 = sadd.s32 %s417, 1
    %s419 = scalar_select %p416, %s417, %s418
    %p422 = pneg %p416
    %p423 = scmp.eq.s32.totalorder %s24, 1
    %p424 = por %p422, %p423
    %p425 = scmp.ne.s32.totalorder %s417, %s420
    %p426 = scmp.eq.s32.totalorder %s24, 0
    %p427 = por %p425, %p426
    %p428 = scmp.ne.s32.totalorder %s417, %s420
    %p429 = scmp.eq.s32.totalorder %s29, 1
    %p430 = por %p428, %p429
    %p431 = scmp.ne.s32.totalorder %s420, %s421
    %p432 = scmp.eq.s32.totalorder %s29, 0
    %p433 = por %p431, %p432
    %p434 = scmp.ne.s32.totalorder %s420, %s421
    %p435 = scmp.eq.s32.totalorder %s30, 1
    %p436 = por %p434, %p435
    %p438 = scmp.ne.s32.totalorder %s421, %s437
    %p439 = scmp.eq.s32.totalorder %s30, 0
    %p440 = por %p438, %p439
    %p441 = scmp.le.s32.totalorder 1, %s24
    %p442 = scmp.lt.s32.totalorder %s24, 3
    %p443 = pnand %p441, %p442
    %p444 = pneg %p443
    // Predicated region
    $region9: #{autoencoder_forward.1} parent=5 // pred_check
      _
    $region10: #{autoencoder_forward.1} parent=5 // pred_check_branch
      %446 = sbr.rel (%p443) target = $region12
    $region11: #{autoencoder_forward.1} parent=5 // pred_region
      %s447 = ssub.s32 %s24, 1
      // Predicated region
      $region13: #{autoencoder_forward.1} parent=11 // pred_check
        %p448 = pneg %p71
      $region14: #{autoencoder_forward.1} parent=11 // pred_check_branch
        %450 = sbr.rel (%p448) target = $region16
      $region15: #{autoencoder_forward.1} parent=11 // pred_region
        _
      $region16: #{autoencoder_forward.1} parent=11 // pred_fallthru
        _
      // Predicated region
      $region17: #{autoencoder_forward.1} parent=11 // pred_check
        %p451 = pneg %p92
      $region18: #{autoencoder_forward.1} parent=11 // pred_check_branch
        %453 = sbr.rel (%p451) target = $region20
      $region19: #{autoencoder_forward.1} parent=11 // pred_region
        _
      $region20: #{autoencoder_forward.1} parent=11 // pred_fallthru
        _
      // Predicated region
      $region21: #{autoencoder_forward.1} parent=11 // pred_check
        %p454 = pneg %p113
      $region22: #{autoencoder_forward.1} parent=11 // pred_check_branch
        %456 = sbr.rel (%p454) target = $region24
      $region23: #{autoencoder_forward.1} parent=11 // pred_region
        _
      $region24: #{autoencoder_forward.1} parent=11 // pred_fallthru
        _
      // Predicated region
      $region25: #{autoencoder_forward.1} parent=11 // pred_check
        %p457 = pneg %p134
      $region26: #{autoencoder_forward.1} parent=11 // pred_check_branch
        %459 = sbr.rel (%p457) target = $region28
      $region27: #{autoencoder_forward.1} parent=11 // pred_region
        _
      $region28: #{autoencoder_forward.1} parent=11 // pred_fallthru
        _
      // Predicated region
      $region29: #{autoencoder_forward.1} parent=11 // pred_check
        %p460 = pneg %p155
      $region30: #{autoencoder_forward.1} parent=11 // pred_check_branch
        %462 = sbr.rel (%p460) target = $region32
      $region31: #{autoencoder_forward.1} parent=11 // pred_region
        _
      $region32: #{autoencoder_forward.1} parent=11 // pred_fallthru
        _
      // Predicated region
      $region33: #{autoencoder_forward.1} parent=11 // pred_check
        %p463 = pneg %p176
      $region34: #{autoencoder_forward.1} parent=11 // pred_check_branch
        %465 = sbr.rel (%p463) target = $region36
      $region35: #{autoencoder_forward.1} parent=11 // pred_region
        _
      $region36: #{autoencoder_forward.1} parent=11 // pred_fallthru
        _
      // Predicated region
      $region37: #{autoencoder_forward.1} parent=11 // pred_check
        %p466 = pneg %p197
      $region38: #{autoencoder_forward.1} parent=11 // pred_check_branch
        %468 = sbr.rel (%p466) target = $region40
      $region39: #{autoencoder_forward.1} parent=11 // pred_region
        _
      $region40: #{autoencoder_forward.1} parent=11 // pred_fallthru
        _
      // Predicated region
      $region41: #{autoencoder_forward.1} parent=11 // pred_check
        %p469 = pneg %p218
      $region42: #{autoencoder_forward.1} parent=11 // pred_check_branch
        %471 = sbr.rel (%p469) target = $region44
      $region43: #{autoencoder_forward.1} parent=11 // pred_region
        _
      $region44: #{autoencoder_forward.1} parent=11 // pred_fallthru
        _
      // Predicated region
      $region45: #{autoencoder_forward.1} parent=11 // pred_check
        %p472 = pneg %p239
      $region46: #{autoencoder_forward.1} parent=11 // pred_check_branch
        %474 = sbr.rel (%p472) target = $region48
      $region47: #{autoencoder_forward.1} parent=11 // pred_region
        _
      $region48: #{autoencoder_forward.1} parent=11 // pred_fallthru
        _
      // Predicated region
      $region49: #{autoencoder_forward.1} parent=11 // pred_check
        %p475 = pneg %p260
      $region50: #{autoencoder_forward.1} parent=11 // pred_check_branch
        %477 = sbr.rel (%p475) target = $region52
      $region51: #{autoencoder_forward.1} parent=11 // pred_region
        _
      $region52: #{autoencoder_forward.1} parent=11 // pred_fallthru
        _
      // Predicated region
      $region53: #{autoencoder_forward.1} parent=11 // pred_check
        %p478 = pneg %p281
      $region54: #{autoencoder_forward.1} parent=11 // pred_check_branch
        %480 = sbr.rel (%p478) target = $region56
      $region55: #{autoencoder_forward.1} parent=11 // pred_region
        _
      $region56: #{autoencoder_forward.1} parent=11 // pred_fallthru
        _
      // Predicated region
      $region57: #{autoencoder_forward.1} parent=11 // pred_check
        %p481 = pneg %p302
      $region58: #{autoencoder_forward.1} parent=11 // pred_check_branch
        %483 = sbr.rel (%p481) target = $region60
      $region59: #{autoencoder_forward.1} parent=11 // pred_region
        _
      $region60: #{autoencoder_forward.1} parent=11 // pred_fallthru
        _
      // Predicated region
      $region61: #{autoencoder_forward.1} parent=11 // pred_check
        %p484 = pneg %p323
      $region62: #{autoencoder_forward.1} parent=11 // pred_check_branch
        %486 = sbr.rel (%p484) target = $region64
      $region63: #{autoencoder_forward.1} parent=11 // pred_region
        _
      $region64: #{autoencoder_forward.1} parent=11 // pred_fallthru
        _
      // Predicated region
      $region65: #{autoencoder_forward.1} parent=11 // pred_check
        %p487 = pneg %p344
      $region66: #{autoencoder_forward.1} parent=11 // pred_check_branch
        %489 = sbr.rel (%p487) target = $region68
      $region67: #{autoencoder_forward.1} parent=11 // pred_region
        _
      $region68: #{autoencoder_forward.1} parent=11 // pred_fallthru
        _
      // Predicated region
      $region69: #{autoencoder_forward.1} parent=11 // pred_check
        %p490 = pneg %p365
      $region70: #{autoencoder_forward.1} parent=11 // pred_check_branch
        %492 = sbr.rel (%p490) target = $region72
      $region71: #{autoencoder_forward.1} parent=11 // pred_region
        _
      $region72: #{autoencoder_forward.1} parent=11 // pred_fallthru
        _
      // Predicated region
      $region73: #{autoencoder_forward.1} parent=11 // pred_check
        %p493 = pneg %p386
      $region74: #{autoencoder_forward.1} parent=11 // pred_check_branch
        %495 = sbr.rel (%p493) target = $region76
      $region75: #{autoencoder_forward.1} parent=11 // pred_region
        _
      $region76: #{autoencoder_forward.1} parent=11 // pred_fallthru
        _
      // Predicated region
      $region77: #{autoencoder_forward.1} parent=11 // pred_check
        %p496 = pneg %p407
      $region78: #{autoencoder_forward.1} parent=11 // pred_check_branch
        %498 = sbr.rel (%p496) target = $region80
      $region79: #{autoencoder_forward.1} parent=11 // pred_region
        _
      $region80: #{autoencoder_forward.1} parent=11 // pred_fallthru
        _
    $region12: #{autoencoder_forward.1} parent=5 // pred_fallthru
      _
    %p499 = scmp.lt.s32.totalorder %s24, 2
    // Predicated region
    $region81: #{autoencoder_forward.1} parent=5 // pred_check
      %p500 = pneg %p499
    $region82: #{autoencoder_forward.1} parent=5 // pred_check_branch
      %502 = sbr.rel (%p500) target = $region84
    $region83: #{autoencoder_forward.1} parent=5 // pred_region
      // Predicated region
      $region85: #{autoencoder_forward.1} parent=83 // pred_check
        %p503 = pneg %p44
      $region86: #{autoencoder_forward.1} parent=83 // pred_check_branch
        %505 = sbr.rel (%p503) target = $region88
      $region87: #{autoencoder_forward.1} parent=83 // pred_region
        %p506 = scmp.lt.s32.totalorder %s24, 1
        %s507 = scalar_select %p506, %s24, 1
        %s508 = smul.addr %s507, 7
        %s509 = smul.addr %s508, 4
        %s510 = scalar_lea.vmem %s0, %s509
      $region88: #{autoencoder_forward.1} parent=83 // pred_fallthru
        _
    $region84: #{autoencoder_forward.1} parent=5 // pred_fallthru
      _
    %p511 = scmp.le.s32.totalorder 1, %s24
    %p512 = scmp.lt.s32.totalorder %s24, 3
    %p513 = pnand %p511, %p512
    %p514 = pneg %p513
    // Predicated region
    $region89: #{autoencoder_forward.1} parent=5 // pred_check
      _
    $region90: #{autoencoder_forward.1} parent=5 // pred_check_branch
      %516 = sbr.rel (%p513) target = $region92
    $region91: #{autoencoder_forward.1} parent=5 // pred_region
      %s517 = ssub.s32 %s24, 1
      %p518 = scmp.lt.s32.totalorder %s29, 1
      %s519 = scalar_select %p518, %s29, 1
      %s520 = smul.addr %s519, 7
      %s521 = smul.addr %s520, 4
      %s522 = scalar_lea.vmem %s0, %s521
      %p523 = pneg %p50
      %p524 = pneg %p47
      %p525 = pneg %p71
      %p526 = pneg %p68
      %p527 = pneg %p92
      %p528 = pneg %p89
      %p529 = pneg %p113
      %p530 = pneg %p110
      %p531 = pneg %p134
      %p532 = pneg %p131
      %p533 = pneg %p155
      %p534 = pneg %p152
      %p535 = pneg %p176
      %p536 = pneg %p173
      %p537 = pneg %p197
      %p538 = pneg %p194
      %p539 = pneg %p218
      %p540 = pneg %p215
      %p541 = pneg %p239
      %p542 = pneg %p236
      %p543 = pneg %p260
      %p544 = pneg %p257
      %p545 = pneg %p281
      %p546 = pneg %p278
      %p547 = pneg %p302
      %p548 = pneg %p299
      %p549 = pneg %p323
      %p550 = pneg %p320
      %p551 = pneg %p344
      %p552 = pneg %p341
      %p553 = pneg %p365
      %p554 = pneg %p362
      %p555 = pneg %p386
      %p556 = pneg %p383
      %p557 = pneg %p407
      %p558 = pneg %p404
      %p559 = pneg %p433
      %p560 = pneg %p430
      %p561 = scmp.lt.s32.totalorder %s29, 1
      %s562 = scalar_select %p561, %s29, 1
      %s563 = smul.addr %s562, 7
      %s564 = smul.addr %s563, 4
      %s565 = scalar_lea.vmem %s18, %s564
      %p566 = scmp.lt.s32.totalorder %s29, 1
      %s567 = scalar_select %p566, %s29, 1
      %s568 = smul.addr %s567, 7
      %s569 = smul.addr %s568, 4
      %s570 = scalar_lea.vmem %s0, %s569
      %p571 = scmp.lt.s32.totalorder %s29, 1
      %s572 = scalar_select %p571, %s29, 1
      %s573 = smul.addr %s572, 7
      %s574 = smul.addr %s573, 4
      %s575 = scalar_lea.vmem %s18, %s574
      %v576 = vld [vmem:[%s570] sm:$0x77]
      %v577 = vld [vmem:[%s570 + $0x8] sm:$0x77]
      %v578 = vld [vmem:[%s570 + $0x10] sm:$0x77]
      %v579 = vld [vmem:[%s570 + $0x18] sm:$0x7]
      %v580 = vld [vmem:[%s1] sm:$0xff]
      %v581 = vld [vmem:[%s1 + $0x8] sm:$0xff]
      %v582 = vld [vmem:[%s1 + $0x10] sm:$0xff]
      %v583 = vld [vmem:[%s1 + $0x18] sm:$0xff]
      %v584 = vld [vmem:[%s1 + $0x20] sm:$0xff]
      %v585 = vld [vmem:[%s1 + $0x28] sm:$0xff]
      %v586 = vld [vmem:[%s1 + $0x30] sm:$0xff]
      %v587 = vld [vmem:[%s1 + $0x38] sm:$0xff]
      %v588 = vld [vmem:[%s1 + $0x40] sm:$0xff]
      %v589 = vld [vmem:[%s1 + $0x48] sm:$0xff]
      %v590 = vld [vmem:[%s1 + $0x50] sm:$0xff]
      %v591 = vld [vmem:[%s1 + $0x58] sm:$0xff]
      %v592 = vld [vmem:[%s1 + $0x60] sm:$0xff]
      %v593 = vld [vmem:[%s1 + $0x68] sm:$0xff]
      %v594 = vld [vmem:[%s1 + $0x70] sm:$0xff]
      %v595 = vld [vmem:[%s1 + $0x78] sm:$0xff]
      %v596 = vld [vmem:[%s1 + $0x80] sm:$0xff]
      %v597 = vld [vmem:[%s1 + $0x88] sm:$0xff]
      %602 = vst [vmem:[#allocation1] ss:$2 sm:$0xff] %v576
      %s603 = scalar_lea.vmem [#allocation1], 16
      %604 = vst [vmem:[%s603] ss:$2 sm:$0xff] %v577
      %s605 = scalar_lea.vmem [#allocation1], 32
      %606 = vst [vmem:[%s605] ss:$2 sm:$0xff] %v578
      %s607 = scalar_lea.vmem [#allocation1], 48
      %608 = vst [vmem:[%s607] ss:$2 sm:$0xff] %v579
      %v609 = vld.sshfl [vmem:[#allocation1] sm:$0xff pattern:$0x75316420]
      %v610 = vld.sshfl [vmem:[#allocation1 + $0x8] sm:$0xff pattern:$0x75316420]
      %v611 = vld.sshfl [vmem:[#allocation1 + $0x10] sm:$0xff pattern:$0x75316420]
      %v612 = vld.sshfl [vmem:[#allocation1 + $0x18] sm:$0xff pattern:$0x75316420]
      %v613 = vld.sshfl [vmem:[#allocation1 + $0x20] sm:$0xff pattern:$0x75316420]
      %v614 = vld.sshfl [vmem:[#allocation1 + $0x28] sm:$0xff pattern:$0x75316420]
      %v615 = vld.sshfl [vmem:[#allocation1 + $0x30] sm:$0xff pattern:$0x75316420]
      %vm616 = vcmask 23552
      %v618 = vsel %vm616, %v580, 0
      %v621 = vsel %vm616, %v581, 0
      %v624 = vsel %vm616, %v582, 0
      %v627 = vsel %vm616, %v583, 0
      %v630 = vsel %vm616, %v584, 0
      %v633 = vsel %vm616, %v585, 0
      %v636 = vsel %vm616, %v586, 0
      %v639 = vsel %vm616, %v587, 0
      %v642 = vsel %vm616, %v588, 0
      %v645 = vsel %vm616, %v589, 0
      %v648 = vsel %vm616, %v590, 0
      %v651 = vsel %vm616, %v591, 0
      %v654 = vsel %vm616, %v592, 0
      %v657 = vsel %vm616, %v593, 0
      %v660 = vsel %vm616, %v594, 0
      %v663 = vsel %vm616, %v595, 0
      %v666 = vsel %vm616, %v596, 0
      %v669 = vsel %vm616, %v597, 0
      %vm671 = vcmask 1042432
      %v672 = vsel %vm671, %v609, 0
      %v674 = vsel %vm671, %v610, 0
      %v676 = vsel %vm671, %v611, 0
      %v678 = vsel %vm671, %v612, 0
      %v680 = vsel %vm671, %v613, 0
      %v682 = vsel %vm671, %v614, 0
      %v684 = vsel %vm671, %v615, 0
      %686 = vmatpush.msra.mxu0 0.0
      %687 = vmatpush.msra.mxu0 0.0
      %688 = vmatpush.msra.mxu0 0.0
      %689 = vmatpush.msra.mxu0 0.0
      %690 = vmatpush.msra.mxu0 0.0
      %691 = vmatpush.msra.mxu0 0.0
      %692 = vmatpush.msra.mxu0 0.0
      %693 = vmatpush.msra.mxu0 0.0
      %694 = vmatpush.msra.mxu0 0.0
      %695 = vmatpush.msra.mxu0 0.0
      %696 = vmatpush.msra.mxu0 0.0
      %697 = vmatpush.msra.mxu0 0.0
      %698 = vmatpush.msra.mxu0 0.0
      %699 = vmatpush.msra.mxu0 0.0
      %700 = vmatpush.msra.mxu0 0.0
      %701 = vmatpush.msra.mxu0 %v672
      %702 = vmatmul.f32.gmra.mxu0 %v618
      %v703 = vpop.f32.mrf.mxu0
      %v704 = vadd.f32 0.0, %v703
      %705 = vmatmul.f32.gmra.mxu0 %v621
      %v706 = vpop.f32.mrf.mxu0
      %v707 = vadd.f32 0.0, %v706
      %708 = vmatmul.f32.gmra.mxu0 %v624
      %v709 = vpop.f32.mrf.mxu0
      %v710 = vadd.f32 0.0, %v709
      %711 = vmatmul.f32.gmra.mxu0 %v627
      %v712 = vpop.f32.mrf.mxu0
      %v713 = vadd.f32 0.0, %v712
      %714 = vmatmul.f32.gmra.mxu0 %v630
      %v715 = vpop.f32.mrf.mxu0
      %v716 = vadd.f32 0.0, %v715
      %717 = vmatmul.f32.gmra.mxu0 %v633
      %v718 = vpop.f32.mrf.mxu0
      %v719 = vadd.f32 0.0, %v718
      %720 = vmatmul.f32.gmra.mxu0 %v636
      %v721 = vpop.f32.mrf.mxu0
      %v722 = vadd.f32 0.0, %v721
      %723 = vmatmul.f32.gmra.mxu0 %v639
      %v724 = vpop.f32.mrf.mxu0
      %v725 = vadd.f32 0.0, %v724
      %726 = vmatmul.f32.gmra.mxu0 %v642
      %v727 = vpop.f32.mrf.mxu0
      %v728 = vadd.f32 0.0, %v727
      %729 = vmatmul.f32.gmra.mxu0 %v645
      %v730 = vpop.f32.mrf.mxu0
      %v731 = vadd.f32 0.0, %v730
      %732 = vmatmul.f32.gmra.mxu0 %v648
      %v733 = vpop.f32.mrf.mxu0
      %v734 = vadd.f32 0.0, %v733
      %735 = vmatmul.f32.gmra.mxu0 %v651
      %v736 = vpop.f32.mrf.mxu0
      %v737 = vadd.f32 0.0, %v736
      %738 = vmatmul.f32.gmra.mxu0 %v654
      %v739 = vpop.f32.mrf.mxu0
      %v740 = vadd.f32 0.0, %v739
      %741 = vmatmul.f32.gmra.mxu0 %v657
      %v742 = vpop.f32.mrf.mxu0
      %v743 = vadd.f32 0.0, %v742
      %744 = vmatmul.f32.gmra.mxu0 %v660
      %v745 = vpop.f32.mrf.mxu0
      %v746 = vadd.f32 0.0, %v745
      %747 = vmatmul.f32.gmra.mxu0 %v663
      %v748 = vpop.f32.mrf.mxu0
      %v749 = vadd.f32 0.0, %v748
      %750 = vmatmul.f32.gmra.mxu0 %v666
      %v751 = vpop.f32.mrf.mxu0
      %v752 = vadd.f32 0.0, %v751
      %753 = vmatmul.f32.gmra.mxu0 %v669
      %v754 = vpop.f32.mrf.mxu0
      %v755 = vadd.f32 0.0, %v754
      %756 = vdwg.mxu0
      %757 = vmatpush.msra.mxu0 0.0
      %758 = vmatpush.msra.mxu0 0.0
      %759 = vmatpush.msra.mxu0 0.0
      %760 = vmatpush.msra.mxu0 0.0
      %761 = vmatpush.msra.mxu0 0.0
      %762 = vmatpush.msra.mxu0 0.0
      %763 = vmatpush.msra.mxu0 0.0
      %764 = vmatpush.msra.mxu0 0.0
      %765 = vmatpush.msra.mxu0 0.0
      %766 = vmatpush.msra.mxu0 0.0
      %767 = vmatpush.msra.mxu0 0.0
      %768 = vmatpush.msra.mxu0 0.0
      %769 = vmatpush.msra.mxu0 0.0
      %770 = vmatpush.msra.mxu0 0.0
      %771 = vmatpush.msra.mxu0 0.0
      %772 = vmatpush.msra.mxu0 %v674
      %773 = vmatmul.f32.gmra.mxu0 %v618
      %v774 = vpop.f32.mrf.mxu0
      %v775 = vadd.f32 0.0, %v774
      %776 = vmatmul.f32.gmra.mxu0 %v621
      %v777 = vpop.f32.mrf.mxu0
      %v778 = vadd.f32 0.0, %v777
      %779 = vmatmul.f32.gmra.mxu0 %v624
      %v780 = vpop.f32.mrf.mxu0
      %v781 = vadd.f32 0.0, %v780
      %782 = vmatmul.f32.gmra.mxu0 %v627
      %v783 = vpop.f32.mrf.mxu0
      %v784 = vadd.f32 0.0, %v783
      %785 = vmatmul.f32.gmra.mxu0 %v630
      %v786 = vpop.f32.mrf.mxu0
      %v787 = vadd.f32 0.0, %v786
      %788 = vmatmul.f32.gmra.mxu0 %v633
      %v789 = vpop.f32.mrf.mxu0
      %v790 = vadd.f32 0.0, %v789
      %791 = vmatmul.f32.gmra.mxu0 %v636
      %v792 = vpop.f32.mrf.mxu0
      %v793 = vadd.f32 0.0, %v792
      %794 = vmatmul.f32.gmra.mxu0 %v639
      %v795 = vpop.f32.mrf.mxu0
      %v796 = vadd.f32 0.0, %v795
      %797 = vmatmul.f32.gmra.mxu0 %v642
      %v798 = vpop.f32.mrf.mxu0
      %v799 = vadd.f32 0.0, %v798
      %800 = vmatmul.f32.gmra.mxu0 %v645
      %v801 = vpop.f32.mrf.mxu0
      %v802 = vadd.f32 0.0, %v801
      %803 = vmatmul.f32.gmra.mxu0 %v648
      %v804 = vpop.f32.mrf.mxu0
      %v805 = vadd.f32 0.0, %v804
      %806 = vmatmul.f32.gmra.mxu0 %v651
      %v807 = vpop.f32.mrf.mxu0
      %v808 = vadd.f32 0.0, %v807
      %809 = vmatmul.f32.gmra.mxu0 %v654
      %v810 = vpop.f32.mrf.mxu0
      %v811 = vadd.f32 0.0, %v810
      %812 = vmatmul.f32.gmra.mxu0 %v657
      %v813 = vpop.f32.mrf.mxu0
      %v814 = vadd.f32 0.0, %v813
      %815 = vmatmul.f32.gmra.mxu0 %v660
      %v816 = vpop.f32.mrf.mxu0
      %v817 = vadd.f32 0.0, %v816
      %818 = vmatmul.f32.gmra.mxu0 %v663
      %v819 = vpop.f32.mrf.mxu0
      %v820 = vadd.f32 0.0, %v819
      %821 = vmatmul.f32.gmra.mxu0 %v666
      %v822 = vpop.f32.mrf.mxu0
      %v823 = vadd.f32 0.0, %v822
      %824 = vmatmul.f32.gmra.mxu0 %v669
      %v825 = vpop.f32.mrf.mxu0
      %v826 = vadd.f32 0.0, %v825
      %827 = vdwg.mxu0
      %828 = vmatpush.msra.mxu0 0.0
      %829 = vmatpush.msra.mxu0 0.0
      %830 = vmatpush.msra.mxu0 0.0
      %831 = vmatpush.msra.mxu0 0.0
      %832 = vmatpush.msra.mxu0 0.0
      %833 = vmatpush.msra.mxu0 0.0
      %834 = vmatpush.msra.mxu0 0.0
      %835 = vmatpush.msra.mxu0 0.0
      %836 = vmatpush.msra.mxu0 0.0
      %837 = vmatpush.msra.mxu0 0.0
      %838 = vmatpush.msra.mxu0 0.0
      %839 = vmatpush.msra.mxu0 0.0
      %840 = vmatpush.msra.mxu0 0.0
      %841 = vmatpush.msra.mxu0 0.0
      %842 = vmatpush.msra.mxu0 0.0
      %843 = vmatpush.msra.mxu0 %v676
      %844 = vmatmul.f32.gmra.mxu0 %v618
      %v845 = vpop.f32.mrf.mxu0
      %v846 = vadd.f32 0.0, %v845
      %847 = vmatmul.f32.gmra.mxu0 %v621
      %v848 = vpop.f32.mrf.mxu0
      %v849 = vadd.f32 0.0, %v848
      %850 = vmatmul.f32.gmra.mxu0 %v624
      %v851 = vpop.f32.mrf.mxu0
      %v852 = vadd.f32 0.0, %v851
      %853 = vmatmul.f32.gmra.mxu0 %v627
      %v854 = vpop.f32.mrf.mxu0
      %v855 = vadd.f32 0.0, %v854
      %856 = vmatmul.f32.gmra.mxu0 %v630
      %v857 = vpop.f32.mrf.mxu0
      %v858 = vadd.f32 0.0, %v857
      %859 = vmatmul.f32.gmra.mxu0 %v633
      %v860 = vpop.f32.mrf.mxu0
      %v861 = vadd.f32 0.0, %v860
      %862 = vmatmul.f32.gmra.mxu0 %v636
      %v863 = vpop.f32.mrf.mxu0
      %v864 = vadd.f32 0.0, %v863
      %865 = vmatmul.f32.gmra.mxu0 %v639
      %v866 = vpop.f32.mrf.mxu0
      %v867 = vadd.f32 0.0, %v866
      %868 = vmatmul.f32.gmra.mxu0 %v642
      %v869 = vpop.f32.mrf.mxu0
      %v870 = vadd.f32 0.0, %v869
      %871 = vmatmul.f32.gmra.mxu0 %v645
      %v872 = vpop.f32.mrf.mxu0
      %v873 = vadd.f32 0.0, %v872
      %874 = vmatmul.f32.gmra.mxu0 %v648
      %v875 = vpop.f32.mrf.mxu0
      %v876 = vadd.f32 0.0, %v875
      %877 = vmatmul.f32.gmra.mxu0 %v651
      %v878 = vpop.f32.mrf.mxu0
      %v879 = vadd.f32 0.0, %v878
      %880 = vmatmul.f32.gmra.mxu0 %v654
      %v881 = vpop.f32.mrf.mxu0
      %v882 = vadd.f32 0.0, %v881
      %883 = vmatmul.f32.gmra.mxu0 %v657
      %v884 = vpop.f32.mrf.mxu0
      %v885 = vadd.f32 0.0, %v884
      %886 = vmatmul.f32.gmra.mxu0 %v660
      %v887 = vpop.f32.mrf.mxu0
      %v888 = vadd.f32 0.0, %v887
      %889 = vmatmul.f32.gmra.mxu0 %v663
      %v890 = vpop.f32.mrf.mxu0
      %v891 = vadd.f32 0.0, %v890
      %892 = vmatmul.f32.gmra.mxu0 %v666
      %v893 = vpop.f32.mrf.mxu0
      %v894 = vadd.f32 0.0, %v893
      %895 = vmatmul.f32.gmra.mxu0 %v669
      %v896 = vpop.f32.mrf.mxu0
      %v897 = vadd.f32 0.0, %v896
      %898 = vdwg.mxu0
      %899 = vmatpush.msra.mxu0 0.0
      %900 = vmatpush.msra.mxu0 0.0
      %901 = vmatpush.msra.mxu0 0.0
      %902 = vmatpush.msra.mxu0 0.0
      %903 = vmatpush.msra.mxu0 0.0
      %904 = vmatpush.msra.mxu0 0.0
      %905 = vmatpush.msra.mxu0 0.0
      %906 = vmatpush.msra.mxu0 0.0
      %907 = vmatpush.msra.mxu0 0.0
      %908 = vmatpush.msra.mxu0 0.0
      %909 = vmatpush.msra.mxu0 0.0
      %910 = vmatpush.msra.mxu0 0.0
      %911 = vmatpush.msra.mxu0 0.0
      %912 = vmatpush.msra.mxu0 0.0
      %913 = vmatpush.msra.mxu0 0.0
      %914 = vmatpush.msra.mxu0 %v678
      %915 = vmatmul.f32.gmra.mxu0 %v618
      %v916 = vpop.f32.mrf.mxu0
      %v917 = vadd.f32 0.0, %v916
      %918 = vmatmul.f32.gmra.mxu0 %v621
      %v919 = vpop.f32.mrf.mxu0
      %v920 = vadd.f32 0.0, %v919
      %921 = vmatmul.f32.gmra.mxu0 %v624
      %v922 = vpop.f32.mrf.mxu0
      %v923 = vadd.f32 0.0, %v922
      %924 = vmatmul.f32.gmra.mxu0 %v627
      %v925 = vpop.f32.mrf.mxu0
      %v926 = vadd.f32 0.0, %v925
      %927 = vmatmul.f32.gmra.mxu0 %v630
      %v928 = vpop.f32.mrf.mxu0
      %v929 = vadd.f32 0.0, %v928
      %930 = vmatmul.f32.gmra.mxu0 %v633
      %v931 = vpop.f32.mrf.mxu0
      %v932 = vadd.f32 0.0, %v931
      %933 = vmatmul.f32.gmra.mxu0 %v636
      %v934 = vpop.f32.mrf.mxu0
      %v935 = vadd.f32 0.0, %v934
      %936 = vmatmul.f32.gmra.mxu0 %v639
      %v937 = vpop.f32.mrf.mxu0
      %v938 = vadd.f32 0.0, %v937
      %939 = vmatmul.f32.gmra.mxu0 %v642
      %v940 = vpop.f32.mrf.mxu0
      %v941 = vadd.f32 0.0, %v940
      %942 = vmatmul.f32.gmra.mxu0 %v645
      %v943 = vpop.f32.mrf.mxu0
      %v944 = vadd.f32 0.0, %v943
      %945 = vmatmul.f32.gmra.mxu0 %v648
      %v946 = vpop.f32.mrf.mxu0
      %v947 = vadd.f32 0.0, %v946
      %948 = vmatmul.f32.gmra.mxu0 %v651
      %v949 = vpop.f32.mrf.mxu0
      %v950 = vadd.f32 0.0, %v949
      %951 = vmatmul.f32.gmra.mxu0 %v654
      %v952 = vpop.f32.mrf.mxu0
      %v953 = vadd.f32 0.0, %v952
      %954 = vmatmul.f32.gmra.mxu0 %v657
      %v955 = vpop.f32.mrf.mxu0
      %v956 = vadd.f32 0.0, %v955
      %957 = vmatmul.f32.gmra.mxu0 %v660
      %v958 = vpop.f32.mrf.mxu0
      %v959 = vadd.f32 0.0, %v958
      %960 = vmatmul.f32.gmra.mxu0 %v663
      %v961 = vpop.f32.mrf.mxu0
      %v962 = vadd.f32 0.0, %v961
      %963 = vmatmul.f32.gmra.mxu0 %v666
      %v964 = vpop.f32.mrf.mxu0
      %v965 = vadd.f32 0.0, %v964
      %966 = vmatmul.f32.gmra.mxu0 %v669
      %v967 = vpop.f32.mrf.mxu0
      %v968 = vadd.f32 0.0, %v967
      %969 = vdwg.mxu0
      %970 = vmatpush.msra.mxu0 0.0
      %971 = vmatpush.msra.mxu0 0.0
      %972 = vmatpush.msra.mxu0 0.0
      %973 = vmatpush.msra.mxu0 0.0
      %974 = vmatpush.msra.mxu0 0.0
      %975 = vmatpush.msra.mxu0 0.0
      %976 = vmatpush.msra.mxu0 0.0
      %977 = vmatpush.msra.mxu0 0.0
      %978 = vmatpush.msra.mxu0 0.0
      %979 = vmatpush.msra.mxu0 0.0
      %980 = vmatpush.msra.mxu0 0.0
      %981 = vmatpush.msra.mxu0 0.0
      %982 = vmatpush.msra.mxu0 0.0
      %983 = vmatpush.msra.mxu0 0.0
      %984 = vmatpush.msra.mxu0 0.0
      %985 = vmatpush.msra.mxu0 %v680
      %986 = vmatmul.f32.gmra.mxu0 %v618
      %v987 = vpop.f32.mrf.mxu0
      %v988 = vadd.f32 0.0, %v987
      %989 = vmatmul.f32.gmra.mxu0 %v621
      %v990 = vpop.f32.mrf.mxu0
      %v991 = vadd.f32 0.0, %v990
      %992 = vmatmul.f32.gmra.mxu0 %v624
      %v993 = vpop.f32.mrf.mxu0
      %v994 = vadd.f32 0.0, %v993
      %995 = vmatmul.f32.gmra.mxu0 %v627
      %v996 = vpop.f32.mrf.mxu0
      %v997 = vadd.f32 0.0, %v996
      %998 = vmatmul.f32.gmra.mxu0 %v630
      %v999 = vpop.f32.mrf.mxu0
      %v1000 = vadd.f32 0.0, %v999
      %1001 = vmatmul.f32.gmra.mxu0 %v633
      %v1002 = vpop.f32.mrf.mxu0
      %v1003 = vadd.f32 0.0, %v1002
      %1004 = vmatmul.f32.gmra.mxu0 %v636
      %v1005 = vpop.f32.mrf.mxu0
      %v1006 = vadd.f32 0.0, %v1005
      %1007 = vmatmul.f32.gmra.mxu0 %v639
      %v1008 = vpop.f32.mrf.mxu0
      %v1009 = vadd.f32 0.0, %v1008
      %1010 = vmatmul.f32.gmra.mxu0 %v642
      %v1011 = vpop.f32.mrf.mxu0
      %v1012 = vadd.f32 0.0, %v1011
      %1013 = vmatmul.f32.gmra.mxu0 %v645
      %v1014 = vpop.f32.mrf.mxu0
      %v1015 = vadd.f32 0.0, %v1014
      %1016 = vmatmul.f32.gmra.mxu0 %v648
      %v1017 = vpop.f32.mrf.mxu0
      %v1018 = vadd.f32 0.0, %v1017
      %1019 = vmatmul.f32.gmra.mxu0 %v651
      %v1020 = vpop.f32.mrf.mxu0
      %v1021 = vadd.f32 0.0, %v1020
      %1022 = vmatmul.f32.gmra.mxu0 %v654
      %v1023 = vpop.f32.mrf.mxu0
      %v1024 = vadd.f32 0.0, %v1023
      %1025 = vmatmul.f32.gmra.mxu0 %v657
      %v1026 = vpop.f32.mrf.mxu0
      %v1027 = vadd.f32 0.0, %v1026
      %1028 = vmatmul.f32.gmra.mxu0 %v660
      %v1029 = vpop.f32.mrf.mxu0
      %v1030 = vadd.f32 0.0, %v1029
      %1031 = vmatmul.f32.gmra.mxu0 %v663
      %v1032 = vpop.f32.mrf.mxu0
      %v1033 = vadd.f32 0.0, %v1032
      %1034 = vmatmul.f32.gmra.mxu0 %v666
      %v1035 = vpop.f32.mrf.mxu0
      %v1036 = vadd.f32 0.0, %v1035
      %1037 = vmatmul.f32.gmra.mxu0 %v669
      %v1038 = vpop.f32.mrf.mxu0
      %v1039 = vadd.f32 0.0, %v1038
      %1040 = vdwg.mxu0
      %1041 = vmatpush.msra.mxu0 0.0
      %1042 = vmatpush.msra.mxu0 0.0
      %1043 = vmatpush.msra.mxu0 0.0
      %1044 = vmatpush.msra.mxu0 0.0
      %1045 = vmatpush.msra.mxu0 0.0
      %1046 = vmatpush.msra.mxu0 0.0
      %1047 = vmatpush.msra.mxu0 0.0
      %1048 = vmatpush.msra.mxu0 0.0
      %1049 = vmatpush.msra.mxu0 0.0
      %1050 = vmatpush.msra.mxu0 0.0
      %1051 = vmatpush.msra.mxu0 0.0
      %1052 = vmatpush.msra.mxu0 0.0
      %1053 = vmatpush.msra.mxu0 0.0
      %1054 = vmatpush.msra.mxu0 0.0
      %1055 = vmatpush.msra.mxu0 0.0
      %1056 = vmatpush.msra.mxu0 %v682
      %1057 = vmatmul.f32.gmra.mxu0 %v618
      %v1058 = vpop.f32.mrf.mxu0
      %v1059 = vadd.f32 0.0, %v1058
      %1060 = vmatmul.f32.gmra.mxu0 %v621
      %v1061 = vpop.f32.mrf.mxu0
      %v1062 = vadd.f32 0.0, %v1061
      %1063 = vmatmul.f32.gmra.mxu0 %v624
      %v1064 = vpop.f32.mrf.mxu0
      %v1065 = vadd.f32 0.0, %v1064
      %1066 = vmatmul.f32.gmra.mxu0 %v627
      %v1067 = vpop.f32.mrf.mxu0
      %v1068 = vadd.f32 0.0, %v1067
      %1069 = vmatmul.f32.gmra.mxu0 %v630
      %v1070 = vpop.f32.mrf.mxu0
      %v1071 = vadd.f32 0.0, %v1070
      %1072 = vmatmul.f32.gmra.mxu0 %v633
      %v1073 = vpop.f32.mrf.mxu0
      %v1074 = vadd.f32 0.0, %v1073
      %1075 = vmatmul.f32.gmra.mxu0 %v636
      %v1076 = vpop.f32.mrf.mxu0
      %v1077 = vadd.f32 0.0, %v1076
      %1078 = vmatmul.f32.gmra.mxu0 %v639
      %v1079 = vpop.f32.mrf.mxu0
      %v1080 = vadd.f32 0.0, %v1079
      %1081 = vmatmul.f32.gmra.mxu0 %v642
      %v1082 = vpop.f32.mrf.mxu0
      %v1083 = vadd.f32 0.0, %v1082
      %1084 = vmatmul.f32.gmra.mxu0 %v645
      %v1085 = vpop.f32.mrf.mxu0
      %v1086 = vadd.f32 0.0, %v1085
      %1087 = vmatmul.f32.gmra.mxu0 %v648
      %v1088 = vpop.f32.mrf.mxu0
      %v1089 = vadd.f32 0.0, %v1088
      %1090 = vmatmul.f32.gmra.mxu0 %v651
      %v1091 = vpop.f32.mrf.mxu0
      %v1092 = vadd.f32 0.0, %v1091
      %1093 = vmatmul.f32.gmra.mxu0 %v654
      %v1094 = vpop.f32.mrf.mxu0
      %v1095 = vadd.f32 0.0, %v1094
      %1096 = vmatmul.f32.gmra.mxu0 %v657
      %v1097 = vpop.f32.mrf.mxu0
      %v1098 = vadd.f32 0.0, %v1097
      %1099 = vmatmul.f32.gmra.mxu0 %v660
      %v1100 = vpop.f32.mrf.mxu0
      %v1101 = vadd.f32 0.0, %v1100
      %1102 = vmatmul.f32.gmra.mxu0 %v663
      %v1103 = vpop.f32.mrf.mxu0
      %v1104 = vadd.f32 0.0, %v1103
      %1105 = vmatmul.f32.gmra.mxu0 %v666
      %v1106 = vpop.f32.mrf.mxu0
      %v1107 = vadd.f32 0.0, %v1106
      %1108 = vmatmul.f32.gmra.mxu0 %v669
      %v1109 = vpop.f32.mrf.mxu0
      %v1110 = vadd.f32 0.0, %v1109
      %1111 = vdwg.mxu0
      %1112 = vmatpush.msra.mxu0 0.0
      %1113 = vmatpush.msra.mxu0 0.0
      %1114 = vmatpush.msra.mxu0 0.0
      %1115 = vmatpush.msra.mxu0 0.0
      %1116 = vmatpush.msra.mxu0 0.0
      %1117 = vmatpush.msra.mxu0 0.0
      %1118 = vmatpush.msra.mxu0 0.0
      %1119 = vmatpush.msra.mxu0 0.0
      %1120 = vmatpush.msra.mxu0 0.0
      %1121 = vmatpush.msra.mxu0 0.0
      %1122 = vmatpush.msra.mxu0 0.0
      %1123 = vmatpush.msra.mxu0 0.0
      %1124 = vmatpush.msra.mxu0 0.0
      %1125 = vmatpush.msra.mxu0 0.0
      %1126 = vmatpush.msra.mxu0 0.0
      %1127 = vmatpush.msra.mxu0 %v684
      %1128 = vmatmul.f32.gmra.mxu0 %v618
      %v1129 = vpop.f32.mrf.mxu0
      %v1130 = vadd.f32 0.0, %v1129
      %1131 = vmatmul.f32.gmra.mxu0 %v621
      %v1132 = vpop.f32.mrf.mxu0
      %v1133 = vadd.f32 0.0, %v1132
      %1134 = vmatmul.f32.gmra.mxu0 %v624
      %v1135 = vpop.f32.mrf.mxu0
      %v1136 = vadd.f32 0.0, %v1135
      %1137 = vmatmul.f32.gmra.mxu0 %v627
      %v1138 = vpop.f32.mrf.mxu0
      %v1139 = vadd.f32 0.0, %v1138
      %1140 = vmatmul.f32.gmra.mxu0 %v630
      %v1141 = vpop.f32.mrf.mxu0
      %v1142 = vadd.f32 0.0, %v1141
      %1143 = vmatmul.f32.gmra.mxu0 %v633
      %v1144 = vpop.f32.mrf.mxu0
      %v1145 = vadd.f32 0.0, %v1144
      %1146 = vmatmul.f32.gmra.mxu0 %v636
      %v1147 = vpop.f32.mrf.mxu0
      %v1148 = vadd.f32 0.0, %v1147
      %1149 = vmatmul.f32.gmra.mxu0 %v639
      %v1150 = vpop.f32.mrf.mxu0
      %v1151 = vadd.f32 0.0, %v1150
      %1152 = vmatmul.f32.gmra.mxu0 %v642
      %v1153 = vpop.f32.mrf.mxu0
      %v1154 = vadd.f32 0.0, %v1153
      %1155 = vmatmul.f32.gmra.mxu0 %v645
      %v1156 = vpop.f32.mrf.mxu0
      %v1157 = vadd.f32 0.0, %v1156
      %1158 = vmatmul.f32.gmra.mxu0 %v648
      %v1159 = vpop.f32.mrf.mxu0
      %v1160 = vadd.f32 0.0, %v1159
      %1161 = vmatmul.f32.gmra.mxu0 %v651
      %v1162 = vpop.f32.mrf.mxu0
      %v1163 = vadd.f32 0.0, %v1162
      %1164 = vmatmul.f32.gmra.mxu0 %v654
      %v1165 = vpop.f32.mrf.mxu0
      %v1166 = vadd.f32 0.0, %v1165
      %1167 = vmatmul.f32.gmra.mxu0 %v657
      %v1168 = vpop.f32.mrf.mxu0
      %v1169 = vadd.f32 0.0, %v1168
      %1170 = vmatmul.f32.gmra.mxu0 %v660
      %v1171 = vpop.f32.mrf.mxu0
      %v1172 = vadd.f32 0.0, %v1171
      %1173 = vmatmul.f32.gmra.mxu0 %v663
      %v1174 = vpop.f32.mrf.mxu0
      %v1175 = vadd.f32 0.0, %v1174
      %1176 = vmatmul.f32.gmra.mxu0 %v666
      %v1177 = vpop.f32.mrf.mxu0
      %v1178 = vadd.f32 0.0, %v1177
      %1179 = vmatmul.f32.gmra.mxu0 %v669
      %v1180 = vpop.f32.mrf.mxu0
      %v1181 = vadd.f32 0.0, %v1180
      %1182 = vdwg.mxu0
      %v1183 = vld [vmem:[%s3] sm:$0xf]
      %v1184 = vld [vmem:[%s3 + $0x4] sm:$0xf]
      %v1185 = vld [vmem:[%s3 + $0x8] sm:$0xf]
      %v1186 = vld [vmem:[%s3 + $0xc] sm:$0xf]
      %v1187 = vld [vmem:[%s3 + $0x10] sm:$0xf]
      %v1188 = vld [vmem:[%s3 + $0x14] sm:$0xf]
      %v1189 = vld [vmem:[%s3 + $0x18] sm:$0xf]
      %v1190 = vld [vmem:[%s3 + $0x1c] sm:$0xf]
      %v1191 = vld [vmem:[%s3 + $0x20] sm:$0xf]
      %v1192 = vld [vmem:[%s3 + $0x24] sm:$0xf]
      %v1193 = vld [vmem:[%s3 + $0x28] sm:$0xf]
      %v1194 = vld [vmem:[%s3 + $0x2c] sm:$0xf]
      %v1195 = vld [vmem:[%s3 + $0x30] sm:$0xf]
      %v1196 = vld [vmem:[%s3 + $0x34] sm:$0xf]
      %v1197 = vld [vmem:[%s3 + $0x38] sm:$0xf]
      %v1198 = vld [vmem:[%s3 + $0x3c] sm:$0xf]
      %v1199 = vld [vmem:[%s3 + $0x40] sm:$0xf]
      %v1200 = vld [vmem:[%s3 + $0x44] sm:$0xf]
      %v1201 = vld [vmem:[%s3 + $0x48] sm:$0xf]
      %v1202 = vld [vmem:[%s3 + $0x4c] sm:$0xf]
      %v1203 = vld [vmem:[%s3 + $0x50] sm:$0xf]
      %v1204 = vld [vmem:[%s3 + $0x54] sm:$0xf]
      %v1205 = vld [vmem:[%s3 + $0x58] sm:$0xf]
      %v1206 = vld [vmem:[%s3 + $0x5c] sm:$0xf]
      %v1207 = vld [vmem:[%s3 + $0x60] sm:$0xf]
      %v1208 = vld [vmem:[%s3 + $0x64] sm:$0xf]
      %v1209 = vld [vmem:[%s3 + $0x68] sm:$0xf]
      %v1210 = vld [vmem:[%s3 + $0x6c] sm:$0xf]
      %v1211 = vld [vmem:[%s3 + $0x70] sm:$0xf]
      %v1212 = vld [vmem:[%s3 + $0x74] sm:$0xf]
      %v1213 = vld [vmem:[%s3 + $0x78] sm:$0xf]
      %v1214 = vld [vmem:[%s3 + $0x7c] sm:$0xf]
      %v1215 = vld [vmem:[%s3 + $0x80] sm:$0xf]
      %v1216 = vld [vmem:[%s3 + $0x84] sm:$0xf]
      %v1217 = vld [vmem:[%s3 + $0x88] sm:$0xf]
      %v1218 = vld [vmem:[%s3 + $0x8c] sm:$0xf]
      %v1219 = vld [vmem:[%s3 + $0x90] sm:$0xf]
      %v1220 = vld [vmem:[%s3 + $0x94] sm:$0xf]
      %v1221 = vld [vmem:[%s3 + $0x98] sm:$0xf]
      %v1222 = vld [vmem:[%s3 + $0x9c] sm:$0xf]
      %v1223 = vld [vmem:[%s3 + $0xa0] sm:$0xf]
      %v1224 = vld [vmem:[%s3 + $0xa4] sm:$0xf]
      %v1225 = vld [vmem:[%s3 + $0xa8] sm:$0xf]
      %v1226 = vld [vmem:[%s3 + $0xac] sm:$0xf]
      %v1227 = vld [vmem:[%s3 + $0xb0] sm:$0xf]
      %v1228 = vld [vmem:[%s3 + $0xb4] sm:$0xf]
      %v1229 = vld [vmem:[%s3 + $0xb8] sm:$0xf]
      %v1230 = vld [vmem:[%s3 + $0xbc] sm:$0xf]
      %v1231 = vld [vmem:[%s3 + $0xc0] sm:$0xf]
      %v1232 = vld [vmem:[%s3 + $0xc4] sm:$0xf]
      %v1233 = vld [vmem:[%s3 + $0xc8] sm:$0xf]
      %v1234 = vld [vmem:[%s3 + $0xcc] sm:$0xf]
      %v1235 = vld [vmem:[%s3 + $0xd0] sm:$0xf]
      %v1236 = vld [vmem:[%s3 + $0xd4] sm:$0xf]
      %v1237 = vld [vmem:[%s3 + $0xd8] sm:$0xf]
      %v1238 = vld [vmem:[%s3 + $0xdc] sm:$0xf]
      %v1239 = vld [vmem:[%s3 + $0xe0] sm:$0xf]
      %v1240 = vld [vmem:[%s3 + $0xe4] sm:$0xf]
      %v1241 = vld [vmem:[%s3 + $0xe8] sm:$0xf]
      %v1242 = vld [vmem:[%s3 + $0xec] sm:$0xf]
      %v1243 = vld [vmem:[%s3 + $0xf0] sm:$0xf]
      %v1244 = vld [vmem:[%s3 + $0xf4] sm:$0xf]
      %v1245 = vld [vmem:[%s3 + $0xf8] sm:$0xf]
      %v1246 = vld [vmem:[%s3 + $0xfc] sm:$0xf]
      %v1247 = vld [vmem:[%s3 + $0x100] sm:$0xf]
      %v1248 = vld [vmem:[%s3 + $0x104] sm:$0xf]
      %v1249 = vld [vmem:[%s3 + $0x108] sm:$0xf]
      %v1250 = vld [vmem:[%s3 + $0x10c] sm:$0xf]
      %v1251 = vld [vmem:[%s3 + $0x110] sm:$0xf]
      %v1252 = vld [vmem:[%s3 + $0x114] sm:$0xf]
      %v1253 = vld [vmem:[%s3 + $0x118] sm:$0xf]
      %v1254 = vld [vmem:[%s3 + $0x11c] sm:$0xf]
      %v1255 = vld [vmem:[%s3 + $0x120] sm:$0xf]
      %v1256 = vld [vmem:[%s3 + $0x124] sm:$0xf]
      %v1257 = vld [vmem:[%s3 + $0x128] sm:$0xf]
      %v1258 = vld [vmem:[%s3 + $0x12c] sm:$0xf]
      %v1259 = vld [vmem:[%s3 + $0x130] sm:$0xf]
      %v1260 = vld [vmem:[%s3 + $0x134] sm:$0xf]
      %v1261 = vld [vmem:[%s3 + $0x138] sm:$0xf]
      %v1262 = vld [vmem:[%s3 + $0x13c] sm:$0xf]
      %v1263 = vld [vmem:[%s3 + $0x140] sm:$0xf]
      %v1264 = vld [vmem:[%s3 + $0x144] sm:$0xf]
      %v1265 = vld [vmem:[%s3 + $0x148] sm:$0xf]
      %v1266 = vld [vmem:[%s3 + $0x14c] sm:$0xf]
      %v1267 = vld [vmem:[%s3 + $0x150] sm:$0xf]
      %v1268 = vld [vmem:[%s3 + $0x154] sm:$0xf]
      %v1269 = vld [vmem:[%s3 + $0x158] sm:$0xf]
      %v1270 = vld [vmem:[%s3 + $0x15c] sm:$0xf]
      %v1271 = vld [vmem:[%s3 + $0x160] sm:$0xf]
      %v1272 = vld [vmem:[%s3 + $0x164] sm:$0xf]
      %v1273 = vld [vmem:[%s3 + $0x168] sm:$0xf]
      %v1274 = vld [vmem:[%s3 + $0x16c] sm:$0xf]
      %v1275 = vld [vmem:[%s3 + $0x170] sm:$0xf]
      %v1276 = vld [vmem:[%s3 + $0x174] sm:$0xf]
      %v1277 = vld [vmem:[%s3 + $0x178] sm:$0xf]
      %v1278 = vld [vmem:[%s3 + $0x17c] sm:$0xf]
      %v1279 = vld [vmem:[%s3 + $0x180] sm:$0xf]
      %v1280 = vld [vmem:[%s3 + $0x184] sm:$0xf]
      %v1281 = vunpack.c.l.bf16 %v1183
      %v1282 = vunpack.c.l.bf16 %v1184
      %v1283 = vunpack.c.l.bf16 %v1185
      %v1284 = vunpack.c.l.bf16 %v1186
      %v1285 = vunpack.c.l.bf16 %v1187
      %v1286 = vunpack.c.l.bf16 %v1188
      %v1287 = vunpack.c.l.bf16 %v1189
      %v1288 = vunpack.c.l.bf16 %v1190
      %v1289 = vunpack.c.l.bf16 %v1191
      %v1290 = vunpack.c.l.bf16 %v1192
      %v1291 = vunpack.c.l.bf16 %v1193
      %v1292 = vunpack.c.l.bf16 %v1194
      %v1293 = vunpack.c.l.bf16 %v1195
      %v1294 = vunpack.c.l.bf16 %v1196
      %v1295 = vunpack.c.l.bf16 %v1197
      %v1296 = vunpack.c.l.bf16 %v1198
      %v1297 = vunpack.c.l.bf16 %v1199
      %v1298 = vunpack.c.l.bf16 %v1200
      %v1299 = vunpack.c.l.bf16 %v1201
      %v1300 = vunpack.c.l.bf16 %v1202
      %v1301 = vunpack.c.l.bf16 %v1203
      %v1302 = vunpack.c.l.bf16 %v1204
      %v1303 = vunpack.c.l.bf16 %v1205
      %v1304 = vunpack.c.l.bf16 %v1206
      %v1305 = vunpack.c.l.bf16 %v1207
      %v1306 = vunpack.c.l.bf16 %v1208
      %v1307 = vunpack.c.l.bf16 %v1209
      %v1308 = vunpack.c.l.bf16 %v1210
      %v1309 = vunpack.c.l.bf16 %v1211
      %v1310 = vunpack.c.l.bf16 %v1212
      %v1311 = vunpack.c.l.bf16 %v1213
      %v1312 = vunpack.c.l.bf16 %v1214
      %v1313 = vunpack.c.l.bf16 %v1215
      %v1314 = vunpack.c.l.bf16 %v1216
      %v1315 = vunpack.c.l.bf16 %v1217
      %v1316 = vunpack.c.l.bf16 %v1218
      %v1317 = vunpack.c.l.bf16 %v1219
      %v1318 = vunpack.c.l.bf16 %v1220
      %v1319 = vunpack.c.l.bf16 %v1221
      %v1320 = vunpack.c.l.bf16 %v1222
      %v1321 = vunpack.c.l.bf16 %v1223
      %v1322 = vunpack.c.l.bf16 %v1224
      %v1323 = vunpack.c.l.bf16 %v1225
      %v1324 = vunpack.c.l.bf16 %v1226
      %v1325 = vunpack.c.l.bf16 %v1227
      %v1326 = vunpack.c.l.bf16 %v1228
      %v1327 = vunpack.c.l.bf16 %v1229
      %v1328 = vunpack.c.l.bf16 %v1230
      %v1329 = vunpack.c.l.bf16 %v1231
      %v1330 = vunpack.c.l.bf16 %v1232
      %v1331 = vunpack.c.l.bf16 %v1233
      %v1332 = vunpack.c.l.bf16 %v1234
      %v1333 = vunpack.c.l.bf16 %v1235
      %v1334 = vunpack.c.l.bf16 %v1236
      %v1335 = vunpack.c.l.bf16 %v1237
      %v1336 = vunpack.c.l.bf16 %v1238
      %v1337 = vunpack.c.l.bf16 %v1239
      %v1338 = vunpack.c.l.bf16 %v1240
      %v1339 = vunpack.c.l.bf16 %v1241
      %v1340 = vunpack.c.l.bf16 %v1242
      %v1341 = vunpack.c.l.bf16 %v1243
      %v1342 = vunpack.c.l.bf16 %v1244
      %v1343 = vunpack.c.l.bf16 %v1245
      %v1344 = vunpack.c.l.bf16 %v1246
      %v1345 = vunpack.c.l.bf16 %v1247
      %v1346 = vunpack.c.l.bf16 %v1248
      %v1347 = vunpack.c.l.bf16 %v1249
      %v1348 = vunpack.c.l.bf16 %v1250
      %v1349 = vunpack.c.l.bf16 %v1251
      %v1350 = vunpack.c.l.bf16 %v1252
      %v1351 = vunpack.c.l.bf16 %v1253
      %v1352 = vunpack.c.l.bf16 %v1254
      %v1353 = vunpack.c.l.bf16 %v1255
      %v1354 = vunpack.c.l.bf16 %v1256
      %v1355 = vunpack.c.l.bf16 %v1257
      %v1356 = vunpack.c.l.bf16 %v1258
      %v1357 = vunpack.c.l.bf16 %v1259
      %v1358 = vunpack.c.l.bf16 %v1260
      %v1359 = vunpack.c.l.bf16 %v1261
      %v1360 = vunpack.c.l.bf16 %v1262
      %v1361 = vunpack.c.l.bf16 %v1263
      %v1362 = vunpack.c.l.bf16 %v1264
      %v1363 = vunpack.c.l.bf16 %v1265
      %v1364 = vunpack.c.l.bf16 %v1266
      %v1365 = vunpack.c.l.bf16 %v1267
      %v1366 = vunpack.c.l.bf16 %v1268
      %v1367 = vunpack.c.l.bf16 %v1269
      %v1368 = vunpack.c.l.bf16 %v1270
      %v1369 = vunpack.c.l.bf16 %v1271
      %v1370 = vunpack.c.l.bf16 %v1272
      %v1371 = vunpack.c.l.bf16 %v1273
      %v1372 = vunpack.c.l.bf16 %v1274
      %v1373 = vunpack.c.l.bf16 %v1275
      %v1374 = vunpack.c.l.bf16 %v1276
      %v1375 = vunpack.c.l.bf16 %v1277
      %v1376 = vunpack.c.l.bf16 %v1278
      %v1377 = vunpack.c.l.bf16 %v1279
      %v1378 = vunpack.c.l.bf16 %v1280
      %s1379 = scalar_lea.vmem %s3, 392
      %v1380 = vld [vmem:[%s1379] sm:$0xf]
      %v1381 = vld [vmem:[%s1379 + $0x4] sm:$0xf]
      %v1382 = vld [vmem:[%s1379 + $0x8] sm:$0xf]
      %v1383 = vld [vmem:[%s1379 + $0xc] sm:$0xf]
      %v1384 = vld [vmem:[%s1379 + $0x10] sm:$0xf]
      %v1385 = vld [vmem:[%s1379 + $0x14] sm:$0xf]
      %v1386 = vld [vmem:[%s1379 + $0x18] sm:$0xf]
      %v1387 = vld [vmem:[%s1379 + $0x1c] sm:$0xf]
      %v1388 = vld [vmem:[%s1379 + $0x20] sm:$0xf]
      %v1389 = vld [vmem:[%s1379 + $0x24] sm:$0xf]
      %v1390 = vld [vmem:[%s1379 + $0x28] sm:$0xf]
      %v1391 = vld [vmem:[%s1379 + $0x2c] sm:$0xf]
      %v1392 = vld [vmem:[%s1379 + $0x30] sm:$0xf]
      %v1393 = vld [vmem:[%s1379 + $0x34] sm:$0xf]
      %v1394 = vld [vmem:[%s1379 + $0x38] sm:$0xf]
      %v1395 = vld [vmem:[%s1379 + $0x3c] sm:$0xf]
      %v1396 = vld [vmem:[%s1379 + $0x40] sm:$0xf]
      %v1397 = vld [vmem:[%s1379 + $0x44] sm:$0xf]
      %v1398 = vld [vmem:[%s1379 + $0x48] sm:$0xf]
      %v1399 = vld [vmem:[%s1379 + $0x4c] sm:$0xf]
      %v1400 = vld [vmem:[%s1379 + $0x50] sm:$0xf]
      %v1401 = vld [vmem:[%s1379 + $0x54] sm:$0xf]
      %v1402 = vld [vmem:[%s1379 + $0x58] sm:$0xf]
      %v1403 = vld [vmem:[%s1379 + $0x5c] sm:$0xf]
      %v1404 = vld [vmem:[%s1379 + $0x60] sm:$0xf]
      %v1405 = vld [vmem:[%s1379 + $0x64] sm:$0xf]
      %v1406 = vld [vmem:[%s1379 + $0x68] sm:$0xf]
      %v1407 = vld [vmem:[%s1379 + $0x6c] sm:$0xf]
      %v1408 = vld [vmem:[%s1379 + $0x70] sm:$0xf]
      %v1409 = vld [vmem:[%s1379 + $0x74] sm:$0xf]
      %v1410 = vld [vmem:[%s1379 + $0x78] sm:$0xf]
      %v1411 = vld [vmem:[%s1379 + $0x7c] sm:$0xf]
      %v1412 = vld [vmem:[%s1379 + $0x80] sm:$0xf]
      %v1413 = vld [vmem:[%s1379 + $0x84] sm:$0xf]
      %v1414 = vld [vmem:[%s1379 + $0x88] sm:$0xf]
      %v1415 = vld [vmem:[%s1379 + $0x8c] sm:$0xf]
      %v1416 = vld [vmem:[%s1379 + $0x90] sm:$0xf]
      %v1417 = vld [vmem:[%s1379 + $0x94] sm:$0xf]
      %v1418 = vld [vmem:[%s1379 + $0x98] sm:$0xf]
      %v1419 = vld [vmem:[%s1379 + $0x9c] sm:$0xf]
      %v1420 = vld [vmem:[%s1379 + $0xa0] sm:$0xf]
      %v1421 = vld [vmem:[%s1379 + $0xa4] sm:$0xf]
      %v1422 = vld [vmem:[%s1379 + $0xa8] sm:$0xf]
      %v1423 = vld [vmem:[%s1379 + $0xac] sm:$0xf]
      %v1424 = vld [vmem:[%s1379 + $0xb0] sm:$0xf]
      %v1425 = vld [vmem:[%s1379 + $0xb4] sm:$0xf]
      %v1426 = vld [vmem:[%s1379 + $0xb8] sm:$0xf]
      %v1427 = vld [vmem:[%s1379 + $0xbc] sm:$0xf]
      %v1428 = vld [vmem:[%s1379 + $0xc0] sm:$0xf]
      %v1429 = vld [vmem:[%s1379 + $0xc4] sm:$0xf]
      %v1430 = vld [vmem:[%s1379 + $0xc8] sm:$0xf]
      %v1431 = vld [vmem:[%s1379 + $0xcc] sm:$0xf]
      %v1432 = vld [vmem:[%s1379 + $0xd0] sm:$0xf]
      %v1433 = vld [vmem:[%s1379 + $0xd4] sm:$0xf]
      %v1434 = vld [vmem:[%s1379 + $0xd8] sm:$0xf]
      %v1435 = vld [vmem:[%s1379 + $0xdc] sm:$0xf]
      %v1436 = vld [vmem:[%s1379 + $0xe0] sm:$0xf]
      %v1437 = vld [vmem:[%s1379 + $0xe4] sm:$0xf]
      %v1438 = vld [vmem:[%s1379 + $0xe8] sm:$0xf]
      %v1439 = vld [vmem:[%s1379 + $0xec] sm:$0xf]
      %v1440 = vld [vmem:[%s1379 + $0xf0] sm:$0xf]
      %v1441 = vld [vmem:[%s1379 + $0xf4] sm:$0xf]
      %v1442 = vld [vmem:[%s1379 + $0xf8] sm:$0xf]
      %v1443 = vld [vmem:[%s1379 + $0xfc] sm:$0xf]
      %v1444 = vld [vmem:[%s1379 + $0x100] sm:$0xf]
      %v1445 = vld [vmem:[%s1379 + $0x104] sm:$0xf]
      %v1446 = vld [vmem:[%s1379 + $0x108] sm:$0xf]
      %v1447 = vld [vmem:[%s1379 + $0x10c] sm:$0xf]
      %v1448 = vld [vmem:[%s1379 + $0x110] sm:$0xf]
      %v1449 = vld [vmem:[%s1379 + $0x114] sm:$0xf]
      %v1450 = vld [vmem:[%s1379 + $0x118] sm:$0xf]
      %v1451 = vld [vmem:[%s1379 + $0x11c] sm:$0xf]
      %v1452 = vld [vmem:[%s1379 + $0x120] sm:$0xf]
      %v1453 = vld [vmem:[%s1379 + $0x124] sm:$0xf]
      %v1454 = vld [vmem:[%s1379 + $0x128] sm:$0xf]
      %v1455 = vld [vmem:[%s1379 + $0x12c] sm:$0xf]
      %v1456 = vld [vmem:[%s1379 + $0x130] sm:$0xf]
      %v1457 = vld [vmem:[%s1379 + $0x134] sm:$0xf]
      %v1458 = vld [vmem:[%s1379 + $0x138] sm:$0xf]
      %v1459 = vld [vmem:[%s1379 + $0x13c] sm:$0xf]
      %v1460 = vld [vmem:[%s1379 + $0x140] sm:$0xf]
      %v1461 = vld [vmem:[%s1379 + $0x144] sm:$0xf]
      %v1462 = vld [vmem:[%s1379 + $0x148] sm:$0xf]
      %v1463 = vld [vmem:[%s1379 + $0x14c] sm:$0xf]
      %v1464 = vld [vmem:[%s1379 + $0x150] sm:$0xf]
      %v1465 = vld [vmem:[%s1379 + $0x154] sm:$0xf]
      %v1466 = vld [vmem:[%s1379 + $0x158] sm:$0xf]
      %v1467 = vld [vmem:[%s1379 + $0x15c] sm:$0xf]
      %v1468 = vld [vmem:[%s1379 + $0x160] sm:$0xf]
      %v1469 = vld [vmem:[%s1379 + $0x164] sm:$0xf]
      %v1470 = vld [vmem:[%s1379 + $0x168] sm:$0xf]
      %v1471 = vld [vmem:[%s1379 + $0x16c] sm:$0xf]
      %v1472 = vld [vmem:[%s1379 + $0x170] sm:$0xf]
      %v1473 = vld [vmem:[%s1379 + $0x174] sm:$0xf]
      %v1474 = vld [vmem:[%s1379 + $0x178] sm:$0xf]
      %v1475 = vld [vmem:[%s1379 + $0x17c] sm:$0xf]
      %v1476 = vld [vmem:[%s1379 + $0x180] sm:$0xf]
      %v1477 = vld [vmem:[%s1379 + $0x184] sm:$0xf]
      %v1478 = vunpack.c.l.bf16 %v1380
      %v1479 = vunpack.c.l.bf16 %v1381
      %v1480 = vunpack.c.l.bf16 %v1382
      %v1481 = vunpack.c.l.bf16 %v1383
      %v1482 = vunpack.c.l.bf16 %v1384
      %v1483 = vunpack.c.l.bf16 %v1385
      %v1484 = vunpack.c.l.bf16 %v1386
      %v1485 = vunpack.c.l.bf16 %v1387
      %v1486 = vunpack.c.l.bf16 %v1388
      %v1487 = vunpack.c.l.bf16 %v1389
      %v1488 = vunpack.c.l.bf16 %v1390
      %v1489 = vunpack.c.l.bf16 %v1391
      %v1490 = vunpack.c.l.bf16 %v1392
      %v1491 = vunpack.c.l.bf16 %v1393
      %v1492 = vunpack.c.l.bf16 %v1394
      %v1493 = vunpack.c.l.bf16 %v1395
      %v1494 = vunpack.c.l.bf16 %v1396
      %v1495 = vunpack.c.l.bf16 %v1397
      %v1496 = vunpack.c.l.bf16 %v1398
      %v1497 = vunpack.c.l.bf16 %v1399
      %v1498 = vunpack.c.l.bf16 %v1400
      %v1499 = vunpack.c.l.bf16 %v1401
      %v1500 = vunpack.c.l.bf16 %v1402
      %v1501 = vunpack.c.l.bf16 %v1403
      %v1502 = vunpack.c.l.bf16 %v1404
      %v1503 = vunpack.c.l.bf16 %v1405
      %v1504 = vunpack.c.l.bf16 %v1406
      %v1505 = vunpack.c.l.bf16 %v1407
      %v1506 = vunpack.c.l.bf16 %v1408
      %v1507 = vunpack.c.l.bf16 %v1409
      %v1508 = vunpack.c.l.bf16 %v1410
      %v1509 = vunpack.c.l.bf16 %v1411
      %v1510 = vunpack.c.l.bf16 %v1412
      %v1511 = vunpack.c.l.bf16 %v1413
      %v1512 = vunpack.c.l.bf16 %v1414
      %v1513 = vunpack.c.l.bf16 %v1415
      %v1514 = vunpack.c.l.bf16 %v1416
      %v1515 = vunpack.c.l.bf16 %v1417
      %v1516 = vunpack.c.l.bf16 %v1418
      %v1517 = vunpack.c.l.bf16 %v1419
      %v1518 = vunpack.c.l.bf16 %v1420
      %v1519 = vunpack.c.l.bf16 %v1421
      %v1520 = vunpack.c.l.bf16 %v1422
      %v1521 = vunpack.c.l.bf16 %v1423
      %v1522 = vunpack.c.l.bf16 %v1424
      %v1523 = vunpack.c.l.bf16 %v1425
      %v1524 = vunpack.c.l.bf16 %v1426
      %v1525 = vunpack.c.l.bf16 %v1427
      %v1526 = vunpack.c.l.bf16 %v1428
      %v1527 = vunpack.c.l.bf16 %v1429
      %v1528 = vunpack.c.l.bf16 %v1430
      %v1529 = vunpack.c.l.bf16 %v1431
      %v1530 = vunpack.c.l.bf16 %v1432
      %v1531 = vunpack.c.l.bf16 %v1433
      %v1532 = vunpack.c.l.bf16 %v1434
      %v1533 = vunpack.c.l.bf16 %v1435
      %v1534 = vunpack.c.l.bf16 %v1436
      %v1535 = vunpack.c.l.bf16 %v1437
      %v1536 = vunpack.c.l.bf16 %v1438
      %v1537 = vunpack.c.l.bf16 %v1439
      %v1538 = vunpack.c.l.bf16 %v1440
      %v1539 = vunpack.c.l.bf16 %v1441
      %v1540 = vunpack.c.l.bf16 %v1442
      %v1541 = vunpack.c.l.bf16 %v1443
      %v1542 = vunpack.c.l.bf16 %v1444
      %v1543 = vunpack.c.l.bf16 %v1445
      %v1544 = vunpack.c.l.bf16 %v1446
      %v1545 = vunpack.c.l.bf16 %v1447
      %v1546 = vunpack.c.l.bf16 %v1448
      %v1547 = vunpack.c.l.bf16 %v1449
      %v1548 = vunpack.c.l.bf16 %v1450
      %v1549 = vunpack.c.l.bf16 %v1451
      %v1550 = vunpack.c.l.bf16 %v1452
      %v1551 = vunpack.c.l.bf16 %v1453
      %v1552 = vunpack.c.l.bf16 %v1454
      %v1553 = vunpack.c.l.bf16 %v1455
      %v1554 = vunpack.c.l.bf16 %v1456
      %v1555 = vunpack.c.l.bf16 %v1457
      %v1556 = vunpack.c.l.bf16 %v1458
      %v1557 = vunpack.c.l.bf16 %v1459
      %v1558 = vunpack.c.l.bf16 %v1460
      %v1559 = vunpack.c.l.bf16 %v1461
      %v1560 = vunpack.c.l.bf16 %v1462
      %v1561 = vunpack.c.l.bf16 %v1463
      %v1562 = vunpack.c.l.bf16 %v1464
      %v1563 = vunpack.c.l.bf16 %v1465
      %v1564 = vunpack.c.l.bf16 %v1466
      %v1565 = vunpack.c.l.bf16 %v1467
      %v1566 = vunpack.c.l.bf16 %v1468
      %v1567 = vunpack.c.l.bf16 %v1469
      %v1568 = vunpack.c.l.bf16 %v1470
      %v1569 = vunpack.c.l.bf16 %v1471
      %v1570 = vunpack.c.l.bf16 %v1472
      %v1571 = vunpack.c.l.bf16 %v1473
      %v1572 = vunpack.c.l.bf16 %v1474
      %v1573 = vunpack.c.l.bf16 %v1475
      %v1574 = vunpack.c.l.bf16 %v1476
      %v1575 = vunpack.c.l.bf16 %v1477
      %vm1576 = vcmask 130048
      %v1578 = vsel %vm1576, %v1136, 0
      %v1581 = vsel %vm1576, %v1139, 0
      %1583 = vmatpush.msra.mxu0 %v1493
      %1584 = vmatpush.msra.mxu0 %v1492
      %1585 = vmatpush.msra.mxu0 %v1491
      %1586 = vmatpush.msra.mxu0 %v1490
      %1587 = vmatpush.msra.mxu0 %v1489
      %1588 = vmatpush.msra.mxu0 %v1488
      %1589 = vmatpush.msra.mxu0 %v1487
      %1590 = vmatpush.msra.mxu0 %v1486
      %1591 = vmatpush.msra.mxu0 %v1485
      %1592 = vmatpush.msra.mxu0 %v1484
      %1593 = vmatpush.msra.mxu0 %v1483
      %1594 = vmatpush.msra.mxu0 %v1482
      %1595 = vmatpush.msra.mxu0 %v1481
      %1596 = vmatpush.msra.mxu0 %v1480
      %1597 = vmatpush.msra.mxu0 %v1479
      %1598 = vmatpush.msra.mxu0 %v1478
      %1599 = vmatmul.f32.gmra.mxu0 %v710
      %v1600 = vpop.f32.mrf.mxu0
      %v1601 = vadd.f32 0.0, %v1600
      %1602 = vmatmul.f32.gmra.mxu0 %v713
      %v1603 = vpop.f32.mrf.mxu0
      %v1604 = vadd.f32 0.0, %v1603
      %1605 = vdwg.mxu0
      %1606 = vmatpush.msra.mxu0 %v1509
      %1607 = vmatpush.msra.mxu0 %v1508
      %1608 = vmatpush.msra.mxu0 %v1507
      %1609 = vmatpush.msra.mxu0 %v1506
      %1610 = vmatpush.msra.mxu0 %v1505
      %1611 = vmatpush.msra.mxu0 %v1504
      %1612 = vmatpush.msra.mxu0 %v1503
      %1613 = vmatpush.msra.mxu0 %v1502
      %1614 = vmatpush.msra.mxu0 %v1501
      %1615 = vmatpush.msra.mxu0 %v1500
      %1616 = vmatpush.msra.mxu0 %v1499
      %1617 = vmatpush.msra.mxu0 %v1498
      %1618 = vmatpush.msra.mxu0 %v1497
      %1619 = vmatpush.msra.mxu0 %v1496
      %1620 = vmatpush.msra.mxu0 %v1495
      %1621 = vmatpush.msra.mxu0 %v1494
      %1622 = vmatmul.f32.gmra.mxu0 %v781
      %v1623 = vpop.f32.mrf.mxu0
      %v1624 = vadd.f32 %v1601, %v1623
      %1625 = vmatmul.f32.gmra.mxu0 %v784
      %v1626 = vpop.f32.mrf.mxu0
      %v1627 = vadd.f32 %v1604, %v1626
      %1628 = vdwg.mxu0
      %1629 = vmatpush.msra.mxu0 %v1525
      %1630 = vmatpush.msra.mxu0 %v1524
      %1631 = vmatpush.msra.mxu0 %v1523
      %1632 = vmatpush.msra.mxu0 %v1522
      %1633 = vmatpush.msra.mxu0 %v1521
      %1634 = vmatpush.msra.mxu0 %v1520
      %1635 = vmatpush.msra.mxu0 %v1519
      %1636 = vmatpush.msra.mxu0 %v1518
      %1637 = vmatpush.msra.mxu0 %v1517
      %1638 = vmatpush.msra.mxu0 %v1516
      %1639 = vmatpush.msra.mxu0 %v1515
      %1640 = vmatpush.msra.mxu0 %v1514
      %1641 = vmatpush.msra.mxu0 %v1513
      %1642 = vmatpush.msra.mxu0 %v1512
      %1643 = vmatpush.msra.mxu0 %v1511
      %1644 = vmatpush.msra.mxu0 %v1510
      %1645 = vmatmul.f32.gmra.mxu0 %v852
      %v1646 = vpop.f32.mrf.mxu0
      %v1647 = vadd.f32 %v1624, %v1646
      %1648 = vmatmul.f32.gmra.mxu0 %v855
      %v1649 = vpop.f32.mrf.mxu0
      %v1650 = vadd.f32 %v1627, %v1649
      %1651 = vdwg.mxu0
      %1652 = vmatpush.msra.mxu0 %v1541
      %1653 = vmatpush.msra.mxu0 %v1540
      %1654 = vmatpush.msra.mxu0 %v1539
      %1655 = vmatpush.msra.mxu0 %v1538
      %1656 = vmatpush.msra.mxu0 %v1537
      %1657 = vmatpush.msra.mxu0 %v1536
      %1658 = vmatpush.msra.mxu0 %v1535
      %1659 = vmatpush.msra.mxu0 %v1534
      %1660 = vmatpush.msra.mxu0 %v1533
      %1661 = vmatpush.msra.mxu0 %v1532
      %1662 = vmatpush.msra.mxu0 %v1531
      %1663 = vmatpush.msra.mxu0 %v1530
      %1664 = vmatpush.msra.mxu0 %v1529
      %1665 = vmatpush.msra.mxu0 %v1528
      %1666 = vmatpush.msra.mxu0 %v1527
      %1667 = vmatpush.msra.mxu0 %v1526
      %1668 = vmatmul.f32.gmra.mxu0 %v923
      %v1669 = vpop.f32.mrf.mxu0
      %v1670 = vadd.f32 %v1647, %v1669
      %1671 = vmatmul.f32.gmra.mxu0 %v926
      %v1672 = vpop.f32.mrf.mxu0
      %v1673 = vadd.f32 %v1650, %v1672
      %1674 = vdwg.mxu0
      %1675 = vmatpush.msra.mxu0 %v1557
      %1676 = vmatpush.msra.mxu0 %v1556
      %1677 = vmatpush.msra.mxu0 %v1555
      %1678 = vmatpush.msra.mxu0 %v1554
      %1679 = vmatpush.msra.mxu0 %v1553
      %1680 = vmatpush.msra.mxu0 %v1552
      %1681 = vmatpush.msra.mxu0 %v1551
      %1682 = vmatpush.msra.mxu0 %v1550
      %1683 = vmatpush.msra.mxu0 %v1549
      %1684 = vmatpush.msra.mxu0 %v1548
      %1685 = vmatpush.msra.mxu0 %v1547
      %1686 = vmatpush.msra.mxu0 %v1546
      %1687 = vmatpush.msra.mxu0 %v1545
      %1688 = vmatpush.msra.mxu0 %v1544
      %1689 = vmatpush.msra.mxu0 %v1543
      %1690 = vmatpush.msra.mxu0 %v1542
      %1691 = vmatmul.f32.gmra.mxu0 %v994
      %v1692 = vpop.f32.mrf.mxu0
      %v1693 = vadd.f32 %v1670, %v1692
      %1694 = vmatmul.f32.gmra.mxu0 %v997
      %v1695 = vpop.f32.mrf.mxu0
      %v1696 = vadd.f32 %v1673, %v1695
      %1697 = vdwg.mxu0
      %1698 = vmatpush.msra.mxu0 %v1573
      %1699 = vmatpush.msra.mxu0 %v1572
      %1700 = vmatpush.msra.mxu0 %v1571
      %1701 = vmatpush.msra.mxu0 %v1570
      %1702 = vmatpush.msra.mxu0 %v1569
      %1703 = vmatpush.msra.mxu0 %v1568
      %1704 = vmatpush.msra.mxu0 %v1567
      %1705 = vmatpush.msra.mxu0 %v1566
      %1706 = vmatpush.msra.mxu0 %v1565
      %1707 = vmatpush.msra.mxu0 %v1564
      %1708 = vmatpush.msra.mxu0 %v1563
      %1709 = vmatpush.msra.mxu0 %v1562
      %1710 = vmatpush.msra.mxu0 %v1561
      %1711 = vmatpush.msra.mxu0 %v1560
      %1712 = vmatpush.msra.mxu0 %v1559
      %1713 = vmatpush.msra.mxu0 %v1558
      %1714 = vmatmul.f32.gmra.mxu0 %v1065
      %v1715 = vpop.f32.mrf.mxu0
      %v1716 = vadd.f32 %v1693, %v1715
      %1717 = vmatmul.f32.gmra.mxu0 %v1068
      %v1718 = vpop.f32.mrf.mxu0
      %v1719 = vadd.f32 %v1696, %v1718
      %1720 = vdwg.mxu0
      %1721 = vmatpush.msra.mxu0 0.0
      %1722 = vmatpush.msra.mxu0 0.0
      %1723 = vmatpush.msra.mxu0 0.0
      %1724 = vmatpush.msra.mxu0 0.0
      %1725 = vmatpush.msra.mxu0 0.0
      %1726 = vmatpush.msra.mxu0 0.0
      %1727 = vmatpush.msra.mxu0 0.0
      %1728 = vmatpush.msra.mxu0 0.0
      %1729 = vmatpush.msra.mxu0 0.0
      %1730 = vmatpush.msra.mxu0 0.0
      %1731 = vmatpush.msra.mxu0 0.0
      %1732 = vmatpush.msra.mxu0 0.0
      %1733 = vmatpush.msra.mxu0 0.0
      %1734 = vmatpush.msra.mxu0 0.0
      %1735 = vmatpush.msra.mxu0 %v1575
      %1736 = vmatpush.msra.mxu0 %v1574
      %1737 = vmatmul.f32.gmra.mxu0 %v1578
      %v1738 = vpop.f32.mrf.mxu0
      %v1739 = vadd.f32 %v1716, %v1738
      %1740 = vmatmul.f32.gmra.mxu0 %v1581
      %v1741 = vpop.f32.mrf.mxu0
      %v1742 = vadd.f32 %v1719, %v1741
      %1743 = vdwg.mxu0
      %v1745 = vsel %vm1576, %v1130, 0
      %v1748 = vsel %vm1576, %v1133, 0
      %1750 = vmatpush.msra.mxu0 %v1296
      %1751 = vmatpush.msra.mxu0 %v1295
      %1752 = vmatpush.msra.mxu0 %v1294
      %1753 = vmatpush.msra.mxu0 %v1293
      %1754 = vmatpush.msra.mxu0 %v1292
      %1755 = vmatpush.msra.mxu0 %v1291
      %1756 = vmatpush.msra.mxu0 %v1290
      %1757 = vmatpush.msra.mxu0 %v1289
      %1758 = vmatpush.msra.mxu0 %v1288
      %1759 = vmatpush.msra.mxu0 %v1287
      %1760 = vmatpush.msra.mxu0 %v1286
      %1761 = vmatpush.msra.mxu0 %v1285
      %1762 = vmatpush.msra.mxu0 %v1284
      %1763 = vmatpush.msra.mxu0 %v1283
      %1764 = vmatpush.msra.mxu0 %v1282
      %1765 = vmatpush.msra.mxu0 %v1281
      %1766 = vmatmul.f32.gmra.mxu0 %v704
      %v1767 = vpop.f32.mrf.mxu0
      %v1768 = vadd.f32 %v1739, %v1767
      %1769 = vmatmul.f32.gmra.mxu0 %v707
      %v1770 = vpop.f32.mrf.mxu0
      %v1771 = vadd.f32 %v1742, %v1770
      %1772 = vdwg.mxu0
      %1773 = vmatpush.msra.mxu0 %v1312
      %1774 = vmatpush.msra.mxu0 %v1311
      %1775 = vmatpush.msra.mxu0 %v1310
      %1776 = vmatpush.msra.mxu0 %v1309
      %1777 = vmatpush.msra.mxu0 %v1308
      %1778 = vmatpush.msra.mxu0 %v1307
      %1779 = vmatpush.msra.mxu0 %v1306
      %1780 = vmatpush.msra.mxu0 %v1305
      %1781 = vmatpush.msra.mxu0 %v1304
      %1782 = vmatpush.msra.mxu0 %v1303
      %1783 = vmatpush.msra.mxu0 %v1302
      %1784 = vmatpush.msra.mxu0 %v1301
      %1785 = vmatpush.msra.mxu0 %v1300
      %1786 = vmatpush.msra.mxu0 %v1299
      %1787 = vmatpush.msra.mxu0 %v1298
      %1788 = vmatpush.msra.mxu0 %v1297
      %1789 = vmatmul.f32.gmra.mxu0 %v775
      %v1790 = vpop.f32.mrf.mxu0
      %v1791 = vadd.f32 %v1768, %v1790
      %1792 = vmatmul.f32.gmra.mxu0 %v778
      %v1793 = vpop.f32.mrf.mxu0
      %v1794 = vadd.f32 %v1771, %v1793
      %1795 = vdwg.mxu0
      %1796 = vmatpush.msra.mxu0 %v1328
      %1797 = vmatpush.msra.mxu0 %v1327
      %1798 = vmatpush.msra.mxu0 %v1326
      %1799 = vmatpush.msra.mxu0 %v1325
      %1800 = vmatpush.msra.mxu0 %v1324
      %1801 = vmatpush.msra.mxu0 %v1323
      %1802 = vmatpush.msra.mxu0 %v1322
      %1803 = vmatpush.msra.mxu0 %v1321
      %1804 = vmatpush.msra.mxu0 %v1320
      %1805 = vmatpush.msra.mxu0 %v1319
      %1806 = vmatpush.msra.mxu0 %v1318
      %1807 = vmatpush.msra.mxu0 %v1317
      %1808 = vmatpush.msra.mxu0 %v1316
      %1809 = vmatpush.msra.mxu0 %v1315
      %1810 = vmatpush.msra.mxu0 %v1314
      %1811 = vmatpush.msra.mxu0 %v1313
      %1812 = vmatmul.f32.gmra.mxu0 %v846
      %v1813 = vpop.f32.mrf.mxu0
      %v1814 = vadd.f32 %v1791, %v1813
      %1815 = vmatmul.f32.gmra.mxu0 %v849
      %v1816 = vpop.f32.mrf.mxu0
      %v1817 = vadd.f32 %v1794, %v1816
      %1818 = vdwg.mxu0
      %1819 = vmatpush.msra.mxu0 %v1344
      %1820 = vmatpush.msra.mxu0 %v1343
      %1821 = vmatpush.msra.mxu0 %v1342
      %1822 = vmatpush.msra.mxu0 %v1341
      %1823 = vmatpush.msra.mxu0 %v1340
      %1824 = vmatpush.msra.mxu0 %v1339
      %1825 = vmatpush.msra.mxu0 %v1338
      %1826 = vmatpush.msra.mxu0 %v1337
      %1827 = vmatpush.msra.mxu0 %v1336
      %1828 = vmatpush.msra.mxu0 %v1335
      %1829 = vmatpush.msra.mxu0 %v1334
      %1830 = vmatpush.msra.mxu0 %v1333
      %1831 = vmatpush.msra.mxu0 %v1332
      %1832 = vmatpush.msra.mxu0 %v1331
      %1833 = vmatpush.msra.mxu0 %v1330
      %1834 = vmatpush.msra.mxu0 %v1329
      %1835 = vmatmul.f32.gmra.mxu0 %v917
      %v1836 = vpop.f32.mrf.mxu0
      %v1837 = vadd.f32 %v1814, %v1836
      %1838 = vmatmul.f32.gmra.mxu0 %v920
      %v1839 = vpop.f32.mrf.mxu0
      %v1840 = vadd.f32 %v1817, %v1839
      %1841 = vdwg.mxu0
      %1842 = vmatpush.msra.mxu0 %v1360
      %1843 = vmatpush.msra.mxu0 %v1359
      %1844 = vmatpush.msra.mxu0 %v1358
      %1845 = vmatpush.msra.mxu0 %v1357
      %1846 = vmatpush.msra.mxu0 %v1356
      %1847 = vmatpush.msra.mxu0 %v1355
      %1848 = vmatpush.msra.mxu0 %v1354
      %1849 = vmatpush.msra.mxu0 %v1353
      %1850 = vmatpush.msra.mxu0 %v1352
      %1851 = vmatpush.msra.mxu0 %v1351
      %1852 = vmatpush.msra.mxu0 %v1350
      %1853 = vmatpush.msra.mxu0 %v1349
      %1854 = vmatpush.msra.mxu0 %v1348
      %1855 = vmatpush.msra.mxu0 %v1347
      %1856 = vmatpush.msra.mxu0 %v1346
      %1857 = vmatpush.msra.mxu0 %v1345
      %1858 = vmatmul.f32.gmra.mxu0 %v988
      %v1859 = vpop.f32.mrf.mxu0
      %v1860 = vadd.f32 %v1837, %v1859
      %1861 = vmatmul.f32.gmra.mxu0 %v991
      %v1862 = vpop.f32.mrf.mxu0
      %v1863 = vadd.f32 %v1840, %v1862
      %1864 = vdwg.mxu0
      %1865 = vmatpush.msra.mxu0 %v1376
      %1866 = vmatpush.msra.mxu0 %v1375
      %1867 = vmatpush.msra.mxu0 %v1374
      %1868 = vmatpush.msra.mxu0 %v1373
      %1869 = vmatpush.msra.mxu0 %v1372
      %1870 = vmatpush.msra.mxu0 %v1371
      %1871 = vmatpush.msra.mxu0 %v1370
      %1872 = vmatpush.msra.mxu0 %v1369
      %1873 = vmatpush.msra.mxu0 %v1368
      %1874 = vmatpush.msra.mxu0 %v1367
      %1875 = vmatpush.msra.mxu0 %v1366
      %1876 = vmatpush.msra.mxu0 %v1365
      %1877 = vmatpush.msra.mxu0 %v1364
      %1878 = vmatpush.msra.mxu0 %v1363
      %1879 = vmatpush.msra.mxu0 %v1362
      %1880 = vmatpush.msra.mxu0 %v1361
      %1881 = vmatmul.f32.gmra.mxu0 %v1059
      %v1882 = vpop.f32.mrf.mxu0
      %v1883 = vadd.f32 %v1860, %v1882
      %1884 = vmatmul.f32.gmra.mxu0 %v1062
      %v1885 = vpop.f32.mrf.mxu0
      %v1886 = vadd.f32 %v1863, %v1885
      %1887 = vdwg.mxu0
      %1888 = vmatpush.msra.mxu0 0.0
      %1889 = vmatpush.msra.mxu0 0.0
      %1890 = vmatpush.msra.mxu0 0.0
      %1891 = vmatpush.msra.mxu0 0.0
      %1892 = vmatpush.msra.mxu0 0.0
      %1893 = vmatpush.msra.mxu0 0.0
      %1894 = vmatpush.msra.mxu0 0.0
      %1895 = vmatpush.msra.mxu0 0.0
      %1896 = vmatpush.msra.mxu0 0.0
      %1897 = vmatpush.msra.mxu0 0.0
      %1898 = vmatpush.msra.mxu0 0.0
      %1899 = vmatpush.msra.mxu0 0.0
      %1900 = vmatpush.msra.mxu0 0.0
      %1901 = vmatpush.msra.mxu0 0.0
      %1902 = vmatpush.msra.mxu0 %v1378
      %1903 = vmatpush.msra.mxu0 %v1377
      %1904 = vmatmul.f32.gmra.mxu0 %v1745
      %v1905 = vpop.f32.mrf.mxu0
      %v1906 = vadd.f32 %v1883, %v1905
      %1907 = vmatmul.f32.gmra.mxu0 %v1748
      %v1908 = vpop.f32.mrf.mxu0
      %v1909 = vadd.f32 %v1886, %v1908
      %1910 = vdwg.mxu0
      %s1911 = scalar_lea.vmem %s3, 784
      %v1912 = vld [vmem:[%s1911] sm:$0xf]
      %v1913 = vld [vmem:[%s1911 + $0x4] sm:$0xf]
      %v1914 = vld [vmem:[%s1911 + $0x8] sm:$0xf]
      %v1915 = vld [vmem:[%s1911 + $0xc] sm:$0xf]
      %v1916 = vld [vmem:[%s1911 + $0x10] sm:$0xf]
      %v1917 = vld [vmem:[%s1911 + $0x14] sm:$0xf]
      %v1918 = vld [vmem:[%s1911 + $0x18] sm:$0xf]
      %v1919 = vld [vmem:[%s1911 + $0x1c] sm:$0xf]
      %v1920 = vld [vmem:[%s1911 + $0x20] sm:$0xf]
      %v1921 = vld [vmem:[%s1911 + $0x24] sm:$0xf]
      %v1922 = vld [vmem:[%s1911 + $0x28] sm:$0xf]
      %v1923 = vld [vmem:[%s1911 + $0x2c] sm:$0xf]
      %v1924 = vld [vmem:[%s1911 + $0x30] sm:$0xf]
      %v1925 = vld [vmem:[%s1911 + $0x34] sm:$0xf]
      %v1926 = vld [vmem:[%s1911 + $0x38] sm:$0xf]
      %v1927 = vld [vmem:[%s1911 + $0x3c] sm:$0xf]
      %v1928 = vld [vmem:[%s1911 + $0x40] sm:$0xf]
      %v1929 = vld [vmem:[%s1911 + $0x44] sm:$0xf]
      %v1930 = vld [vmem:[%s1911 + $0x48] sm:$0xf]
      %v1931 = vld [vmem:[%s1911 + $0x4c] sm:$0xf]
      %v1932 = vld [vmem:[%s1911 + $0x50] sm:$0xf]
      %v1933 = vld [vmem:[%s1911 + $0x54] sm:$0xf]
      %v1934 = vld [vmem:[%s1911 + $0x58] sm:$0xf]
      %v1935 = vld [vmem:[%s1911 + $0x5c] sm:$0xf]
      %v1936 = vld [vmem:[%s1911 + $0x60] sm:$0xf]
      %v1937 = vld [vmem:[%s1911 + $0x64] sm:$0xf]
      %v1938 = vld [vmem:[%s1911 + $0x68] sm:$0xf]
      %v1939 = vld [vmem:[%s1911 + $0x6c] sm:$0xf]
      %v1940 = vld [vmem:[%s1911 + $0x70] sm:$0xf]
      %v1941 = vld [vmem:[%s1911 + $0x74] sm:$0xf]
      %v1942 = vld [vmem:[%s1911 + $0x78] sm:$0xf]
      %v1943 = vld [vmem:[%s1911 + $0x7c] sm:$0xf]
      %v1944 = vld [vmem:[%s1911 + $0x80] sm:$0xf]
      %v1945 = vld [vmem:[%s1911 + $0x84] sm:$0xf]
      %v1946 = vld [vmem:[%s1911 + $0x88] sm:$0xf]
      %v1947 = vld [vmem:[%s1911 + $0x8c] sm:$0xf]
      %v1948 = vld [vmem:[%s1911 + $0x90] sm:$0xf]
      %v1949 = vld [vmem:[%s1911 + $0x94] sm:$0xf]
      %v1950 = vld [vmem:[%s1911 + $0x98] sm:$0xf]
      %v1951 = vld [vmem:[%s1911 + $0x9c] sm:$0xf]
      %v1952 = vld [vmem:[%s1911 + $0xa0] sm:$0xf]
      %v1953 = vld [vmem:[%s1911 + $0xa4] sm:$0xf]
      %v1954 = vld [vmem:[%s1911 + $0xa8] sm:$0xf]
      %v1955 = vld [vmem:[%s1911 + $0xac] sm:$0xf]
      %v1956 = vld [vmem:[%s1911 + $0xb0] sm:$0xf]
      %v1957 = vld [vmem:[%s1911 + $0xb4] sm:$0xf]
      %v1958 = vld [vmem:[%s1911 + $0xb8] sm:$0xf]
      %v1959 = vld [vmem:[%s1911 + $0xbc] sm:$0xf]
      %v1960 = vld [vmem:[%s1911 + $0xc0] sm:$0xf]
      %v1961 = vld [vmem:[%s1911 + $0xc4] sm:$0xf]
      %v1962 = vld [vmem:[%s1911 + $0xc8] sm:$0xf]
      %v1963 = vld [vmem:[%s1911 + $0xcc] sm:$0xf]
      %v1964 = vld [vmem:[%s1911 + $0xd0] sm:$0xf]
      %v1965 = vld [vmem:[%s1911 + $0xd4] sm:$0xf]
      %v1966 = vld [vmem:[%s1911 + $0xd8] sm:$0xf]
      %v1967 = vld [vmem:[%s1911 + $0xdc] sm:$0xf]
      %v1968 = vld [vmem:[%s1911 + $0xe0] sm:$0xf]
      %v1969 = vld [vmem:[%s1911 + $0xe4] sm:$0xf]
      %v1970 = vld [vmem:[%s1911 + $0xe8] sm:$0xf]
      %v1971 = vld [vmem:[%s1911 + $0xec] sm:$0xf]
      %v1972 = vld [vmem:[%s1911 + $0xf0] sm:$0xf]
      %v1973 = vld [vmem:[%s1911 + $0xf4] sm:$0xf]
      %v1974 = vld [vmem:[%s1911 + $0xf8] sm:$0xf]
      %v1975 = vld [vmem:[%s1911 + $0xfc] sm:$0xf]
      %v1976 = vld [vmem:[%s1911 + $0x100] sm:$0xf]
      %v1977 = vld [vmem:[%s1911 + $0x104] sm:$0xf]
      %v1978 = vld [vmem:[%s1911 + $0x108] sm:$0xf]
      %v1979 = vld [vmem:[%s1911 + $0x10c] sm:$0xf]
      %v1980 = vld [vmem:[%s1911 + $0x110] sm:$0xf]
      %v1981 = vld [vmem:[%s1911 + $0x114] sm:$0xf]
      %v1982 = vld [vmem:[%s1911 + $0x118] sm:$0xf]
      %v1983 = vld [vmem:[%s1911 + $0x11c] sm:$0xf]
      %v1984 = vld [vmem:[%s1911 + $0x120] sm:$0xf]
      %v1985 = vld [vmem:[%s1911 + $0x124] sm:$0xf]
      %v1986 = vld [vmem:[%s1911 + $0x128] sm:$0xf]
      %v1987 = vld [vmem:[%s1911 + $0x12c] sm:$0xf]
      %v1988 = vld [vmem:[%s1911 + $0x130] sm:$0xf]
      %v1989 = vld [vmem:[%s1911 + $0x134] sm:$0xf]
      %v1990 = vld [vmem:[%s1911 + $0x138] sm:$0xf]
      %v1991 = vld [vmem:[%s1911 + $0x13c] sm:$0xf]
      %v1992 = vld [vmem:[%s1911 + $0x140] sm:$0xf]
      %v1993 = vld [vmem:[%s1911 + $0x144] sm:$0xf]
      %v1994 = vld [vmem:[%s1911 + $0x148] sm:$0xf]
      %v1995 = vld [vmem:[%s1911 + $0x14c] sm:$0xf]
      %v1996 = vld [vmem:[%s1911 + $0x150] sm:$0xf]
      %v1997 = vld [vmem:[%s1911 + $0x154] sm:$0xf]
      %v1998 = vld [vmem:[%s1911 + $0x158] sm:$0xf]
      %v1999 = vld [vmem:[%s1911 + $0x15c] sm:$0xf]
      %v2000 = vld [vmem:[%s1911 + $0x160] sm:$0xf]
      %v2001 = vld [vmem:[%s1911 + $0x164] sm:$0xf]
      %v2002 = vld [vmem:[%s1911 + $0x168] sm:$0xf]
      %v2003 = vld [vmem:[%s1911 + $0x16c] sm:$0xf]
      %v2004 = vld [vmem:[%s1911 + $0x170] sm:$0xf]
      %v2005 = vld [vmem:[%s1911 + $0x174] sm:$0xf]
      %v2006 = vld [vmem:[%s1911 + $0x178] sm:$0xf]
      %v2007 = vld [vmem:[%s1911 + $0x17c] sm:$0xf]
      %v2008 = vld [vmem:[%s1911 + $0x180] sm:$0xf]
      %v2009 = vld [vmem:[%s1911 + $0x184] sm:$0xf]
      %v2010 = vunpack.c.l.bf16 %v1912
      %v2011 = vunpack.c.l.bf16 %v1913
      %v2012 = vunpack.c.l.bf16 %v1914
      %v2013 = vunpack.c.l.bf16 %v1915
      %v2014 = vunpack.c.l.bf16 %v1916
      %v2015 = vunpack.c.l.bf16 %v1917
      %v2016 = vunpack.c.l.bf16 %v1918
      %v2017 = vunpack.c.l.bf16 %v1919
      %v2018 = vunpack.c.l.bf16 %v1920
      %v2019 = vunpack.c.l.bf16 %v1921
      %v2020 = vunpack.c.l.bf16 %v1922
      %v2021 = vunpack.c.l.bf16 %v1923
      %v2022 = vunpack.c.l.bf16 %v1924
      %v2023 = vunpack.c.l.bf16 %v1925
      %v2024 = vunpack.c.l.bf16 %v1926
      %v2025 = vunpack.c.l.bf16 %v1927
      %v2026 = vunpack.c.l.bf16 %v1928
      %v2027 = vunpack.c.l.bf16 %v1929
      %v2028 = vunpack.c.l.bf16 %v1930
      %v2029 = vunpack.c.l.bf16 %v1931
      %v2030 = vunpack.c.l.bf16 %v1932
      %v2031 = vunpack.c.l.bf16 %v1933
      %v2032 = vunpack.c.l.bf16 %v1934
      %v2033 = vunpack.c.l.bf16 %v1935
      %v2034 = vunpack.c.l.bf16 %v1936
      %v2035 = vunpack.c.l.bf16 %v1937
      %v2036 = vunpack.c.l.bf16 %v1938
      %v2037 = vunpack.c.l.bf16 %v1939
      %v2038 = vunpack.c.l.bf16 %v1940
      %v2039 = vunpack.c.l.bf16 %v1941
      %v2040 = vunpack.c.l.bf16 %v1942
      %v2041 = vunpack.c.l.bf16 %v1943
      %v2042 = vunpack.c.l.bf16 %v1944
      %v2043 = vunpack.c.l.bf16 %v1945
      %v2044 = vunpack.c.l.bf16 %v1946
      %v2045 = vunpack.c.l.bf16 %v1947
      %v2046 = vunpack.c.l.bf16 %v1948
      %v2047 = vunpack.c.l.bf16 %v1949
      %v2048 = vunpack.c.l.bf16 %v1950
      %v2049 = vunpack.c.l.bf16 %v1951
      %v2050 = vunpack.c.l.bf16 %v1952
      %v2051 = vunpack.c.l.bf16 %v1953
      %v2052 = vunpack.c.l.bf16 %v1954
      %v2053 = vunpack.c.l.bf16 %v1955
      %v2054 = vunpack.c.l.bf16 %v1956
      %v2055 = vunpack.c.l.bf16 %v1957
      %v2056 = vunpack.c.l.bf16 %v1958
      %v2057 = vunpack.c.l.bf16 %v1959
      %v2058 = vunpack.c.l.bf16 %v1960
      %v2059 = vunpack.c.l.bf16 %v1961
      %v2060 = vunpack.c.l.bf16 %v1962
      %v2061 = vunpack.c.l.bf16 %v1963
      %v2062 = vunpack.c.l.bf16 %v1964
      %v2063 = vunpack.c.l.bf16 %v1965
      %v2064 = vunpack.c.l.bf16 %v1966
      %v2065 = vunpack.c.l.bf16 %v1967
      %v2066 = vunpack.c.l.bf16 %v1968
      %v2067 = vunpack.c.l.bf16 %v1969
      %v2068 = vunpack.c.l.bf16 %v1970
      %v2069 = vunpack.c.l.bf16 %v1971
      %v2070 = vunpack.c.l.bf16 %v1972
      %v2071 = vunpack.c.l.bf16 %v1973
      %v2072 = vunpack.c.l.bf16 %v1974
      %v2073 = vunpack.c.l.bf16 %v1975
      %v2074 = vunpack.c.l.bf16 %v1976
      %v2075 = vunpack.c.l.bf16 %v1977
      %v2076 = vunpack.c.l.bf16 %v1978
      %v2077 = vunpack.c.l.bf16 %v1979
      %v2078 = vunpack.c.l.bf16 %v1980
      %v2079 = vunpack.c.l.bf16 %v1981
      %v2080 = vunpack.c.l.bf16 %v1982
      %v2081 = vunpack.c.l.bf16 %v1983
      %v2082 = vunpack.c.l.bf16 %v1984
      %v2083 = vunpack.c.l.bf16 %v1985
      %v2084 = vunpack.c.l.bf16 %v1986
      %v2085 = vunpack.c.l.bf16 %v1987
      %v2086 = vunpack.c.l.bf16 %v1988
      %v2087 = vunpack.c.l.bf16 %v1989
      %v2088 = vunpack.c.l.bf16 %v1990
      %v2089 = vunpack.c.l.bf16 %v1991
      %v2090 = vunpack.c.l.bf16 %v1992
      %v2091 = vunpack.c.l.bf16 %v1993
      %v2092 = vunpack.c.l.bf16 %v1994
      %v2093 = vunpack.c.l.bf16 %v1995
      %v2094 = vunpack.c.l.bf16 %v1996
      %v2095 = vunpack.c.l.bf16 %v1997
      %v2096 = vunpack.c.l.bf16 %v1998
      %v2097 = vunpack.c.l.bf16 %v1999
      %v2098 = vunpack.c.l.bf16 %v2000
      %v2099 = vunpack.c.l.bf16 %v2001
      %v2100 = vunpack.c.l.bf16 %v2002
      %v2101 = vunpack.c.l.bf16 %v2003
      %v2102 = vunpack.c.l.bf16 %v2004
      %v2103 = vunpack.c.l.bf16 %v2005
      %v2104 = vunpack.c.l.bf16 %v2006
      %v2105 = vunpack.c.l.bf16 %v2007
      %v2106 = vunpack.c.l.bf16 %v2008
      %v2107 = vunpack.c.l.bf16 %v2009
      %v2109 = vsel %vm1576, %v1142, 0
      %v2112 = vsel %vm1576, %v1145, 0
      %2114 = vmatpush.msra.mxu0 %v2025
      %2115 = vmatpush.msra.mxu0 %v2024
      %2116 = vmatpush.msra.mxu0 %v2023
      %2117 = vmatpush.msra.mxu0 %v2022
      %2118 = vmatpush.msra.mxu0 %v2021
      %2119 = vmatpush.msra.mxu0 %v2020
      %2120 = vmatpush.msra.mxu0 %v2019
      %2121 = vmatpush.msra.mxu0 %v2018
      %2122 = vmatpush.msra.mxu0 %v2017
      %2123 = vmatpush.msra.mxu0 %v2016
      %2124 = vmatpush.msra.mxu0 %v2015
      %2125 = vmatpush.msra.mxu0 %v2014
      %2126 = vmatpush.msra.mxu0 %v2013
      %2127 = vmatpush.msra.mxu0 %v2012
      %2128 = vmatpush.msra.mxu0 %v2011
      %2129 = vmatpush.msra.mxu0 %v2010
      %2130 = vmatmul.f32.gmra.mxu0 %v716
      %v2131 = vpop.f32.mrf.mxu0
      %v2132 = vadd.f32 0.0, %v2131
      %2133 = vmatmul.f32.gmra.mxu0 %v719
      %v2134 = vpop.f32.mrf.mxu0
      %v2135 = vadd.f32 0.0, %v2134
      %2136 = vdwg.mxu0
      %2137 = vmatpush.msra.mxu0 %v2041
      %2138 = vmatpush.msra.mxu0 %v2040
      %2139 = vmatpush.msra.mxu0 %v2039
      %2140 = vmatpush.msra.mxu0 %v2038
      %2141 = vmatpush.msra.mxu0 %v2037
      %2142 = vmatpush.msra.mxu0 %v2036
      %2143 = vmatpush.msra.mxu0 %v2035
      %2144 = vmatpush.msra.mxu0 %v2034
      %2145 = vmatpush.msra.mxu0 %v2033
      %2146 = vmatpush.msra.mxu0 %v2032
      %2147 = vmatpush.msra.mxu0 %v2031
      %2148 = vmatpush.msra.mxu0 %v2030
      %2149 = vmatpush.msra.mxu0 %v2029
      %2150 = vmatpush.msra.mxu0 %v2028
      %2151 = vmatpush.msra.mxu0 %v2027
      %2152 = vmatpush.msra.mxu0 %v2026
      %2153 = vmatmul.f32.gmra.mxu0 %v787
      %v2154 = vpop.f32.mrf.mxu0
      %v2155 = vadd.f32 %v2132, %v2154
      %2156 = vmatmul.f32.gmra.mxu0 %v790
      %v2157 = vpop.f32.mrf.mxu0
      %v2158 = vadd.f32 %v2135, %v2157
      %2159 = vdwg.mxu0
      %2160 = vmatpush.msra.mxu0 %v2057
      %2161 = vmatpush.msra.mxu0 %v2056
      %2162 = vmatpush.msra.mxu0 %v2055
      %2163 = vmatpush.msra.mxu0 %v2054
      %2164 = vmatpush.msra.mxu0 %v2053
      %2165 = vmatpush.msra.mxu0 %v2052
      %2166 = vmatpush.msra.mxu0 %v2051
      %2167 = vmatpush.msra.mxu0 %v2050
      %2168 = vmatpush.msra.mxu0 %v2049
      %2169 = vmatpush.msra.mxu0 %v2048
      %2170 = vmatpush.msra.mxu0 %v2047
      %2171 = vmatpush.msra.mxu0 %v2046
      %2172 = vmatpush.msra.mxu0 %v2045
      %2173 = vmatpush.msra.mxu0 %v2044
      %2174 = vmatpush.msra.mxu0 %v2043
      %2175 = vmatpush.msra.mxu0 %v2042
      %2176 = vmatmul.f32.gmra.mxu0 %v858
      %v2177 = vpop.f32.mrf.mxu0
      %v2178 = vadd.f32 %v2155, %v2177
      %2179 = vmatmul.f32.gmra.mxu0 %v861
      %v2180 = vpop.f32.mrf.mxu0
      %v2181 = vadd.f32 %v2158, %v2180
      %2182 = vdwg.mxu0
      %2183 = vmatpush.msra.mxu0 %v2073
      %2184 = vmatpush.msra.mxu0 %v2072
      %2185 = vmatpush.msra.mxu0 %v2071
      %2186 = vmatpush.msra.mxu0 %v2070
      %2187 = vmatpush.msra.mxu0 %v2069
      %2188 = vmatpush.msra.mxu0 %v2068
      %2189 = vmatpush.msra.mxu0 %v2067
      %2190 = vmatpush.msra.mxu0 %v2066
      %2191 = vmatpush.msra.mxu0 %v2065
      %2192 = vmatpush.msra.mxu0 %v2064
      %2193 = vmatpush.msra.mxu0 %v2063
      %2194 = vmatpush.msra.mxu0 %v2062
      %2195 = vmatpush.msra.mxu0 %v2061
      %2196 = vmatpush.msra.mxu0 %v2060
      %2197 = vmatpush.msra.mxu0 %v2059
      %2198 = vmatpush.msra.mxu0 %v2058
      %2199 = vmatmul.f32.gmra.mxu0 %v929
      %v2200 = vpop.f32.mrf.mxu0
      %v2201 = vadd.f32 %v2178, %v2200
      %2202 = vmatmul.f32.gmra.mxu0 %v932
      %v2203 = vpop.f32.mrf.mxu0
      %v2204 = vadd.f32 %v2181, %v2203
      %2205 = vdwg.mxu0
      %2206 = vmatpush.msra.mxu0 %v2089
      %2207 = vmatpush.msra.mxu0 %v2088
      %2208 = vmatpush.msra.mxu0 %v2087
      %2209 = vmatpush.msra.mxu0 %v2086
      %2210 = vmatpush.msra.mxu0 %v2085
      %2211 = vmatpush.msra.mxu0 %v2084
      %2212 = vmatpush.msra.mxu0 %v2083
      %2213 = vmatpush.msra.mxu0 %v2082
      %2214 = vmatpush.msra.mxu0 %v2081
      %2215 = vmatpush.msra.mxu0 %v2080
      %2216 = vmatpush.msra.mxu0 %v2079
      %2217 = vmatpush.msra.mxu0 %v2078
      %2218 = vmatpush.msra.mxu0 %v2077
      %2219 = vmatpush.msra.mxu0 %v2076
      %2220 = vmatpush.msra.mxu0 %v2075
      %2221 = vmatpush.msra.mxu0 %v2074
      %2222 = vmatmul.f32.gmra.mxu0 %v1000
      %v2223 = vpop.f32.mrf.mxu0
      %v2224 = vadd.f32 %v2201, %v2223
      %2225 = vmatmul.f32.gmra.mxu0 %v1003
      %v2226 = vpop.f32.mrf.mxu0
      %v2227 = vadd.f32 %v2204, %v2226
      %2228 = vdwg.mxu0
      %2229 = vmatpush.msra.mxu0 %v2105
      %2230 = vmatpush.msra.mxu0 %v2104
      %2231 = vmatpush.msra.mxu0 %v2103
      %2232 = vmatpush.msra.mxu0 %v2102
      %2233 = vmatpush.msra.mxu0 %v2101
      %2234 = vmatpush.msra.mxu0 %v2100
      %2235 = vmatpush.msra.mxu0 %v2099
      %2236 = vmatpush.msra.mxu0 %v2098
      %2237 = vmatpush.msra.mxu0 %v2097
      %2238 = vmatpush.msra.mxu0 %v2096
      %2239 = vmatpush.msra.mxu0 %v2095
      %2240 = vmatpush.msra.mxu0 %v2094
      %2241 = vmatpush.msra.mxu0 %v2093
      %2242 = vmatpush.msra.mxu0 %v2092
      %2243 = vmatpush.msra.mxu0 %v2091
      %2244 = vmatpush.msra.mxu0 %v2090
      %2245 = vmatmul.f32.gmra.mxu0 %v1071
      %v2246 = vpop.f32.mrf.mxu0
      %v2247 = vadd.f32 %v2224, %v2246
      %2248 = vmatmul.f32.gmra.mxu0 %v1074
      %v2249 = vpop.f32.mrf.mxu0
      %v2250 = vadd.f32 %v2227, %v2249
      %2251 = vdwg.mxu0
      %2252 = vmatpush.msra.mxu0 0.0
      %2253 = vmatpush.msra.mxu0 0.0
      %2254 = vmatpush.msra.mxu0 0.0
      %2255 = vmatpush.msra.mxu0 0.0
      %2256 = vmatpush.msra.mxu0 0.0
      %2257 = vmatpush.msra.mxu0 0.0
      %2258 = vmatpush.msra.mxu0 0.0
      %2259 = vmatpush.msra.mxu0 0.0
      %2260 = vmatpush.msra.mxu0 0.0
      %2261 = vmatpush.msra.mxu0 0.0
      %2262 = vmatpush.msra.mxu0 0.0
      %2263 = vmatpush.msra.mxu0 0.0
      %2264 = vmatpush.msra.mxu0 0.0
      %2265 = vmatpush.msra.mxu0 0.0
      %2266 = vmatpush.msra.mxu0 %v2107
      %2267 = vmatpush.msra.mxu0 %v2106
      %2268 = vmatmul.f32.gmra.mxu0 %v2109
      %v2269 = vpop.f32.mrf.mxu0
      %v2270 = vadd.f32 %v2247, %v2269
      %2271 = vmatmul.f32.gmra.mxu0 %v2112
      %v2272 = vpop.f32.mrf.mxu0
      %v2273 = vadd.f32 %v2250, %v2272
      %2274 = vdwg.mxu0
      %v2275 = vadd.f32 %v1906, %v2270
      %v2276 = vadd.f32 %v1909, %v2273
      %s2277 = scalar_lea.vmem %s3, 1176
      %v2278 = vld [vmem:[%s2277] sm:$0xf]
      %v2279 = vld [vmem:[%s2277 + $0x4] sm:$0xf]
      %v2280 = vld [vmem:[%s2277 + $0x8] sm:$0xf]
      %v2281 = vld [vmem:[%s2277 + $0xc] sm:$0xf]
      %v2282 = vld [vmem:[%s2277 + $0x10] sm:$0xf]
      %v2283 = vld [vmem:[%s2277 + $0x14] sm:$0xf]
      %v2284 = vld [vmem:[%s2277 + $0x18] sm:$0xf]
      %v2285 = vld [vmem:[%s2277 + $0x1c] sm:$0xf]
      %v2286 = vld [vmem:[%s2277 + $0x20] sm:$0xf]
      %v2287 = vld [vmem:[%s2277 + $0x24] sm:$0xf]
      %v2288 = vld [vmem:[%s2277 + $0x28] sm:$0xf]
      %v2289 = vld [vmem:[%s2277 + $0x2c] sm:$0xf]
      %v2290 = vld [vmem:[%s2277 + $0x30] sm:$0xf]
      %v2291 = vld [vmem:[%s2277 + $0x34] sm:$0xf]
      %v2292 = vld [vmem:[%s2277 + $0x38] sm:$0xf]
      %v2293 = vld [vmem:[%s2277 + $0x3c] sm:$0xf]
      %v2294 = vld [vmem:[%s2277 + $0x40] sm:$0xf]
      %v2295 = vld [vmem:[%s2277 + $0x44] sm:$0xf]
      %v2296 = vld [vmem:[%s2277 + $0x48] sm:$0xf]
      %v2297 = vld [vmem:[%s2277 + $0x4c] sm:$0xf]
      %v2298 = vld [vmem:[%s2277 + $0x50] sm:$0xf]
      %v2299 = vld [vmem:[%s2277 + $0x54] sm:$0xf]
      %v2300 = vld [vmem:[%s2277 + $0x58] sm:$0xf]
      %v2301 = vld [vmem:[%s2277 + $0x5c] sm:$0xf]
      %v2302 = vld [vmem:[%s2277 + $0x60] sm:$0xf]
      %v2303 = vld [vmem:[%s2277 + $0x64] sm:$0xf]
      %v2304 = vld [vmem:[%s2277 + $0x68] sm:$0xf]
      %v2305 = vld [vmem:[%s2277 + $0x6c] sm:$0xf]
      %v2306 = vld [vmem:[%s2277 + $0x70] sm:$0xf]
      %v2307 = vld [vmem:[%s2277 + $0x74] sm:$0xf]
      %v2308 = vld [vmem:[%s2277 + $0x78] sm:$0xf]
      %v2309 = vld [vmem:[%s2277 + $0x7c] sm:$0xf]
      %v2310 = vld [vmem:[%s2277 + $0x80] sm:$0xf]
      %v2311 = vld [vmem:[%s2277 + $0x84] sm:$0xf]
      %v2312 = vld [vmem:[%s2277 + $0x88] sm:$0xf]
      %v2313 = vld [vmem:[%s2277 + $0x8c] sm:$0xf]
      %v2314 = vld [vmem:[%s2277 + $0x90] sm:$0xf]
      %v2315 = vld [vmem:[%s2277 + $0x94] sm:$0xf]
      %v2316 = vld [vmem:[%s2277 + $0x98] sm:$0xf]
      %v2317 = vld [vmem:[%s2277 + $0x9c] sm:$0xf]
      %v2318 = vld [vmem:[%s2277 + $0xa0] sm:$0xf]
      %v2319 = vld [vmem:[%s2277 + $0xa4] sm:$0xf]
      %v2320 = vld [vmem:[%s2277 + $0xa8] sm:$0xf]
      %v2321 = vld [vmem:[%s2277 + $0xac] sm:$0xf]
      %v2322 = vld [vmem:[%s2277 + $0xb0] sm:$0xf]
      %v2323 = vld [vmem:[%s2277 + $0xb4] sm:$0xf]
      %v2324 = vld [vmem:[%s2277 + $0xb8] sm:$0xf]
      %v2325 = vld [vmem:[%s2277 + $0xbc] sm:$0xf]
      %v2326 = vld [vmem:[%s2277 + $0xc0] sm:$0xf]
      %v2327 = vld [vmem:[%s2277 + $0xc4] sm:$0xf]
      %v2328 = vld [vmem:[%s2277 + $0xc8] sm:$0xf]
      %v2329 = vld [vmem:[%s2277 + $0xcc] sm:$0xf]
      %v2330 = vld [vmem:[%s2277 + $0xd0] sm:$0xf]
      %v2331 = vld [vmem:[%s2277 + $0xd4] sm:$0xf]
      %v2332 = vld [vmem:[%s2277 + $0xd8] sm:$0xf]
      %v2333 = vld [vmem:[%s2277 + $0xdc] sm:$0xf]
      %v2334 = vld [vmem:[%s2277 + $0xe0] sm:$0xf]
      %v2335 = vld [vmem:[%s2277 + $0xe4] sm:$0xf]
      %v2336 = vld [vmem:[%s2277 + $0xe8] sm:$0xf]
      %v2337 = vld [vmem:[%s2277 + $0xec] sm:$0xf]
      %v2338 = vld [vmem:[%s2277 + $0xf0] sm:$0xf]
      %v2339 = vld [vmem:[%s2277 + $0xf4] sm:$0xf]
      %v2340 = vld [vmem:[%s2277 + $0xf8] sm:$0xf]
      %v2341 = vld [vmem:[%s2277 + $0xfc] sm:$0xf]
      %v2342 = vld [vmem:[%s2277 + $0x100] sm:$0xf]
      %v2343 = vld [vmem:[%s2277 + $0x104] sm:$0xf]
      %v2344 = vld [vmem:[%s2277 + $0x108] sm:$0xf]
      %v2345 = vld [vmem:[%s2277 + $0x10c] sm:$0xf]
      %v2346 = vld [vmem:[%s2277 + $0x110] sm:$0xf]
      %v2347 = vld [vmem:[%s2277 + $0x114] sm:$0xf]
      %v2348 = vld [vmem:[%s2277 + $0x118] sm:$0xf]
      %v2349 = vld [vmem:[%s2277 + $0x11c] sm:$0xf]
      %v2350 = vld [vmem:[%s2277 + $0x120] sm:$0xf]
      %v2351 = vld [vmem:[%s2277 + $0x124] sm:$0xf]
      %v2352 = vld [vmem:[%s2277 + $0x128] sm:$0xf]
      %v2353 = vld [vmem:[%s2277 + $0x12c] sm:$0xf]
      %v2354 = vld [vmem:[%s2277 + $0x130] sm:$0xf]
      %v2355 = vld [vmem:[%s2277 + $0x134] sm:$0xf]
      %v2356 = vld [vmem:[%s2277 + $0x138] sm:$0xf]
      %v2357 = vld [vmem:[%s2277 + $0x13c] sm:$0xf]
      %v2358 = vld [vmem:[%s2277 + $0x140] sm:$0xf]
      %v2359 = vld [vmem:[%s2277 + $0x144] sm:$0xf]
      %v2360 = vld [vmem:[%s2277 + $0x148] sm:$0xf]
      %v2361 = vld [vmem:[%s2277 + $0x14c] sm:$0xf]
      %v2362 = vld [vmem:[%s2277 + $0x150] sm:$0xf]
      %v2363 = vld [vmem:[%s2277 + $0x154] sm:$0xf]
      %v2364 = vld [vmem:[%s2277 + $0x158] sm:$0xf]
      %v2365 = vld [vmem:[%s2277 + $0x15c] sm:$0xf]
      %v2366 = vld [vmem:[%s2277 + $0x160] sm:$0xf]
      %v2367 = vld [vmem:[%s2277 + $0x164] sm:$0xf]
      %v2368 = vld [vmem:[%s2277 + $0x168] sm:$0xf]
      %v2369 = vld [vmem:[%s2277 + $0x16c] sm:$0xf]
      %v2370 = vld [vmem:[%s2277 + $0x170] sm:$0xf]
      %v2371 = vld [vmem:[%s2277 + $0x174] sm:$0xf]
      %v2372 = vld [vmem:[%s2277 + $0x178] sm:$0xf]
      %v2373 = vld [vmem:[%s2277 + $0x17c] sm:$0xf]
      %v2374 = vld [vmem:[%s2277 + $0x180] sm:$0xf]
      %v2375 = vld [vmem:[%s2277 + $0x184] sm:$0xf]
      %v2376 = vunpack.c.l.bf16 %v2278
      %v2377 = vunpack.c.l.bf16 %v2279
      %v2378 = vunpack.c.l.bf16 %v2280
      %v2379 = vunpack.c.l.bf16 %v2281
      %v2380 = vunpack.c.l.bf16 %v2282
      %v2381 = vunpack.c.l.bf16 %v2283
      %v2382 = vunpack.c.l.bf16 %v2284
      %v2383 = vunpack.c.l.bf16 %v2285
      %v2384 = vunpack.c.l.bf16 %v2286
      %v2385 = vunpack.c.l.bf16 %v2287
      %v2386 = vunpack.c.l.bf16 %v2288
      %v2387 = vunpack.c.l.bf16 %v2289
      %v2388 = vunpack.c.l.bf16 %v2290
      %v2389 = vunpack.c.l.bf16 %v2291
      %v2390 = vunpack.c.l.bf16 %v2292
      %v2391 = vunpack.c.l.bf16 %v2293
      %v2392 = vunpack.c.l.bf16 %v2294
      %v2393 = vunpack.c.l.bf16 %v2295
      %v2394 = vunpack.c.l.bf16 %v2296
      %v2395 = vunpack.c.l.bf16 %v2297
      %v2396 = vunpack.c.l.bf16 %v2298
      %v2397 = vunpack.c.l.bf16 %v2299
      %v2398 = vunpack.c.l.bf16 %v2300
      %v2399 = vunpack.c.l.bf16 %v2301
      %v2400 = vunpack.c.l.bf16 %v2302
      %v2401 = vunpack.c.l.bf16 %v2303
      %v2402 = vunpack.c.l.bf16 %v2304
      %v2403 = vunpack.c.l.bf16 %v2305
      %v2404 = vunpack.c.l.bf16 %v2306
      %v2405 = vunpack.c.l.bf16 %v2307
      %v2406 = vunpack.c.l.bf16 %v2308
      %v2407 = vunpack.c.l.bf16 %v2309
      %v2408 = vunpack.c.l.bf16 %v2310
      %v2409 = vunpack.c.l.bf16 %v2311
      %v2410 = vunpack.c.l.bf16 %v2312
      %v2411 = vunpack.c.l.bf16 %v2313
      %v2412 = vunpack.c.l.bf16 %v2314
      %v2413 = vunpack.c.l.bf16 %v2315
      %v2414 = vunpack.c.l.bf16 %v2316
      %v2415 = vunpack.c.l.bf16 %v2317
      %v2416 = vunpack.c.l.bf16 %v2318
      %v2417 = vunpack.c.l.bf16 %v2319
      %v2418 = vunpack.c.l.bf16 %v2320
      %v2419 = vunpack.c.l.bf16 %v2321
      %v2420 = vunpack.c.l.bf16 %v2322
      %v2421 = vunpack.c.l.bf16 %v2323
      %v2422 = vunpack.c.l.bf16 %v2324
      %v2423 = vunpack.c.l.bf16 %v2325
      %v2424 = vunpack.c.l.bf16 %v2326
      %v2425 = vunpack.c.l.bf16 %v2327
      %v2426 = vunpack.c.l.bf16 %v2328
      %v2427 = vunpack.c.l.bf16 %v2329
      %v2428 = vunpack.c.l.bf16 %v2330
      %v2429 = vunpack.c.l.bf16 %v2331
      %v2430 = vunpack.c.l.bf16 %v2332
      %v2431 = vunpack.c.l.bf16 %v2333
      %v2432 = vunpack.c.l.bf16 %v2334
      %v2433 = vunpack.c.l.bf16 %v2335
      %v2434 = vunpack.c.l.bf16 %v2336
      %v2435 = vunpack.c.l.bf16 %v2337
      %v2436 = vunpack.c.l.bf16 %v2338
      %v2437 = vunpack.c.l.bf16 %v2339
      %v2438 = vunpack.c.l.bf16 %v2340
      %v2439 = vunpack.c.l.bf16 %v2341
      %v2440 = vunpack.c.l.bf16 %v2342
      %v2441 = vunpack.c.l.bf16 %v2343
      %v2442 = vunpack.c.l.bf16 %v2344
      %v2443 = vunpack.c.l.bf16 %v2345
      %v2444 = vunpack.c.l.bf16 %v2346
      %v2445 = vunpack.c.l.bf16 %v2347
      %v2446 = vunpack.c.l.bf16 %v2348
      %v2447 = vunpack.c.l.bf16 %v2349
      %v2448 = vunpack.c.l.bf16 %v2350
      %v2449 = vunpack.c.l.bf16 %v2351
      %v2450 = vunpack.c.l.bf16 %v2352
      %v2451 = vunpack.c.l.bf16 %v2353
      %v2452 = vunpack.c.l.bf16 %v2354
      %v2453 = vunpack.c.l.bf16 %v2355
      %v2454 = vunpack.c.l.bf16 %v2356
      %v2455 = vunpack.c.l.bf16 %v2357
      %v2456 = vunpack.c.l.bf16 %v2358
      %v2457 = vunpack.c.l.bf16 %v2359
      %v2458 = vunpack.c.l.bf16 %v2360
      %v2459 = vunpack.c.l.bf16 %v2361
      %v2460 = vunpack.c.l.bf16 %v2362
      %v2461 = vunpack.c.l.bf16 %v2363
      %v2462 = vunpack.c.l.bf16 %v2364
      %v2463 = vunpack.c.l.bf16 %v2365
      %v2464 = vunpack.c.l.bf16 %v2366
      %v2465 = vunpack.c.l.bf16 %v2367
      %v2466 = vunpack.c.l.bf16 %v2368
      %v2467 = vunpack.c.l.bf16 %v2369
      %v2468 = vunpack.c.l.bf16 %v2370
      %v2469 = vunpack.c.l.bf16 %v2371
      %v2470 = vunpack.c.l.bf16 %v2372
      %v2471 = vunpack.c.l.bf16 %v2373
      %v2472 = vunpack.c.l.bf16 %v2374
      %v2473 = vunpack.c.l.bf16 %v2375
      %v2475 = vsel %vm1576, %v1148, 0
      %v2478 = vsel %vm1576, %v1151, 0
      %2480 = vmatpush.msra.mxu0 %v2391
      %2481 = vmatpush.msra.mxu0 %v2390
      %2482 = vmatpush.msra.mxu0 %v2389
      %2483 = vmatpush.msra.mxu0 %v2388
      %2484 = vmatpush.msra.mxu0 %v2387
      %2485 = vmatpush.msra.mxu0 %v2386
      %2486 = vmatpush.msra.mxu0 %v2385
      %2487 = vmatpush.msra.mxu0 %v2384
      %2488 = vmatpush.msra.mxu0 %v2383
      %2489 = vmatpush.msra.mxu0 %v2382
      %2490 = vmatpush.msra.mxu0 %v2381
      %2491 = vmatpush.msra.mxu0 %v2380
      %2492 = vmatpush.msra.mxu0 %v2379
      %2493 = vmatpush.msra.mxu0 %v2378
      %2494 = vmatpush.msra.mxu0 %v2377
      %2495 = vmatpush.msra.mxu0 %v2376
      %2496 = vmatmul.f32.gmra.mxu0 %v722
      %v2497 = vpop.f32.mrf.mxu0
      %v2498 = vadd.f32 0.0, %v2497
      %2499 = vmatmul.f32.gmra.mxu0 %v725
      %v2500 = vpop.f32.mrf.mxu0
      %v2501 = vadd.f32 0.0, %v2500
      %2502 = vdwg.mxu0
      %2503 = vmatpush.msra.mxu0 %v2407
      %2504 = vmatpush.msra.mxu0 %v2406
      %2505 = vmatpush.msra.mxu0 %v2405
      %2506 = vmatpush.msra.mxu0 %v2404
      %2507 = vmatpush.msra.mxu0 %v2403
      %2508 = vmatpush.msra.mxu0 %v2402
      %2509 = vmatpush.msra.mxu0 %v2401
      %2510 = vmatpush.msra.mxu0 %v2400
      %2511 = vmatpush.msra.mxu0 %v2399
      %2512 = vmatpush.msra.mxu0 %v2398
      %2513 = vmatpush.msra.mxu0 %v2397
      %2514 = vmatpush.msra.mxu0 %v2396
      %2515 = vmatpush.msra.mxu0 %v2395
      %2516 = vmatpush.msra.mxu0 %v2394
      %2517 = vmatpush.msra.mxu0 %v2393
      %2518 = vmatpush.msra.mxu0 %v2392
      %2519 = vmatmul.f32.gmra.mxu0 %v793
      %v2520 = vpop.f32.mrf.mxu0
      %v2521 = vadd.f32 %v2498, %v2520
      %2522 = vmatmul.f32.gmra.mxu0 %v796
      %v2523 = vpop.f32.mrf.mxu0
      %v2524 = vadd.f32 %v2501, %v2523
      %2525 = vdwg.mxu0
      %2526 = vmatpush.msra.mxu0 %v2423
      %2527 = vmatpush.msra.mxu0 %v2422
      %2528 = vmatpush.msra.mxu0 %v2421
      %2529 = vmatpush.msra.mxu0 %v2420
      %2530 = vmatpush.msra.mxu0 %v2419
      %2531 = vmatpush.msra.mxu0 %v2418
      %2532 = vmatpush.msra.mxu0 %v2417
      %2533 = vmatpush.msra.mxu0 %v2416
      %2534 = vmatpush.msra.mxu0 %v2415
      %2535 = vmatpush.msra.mxu0 %v2414
      %2536 = vmatpush.msra.mxu0 %v2413
      %2537 = vmatpush.msra.mxu0 %v2412
      %2538 = vmatpush.msra.mxu0 %v2411
      %2539 = vmatpush.msra.mxu0 %v2410
      %2540 = vmatpush.msra.mxu0 %v2409
      %2541 = vmatpush.msra.mxu0 %v2408
      %2542 = vmatmul.f32.gmra.mxu0 %v864
      %v2543 = vpop.f32.mrf.mxu0
      %v2544 = vadd.f32 %v2521, %v2543
      %2545 = vmatmul.f32.gmra.mxu0 %v867
      %v2546 = vpop.f32.mrf.mxu0
      %v2547 = vadd.f32 %v2524, %v2546
      %2548 = vdwg.mxu0
      %2549 = vmatpush.msra.mxu0 %v2439
      %2550 = vmatpush.msra.mxu0 %v2438
      %2551 = vmatpush.msra.mxu0 %v2437
      %2552 = vmatpush.msra.mxu0 %v2436
      %2553 = vmatpush.msra.mxu0 %v2435
      %2554 = vmatpush.msra.mxu0 %v2434
      %2555 = vmatpush.msra.mxu0 %v2433
      %2556 = vmatpush.msra.mxu0 %v2432
      %2557 = vmatpush.msra.mxu0 %v2431
      %2558 = vmatpush.msra.mxu0 %v2430
      %2559 = vmatpush.msra.mxu0 %v2429
      %2560 = vmatpush.msra.mxu0 %v2428
      %2561 = vmatpush.msra.mxu0 %v2427
      %2562 = vmatpush.msra.mxu0 %v2426
      %2563 = vmatpush.msra.mxu0 %v2425
      %2564 = vmatpush.msra.mxu0 %v2424
      %2565 = vmatmul.f32.gmra.mxu0 %v935
      %v2566 = vpop.f32.mrf.mxu0
      %v2567 = vadd.f32 %v2544, %v2566
      %2568 = vmatmul.f32.gmra.mxu0 %v938
      %v2569 = vpop.f32.mrf.mxu0
      %v2570 = vadd.f32 %v2547, %v2569
      %2571 = vdwg.mxu0
      %2572 = vmatpush.msra.mxu0 %v2455
      %2573 = vmatpush.msra.mxu0 %v2454
      %2574 = vmatpush.msra.mxu0 %v2453
      %2575 = vmatpush.msra.mxu0 %v2452
      %2576 = vmatpush.msra.mxu0 %v2451
      %2577 = vmatpush.msra.mxu0 %v2450
      %2578 = vmatpush.msra.mxu0 %v2449
      %2579 = vmatpush.msra.mxu0 %v2448
      %2580 = vmatpush.msra.mxu0 %v2447
      %2581 = vmatpush.msra.mxu0 %v2446
      %2582 = vmatpush.msra.mxu0 %v2445
      %2583 = vmatpush.msra.mxu0 %v2444
      %2584 = vmatpush.msra.mxu0 %v2443
      %2585 = vmatpush.msra.mxu0 %v2442
      %2586 = vmatpush.msra.mxu0 %v2441
      %2587 = vmatpush.msra.mxu0 %v2440
      %2588 = vmatmul.f32.gmra.mxu0 %v1006
      %v2589 = vpop.f32.mrf.mxu0
      %v2590 = vadd.f32 %v2567, %v2589
      %2591 = vmatmul.f32.gmra.mxu0 %v1009
      %v2592 = vpop.f32.mrf.mxu0
      %v2593 = vadd.f32 %v2570, %v2592
      %2594 = vdwg.mxu0
      %2595 = vmatpush.msra.mxu0 %v2471
      %2596 = vmatpush.msra.mxu0 %v2470
      %2597 = vmatpush.msra.mxu0 %v2469
      %2598 = vmatpush.msra.mxu0 %v2468
      %2599 = vmatpush.msra.mxu0 %v2467
      %2600 = vmatpush.msra.mxu0 %v2466
      %2601 = vmatpush.msra.mxu0 %v2465
      %2602 = vmatpush.msra.mxu0 %v2464
      %2603 = vmatpush.msra.mxu0 %v2463
      %2604 = vmatpush.msra.mxu0 %v2462
      %2605 = vmatpush.msra.mxu0 %v2461
      %2606 = vmatpush.msra.mxu0 %v2460
      %2607 = vmatpush.msra.mxu0 %v2459
      %2608 = vmatpush.msra.mxu0 %v2458
      %2609 = vmatpush.msra.mxu0 %v2457
      %2610 = vmatpush.msra.mxu0 %v2456
      %2611 = vmatmul.f32.gmra.mxu0 %v1077
      %v2612 = vpop.f32.mrf.mxu0
      %v2613 = vadd.f32 %v2590, %v2612
      %2614 = vmatmul.f32.gmra.mxu0 %v1080
      %v2615 = vpop.f32.mrf.mxu0
      %v2616 = vadd.f32 %v2593, %v2615
      %2617 = vdwg.mxu0
      %2618 = vmatpush.msra.mxu0 0.0
      %2619 = vmatpush.msra.mxu0 0.0
      %2620 = vmatpush.msra.mxu0 0.0
      %2621 = vmatpush.msra.mxu0 0.0
      %2622 = vmatpush.msra.mxu0 0.0
      %2623 = vmatpush.msra.mxu0 0.0
      %2624 = vmatpush.msra.mxu0 0.0
      %2625 = vmatpush.msra.mxu0 0.0
      %2626 = vmatpush.msra.mxu0 0.0
      %2627 = vmatpush.msra.mxu0 0.0
      %2628 = vmatpush.msra.mxu0 0.0
      %2629 = vmatpush.msra.mxu0 0.0
      %2630 = vmatpush.msra.mxu0 0.0
      %2631 = vmatpush.msra.mxu0 0.0
      %2632 = vmatpush.msra.mxu0 %v2473
      %2633 = vmatpush.msra.mxu0 %v2472
      %2634 = vmatmul.f32.gmra.mxu0 %v2475
      %v2635 = vpop.f32.mrf.mxu0
      %v2636 = vadd.f32 %v2613, %v2635
      %2637 = vmatmul.f32.gmra.mxu0 %v2478
      %v2638 = vpop.f32.mrf.mxu0
      %v2639 = vadd.f32 %v2616, %v2638
      %2640 = vdwg.mxu0
      %v2641 = vadd.f32 %v2275, %v2636
      %v2642 = vadd.f32 %v2276, %v2639
      %s2643 = scalar_lea.vmem %s3, 1568
      %v2644 = vld [vmem:[%s2643] sm:$0xf]
      %v2645 = vld [vmem:[%s2643 + $0x4] sm:$0xf]
      %v2646 = vld [vmem:[%s2643 + $0x8] sm:$0xf]
      %v2647 = vld [vmem:[%s2643 + $0xc] sm:$0xf]
      %v2648 = vld [vmem:[%s2643 + $0x10] sm:$0xf]
      %v2649 = vld [vmem:[%s2643 + $0x14] sm:$0xf]
      %v2650 = vld [vmem:[%s2643 + $0x18] sm:$0xf]
      %v2651 = vld [vmem:[%s2643 + $0x1c] sm:$0xf]
      %v2652 = vld [vmem:[%s2643 + $0x20] sm:$0xf]
      %v2653 = vld [vmem:[%s2643 + $0x24] sm:$0xf]
      %v2654 = vld [vmem:[%s2643 + $0x28] sm:$0xf]
      %v2655 = vld [vmem:[%s2643 + $0x2c] sm:$0xf]
      %v2656 = vld [vmem:[%s2643 + $0x30] sm:$0xf]
      %v2657 = vld [vmem:[%s2643 + $0x34] sm:$0xf]
      %v2658 = vld [vmem:[%s2643 + $0x38] sm:$0xf]
      %v2659 = vld [vmem:[%s2643 + $0x3c] sm:$0xf]
      %v2660 = vld [vmem:[%s2643 + $0x40] sm:$0xf]
      %v2661 = vld [vmem:[%s2643 + $0x44] sm:$0xf]
      %v2662 = vld [vmem:[%s2643 + $0x48] sm:$0xf]
      %v2663 = vld [vmem:[%s2643 + $0x4c] sm:$0xf]
      %v2664 = vld [vmem:[%s2643 + $0x50] sm:$0xf]
      %v2665 = vld [vmem:[%s2643 + $0x54] sm:$0xf]
      %v2666 = vld [vmem:[%s2643 + $0x58] sm:$0xf]
      %v2667 = vld [vmem:[%s2643 + $0x5c] sm:$0xf]
      %v2668 = vld [vmem:[%s2643 + $0x60] sm:$0xf]
      %v2669 = vld [vmem:[%s2643 + $0x64] sm:$0xf]
      %v2670 = vld [vmem:[%s2643 + $0x68] sm:$0xf]
      %v2671 = vld [vmem:[%s2643 + $0x6c] sm:$0xf]
      %v2672 = vld [vmem:[%s2643 + $0x70] sm:$0xf]
      %v2673 = vld [vmem:[%s2643 + $0x74] sm:$0xf]
      %v2674 = vld [vmem:[%s2643 + $0x78] sm:$0xf]
      %v2675 = vld [vmem:[%s2643 + $0x7c] sm:$0xf]
      %v2676 = vld [vmem:[%s2643 + $0x80] sm:$0xf]
      %v2677 = vld [vmem:[%s2643 + $0x84] sm:$0xf]
      %v2678 = vld [vmem:[%s2643 + $0x88] sm:$0xf]
      %v2679 = vld [vmem:[%s2643 + $0x8c] sm:$0xf]
      %v2680 = vld [vmem:[%s2643 + $0x90] sm:$0xf]
      %v2681 = vld [vmem:[%s2643 + $0x94] sm:$0xf]
      %v2682 = vld [vmem:[%s2643 + $0x98] sm:$0xf]
      %v2683 = vld [vmem:[%s2643 + $0x9c] sm:$0xf]
      %v2684 = vld [vmem:[%s2643 + $0xa0] sm:$0xf]
      %v2685 = vld [vmem:[%s2643 + $0xa4] sm:$0xf]
      %v2686 = vld [vmem:[%s2643 + $0xa8] sm:$0xf]
      %v2687 = vld [vmem:[%s2643 + $0xac] sm:$0xf]
      %v2688 = vld [vmem:[%s2643 + $0xb0] sm:$0xf]
      %v2689 = vld [vmem:[%s2643 + $0xb4] sm:$0xf]
      %v2690 = vld [vmem:[%s2643 + $0xb8] sm:$0xf]
      %v2691 = vld [vmem:[%s2643 + $0xbc] sm:$0xf]
      %v2692 = vld [vmem:[%s2643 + $0xc0] sm:$0xf]
      %v2693 = vld [vmem:[%s2643 + $0xc4] sm:$0xf]
      %v2694 = vld [vmem:[%s2643 + $0xc8] sm:$0xf]
      %v2695 = vld [vmem:[%s2643 + $0xcc] sm:$0xf]
      %v2696 = vld [vmem:[%s2643 + $0xd0] sm:$0xf]
      %v2697 = vld [vmem:[%s2643 + $0xd4] sm:$0xf]
      %v2698 = vld [vmem:[%s2643 + $0xd8] sm:$0xf]
      %v2699 = vld [vmem:[%s2643 + $0xdc] sm:$0xf]
      %v2700 = vld [vmem:[%s2643 + $0xe0] sm:$0xf]
      %v2701 = vld [vmem:[%s2643 + $0xe4] sm:$0xf]
      %v2702 = vld [vmem:[%s2643 + $0xe8] sm:$0xf]
      %v2703 = vld [vmem:[%s2643 + $0xec] sm:$0xf]
      %v2704 = vld [vmem:[%s2643 + $0xf0] sm:$0xf]
      %v2705 = vld [vmem:[%s2643 + $0xf4] sm:$0xf]
      %v2706 = vld [vmem:[%s2643 + $0xf8] sm:$0xf]
      %v2707 = vld [vmem:[%s2643 + $0xfc] sm:$0xf]
      %v2708 = vld [vmem:[%s2643 + $0x100] sm:$0xf]
      %v2709 = vld [vmem:[%s2643 + $0x104] sm:$0xf]
      %v2710 = vld [vmem:[%s2643 + $0x108] sm:$0xf]
      %v2711 = vld [vmem:[%s2643 + $0x10c] sm:$0xf]
      %v2712 = vld [vmem:[%s2643 + $0x110] sm:$0xf]
      %v2713 = vld [vmem:[%s2643 + $0x114] sm:$0xf]
      %v2714 = vld [vmem:[%s2643 + $0x118] sm:$0xf]
      %v2715 = vld [vmem:[%s2643 + $0x11c] sm:$0xf]
      %v2716 = vld [vmem:[%s2643 + $0x120] sm:$0xf]
      %v2717 = vld [vmem:[%s2643 + $0x124] sm:$0xf]
      %v2718 = vld [vmem:[%s2643 + $0x128] sm:$0xf]
      %v2719 = vld [vmem:[%s2643 + $0x12c] sm:$0xf]
      %v2720 = vld [vmem:[%s2643 + $0x130] sm:$0xf]
      %v2721 = vld [vmem:[%s2643 + $0x134] sm:$0xf]
      %v2722 = vld [vmem:[%s2643 + $0x138] sm:$0xf]
      %v2723 = vld [vmem:[%s2643 + $0x13c] sm:$0xf]
      %v2724 = vld [vmem:[%s2643 + $0x140] sm:$0xf]
      %v2725 = vld [vmem:[%s2643 + $0x144] sm:$0xf]
      %v2726 = vld [vmem:[%s2643 + $0x148] sm:$0xf]
      %v2727 = vld [vmem:[%s2643 + $0x14c] sm:$0xf]
      %v2728 = vld [vmem:[%s2643 + $0x150] sm:$0xf]
      %v2729 = vld [vmem:[%s2643 + $0x154] sm:$0xf]
      %v2730 = vld [vmem:[%s2643 + $0x158] sm:$0xf]
      %v2731 = vld [vmem:[%s2643 + $0x15c] sm:$0xf]
      %v2732 = vld [vmem:[%s2643 + $0x160] sm:$0xf]
      %v2733 = vld [vmem:[%s2643 + $0x164] sm:$0xf]
      %v2734 = vld [vmem:[%s2643 + $0x168] sm:$0xf]
      %v2735 = vld [vmem:[%s2643 + $0x16c] sm:$0xf]
      %v2736 = vld [vmem:[%s2643 + $0x170] sm:$0xf]
      %v2737 = vld [vmem:[%s2643 + $0x174] sm:$0xf]
      %v2738 = vld [vmem:[%s2643 + $0x178] sm:$0xf]
      %v2739 = vld [vmem:[%s2643 + $0x17c] sm:$0xf]
      %v2740 = vld [vmem:[%s2643 + $0x180] sm:$0xf]
      %v2741 = vld [vmem:[%s2643 + $0x184] sm:$0xf]
      %v2742 = vunpack.c.l.bf16 %v2644
      %v2743 = vunpack.c.l.bf16 %v2645
      %v2744 = vunpack.c.l.bf16 %v2646
      %v2745 = vunpack.c.l.bf16 %v2647
      %v2746 = vunpack.c.l.bf16 %v2648
      %v2747 = vunpack.c.l.bf16 %v2649
      %v2748 = vunpack.c.l.bf16 %v2650
      %v2749 = vunpack.c.l.bf16 %v2651
      %v2750 = vunpack.c.l.bf16 %v2652
      %v2751 = vunpack.c.l.bf16 %v2653
      %v2752 = vunpack.c.l.bf16 %v2654
      %v2753 = vunpack.c.l.bf16 %v2655
      %v2754 = vunpack.c.l.bf16 %v2656
      %v2755 = vunpack.c.l.bf16 %v2657
      %v2756 = vunpack.c.l.bf16 %v2658
      %v2757 = vunpack.c.l.bf16 %v2659
      %v2758 = vunpack.c.l.bf16 %v2660
      %v2759 = vunpack.c.l.bf16 %v2661
      %v2760 = vunpack.c.l.bf16 %v2662
      %v2761 = vunpack.c.l.bf16 %v2663
      %v2762 = vunpack.c.l.bf16 %v2664
      %v2763 = vunpack.c.l.bf16 %v2665
      %v2764 = vunpack.c.l.bf16 %v2666
      %v2765 = vunpack.c.l.bf16 %v2667
      %v2766 = vunpack.c.l.bf16 %v2668
      %v2767 = vunpack.c.l.bf16 %v2669
      %v2768 = vunpack.c.l.bf16 %v2670
      %v2769 = vunpack.c.l.bf16 %v2671
      %v2770 = vunpack.c.l.bf16 %v2672
      %v2771 = vunpack.c.l.bf16 %v2673
      %v2772 = vunpack.c.l.bf16 %v2674
      %v2773 = vunpack.c.l.bf16 %v2675
      %v2774 = vunpack.c.l.bf16 %v2676
      %v2775 = vunpack.c.l.bf16 %v2677
      %v2776 = vunpack.c.l.bf16 %v2678
      %v2777 = vunpack.c.l.bf16 %v2679
      %v2778 = vunpack.c.l.bf16 %v2680
      %v2779 = vunpack.c.l.bf16 %v2681
      %v2780 = vunpack.c.l.bf16 %v2682
      %v2781 = vunpack.c.l.bf16 %v2683
      %v2782 = vunpack.c.l.bf16 %v2684
      %v2783 = vunpack.c.l.bf16 %v2685
      %v2784 = vunpack.c.l.bf16 %v2686
      %v2785 = vunpack.c.l.bf16 %v2687
      %v2786 = vunpack.c.l.bf16 %v2688
      %v2787 = vunpack.c.l.bf16 %v2689
      %v2788 = vunpack.c.l.bf16 %v2690
      %v2789 = vunpack.c.l.bf16 %v2691
      %v2790 = vunpack.c.l.bf16 %v2692
      %v2791 = vunpack.c.l.bf16 %v2693
      %v2792 = vunpack.c.l.bf16 %v2694
      %v2793 = vunpack.c.l.bf16 %v2695
      %v2794 = vunpack.c.l.bf16 %v2696
      %v2795 = vunpack.c.l.bf16 %v2697
      %v2796 = vunpack.c.l.bf16 %v2698
      %v2797 = vunpack.c.l.bf16 %v2699
      %v2798 = vunpack.c.l.bf16 %v2700
      %v2799 = vunpack.c.l.bf16 %v2701
      %v2800 = vunpack.c.l.bf16 %v2702
      %v2801 = vunpack.c.l.bf16 %v2703
      %v2802 = vunpack.c.l.bf16 %v2704
      %v2803 = vunpack.c.l.bf16 %v2705
      %v2804 = vunpack.c.l.bf16 %v2706
      %v2805 = vunpack.c.l.bf16 %v2707
      %v2806 = vunpack.c.l.bf16 %v2708
      %v2807 = vunpack.c.l.bf16 %v2709
      %v2808 = vunpack.c.l.bf16 %v2710
      %v2809 = vunpack.c.l.bf16 %v2711
      %v2810 = vunpack.c.l.bf16 %v2712
      %v2811 = vunpack.c.l.bf16 %v2713
      %v2812 = vunpack.c.l.bf16 %v2714
      %v2813 = vunpack.c.l.bf16 %v2715
      %v2814 = vunpack.c.l.bf16 %v2716
      %v2815 = vunpack.c.l.bf16 %v2717
      %v2816 = vunpack.c.l.bf16 %v2718
      %v2817 = vunpack.c.l.bf16 %v2719
      %v2818 = vunpack.c.l.bf16 %v2720
      %v2819 = vunpack.c.l.bf16 %v2721
      %v2820 = vunpack.c.l.bf16 %v2722
      %v2821 = vunpack.c.l.bf16 %v2723
      %v2822 = vunpack.c.l.bf16 %v2724
      %v2823 = vunpack.c.l.bf16 %v2725
      %v2824 = vunpack.c.l.bf16 %v2726
      %v2825 = vunpack.c.l.bf16 %v2727
      %v2826 = vunpack.c.l.bf16 %v2728
      %v2827 = vunpack.c.l.bf16 %v2729
      %v2828 = vunpack.c.l.bf16 %v2730
      %v2829 = vunpack.c.l.bf16 %v2731
      %v2830 = vunpack.c.l.bf16 %v2732
      %v2831 = vunpack.c.l.bf16 %v2733
      %v2832 = vunpack.c.l.bf16 %v2734
      %v2833 = vunpack.c.l.bf16 %v2735
      %v2834 = vunpack.c.l.bf16 %v2736
      %v2835 = vunpack.c.l.bf16 %v2737
      %v2836 = vunpack.c.l.bf16 %v2738
      %v2837 = vunpack.c.l.bf16 %v2739
      %v2838 = vunpack.c.l.bf16 %v2740
      %v2839 = vunpack.c.l.bf16 %v2741
      %v2841 = vsel %vm1576, %v1154, 0
      %v2844 = vsel %vm1576, %v1157, 0
      %2846 = vmatpush.msra.mxu0 %v2757
      %2847 = vmatpush.msra.mxu0 %v2756
      %2848 = vmatpush.msra.mxu0 %v2755
      %2849 = vmatpush.msra.mxu0 %v2754
      %2850 = vmatpush.msra.mxu0 %v2753
      %2851 = vmatpush.msra.mxu0 %v2752
      %2852 = vmatpush.msra.mxu0 %v2751
      %2853 = vmatpush.msra.mxu0 %v2750
      %2854 = vmatpush.msra.mxu0 %v2749
      %2855 = vmatpush.msra.mxu0 %v2748
      %2856 = vmatpush.msra.mxu0 %v2747
      %2857 = vmatpush.msra.mxu0 %v2746
      %2858 = vmatpush.msra.mxu0 %v2745
      %2859 = vmatpush.msra.mxu0 %v2744
      %2860 = vmatpush.msra.mxu0 %v2743
      %2861 = vmatpush.msra.mxu0 %v2742
      %2862 = vmatmul.f32.gmra.mxu0 %v728
      %v2863 = vpop.f32.mrf.mxu0
      %v2864 = vadd.f32 0.0, %v2863
      %2865 = vmatmul.f32.gmra.mxu0 %v731
      %v2866 = vpop.f32.mrf.mxu0
      %v2867 = vadd.f32 0.0, %v2866
      %2868 = vdwg.mxu0
      %2869 = vmatpush.msra.mxu0 %v2773
      %2870 = vmatpush.msra.mxu0 %v2772
      %2871 = vmatpush.msra.mxu0 %v2771
      %2872 = vmatpush.msra.mxu0 %v2770
      %2873 = vmatpush.msra.mxu0 %v2769
      %2874 = vmatpush.msra.mxu0 %v2768
      %2875 = vmatpush.msra.mxu0 %v2767
      %2876 = vmatpush.msra.mxu0 %v2766
      %2877 = vmatpush.msra.mxu0 %v2765
      %2878 = vmatpush.msra.mxu0 %v2764
      %2879 = vmatpush.msra.mxu0 %v2763
      %2880 = vmatpush.msra.mxu0 %v2762
      %2881 = vmatpush.msra.mxu0 %v2761
      %2882 = vmatpush.msra.mxu0 %v2760
      %2883 = vmatpush.msra.mxu0 %v2759
      %2884 = vmatpush.msra.mxu0 %v2758
      %2885 = vmatmul.f32.gmra.mxu0 %v799
      %v2886 = vpop.f32.mrf.mxu0
      %v2887 = vadd.f32 %v2864, %v2886
      %2888 = vmatmul.f32.gmra.mxu0 %v802
      %v2889 = vpop.f32.mrf.mxu0
      %v2890 = vadd.f32 %v2867, %v2889
      %2891 = vdwg.mxu0
      %2892 = vmatpush.msra.mxu0 %v2789
      %2893 = vmatpush.msra.mxu0 %v2788
      %2894 = vmatpush.msra.mxu0 %v2787
      %2895 = vmatpush.msra.mxu0 %v2786
      %2896 = vmatpush.msra.mxu0 %v2785
      %2897 = vmatpush.msra.mxu0 %v2784
      %2898 = vmatpush.msra.mxu0 %v2783
      %2899 = vmatpush.msra.mxu0 %v2782
      %2900 = vmatpush.msra.mxu0 %v2781
      %2901 = vmatpush.msra.mxu0 %v2780
      %2902 = vmatpush.msra.mxu0 %v2779
      %2903 = vmatpush.msra.mxu0 %v2778
      %2904 = vmatpush.msra.mxu0 %v2777
      %2905 = vmatpush.msra.mxu0 %v2776
      %2906 = vmatpush.msra.mxu0 %v2775
      %2907 = vmatpush.msra.mxu0 %v2774
      %2908 = vmatmul.f32.gmra.mxu0 %v870
      %v2909 = vpop.f32.mrf.mxu0
      %v2910 = vadd.f32 %v2887, %v2909
      %2911 = vmatmul.f32.gmra.mxu0 %v873
      %v2912 = vpop.f32.mrf.mxu0
      %v2913 = vadd.f32 %v2890, %v2912
      %2914 = vdwg.mxu0
      %2915 = vmatpush.msra.mxu0 %v2805
      %2916 = vmatpush.msra.mxu0 %v2804
      %2917 = vmatpush.msra.mxu0 %v2803
      %2918 = vmatpush.msra.mxu0 %v2802
      %2919 = vmatpush.msra.mxu0 %v2801
      %2920 = vmatpush.msra.mxu0 %v2800
      %2921 = vmatpush.msra.mxu0 %v2799
      %2922 = vmatpush.msra.mxu0 %v2798
      %2923 = vmatpush.msra.mxu0 %v2797
      %2924 = vmatpush.msra.mxu0 %v2796
      %2925 = vmatpush.msra.mxu0 %v2795
      %2926 = vmatpush.msra.mxu0 %v2794
      %2927 = vmatpush.msra.mxu0 %v2793
      %2928 = vmatpush.msra.mxu0 %v2792
      %2929 = vmatpush.msra.mxu0 %v2791
      %2930 = vmatpush.msra.mxu0 %v2790
      %2931 = vmatmul.f32.gmra.mxu0 %v941
      %v2932 = vpop.f32.mrf.mxu0
      %v2933 = vadd.f32 %v2910, %v2932
      %2934 = vmatmul.f32.gmra.mxu0 %v944
      %v2935 = vpop.f32.mrf.mxu0
      %v2936 = vadd.f32 %v2913, %v2935
      %2937 = vdwg.mxu0
      %2938 = vmatpush.msra.mxu0 %v2821
      %2939 = vmatpush.msra.mxu0 %v2820
      %2940 = vmatpush.msra.mxu0 %v2819
      %2941 = vmatpush.msra.mxu0 %v2818
      %2942 = vmatpush.msra.mxu0 %v2817
      %2943 = vmatpush.msra.mxu0 %v2816
      %2944 = vmatpush.msra.mxu0 %v2815
      %2945 = vmatpush.msra.mxu0 %v2814
      %2946 = vmatpush.msra.mxu0 %v2813
      %2947 = vmatpush.msra.mxu0 %v2812
      %2948 = vmatpush.msra.mxu0 %v2811
      %2949 = vmatpush.msra.mxu0 %v2810
      %2950 = vmatpush.msra.mxu0 %v2809
      %2951 = vmatpush.msra.mxu0 %v2808
      %2952 = vmatpush.msra.mxu0 %v2807
      %2953 = vmatpush.msra.mxu0 %v2806
      %2954 = vmatmul.f32.gmra.mxu0 %v1012
      %v2955 = vpop.f32.mrf.mxu0
      %v2956 = vadd.f32 %v2933, %v2955
      %2957 = vmatmul.f32.gmra.mxu0 %v1015
      %v2958 = vpop.f32.mrf.mxu0
      %v2959 = vadd.f32 %v2936, %v2958
      %2960 = vdwg.mxu0
      %2961 = vmatpush.msra.mxu0 %v2837
      %2962 = vmatpush.msra.mxu0 %v2836
      %2963 = vmatpush.msra.mxu0 %v2835
      %2964 = vmatpush.msra.mxu0 %v2834
      %2965 = vmatpush.msra.mxu0 %v2833
      %2966 = vmatpush.msra.mxu0 %v2832
      %2967 = vmatpush.msra.mxu0 %v2831
      %2968 = vmatpush.msra.mxu0 %v2830
      %2969 = vmatpush.msra.mxu0 %v2829
      %2970 = vmatpush.msra.mxu0 %v2828
      %2971 = vmatpush.msra.mxu0 %v2827
      %2972 = vmatpush.msra.mxu0 %v2826
      %2973 = vmatpush.msra.mxu0 %v2825
      %2974 = vmatpush.msra.mxu0 %v2824
      %2975 = vmatpush.msra.mxu0 %v2823
      %2976 = vmatpush.msra.mxu0 %v2822
      %2977 = vmatmul.f32.gmra.mxu0 %v1083
      %v2978 = vpop.f32.mrf.mxu0
      %v2979 = vadd.f32 %v2956, %v2978
      %2980 = vmatmul.f32.gmra.mxu0 %v1086
      %v2981 = vpop.f32.mrf.mxu0
      %v2982 = vadd.f32 %v2959, %v2981
      %2983 = vdwg.mxu0
      %2984 = vmatpush.msra.mxu0 0.0
      %2985 = vmatpush.msra.mxu0 0.0
      %2986 = vmatpush.msra.mxu0 0.0
      %2987 = vmatpush.msra.mxu0 0.0
      %2988 = vmatpush.msra.mxu0 0.0
      %2989 = vmatpush.msra.mxu0 0.0
      %2990 = vmatpush.msra.mxu0 0.0
      %2991 = vmatpush.msra.mxu0 0.0
      %2992 = vmatpush.msra.mxu0 0.0
      %2993 = vmatpush.msra.mxu0 0.0
      %2994 = vmatpush.msra.mxu0 0.0
      %2995 = vmatpush.msra.mxu0 0.0
      %2996 = vmatpush.msra.mxu0 0.0
      %2997 = vmatpush.msra.mxu0 0.0
      %2998 = vmatpush.msra.mxu0 %v2839
      %2999 = vmatpush.msra.mxu0 %v2838
      %3000 = vmatmul.f32.gmra.mxu0 %v2841
      %v3001 = vpop.f32.mrf.mxu0
      %v3002 = vadd.f32 %v2979, %v3001
      %3003 = vmatmul.f32.gmra.mxu0 %v2844
      %v3004 = vpop.f32.mrf.mxu0
      %v3005 = vadd.f32 %v2982, %v3004
      %3006 = vdwg.mxu0
      %v3007 = vadd.f32 %v2641, %v3002
      %v3008 = vadd.f32 %v2642, %v3005
      %s3009 = scalar_lea.vmem %s3, 1960
      %v3010 = vld [vmem:[%s3009] sm:$0xf]
      %v3011 = vld [vmem:[%s3009 + $0x4] sm:$0xf]
      %v3012 = vld [vmem:[%s3009 + $0x8] sm:$0xf]
      %v3013 = vld [vmem:[%s3009 + $0xc] sm:$0xf]
      %v3014 = vld [vmem:[%s3009 + $0x10] sm:$0xf]
      %v3015 = vld [vmem:[%s3009 + $0x14] sm:$0xf]
      %v3016 = vld [vmem:[%s3009 + $0x18] sm:$0xf]
      %v3017 = vld [vmem:[%s3009 + $0x1c] sm:$0xf]
      %v3018 = vld [vmem:[%s3009 + $0x20] sm:$0xf]
      %v3019 = vld [vmem:[%s3009 + $0x24] sm:$0xf]
      %v3020 = vld [vmem:[%s3009 + $0x28] sm:$0xf]
      %v3021 = vld [vmem:[%s3009 + $0x2c] sm:$0xf]
      %v3022 = vld [vmem:[%s3009 + $0x30] sm:$0xf]
      %v3023 = vld [vmem:[%s3009 + $0x34] sm:$0xf]
      %v3024 = vld [vmem:[%s3009 + $0x38] sm:$0xf]
      %v3025 = vld [vmem:[%s3009 + $0x3c] sm:$0xf]
      %v3026 = vld [vmem:[%s3009 + $0x40] sm:$0xf]
      %v3027 = vld [vmem:[%s3009 + $0x44] sm:$0xf]
      %v3028 = vld [vmem:[%s3009 + $0x48] sm:$0xf]
      %v3029 = vld [vmem:[%s3009 + $0x4c] sm:$0xf]
      %v3030 = vld [vmem:[%s3009 + $0x50] sm:$0xf]
      %v3031 = vld [vmem:[%s3009 + $0x54] sm:$0xf]
      %v3032 = vld [vmem:[%s3009 + $0x58] sm:$0xf]
      %v3033 = vld [vmem:[%s3009 + $0x5c] sm:$0xf]
      %v3034 = vld [vmem:[%s3009 + $0x60] sm:$0xf]
      %v3035 = vld [vmem:[%s3009 + $0x64] sm:$0xf]
      %v3036 = vld [vmem:[%s3009 + $0x68] sm:$0xf]
      %v3037 = vld [vmem:[%s3009 + $0x6c] sm:$0xf]
      %v3038 = vld [vmem:[%s3009 + $0x70] sm:$0xf]
      %v3039 = vld [vmem:[%s3009 + $0x74] sm:$0xf]
      %v3040 = vld [vmem:[%s3009 + $0x78] sm:$0xf]
      %v3041 = vld [vmem:[%s3009 + $0x7c] sm:$0xf]
      %v3042 = vld [vmem:[%s3009 + $0x80] sm:$0xf]
      %v3043 = vld [vmem:[%s3009 + $0x84] sm:$0xf]
      %v3044 = vld [vmem:[%s3009 + $0x88] sm:$0xf]
      %v3045 = vld [vmem:[%s3009 + $0x8c] sm:$0xf]
      %v3046 = vld [vmem:[%s3009 + $0x90] sm:$0xf]
      %v3047 = vld [vmem:[%s3009 + $0x94] sm:$0xf]
      %v3048 = vld [vmem:[%s3009 + $0x98] sm:$0xf]
      %v3049 = vld [vmem:[%s3009 + $0x9c] sm:$0xf]
      %v3050 = vld [vmem:[%s3009 + $0xa0] sm:$0xf]
      %v3051 = vld [vmem:[%s3009 + $0xa4] sm:$0xf]
      %v3052 = vld [vmem:[%s3009 + $0xa8] sm:$0xf]
      %v3053 = vld [vmem:[%s3009 + $0xac] sm:$0xf]
      %v3054 = vld [vmem:[%s3009 + $0xb0] sm:$0xf]
      %v3055 = vld [vmem:[%s3009 + $0xb4] sm:$0xf]
      %v3056 = vld [vmem:[%s3009 + $0xb8] sm:$0xf]
      %v3057 = vld [vmem:[%s3009 + $0xbc] sm:$0xf]
      %v3058 = vld [vmem:[%s3009 + $0xc0] sm:$0xf]
      %v3059 = vld [vmem:[%s3009 + $0xc4] sm:$0xf]
      %v3060 = vld [vmem:[%s3009 + $0xc8] sm:$0xf]
      %v3061 = vld [vmem:[%s3009 + $0xcc] sm:$0xf]
      %v3062 = vld [vmem:[%s3009 + $0xd0] sm:$0xf]
      %v3063 = vld [vmem:[%s3009 + $0xd4] sm:$0xf]
      %v3064 = vld [vmem:[%s3009 + $0xd8] sm:$0xf]
      %v3065 = vld [vmem:[%s3009 + $0xdc] sm:$0xf]
      %v3066 = vld [vmem:[%s3009 + $0xe0] sm:$0xf]
      %v3067 = vld [vmem:[%s3009 + $0xe4] sm:$0xf]
      %v3068 = vld [vmem:[%s3009 + $0xe8] sm:$0xf]
      %v3069 = vld [vmem:[%s3009 + $0xec] sm:$0xf]
      %v3070 = vld [vmem:[%s3009 + $0xf0] sm:$0xf]
      %v3071 = vld [vmem:[%s3009 + $0xf4] sm:$0xf]
      %v3072 = vld [vmem:[%s3009 + $0xf8] sm:$0xf]
      %v3073 = vld [vmem:[%s3009 + $0xfc] sm:$0xf]
      %v3074 = vld [vmem:[%s3009 + $0x100] sm:$0xf]
      %v3075 = vld [vmem:[%s3009 + $0x104] sm:$0xf]
      %v3076 = vld [vmem:[%s3009 + $0x108] sm:$0xf]
      %v3077 = vld [vmem:[%s3009 + $0x10c] sm:$0xf]
      %v3078 = vld [vmem:[%s3009 + $0x110] sm:$0xf]
      %v3079 = vld [vmem:[%s3009 + $0x114] sm:$0xf]
      %v3080 = vld [vmem:[%s3009 + $0x118] sm:$0xf]
      %v3081 = vld [vmem:[%s3009 + $0x11c] sm:$0xf]
      %v3082 = vld [vmem:[%s3009 + $0x120] sm:$0xf]
      %v3083 = vld [vmem:[%s3009 + $0x124] sm:$0xf]
      %v3084 = vld [vmem:[%s3009 + $0x128] sm:$0xf]
      %v3085 = vld [vmem:[%s3009 + $0x12c] sm:$0xf]
      %v3086 = vld [vmem:[%s3009 + $0x130] sm:$0xf]
      %v3087 = vld [vmem:[%s3009 + $0x134] sm:$0xf]
      %v3088 = vld [vmem:[%s3009 + $0x138] sm:$0xf]
      %v3089 = vld [vmem:[%s3009 + $0x13c] sm:$0xf]
      %v3090 = vld [vmem:[%s3009 + $0x140] sm:$0xf]
      %v3091 = vld [vmem:[%s3009 + $0x144] sm:$0xf]
      %v3092 = vld [vmem:[%s3009 + $0x148] sm:$0xf]
      %v3093 = vld [vmem:[%s3009 + $0x14c] sm:$0xf]
      %v3094 = vld [vmem:[%s3009 + $0x150] sm:$0xf]
      %v3095 = vld [vmem:[%s3009 + $0x154] sm:$0xf]
      %v3096 = vld [vmem:[%s3009 + $0x158] sm:$0xf]
      %v3097 = vld [vmem:[%s3009 + $0x15c] sm:$0xf]
      %v3098 = vld [vmem:[%s3009 + $0x160] sm:$0xf]
      %v3099 = vld [vmem:[%s3009 + $0x164] sm:$0xf]
      %v3100 = vld [vmem:[%s3009 + $0x168] sm:$0xf]
      %v3101 = vld [vmem:[%s3009 + $0x16c] sm:$0xf]
      %v3102 = vld [vmem:[%s3009 + $0x170] sm:$0xf]
      %v3103 = vld [vmem:[%s3009 + $0x174] sm:$0xf]
      %v3104 = vld [vmem:[%s3009 + $0x178] sm:$0xf]
      %v3105 = vld [vmem:[%s3009 + $0x17c] sm:$0xf]
      %v3106 = vld [vmem:[%s3009 + $0x180] sm:$0xf]
      %v3107 = vld [vmem:[%s3009 + $0x184] sm:$0xf]
      %v3108 = vunpack.c.l.bf16 %v3010
      %v3109 = vunpack.c.l.bf16 %v3011
      %v3110 = vunpack.c.l.bf16 %v3012
      %v3111 = vunpack.c.l.bf16 %v3013
      %v3112 = vunpack.c.l.bf16 %v3014
      %v3113 = vunpack.c.l.bf16 %v3015
      %v3114 = vunpack.c.l.bf16 %v3016
      %v3115 = vunpack.c.l.bf16 %v3017
      %v3116 = vunpack.c.l.bf16 %v3018
      %v3117 = vunpack.c.l.bf16 %v3019
      %v3118 = vunpack.c.l.bf16 %v3020
      %v3119 = vunpack.c.l.bf16 %v3021
      %v3120 = vunpack.c.l.bf16 %v3022
      %v3121 = vunpack.c.l.bf16 %v3023
      %v3122 = vunpack.c.l.bf16 %v3024
      %v3123 = vunpack.c.l.bf16 %v3025
      %v3124 = vunpack.c.l.bf16 %v3026
      %v3125 = vunpack.c.l.bf16 %v3027
      %v3126 = vunpack.c.l.bf16 %v3028
      %v3127 = vunpack.c.l.bf16 %v3029
      %v3128 = vunpack.c.l.bf16 %v3030
      %v3129 = vunpack.c.l.bf16 %v3031
      %v3130 = vunpack.c.l.bf16 %v3032
      %v3131 = vunpack.c.l.bf16 %v3033
      %v3132 = vunpack.c.l.bf16 %v3034
      %v3133 = vunpack.c.l.bf16 %v3035
      %v3134 = vunpack.c.l.bf16 %v3036
      %v3135 = vunpack.c.l.bf16 %v3037
      %v3136 = vunpack.c.l.bf16 %v3038
      %v3137 = vunpack.c.l.bf16 %v3039
      %v3138 = vunpack.c.l.bf16 %v3040
      %v3139 = vunpack.c.l.bf16 %v3041
      %v3140 = vunpack.c.l.bf16 %v3042
      %v3141 = vunpack.c.l.bf16 %v3043
      %v3142 = vunpack.c.l.bf16 %v3044
      %v3143 = vunpack.c.l.bf16 %v3045
      %v3144 = vunpack.c.l.bf16 %v3046
      %v3145 = vunpack.c.l.bf16 %v3047
      %v3146 = vunpack.c.l.bf16 %v3048
      %v3147 = vunpack.c.l.bf16 %v3049
      %v3148 = vunpack.c.l.bf16 %v3050
      %v3149 = vunpack.c.l.bf16 %v3051
      %v3150 = vunpack.c.l.bf16 %v3052
      %v3151 = vunpack.c.l.bf16 %v3053
      %v3152 = vunpack.c.l.bf16 %v3054
      %v3153 = vunpack.c.l.bf16 %v3055
      %v3154 = vunpack.c.l.bf16 %v3056
      %v3155 = vunpack.c.l.bf16 %v3057
      %v3156 = vunpack.c.l.bf16 %v3058
      %v3157 = vunpack.c.l.bf16 %v3059
      %v3158 = vunpack.c.l.bf16 %v3060
      %v3159 = vunpack.c.l.bf16 %v3061
      %v3160 = vunpack.c.l.bf16 %v3062
      %v3161 = vunpack.c.l.bf16 %v3063
      %v3162 = vunpack.c.l.bf16 %v3064
      %v3163 = vunpack.c.l.bf16 %v3065
      %v3164 = vunpack.c.l.bf16 %v3066
      %v3165 = vunpack.c.l.bf16 %v3067
      %v3166 = vunpack.c.l.bf16 %v3068
      %v3167 = vunpack.c.l.bf16 %v3069
      %v3168 = vunpack.c.l.bf16 %v3070
      %v3169 = vunpack.c.l.bf16 %v3071
      %v3170 = vunpack.c.l.bf16 %v3072
      %v3171 = vunpack.c.l.bf16 %v3073
      %v3172 = vunpack.c.l.bf16 %v3074
      %v3173 = vunpack.c.l.bf16 %v3075
      %v3174 = vunpack.c.l.bf16 %v3076
      %v3175 = vunpack.c.l.bf16 %v3077
      %v3176 = vunpack.c.l.bf16 %v3078
      %v3177 = vunpack.c.l.bf16 %v3079
      %v3178 = vunpack.c.l.bf16 %v3080
      %v3179 = vunpack.c.l.bf16 %v3081
      %v3180 = vunpack.c.l.bf16 %v3082
      %v3181 = vunpack.c.l.bf16 %v3083
      %v3182 = vunpack.c.l.bf16 %v3084
      %v3183 = vunpack.c.l.bf16 %v3085
      %v3184 = vunpack.c.l.bf16 %v3086
      %v3185 = vunpack.c.l.bf16 %v3087
      %v3186 = vunpack.c.l.bf16 %v3088
      %v3187 = vunpack.c.l.bf16 %v3089
      %v3188 = vunpack.c.l.bf16 %v3090
      %v3189 = vunpack.c.l.bf16 %v3091
      %v3190 = vunpack.c.l.bf16 %v3092
      %v3191 = vunpack.c.l.bf16 %v3093
      %v3192 = vunpack.c.l.bf16 %v3094
      %v3193 = vunpack.c.l.bf16 %v3095
      %v3194 = vunpack.c.l.bf16 %v3096
      %v3195 = vunpack.c.l.bf16 %v3097
      %v3196 = vunpack.c.l.bf16 %v3098
      %v3197 = vunpack.c.l.bf16 %v3099
      %v3198 = vunpack.c.l.bf16 %v3100
      %v3199 = vunpack.c.l.bf16 %v3101
      %v3200 = vunpack.c.l.bf16 %v3102
      %v3201 = vunpack.c.l.bf16 %v3103
      %v3202 = vunpack.c.l.bf16 %v3104
      %v3203 = vunpack.c.l.bf16 %v3105
      %v3204 = vunpack.c.l.bf16 %v3106
      %v3205 = vunpack.c.l.bf16 %v3107
      %v3207 = vsel %vm1576, %v1160, 0
      %v3210 = vsel %vm1576, %v1163, 0
      %3212 = vmatpush.msra.mxu0 %v3123
      %3213 = vmatpush.msra.mxu0 %v3122
      %3214 = vmatpush.msra.mxu0 %v3121
      %3215 = vmatpush.msra.mxu0 %v3120
      %3216 = vmatpush.msra.mxu0 %v3119
      %3217 = vmatpush.msra.mxu0 %v3118
      %3218 = vmatpush.msra.mxu0 %v3117
      %3219 = vmatpush.msra.mxu0 %v3116
      %3220 = vmatpush.msra.mxu0 %v3115
      %3221 = vmatpush.msra.mxu0 %v3114
      %3222 = vmatpush.msra.mxu0 %v3113
      %3223 = vmatpush.msra.mxu0 %v3112
      %3224 = vmatpush.msra.mxu0 %v3111
      %3225 = vmatpush.msra.mxu0 %v3110
      %3226 = vmatpush.msra.mxu0 %v3109
      %3227 = vmatpush.msra.mxu0 %v3108
      %3228 = vmatmul.f32.gmra.mxu0 %v734
      %v3229 = vpop.f32.mrf.mxu0
      %v3230 = vadd.f32 0.0, %v3229
      %3231 = vmatmul.f32.gmra.mxu0 %v737
      %v3232 = vpop.f32.mrf.mxu0
      %v3233 = vadd.f32 0.0, %v3232
      %3234 = vdwg.mxu0
      %3235 = vmatpush.msra.mxu0 %v3139
      %3236 = vmatpush.msra.mxu0 %v3138
      %3237 = vmatpush.msra.mxu0 %v3137
      %3238 = vmatpush.msra.mxu0 %v3136
      %3239 = vmatpush.msra.mxu0 %v3135
      %3240 = vmatpush.msra.mxu0 %v3134
      %3241 = vmatpush.msra.mxu0 %v3133
      %3242 = vmatpush.msra.mxu0 %v3132
      %3243 = vmatpush.msra.mxu0 %v3131
      %3244 = vmatpush.msra.mxu0 %v3130
      %3245 = vmatpush.msra.mxu0 %v3129
      %3246 = vmatpush.msra.mxu0 %v3128
      %3247 = vmatpush.msra.mxu0 %v3127
      %3248 = vmatpush.msra.mxu0 %v3126
      %3249 = vmatpush.msra.mxu0 %v3125
      %3250 = vmatpush.msra.mxu0 %v3124
      %3251 = vmatmul.f32.gmra.mxu0 %v805
      %v3252 = vpop.f32.mrf.mxu0
      %v3253 = vadd.f32 %v3230, %v3252
      %3254 = vmatmul.f32.gmra.mxu0 %v808
      %v3255 = vpop.f32.mrf.mxu0
      %v3256 = vadd.f32 %v3233, %v3255
      %3257 = vdwg.mxu0
      %3258 = vmatpush.msra.mxu0 %v3155
      %3259 = vmatpush.msra.mxu0 %v3154
      %3260 = vmatpush.msra.mxu0 %v3153
      %3261 = vmatpush.msra.mxu0 %v3152
      %3262 = vmatpush.msra.mxu0 %v3151
      %3263 = vmatpush.msra.mxu0 %v3150
      %3264 = vmatpush.msra.mxu0 %v3149
      %3265 = vmatpush.msra.mxu0 %v3148
      %3266 = vmatpush.msra.mxu0 %v3147
      %3267 = vmatpush.msra.mxu0 %v3146
      %3268 = vmatpush.msra.mxu0 %v3145
      %3269 = vmatpush.msra.mxu0 %v3144
      %3270 = vmatpush.msra.mxu0 %v3143
      %3271 = vmatpush.msra.mxu0 %v3142
      %3272 = vmatpush.msra.mxu0 %v3141
      %3273 = vmatpush.msra.mxu0 %v3140
      %3274 = vmatmul.f32.gmra.mxu0 %v876
      %v3275 = vpop.f32.mrf.mxu0
      %v3276 = vadd.f32 %v3253, %v3275
      %3277 = vmatmul.f32.gmra.mxu0 %v879
      %v3278 = vpop.f32.mrf.mxu0
      %v3279 = vadd.f32 %v3256, %v3278
      %3280 = vdwg.mxu0
      %3281 = vmatpush.msra.mxu0 %v3171
      %3282 = vmatpush.msra.mxu0 %v3170
      %3283 = vmatpush.msra.mxu0 %v3169
      %3284 = vmatpush.msra.mxu0 %v3168
      %3285 = vmatpush.msra.mxu0 %v3167
      %3286 = vmatpush.msra.mxu0 %v3166
      %3287 = vmatpush.msra.mxu0 %v3165
      %3288 = vmatpush.msra.mxu0 %v3164
      %3289 = vmatpush.msra.mxu0 %v3163
      %3290 = vmatpush.msra.mxu0 %v3162
      %3291 = vmatpush.msra.mxu0 %v3161
      %3292 = vmatpush.msra.mxu0 %v3160
      %3293 = vmatpush.msra.mxu0 %v3159
      %3294 = vmatpush.msra.mxu0 %v3158
      %3295 = vmatpush.msra.mxu0 %v3157
      %3296 = vmatpush.msra.mxu0 %v3156
      %3297 = vmatmul.f32.gmra.mxu0 %v947
      %v3298 = vpop.f32.mrf.mxu0
      %v3299 = vadd.f32 %v3276, %v3298
      %3300 = vmatmul.f32.gmra.mxu0 %v950
      %v3301 = vpop.f32.mrf.mxu0
      %v3302 = vadd.f32 %v3279, %v3301
      %3303 = vdwg.mxu0
      %3304 = vmatpush.msra.mxu0 %v3187
      %3305 = vmatpush.msra.mxu0 %v3186
      %3306 = vmatpush.msra.mxu0 %v3185
      %3307 = vmatpush.msra.mxu0 %v3184
      %3308 = vmatpush.msra.mxu0 %v3183
      %3309 = vmatpush.msra.mxu0 %v3182
      %3310 = vmatpush.msra.mxu0 %v3181
      %3311 = vmatpush.msra.mxu0 %v3180
      %3312 = vmatpush.msra.mxu0 %v3179
      %3313 = vmatpush.msra.mxu0 %v3178
      %3314 = vmatpush.msra.mxu0 %v3177
      %3315 = vmatpush.msra.mxu0 %v3176
      %3316 = vmatpush.msra.mxu0 %v3175
      %3317 = vmatpush.msra.mxu0 %v3174
      %3318 = vmatpush.msra.mxu0 %v3173
      %3319 = vmatpush.msra.mxu0 %v3172
      %3320 = vmatmul.f32.gmra.mxu0 %v1018
      %v3321 = vpop.f32.mrf.mxu0
      %v3322 = vadd.f32 %v3299, %v3321
      %3323 = vmatmul.f32.gmra.mxu0 %v1021
      %v3324 = vpop.f32.mrf.mxu0
      %v3325 = vadd.f32 %v3302, %v3324
      %3326 = vdwg.mxu0
      %3327 = vmatpush.msra.mxu0 %v3203
      %3328 = vmatpush.msra.mxu0 %v3202
      %3329 = vmatpush.msra.mxu0 %v3201
      %3330 = vmatpush.msra.mxu0 %v3200
      %3331 = vmatpush.msra.mxu0 %v3199
      %3332 = vmatpush.msra.mxu0 %v3198
      %3333 = vmatpush.msra.mxu0 %v3197
      %3334 = vmatpush.msra.mxu0 %v3196
      %3335 = vmatpush.msra.mxu0 %v3195
      %3336 = vmatpush.msra.mxu0 %v3194
      %3337 = vmatpush.msra.mxu0 %v3193
      %3338 = vmatpush.msra.mxu0 %v3192
      %3339 = vmatpush.msra.mxu0 %v3191
      %3340 = vmatpush.msra.mxu0 %v3190
      %3341 = vmatpush.msra.mxu0 %v3189
      %3342 = vmatpush.msra.mxu0 %v3188
      %3343 = vmatmul.f32.gmra.mxu0 %v1089
      %v3344 = vpop.f32.mrf.mxu0
      %v3345 = vadd.f32 %v3322, %v3344
      %3346 = vmatmul.f32.gmra.mxu0 %v1092
      %v3347 = vpop.f32.mrf.mxu0
      %v3348 = vadd.f32 %v3325, %v3347
      %3349 = vdwg.mxu0
      %3350 = vmatpush.msra.mxu0 0.0
      %3351 = vmatpush.msra.mxu0 0.0
      %3352 = vmatpush.msra.mxu0 0.0
      %3353 = vmatpush.msra.mxu0 0.0
      %3354 = vmatpush.msra.mxu0 0.0
      %3355 = vmatpush.msra.mxu0 0.0
      %3356 = vmatpush.msra.mxu0 0.0
      %3357 = vmatpush.msra.mxu0 0.0
      %3358 = vmatpush.msra.mxu0 0.0
      %3359 = vmatpush.msra.mxu0 0.0
      %3360 = vmatpush.msra.mxu0 0.0
      %3361 = vmatpush.msra.mxu0 0.0
      %3362 = vmatpush.msra.mxu0 0.0
      %3363 = vmatpush.msra.mxu0 0.0
      %3364 = vmatpush.msra.mxu0 %v3205
      %3365 = vmatpush.msra.mxu0 %v3204
      %3366 = vmatmul.f32.gmra.mxu0 %v3207
      %v3367 = vpop.f32.mrf.mxu0
      %v3368 = vadd.f32 %v3345, %v3367
      %3369 = vmatmul.f32.gmra.mxu0 %v3210
      %v3370 = vpop.f32.mrf.mxu0
      %v3371 = vadd.f32 %v3348, %v3370
      %3372 = vdwg.mxu0
      %v3373 = vadd.f32 %v3007, %v3368
      %v3374 = vadd.f32 %v3008, %v3371
      %s3375 = scalar_lea.vmem %s3, 2352
      %v3376 = vld [vmem:[%s3375] sm:$0xf]
      %v3377 = vld [vmem:[%s3375 + $0x4] sm:$0xf]
      %v3378 = vld [vmem:[%s3375 + $0x8] sm:$0xf]
      %v3379 = vld [vmem:[%s3375 + $0xc] sm:$0xf]
      %v3380 = vld [vmem:[%s3375 + $0x10] sm:$0xf]
      %v3381 = vld [vmem:[%s3375 + $0x14] sm:$0xf]
      %v3382 = vld [vmem:[%s3375 + $0x18] sm:$0xf]
      %v3383 = vld [vmem:[%s3375 + $0x1c] sm:$0xf]
      %v3384 = vld [vmem:[%s3375 + $0x20] sm:$0xf]
      %v3385 = vld [vmem:[%s3375 + $0x24] sm:$0xf]
      %v3386 = vld [vmem:[%s3375 + $0x28] sm:$0xf]
      %v3387 = vld [vmem:[%s3375 + $0x2c] sm:$0xf]
      %v3388 = vld [vmem:[%s3375 + $0x30] sm:$0xf]
      %v3389 = vld [vmem:[%s3375 + $0x34] sm:$0xf]
      %v3390 = vld [vmem:[%s3375 + $0x38] sm:$0xf]
      %v3391 = vld [vmem:[%s3375 + $0x3c] sm:$0xf]
      %v3392 = vld [vmem:[%s3375 + $0x40] sm:$0xf]
      %v3393 = vld [vmem:[%s3375 + $0x44] sm:$0xf]
      %v3394 = vld [vmem:[%s3375 + $0x48] sm:$0xf]
      %v3395 = vld [vmem:[%s3375 + $0x4c] sm:$0xf]
      %v3396 = vld [vmem:[%s3375 + $0x50] sm:$0xf]
      %v3397 = vld [vmem:[%s3375 + $0x54] sm:$0xf]
      %v3398 = vld [vmem:[%s3375 + $0x58] sm:$0xf]
      %v3399 = vld [vmem:[%s3375 + $0x5c] sm:$0xf]
      %v3400 = vld [vmem:[%s3375 + $0x60] sm:$0xf]
      %v3401 = vld [vmem:[%s3375 + $0x64] sm:$0xf]
      %v3402 = vld [vmem:[%s3375 + $0x68] sm:$0xf]
      %v3403 = vld [vmem:[%s3375 + $0x6c] sm:$0xf]
      %v3404 = vld [vmem:[%s3375 + $0x70] sm:$0xf]
      %v3405 = vld [vmem:[%s3375 + $0x74] sm:$0xf]
      %v3406 = vld [vmem:[%s3375 + $0x78] sm:$0xf]
      %v3407 = vld [vmem:[%s3375 + $0x7c] sm:$0xf]
      %v3408 = vld [vmem:[%s3375 + $0x80] sm:$0xf]
      %v3409 = vld [vmem:[%s3375 + $0x84] sm:$0xf]
      %v3410 = vld [vmem:[%s3375 + $0x88] sm:$0xf]
      %v3411 = vld [vmem:[%s3375 + $0x8c] sm:$0xf]
      %v3412 = vld [vmem:[%s3375 + $0x90] sm:$0xf]
      %v3413 = vld [vmem:[%s3375 + $0x94] sm:$0xf]
      %v3414 = vld [vmem:[%s3375 + $0x98] sm:$0xf]
      %v3415 = vld [vmem:[%s3375 + $0x9c] sm:$0xf]
      %v3416 = vld [vmem:[%s3375 + $0xa0] sm:$0xf]
      %v3417 = vld [vmem:[%s3375 + $0xa4] sm:$0xf]
      %v3418 = vld [vmem:[%s3375 + $0xa8] sm:$0xf]
      %v3419 = vld [vmem:[%s3375 + $0xac] sm:$0xf]
      %v3420 = vld [vmem:[%s3375 + $0xb0] sm:$0xf]
      %v3421 = vld [vmem:[%s3375 + $0xb4] sm:$0xf]
      %v3422 = vld [vmem:[%s3375 + $0xb8] sm:$0xf]
      %v3423 = vld [vmem:[%s3375 + $0xbc] sm:$0xf]
      %v3424 = vld [vmem:[%s3375 + $0xc0] sm:$0xf]
      %v3425 = vld [vmem:[%s3375 + $0xc4] sm:$0xf]
      %v3426 = vld [vmem:[%s3375 + $0xc8] sm:$0xf]
      %v3427 = vld [vmem:[%s3375 + $0xcc] sm:$0xf]
      %v3428 = vld [vmem:[%s3375 + $0xd0] sm:$0xf]
      %v3429 = vld [vmem:[%s3375 + $0xd4] sm:$0xf]
      %v3430 = vld [vmem:[%s3375 + $0xd8] sm:$0xf]
      %v3431 = vld [vmem:[%s3375 + $0xdc] sm:$0xf]
      %v3432 = vld [vmem:[%s3375 + $0xe0] sm:$0xf]
      %v3433 = vld [vmem:[%s3375 + $0xe4] sm:$0xf]
      %v3434 = vld [vmem:[%s3375 + $0xe8] sm:$0xf]
      %v3435 = vld [vmem:[%s3375 + $0xec] sm:$0xf]
      %v3436 = vld [vmem:[%s3375 + $0xf0] sm:$0xf]
      %v3437 = vld [vmem:[%s3375 + $0xf4] sm:$0xf]
      %v3438 = vld [vmem:[%s3375 + $0xf8] sm:$0xf]
      %v3439 = vld [vmem:[%s3375 + $0xfc] sm:$0xf]
      %v3440 = vld [vmem:[%s3375 + $0x100] sm:$0xf]
      %v3441 = vld [vmem:[%s3375 + $0x104] sm:$0xf]
      %v3442 = vld [vmem:[%s3375 + $0x108] sm:$0xf]
      %v3443 = vld [vmem:[%s3375 + $0x10c] sm:$0xf]
      %v3444 = vld [vmem:[%s3375 + $0x110] sm:$0xf]
      %v3445 = vld [vmem:[%s3375 + $0x114] sm:$0xf]
      %v3446 = vld [vmem:[%s3375 + $0x118] sm:$0xf]
      %v3447 = vld [vmem:[%s3375 + $0x11c] sm:$0xf]
      %v3448 = vld [vmem:[%s3375 + $0x120] sm:$0xf]
      %v3449 = vld [vmem:[%s3375 + $0x124] sm:$0xf]
      %v3450 = vld [vmem:[%s3375 + $0x128] sm:$0xf]
      %v3451 = vld [vmem:[%s3375 + $0x12c] sm:$0xf]
      %v3452 = vld [vmem:[%s3375 + $0x130] sm:$0xf]
      %v3453 = vld [vmem:[%s3375 + $0x134] sm:$0xf]
      %v3454 = vld [vmem:[%s3375 + $0x138] sm:$0xf]
      %v3455 = vld [vmem:[%s3375 + $0x13c] sm:$0xf]
      %v3456 = vld [vmem:[%s3375 + $0x140] sm:$0xf]
      %v3457 = vld [vmem:[%s3375 + $0x144] sm:$0xf]
      %v3458 = vld [vmem:[%s3375 + $0x148] sm:$0xf]
      %v3459 = vld [vmem:[%s3375 + $0x14c] sm:$0xf]
      %v3460 = vld [vmem:[%s3375 + $0x150] sm:$0xf]
      %v3461 = vld [vmem:[%s3375 + $0x154] sm:$0xf]
      %v3462 = vld [vmem:[%s3375 + $0x158] sm:$0xf]
      %v3463 = vld [vmem:[%s3375 + $0x15c] sm:$0xf]
      %v3464 = vld [vmem:[%s3375 + $0x160] sm:$0xf]
      %v3465 = vld [vmem:[%s3375 + $0x164] sm:$0xf]
      %v3466 = vld [vmem:[%s3375 + $0x168] sm:$0xf]
      %v3467 = vld [vmem:[%s3375 + $0x16c] sm:$0xf]
      %v3468 = vld [vmem:[%s3375 + $0x170] sm:$0xf]
      %v3469 = vld [vmem:[%s3375 + $0x174] sm:$0xf]
      %v3470 = vld [vmem:[%s3375 + $0x178] sm:$0xf]
      %v3471 = vld [vmem:[%s3375 + $0x17c] sm:$0xf]
      %v3472 = vld [vmem:[%s3375 + $0x180] sm:$0xf]
      %v3473 = vld [vmem:[%s3375 + $0x184] sm:$0xf]
      %v3474 = vunpack.c.l.bf16 %v3376
      %v3475 = vunpack.c.l.bf16 %v3377
      %v3476 = vunpack.c.l.bf16 %v3378
      %v3477 = vunpack.c.l.bf16 %v3379
      %v3478 = vunpack.c.l.bf16 %v3380
      %v3479 = vunpack.c.l.bf16 %v3381
      %v3480 = vunpack.c.l.bf16 %v3382
      %v3481 = vunpack.c.l.bf16 %v3383
      %v3482 = vunpack.c.l.bf16 %v3384
      %v3483 = vunpack.c.l.bf16 %v3385
      %v3484 = vunpack.c.l.bf16 %v3386
      %v3485 = vunpack.c.l.bf16 %v3387
      %v3486 = vunpack.c.l.bf16 %v3388
      %v3487 = vunpack.c.l.bf16 %v3389
      %v3488 = vunpack.c.l.bf16 %v3390
      %v3489 = vunpack.c.l.bf16 %v3391
      %v3490 = vunpack.c.l.bf16 %v3392
      %v3491 = vunpack.c.l.bf16 %v3393
      %v3492 = vunpack.c.l.bf16 %v3394
      %v3493 = vunpack.c.l.bf16 %v3395
      %v3494 = vunpack.c.l.bf16 %v3396
      %v3495 = vunpack.c.l.bf16 %v3397
      %v3496 = vunpack.c.l.bf16 %v3398
      %v3497 = vunpack.c.l.bf16 %v3399
      %v3498 = vunpack.c.l.bf16 %v3400
      %v3499 = vunpack.c.l.bf16 %v3401
      %v3500 = vunpack.c.l.bf16 %v3402
      %v3501 = vunpack.c.l.bf16 %v3403
      %v3502 = vunpack.c.l.bf16 %v3404
      %v3503 = vunpack.c.l.bf16 %v3405
      %v3504 = vunpack.c.l.bf16 %v3406
      %v3505 = vunpack.c.l.bf16 %v3407
      %v3506 = vunpack.c.l.bf16 %v3408
      %v3507 = vunpack.c.l.bf16 %v3409
      %v3508 = vunpack.c.l.bf16 %v3410
      %v3509 = vunpack.c.l.bf16 %v3411
      %v3510 = vunpack.c.l.bf16 %v3412
      %v3511 = vunpack.c.l.bf16 %v3413
      %v3512 = vunpack.c.l.bf16 %v3414
      %v3513 = vunpack.c.l.bf16 %v3415
      %v3514 = vunpack.c.l.bf16 %v3416
      %v3515 = vunpack.c.l.bf16 %v3417
      %v3516 = vunpack.c.l.bf16 %v3418
      %v3517 = vunpack.c.l.bf16 %v3419
      %v3518 = vunpack.c.l.bf16 %v3420
      %v3519 = vunpack.c.l.bf16 %v3421
      %v3520 = vunpack.c.l.bf16 %v3422
      %v3521 = vunpack.c.l.bf16 %v3423
      %v3522 = vunpack.c.l.bf16 %v3424
      %v3523 = vunpack.c.l.bf16 %v3425
      %v3524 = vunpack.c.l.bf16 %v3426
      %v3525 = vunpack.c.l.bf16 %v3427
      %v3526 = vunpack.c.l.bf16 %v3428
      %v3527 = vunpack.c.l.bf16 %v3429
      %v3528 = vunpack.c.l.bf16 %v3430
      %v3529 = vunpack.c.l.bf16 %v3431
      %v3530 = vunpack.c.l.bf16 %v3432
      %v3531 = vunpack.c.l.bf16 %v3433
      %v3532 = vunpack.c.l.bf16 %v3434
      %v3533 = vunpack.c.l.bf16 %v3435
      %v3534 = vunpack.c.l.bf16 %v3436
      %v3535 = vunpack.c.l.bf16 %v3437
      %v3536 = vunpack.c.l.bf16 %v3438
      %v3537 = vunpack.c.l.bf16 %v3439
      %v3538 = vunpack.c.l.bf16 %v3440
      %v3539 = vunpack.c.l.bf16 %v3441
      %v3540 = vunpack.c.l.bf16 %v3442
      %v3541 = vunpack.c.l.bf16 %v3443
      %v3542 = vunpack.c.l.bf16 %v3444
      %v3543 = vunpack.c.l.bf16 %v3445
      %v3544 = vunpack.c.l.bf16 %v3446
      %v3545 = vunpack.c.l.bf16 %v3447
      %v3546 = vunpack.c.l.bf16 %v3448
      %v3547 = vunpack.c.l.bf16 %v3449
      %v3548 = vunpack.c.l.bf16 %v3450
      %v3549 = vunpack.c.l.bf16 %v3451
      %v3550 = vunpack.c.l.bf16 %v3452
      %v3551 = vunpack.c.l.bf16 %v3453
      %v3552 = vunpack.c.l.bf16 %v3454
      %v3553 = vunpack.c.l.bf16 %v3455
      %v3554 = vunpack.c.l.bf16 %v3456
      %v3555 = vunpack.c.l.bf16 %v3457
      %v3556 = vunpack.c.l.bf16 %v3458
      %v3557 = vunpack.c.l.bf16 %v3459
      %v3558 = vunpack.c.l.bf16 %v3460
      %v3559 = vunpack.c.l.bf16 %v3461
      %v3560 = vunpack.c.l.bf16 %v3462
      %v3561 = vunpack.c.l.bf16 %v3463
      %v3562 = vunpack.c.l.bf16 %v3464
      %v3563 = vunpack.c.l.bf16 %v3465
      %v3564 = vunpack.c.l.bf16 %v3466
      %v3565 = vunpack.c.l.bf16 %v3467
      %v3566 = vunpack.c.l.bf16 %v3468
      %v3567 = vunpack.c.l.bf16 %v3469
      %v3568 = vunpack.c.l.bf16 %v3470
      %v3569 = vunpack.c.l.bf16 %v3471
      %v3570 = vunpack.c.l.bf16 %v3472
      %v3571 = vunpack.c.l.bf16 %v3473
      %v3573 = vsel %vm1576, %v1166, 0
      %v3576 = vsel %vm1576, %v1169, 0
      %3578 = vmatpush.msra.mxu0 %v3489
      %3579 = vmatpush.msra.mxu0 %v3488
      %3580 = vmatpush.msra.mxu0 %v3487
      %3581 = vmatpush.msra.mxu0 %v3486
      %3582 = vmatpush.msra.mxu0 %v3485
      %3583 = vmatpush.msra.mxu0 %v3484
      %3584 = vmatpush.msra.mxu0 %v3483
      %3585 = vmatpush.msra.mxu0 %v3482
      %3586 = vmatpush.msra.mxu0 %v3481
      %3587 = vmatpush.msra.mxu0 %v3480
      %3588 = vmatpush.msra.mxu0 %v3479
      %3589 = vmatpush.msra.mxu0 %v3478
      %3590 = vmatpush.msra.mxu0 %v3477
      %3591 = vmatpush.msra.mxu0 %v3476
      %3592 = vmatpush.msra.mxu0 %v3475
      %3593 = vmatpush.msra.mxu0 %v3474
      %3594 = vmatmul.f32.gmra.mxu0 %v740
      %v3595 = vpop.f32.mrf.mxu0
      %v3596 = vadd.f32 0.0, %v3595
      %3597 = vmatmul.f32.gmra.mxu0 %v743
      %v3598 = vpop.f32.mrf.mxu0
      %v3599 = vadd.f32 0.0, %v3598
      %3600 = vdwg.mxu0
      %3601 = vmatpush.msra.mxu0 %v3505
      %3602 = vmatpush.msra.mxu0 %v3504
      %3603 = vmatpush.msra.mxu0 %v3503
      %3604 = vmatpush.msra.mxu0 %v3502
      %3605 = vmatpush.msra.mxu0 %v3501
      %3606 = vmatpush.msra.mxu0 %v3500
      %3607 = vmatpush.msra.mxu0 %v3499
      %3608 = vmatpush.msra.mxu0 %v3498
      %3609 = vmatpush.msra.mxu0 %v3497
      %3610 = vmatpush.msra.mxu0 %v3496
      %3611 = vmatpush.msra.mxu0 %v3495
      %3612 = vmatpush.msra.mxu0 %v3494
      %3613 = vmatpush.msra.mxu0 %v3493
      %3614 = vmatpush.msra.mxu0 %v3492
      %3615 = vmatpush.msra.mxu0 %v3491
      %3616 = vmatpush.msra.mxu0 %v3490
      %3617 = vmatmul.f32.gmra.mxu0 %v811
      %v3618 = vpop.f32.mrf.mxu0
      %v3619 = vadd.f32 %v3596, %v3618
      %3620 = vmatmul.f32.gmra.mxu0 %v814
      %v3621 = vpop.f32.mrf.mxu0
      %v3622 = vadd.f32 %v3599, %v3621
      %3623 = vdwg.mxu0
      %3624 = vmatpush.msra.mxu0 %v3521
      %3625 = vmatpush.msra.mxu0 %v3520
      %3626 = vmatpush.msra.mxu0 %v3519
      %3627 = vmatpush.msra.mxu0 %v3518
      %3628 = vmatpush.msra.mxu0 %v3517
      %3629 = vmatpush.msra.mxu0 %v3516
      %3630 = vmatpush.msra.mxu0 %v3515
      %3631 = vmatpush.msra.mxu0 %v3514
      %3632 = vmatpush.msra.mxu0 %v3513
      %3633 = vmatpush.msra.mxu0 %v3512
      %3634 = vmatpush.msra.mxu0 %v3511
      %3635 = vmatpush.msra.mxu0 %v3510
      %3636 = vmatpush.msra.mxu0 %v3509
      %3637 = vmatpush.msra.mxu0 %v3508
      %3638 = vmatpush.msra.mxu0 %v3507
      %3639 = vmatpush.msra.mxu0 %v3506
      %3640 = vmatmul.f32.gmra.mxu0 %v882
      %v3641 = vpop.f32.mrf.mxu0
      %v3642 = vadd.f32 %v3619, %v3641
      %3643 = vmatmul.f32.gmra.mxu0 %v885
      %v3644 = vpop.f32.mrf.mxu0
      %v3645 = vadd.f32 %v3622, %v3644
      %3646 = vdwg.mxu0
      %3647 = vmatpush.msra.mxu0 %v3537
      %3648 = vmatpush.msra.mxu0 %v3536
      %3649 = vmatpush.msra.mxu0 %v3535
      %3650 = vmatpush.msra.mxu0 %v3534
      %3651 = vmatpush.msra.mxu0 %v3533
      %3652 = vmatpush.msra.mxu0 %v3532
      %3653 = vmatpush.msra.mxu0 %v3531
      %3654 = vmatpush.msra.mxu0 %v3530
      %3655 = vmatpush.msra.mxu0 %v3529
      %3656 = vmatpush.msra.mxu0 %v3528
      %3657 = vmatpush.msra.mxu0 %v3527
      %3658 = vmatpush.msra.mxu0 %v3526
      %3659 = vmatpush.msra.mxu0 %v3525
      %3660 = vmatpush.msra.mxu0 %v3524
      %3661 = vmatpush.msra.mxu0 %v3523
      %3662 = vmatpush.msra.mxu0 %v3522
      %3663 = vmatmul.f32.gmra.mxu0 %v953
      %v3664 = vpop.f32.mrf.mxu0
      %v3665 = vadd.f32 %v3642, %v3664
      %3666 = vmatmul.f32.gmra.mxu0 %v956
      %v3667 = vpop.f32.mrf.mxu0
      %v3668 = vadd.f32 %v3645, %v3667
      %3669 = vdwg.mxu0
      %3670 = vmatpush.msra.mxu0 %v3553
      %3671 = vmatpush.msra.mxu0 %v3552
      %3672 = vmatpush.msra.mxu0 %v3551
      %3673 = vmatpush.msra.mxu0 %v3550
      %3674 = vmatpush.msra.mxu0 %v3549
      %3675 = vmatpush.msra.mxu0 %v3548
      %3676 = vmatpush.msra.mxu0 %v3547
      %3677 = vmatpush.msra.mxu0 %v3546
      %3678 = vmatpush.msra.mxu0 %v3545
      %3679 = vmatpush.msra.mxu0 %v3544
      %3680 = vmatpush.msra.mxu0 %v3543
      %3681 = vmatpush.msra.mxu0 %v3542
      %3682 = vmatpush.msra.mxu0 %v3541
      %3683 = vmatpush.msra.mxu0 %v3540
      %3684 = vmatpush.msra.mxu0 %v3539
      %3685 = vmatpush.msra.mxu0 %v3538
      %3686 = vmatmul.f32.gmra.mxu0 %v1024
      %v3687 = vpop.f32.mrf.mxu0
      %v3688 = vadd.f32 %v3665, %v3687
      %3689 = vmatmul.f32.gmra.mxu0 %v1027
      %v3690 = vpop.f32.mrf.mxu0
      %v3691 = vadd.f32 %v3668, %v3690
      %3692 = vdwg.mxu0
      %3693 = vmatpush.msra.mxu0 %v3569
      %3694 = vmatpush.msra.mxu0 %v3568
      %3695 = vmatpush.msra.mxu0 %v3567
      %3696 = vmatpush.msra.mxu0 %v3566
      %3697 = vmatpush.msra.mxu0 %v3565
      %3698 = vmatpush.msra.mxu0 %v3564
      %3699 = vmatpush.msra.mxu0 %v3563
      %3700 = vmatpush.msra.mxu0 %v3562
      %3701 = vmatpush.msra.mxu0 %v3561
      %3702 = vmatpush.msra.mxu0 %v3560
      %3703 = vmatpush.msra.mxu0 %v3559
      %3704 = vmatpush.msra.mxu0 %v3558
      %3705 = vmatpush.msra.mxu0 %v3557
      %3706 = vmatpush.msra.mxu0 %v3556
      %3707 = vmatpush.msra.mxu0 %v3555
      %3708 = vmatpush.msra.mxu0 %v3554
      %3709 = vmatmul.f32.gmra.mxu0 %v1095
      %v3710 = vpop.f32.mrf.mxu0
      %v3711 = vadd.f32 %v3688, %v3710
      %3712 = vmatmul.f32.gmra.mxu0 %v1098
      %v3713 = vpop.f32.mrf.mxu0
      %v3714 = vadd.f32 %v3691, %v3713
      %3715 = vdwg.mxu0
      %3716 = vmatpush.msra.mxu0 0.0
      %3717 = vmatpush.msra.mxu0 0.0
      %3718 = vmatpush.msra.mxu0 0.0
      %3719 = vmatpush.msra.mxu0 0.0
      %3720 = vmatpush.msra.mxu0 0.0
      %3721 = vmatpush.msra.mxu0 0.0
      %3722 = vmatpush.msra.mxu0 0.0
      %3723 = vmatpush.msra.mxu0 0.0
      %3724 = vmatpush.msra.mxu0 0.0
      %3725 = vmatpush.msra.mxu0 0.0
      %3726 = vmatpush.msra.mxu0 0.0
      %3727 = vmatpush.msra.mxu0 0.0
      %3728 = vmatpush.msra.mxu0 0.0
      %3729 = vmatpush.msra.mxu0 0.0
      %3730 = vmatpush.msra.mxu0 %v3571
      %3731 = vmatpush.msra.mxu0 %v3570
      %3732 = vmatmul.f32.gmra.mxu0 %v3573
      %v3733 = vpop.f32.mrf.mxu0
      %v3734 = vadd.f32 %v3711, %v3733
      %3735 = vmatmul.f32.gmra.mxu0 %v3576
      %v3736 = vpop.f32.mrf.mxu0
      %v3737 = vadd.f32 %v3714, %v3736
      %3738 = vdwg.mxu0
      %v3739 = vadd.f32 %v3373, %v3734
      %v3740 = vadd.f32 %v3374, %v3737
      %s3741 = scalar_lea.vmem %s3, 2744
      %v3742 = vld [vmem:[%s3741] sm:$0xf]
      %v3743 = vld [vmem:[%s3741 + $0x4] sm:$0xf]
      %v3744 = vld [vmem:[%s3741 + $0x8] sm:$0xf]
      %v3745 = vld [vmem:[%s3741 + $0xc] sm:$0xf]
      %v3746 = vld [vmem:[%s3741 + $0x10] sm:$0xf]
      %v3747 = vld [vmem:[%s3741 + $0x14] sm:$0xf]
      %v3748 = vld [vmem:[%s3741 + $0x18] sm:$0xf]
      %v3749 = vld [vmem:[%s3741 + $0x1c] sm:$0xf]
      %v3750 = vld [vmem:[%s3741 + $0x20] sm:$0xf]
      %v3751 = vld [vmem:[%s3741 + $0x24] sm:$0xf]
      %v3752 = vld [vmem:[%s3741 + $0x28] sm:$0xf]
      %v3753 = vld [vmem:[%s3741 + $0x2c] sm:$0xf]
      %v3754 = vld [vmem:[%s3741 + $0x30] sm:$0xf]
      %v3755 = vld [vmem:[%s3741 + $0x34] sm:$0xf]
      %v3756 = vld [vmem:[%s3741 + $0x38] sm:$0xf]
      %v3757 = vld [vmem:[%s3741 + $0x3c] sm:$0xf]
      %v3758 = vld [vmem:[%s3741 + $0x40] sm:$0xf]
      %v3759 = vld [vmem:[%s3741 + $0x44] sm:$0xf]
      %v3760 = vld [vmem:[%s3741 + $0x48] sm:$0xf]
      %v3761 = vld [vmem:[%s3741 + $0x4c] sm:$0xf]
      %v3762 = vld [vmem:[%s3741 + $0x50] sm:$0xf]
      %v3763 = vld [vmem:[%s3741 + $0x54] sm:$0xf]
      %v3764 = vld [vmem:[%s3741 + $0x58] sm:$0xf]
      %v3765 = vld [vmem:[%s3741 + $0x5c] sm:$0xf]
      %v3766 = vld [vmem:[%s3741 + $0x60] sm:$0xf]
      %v3767 = vld [vmem:[%s3741 + $0x64] sm:$0xf]
      %v3768 = vld [vmem:[%s3741 + $0x68] sm:$0xf]
      %v3769 = vld [vmem:[%s3741 + $0x6c] sm:$0xf]
      %v3770 = vld [vmem:[%s3741 + $0x70] sm:$0xf]
      %v3771 = vld [vmem:[%s3741 + $0x74] sm:$0xf]
      %v3772 = vld [vmem:[%s3741 + $0x78] sm:$0xf]
      %v3773 = vld [vmem:[%s3741 + $0x7c] sm:$0xf]
      %v3774 = vld [vmem:[%s3741 + $0x80] sm:$0xf]
      %v3775 = vld [vmem:[%s3741 + $0x84] sm:$0xf]
      %v3776 = vld [vmem:[%s3741 + $0x88] sm:$0xf]
      %v3777 = vld [vmem:[%s3741 + $0x8c] sm:$0xf]
      %v3778 = vld [vmem:[%s3741 + $0x90] sm:$0xf]
      %v3779 = vld [vmem:[%s3741 + $0x94] sm:$0xf]
      %v3780 = vld [vmem:[%s3741 + $0x98] sm:$0xf]
      %v3781 = vld [vmem:[%s3741 + $0x9c] sm:$0xf]
      %v3782 = vld [vmem:[%s3741 + $0xa0] sm:$0xf]
      %v3783 = vld [vmem:[%s3741 + $0xa4] sm:$0xf]
      %v3784 = vld [vmem:[%s3741 + $0xa8] sm:$0xf]
      %v3785 = vld [vmem:[%s3741 + $0xac] sm:$0xf]
      %v3786 = vld [vmem:[%s3741 + $0xb0] sm:$0xf]
      %v3787 = vld [vmem:[%s3741 + $0xb4] sm:$0xf]
      %v3788 = vld [vmem:[%s3741 + $0xb8] sm:$0xf]
      %v3789 = vld [vmem:[%s3741 + $0xbc] sm:$0xf]
      %v3790 = vld [vmem:[%s3741 + $0xc0] sm:$0xf]
      %v3791 = vld [vmem:[%s3741 + $0xc4] sm:$0xf]
      %v3792 = vld [vmem:[%s3741 + $0xc8] sm:$0xf]
      %v3793 = vld [vmem:[%s3741 + $0xcc] sm:$0xf]
      %v3794 = vld [vmem:[%s3741 + $0xd0] sm:$0xf]
      %v3795 = vld [vmem:[%s3741 + $0xd4] sm:$0xf]
      %v3796 = vld [vmem:[%s3741 + $0xd8] sm:$0xf]
      %v3797 = vld [vmem:[%s3741 + $0xdc] sm:$0xf]
      %v3798 = vld [vmem:[%s3741 + $0xe0] sm:$0xf]
      %v3799 = vld [vmem:[%s3741 + $0xe4] sm:$0xf]
      %v3800 = vld [vmem:[%s3741 + $0xe8] sm:$0xf]
      %v3801 = vld [vmem:[%s3741 + $0xec] sm:$0xf]
      %v3802 = vld [vmem:[%s3741 + $0xf0] sm:$0xf]
      %v3803 = vld [vmem:[%s3741 + $0xf4] sm:$0xf]
      %v3804 = vld [vmem:[%s3741 + $0xf8] sm:$0xf]
      %v3805 = vld [vmem:[%s3741 + $0xfc] sm:$0xf]
      %v3806 = vld [vmem:[%s3741 + $0x100] sm:$0xf]
      %v3807 = vld [vmem:[%s3741 + $0x104] sm:$0xf]
      %v3808 = vld [vmem:[%s3741 + $0x108] sm:$0xf]
      %v3809 = vld [vmem:[%s3741 + $0x10c] sm:$0xf]
      %v3810 = vld [vmem:[%s3741 + $0x110] sm:$0xf]
      %v3811 = vld [vmem:[%s3741 + $0x114] sm:$0xf]
      %v3812 = vld [vmem:[%s3741 + $0x118] sm:$0xf]
      %v3813 = vld [vmem:[%s3741 + $0x11c] sm:$0xf]
      %v3814 = vld [vmem:[%s3741 + $0x120] sm:$0xf]
      %v3815 = vld [vmem:[%s3741 + $0x124] sm:$0xf]
      %v3816 = vld [vmem:[%s3741 + $0x128] sm:$0xf]
      %v3817 = vld [vmem:[%s3741 + $0x12c] sm:$0xf]
      %v3818 = vld [vmem:[%s3741 + $0x130] sm:$0xf]
      %v3819 = vld [vmem:[%s3741 + $0x134] sm:$0xf]
      %v3820 = vld [vmem:[%s3741 + $0x138] sm:$0xf]
      %v3821 = vld [vmem:[%s3741 + $0x13c] sm:$0xf]
      %v3822 = vld [vmem:[%s3741 + $0x140] sm:$0xf]
      %v3823 = vld [vmem:[%s3741 + $0x144] sm:$0xf]
      %v3824 = vld [vmem:[%s3741 + $0x148] sm:$0xf]
      %v3825 = vld [vmem:[%s3741 + $0x14c] sm:$0xf]
      %v3826 = vld [vmem:[%s3741 + $0x150] sm:$0xf]
      %v3827 = vld [vmem:[%s3741 + $0x154] sm:$0xf]
      %v3828 = vld [vmem:[%s3741 + $0x158] sm:$0xf]
      %v3829 = vld [vmem:[%s3741 + $0x15c] sm:$0xf]
      %v3830 = vld [vmem:[%s3741 + $0x160] sm:$0xf]
      %v3831 = vld [vmem:[%s3741 + $0x164] sm:$0xf]
      %v3832 = vld [vmem:[%s3741 + $0x168] sm:$0xf]
      %v3833 = vld [vmem:[%s3741 + $0x16c] sm:$0xf]
      %v3834 = vld [vmem:[%s3741 + $0x170] sm:$0xf]
      %v3835 = vld [vmem:[%s3741 + $0x174] sm:$0xf]
      %v3836 = vld [vmem:[%s3741 + $0x178] sm:$0xf]
      %v3837 = vld [vmem:[%s3741 + $0x17c] sm:$0xf]
      %v3838 = vld [vmem:[%s3741 + $0x180] sm:$0xf]
      %v3839 = vld [vmem:[%s3741 + $0x184] sm:$0xf]
      %v3840 = vunpack.c.l.bf16 %v3742
      %v3841 = vunpack.c.l.bf16 %v3743
      %v3842 = vunpack.c.l.bf16 %v3744
      %v3843 = vunpack.c.l.bf16 %v3745
      %v3844 = vunpack.c.l.bf16 %v3746
      %v3845 = vunpack.c.l.bf16 %v3747
      %v3846 = vunpack.c.l.bf16 %v3748
      %v3847 = vunpack.c.l.bf16 %v3749
      %v3848 = vunpack.c.l.bf16 %v3750
      %v3849 = vunpack.c.l.bf16 %v3751
      %v3850 = vunpack.c.l.bf16 %v3752
      %v3851 = vunpack.c.l.bf16 %v3753
      %v3852 = vunpack.c.l.bf16 %v3754
      %v3853 = vunpack.c.l.bf16 %v3755
      %v3854 = vunpack.c.l.bf16 %v3756
      %v3855 = vunpack.c.l.bf16 %v3757
      %v3856 = vunpack.c.l.bf16 %v3758
      %v3857 = vunpack.c.l.bf16 %v3759
      %v3858 = vunpack.c.l.bf16 %v3760
      %v3859 = vunpack.c.l.bf16 %v3761
      %v3860 = vunpack.c.l.bf16 %v3762
      %v3861 = vunpack.c.l.bf16 %v3763
      %v3862 = vunpack.c.l.bf16 %v3764
      %v3863 = vunpack.c.l.bf16 %v3765
      %v3864 = vunpack.c.l.bf16 %v3766
      %v3865 = vunpack.c.l.bf16 %v3767
      %v3866 = vunpack.c.l.bf16 %v3768
      %v3867 = vunpack.c.l.bf16 %v3769
      %v3868 = vunpack.c.l.bf16 %v3770
      %v3869 = vunpack.c.l.bf16 %v3771
      %v3870 = vunpack.c.l.bf16 %v3772
      %v3871 = vunpack.c.l.bf16 %v3773
      %v3872 = vunpack.c.l.bf16 %v3774
      %v3873 = vunpack.c.l.bf16 %v3775
      %v3874 = vunpack.c.l.bf16 %v3776
      %v3875 = vunpack.c.l.bf16 %v3777
      %v3876 = vunpack.c.l.bf16 %v3778
      %v3877 = vunpack.c.l.bf16 %v3779
      %v3878 = vunpack.c.l.bf16 %v3780
      %v3879 = vunpack.c.l.bf16 %v3781
      %v3880 = vunpack.c.l.bf16 %v3782
      %v3881 = vunpack.c.l.bf16 %v3783
      %v3882 = vunpack.c.l.bf16 %v3784
      %v3883 = vunpack.c.l.bf16 %v3785
      %v3884 = vunpack.c.l.bf16 %v3786
      %v3885 = vunpack.c.l.bf16 %v3787
      %v3886 = vunpack.c.l.bf16 %v3788
      %v3887 = vunpack.c.l.bf16 %v3789
      %v3888 = vunpack.c.l.bf16 %v3790
      %v3889 = vunpack.c.l.bf16 %v3791
      %v3890 = vunpack.c.l.bf16 %v3792
      %v3891 = vunpack.c.l.bf16 %v3793
      %v3892 = vunpack.c.l.bf16 %v3794
      %v3893 = vunpack.c.l.bf16 %v3795
      %v3894 = vunpack.c.l.bf16 %v3796
      %v3895 = vunpack.c.l.bf16 %v3797
      %v3896 = vunpack.c.l.bf16 %v3798
      %v3897 = vunpack.c.l.bf16 %v3799
      %v3898 = vunpack.c.l.bf16 %v3800
      %v3899 = vunpack.c.l.bf16 %v3801
      %v3900 = vunpack.c.l.bf16 %v3802
      %v3901 = vunpack.c.l.bf16 %v3803
      %v3902 = vunpack.c.l.bf16 %v3804
      %v3903 = vunpack.c.l.bf16 %v3805
      %v3904 = vunpack.c.l.bf16 %v3806
      %v3905 = vunpack.c.l.bf16 %v3807
      %v3906 = vunpack.c.l.bf16 %v3808
      %v3907 = vunpack.c.l.bf16 %v3809
      %v3908 = vunpack.c.l.bf16 %v3810
      %v3909 = vunpack.c.l.bf16 %v3811
      %v3910 = vunpack.c.l.bf16 %v3812
      %v3911 = vunpack.c.l.bf16 %v3813
      %v3912 = vunpack.c.l.bf16 %v3814
      %v3913 = vunpack.c.l.bf16 %v3815
      %v3914 = vunpack.c.l.bf16 %v3816
      %v3915 = vunpack.c.l.bf16 %v3817
      %v3916 = vunpack.c.l.bf16 %v3818
      %v3917 = vunpack.c.l.bf16 %v3819
      %v3918 = vunpack.c.l.bf16 %v3820
      %v3919 = vunpack.c.l.bf16 %v3821
      %v3920 = vunpack.c.l.bf16 %v3822
      %v3921 = vunpack.c.l.bf16 %v3823
      %v3922 = vunpack.c.l.bf16 %v3824
      %v3923 = vunpack.c.l.bf16 %v3825
      %v3924 = vunpack.c.l.bf16 %v3826
      %v3925 = vunpack.c.l.bf16 %v3827
      %v3926 = vunpack.c.l.bf16 %v3828
      %v3927 = vunpack.c.l.bf16 %v3829
      %v3928 = vunpack.c.l.bf16 %v3830
      %v3929 = vunpack.c.l.bf16 %v3831
      %v3930 = vunpack.c.l.bf16 %v3832
      %v3931 = vunpack.c.l.bf16 %v3833
      %v3932 = vunpack.c.l.bf16 %v3834
      %v3933 = vunpack.c.l.bf16 %v3835
      %v3934 = vunpack.c.l.bf16 %v3836
      %v3935 = vunpack.c.l.bf16 %v3837
      %v3936 = vunpack.c.l.bf16 %v3838
      %v3937 = vunpack.c.l.bf16 %v3839
      %v3939 = vsel %vm1576, %v1172, 0
      %v3942 = vsel %vm1576, %v1175, 0
      %3944 = vmatpush.msra.mxu0 %v3855
      %3945 = vmatpush.msra.mxu0 %v3854
      %3946 = vmatpush.msra.mxu0 %v3853
      %3947 = vmatpush.msra.mxu0 %v3852
      %3948 = vmatpush.msra.mxu0 %v3851
      %3949 = vmatpush.msra.mxu0 %v3850
      %3950 = vmatpush.msra.mxu0 %v3849
      %3951 = vmatpush.msra.mxu0 %v3848
      %3952 = vmatpush.msra.mxu0 %v3847
      %3953 = vmatpush.msra.mxu0 %v3846
      %3954 = vmatpush.msra.mxu0 %v3845
      %3955 = vmatpush.msra.mxu0 %v3844
      %3956 = vmatpush.msra.mxu0 %v3843
      %3957 = vmatpush.msra.mxu0 %v3842
      %3958 = vmatpush.msra.mxu0 %v3841
      %3959 = vmatpush.msra.mxu0 %v3840
      %3960 = vmatmul.f32.gmra.mxu0 %v746
      %v3961 = vpop.f32.mrf.mxu0
      %v3962 = vadd.f32 0.0, %v3961
      %3963 = vmatmul.f32.gmra.mxu0 %v749
      %v3964 = vpop.f32.mrf.mxu0
      %v3965 = vadd.f32 0.0, %v3964
      %3966 = vdwg.mxu0
      %3967 = vmatpush.msra.mxu0 %v3871
      %3968 = vmatpush.msra.mxu0 %v3870
      %3969 = vmatpush.msra.mxu0 %v3869
      %3970 = vmatpush.msra.mxu0 %v3868
      %3971 = vmatpush.msra.mxu0 %v3867
      %3972 = vmatpush.msra.mxu0 %v3866
      %3973 = vmatpush.msra.mxu0 %v3865
      %3974 = vmatpush.msra.mxu0 %v3864
      %3975 = vmatpush.msra.mxu0 %v3863
      %3976 = vmatpush.msra.mxu0 %v3862
      %3977 = vmatpush.msra.mxu0 %v3861
      %3978 = vmatpush.msra.mxu0 %v3860
      %3979 = vmatpush.msra.mxu0 %v3859
      %3980 = vmatpush.msra.mxu0 %v3858
      %3981 = vmatpush.msra.mxu0 %v3857
      %3982 = vmatpush.msra.mxu0 %v3856
      %3983 = vmatmul.f32.gmra.mxu0 %v817
      %v3984 = vpop.f32.mrf.mxu0
      %v3985 = vadd.f32 %v3962, %v3984
      %3986 = vmatmul.f32.gmra.mxu0 %v820
      %v3987 = vpop.f32.mrf.mxu0
      %v3988 = vadd.f32 %v3965, %v3987
      %3989 = vdwg.mxu0
      %3990 = vmatpush.msra.mxu0 %v3887
      %3991 = vmatpush.msra.mxu0 %v3886
      %3992 = vmatpush.msra.mxu0 %v3885
      %3993 = vmatpush.msra.mxu0 %v3884
      %3994 = vmatpush.msra.mxu0 %v3883
      %3995 = vmatpush.msra.mxu0 %v3882
      %3996 = vmatpush.msra.mxu0 %v3881
      %3997 = vmatpush.msra.mxu0 %v3880
      %3998 = vmatpush.msra.mxu0 %v3879
      %3999 = vmatpush.msra.mxu0 %v3878
      %4000 = vmatpush.msra.mxu0 %v3877
      %4001 = vmatpush.msra.mxu0 %v3876
      %4002 = vmatpush.msra.mxu0 %v3875
      %4003 = vmatpush.msra.mxu0 %v3874
      %4004 = vmatpush.msra.mxu0 %v3873
      %4005 = vmatpush.msra.mxu0 %v3872
      %4006 = vmatmul.f32.gmra.mxu0 %v888
      %v4007 = vpop.f32.mrf.mxu0
      %v4008 = vadd.f32 %v3985, %v4007
      %4009 = vmatmul.f32.gmra.mxu0 %v891
      %v4010 = vpop.f32.mrf.mxu0
      %v4011 = vadd.f32 %v3988, %v4010
      %4012 = vdwg.mxu0
      %4013 = vmatpush.msra.mxu0 %v3903
      %4014 = vmatpush.msra.mxu0 %v3902
      %4015 = vmatpush.msra.mxu0 %v3901
      %4016 = vmatpush.msra.mxu0 %v3900
      %4017 = vmatpush.msra.mxu0 %v3899
      %4018 = vmatpush.msra.mxu0 %v3898
      %4019 = vmatpush.msra.mxu0 %v3897
      %4020 = vmatpush.msra.mxu0 %v3896
      %4021 = vmatpush.msra.mxu0 %v3895
      %4022 = vmatpush.msra.mxu0 %v3894
      %4023 = vmatpush.msra.mxu0 %v3893
      %4024 = vmatpush.msra.mxu0 %v3892
      %4025 = vmatpush.msra.mxu0 %v3891
      %4026 = vmatpush.msra.mxu0 %v3890
      %4027 = vmatpush.msra.mxu0 %v3889
      %4028 = vmatpush.msra.mxu0 %v3888
      %4029 = vmatmul.f32.gmra.mxu0 %v959
      %v4030 = vpop.f32.mrf.mxu0
      %v4031 = vadd.f32 %v4008, %v4030
      %4032 = vmatmul.f32.gmra.mxu0 %v962
      %v4033 = vpop.f32.mrf.mxu0
      %v4034 = vadd.f32 %v4011, %v4033
      %4035 = vdwg.mxu0
      %4036 = vmatpush.msra.mxu0 %v3919
      %4037 = vmatpush.msra.mxu0 %v3918
      %4038 = vmatpush.msra.mxu0 %v3917
      %4039 = vmatpush.msra.mxu0 %v3916
      %4040 = vmatpush.msra.mxu0 %v3915
      %4041 = vmatpush.msra.mxu0 %v3914
      %4042 = vmatpush.msra.mxu0 %v3913
      %4043 = vmatpush.msra.mxu0 %v3912
      %4044 = vmatpush.msra.mxu0 %v3911
      %4045 = vmatpush.msra.mxu0 %v3910
      %4046 = vmatpush.msra.mxu0 %v3909
      %4047 = vmatpush.msra.mxu0 %v3908
      %4048 = vmatpush.msra.mxu0 %v3907
      %4049 = vmatpush.msra.mxu0 %v3906
      %4050 = vmatpush.msra.mxu0 %v3905
      %4051 = vmatpush.msra.mxu0 %v3904
      %4052 = vmatmul.f32.gmra.mxu0 %v1030
      %v4053 = vpop.f32.mrf.mxu0
      %v4054 = vadd.f32 %v4031, %v4053
      %4055 = vmatmul.f32.gmra.mxu0 %v1033
      %v4056 = vpop.f32.mrf.mxu0
      %v4057 = vadd.f32 %v4034, %v4056
      %4058 = vdwg.mxu0
      %4059 = vmatpush.msra.mxu0 %v3935
      %4060 = vmatpush.msra.mxu0 %v3934
      %4061 = vmatpush.msra.mxu0 %v3933
      %4062 = vmatpush.msra.mxu0 %v3932
      %4063 = vmatpush.msra.mxu0 %v3931
      %4064 = vmatpush.msra.mxu0 %v3930
      %4065 = vmatpush.msra.mxu0 %v3929
      %4066 = vmatpush.msra.mxu0 %v3928
      %4067 = vmatpush.msra.mxu0 %v3927
      %4068 = vmatpush.msra.mxu0 %v3926
      %4069 = vmatpush.msra.mxu0 %v3925
      %4070 = vmatpush.msra.mxu0 %v3924
      %4071 = vmatpush.msra.mxu0 %v3923
      %4072 = vmatpush.msra.mxu0 %v3922
      %4073 = vmatpush.msra.mxu0 %v3921
      %4074 = vmatpush.msra.mxu0 %v3920
      %4075 = vmatmul.f32.gmra.mxu0 %v1101
      %v4076 = vpop.f32.mrf.mxu0
      %v4077 = vadd.f32 %v4054, %v4076
      %4078 = vmatmul.f32.gmra.mxu0 %v1104
      %v4079 = vpop.f32.mrf.mxu0
      %v4080 = vadd.f32 %v4057, %v4079
      %4081 = vdwg.mxu0
      %4082 = vmatpush.msra.mxu0 0.0
      %4083 = vmatpush.msra.mxu0 0.0
      %4084 = vmatpush.msra.mxu0 0.0
      %4085 = vmatpush.msra.mxu0 0.0
      %4086 = vmatpush.msra.mxu0 0.0
      %4087 = vmatpush.msra.mxu0 0.0
      %4088 = vmatpush.msra.mxu0 0.0
      %4089 = vmatpush.msra.mxu0 0.0
      %4090 = vmatpush.msra.mxu0 0.0
      %4091 = vmatpush.msra.mxu0 0.0
      %4092 = vmatpush.msra.mxu0 0.0
      %4093 = vmatpush.msra.mxu0 0.0
      %4094 = vmatpush.msra.mxu0 0.0
      %4095 = vmatpush.msra.mxu0 0.0
      %4096 = vmatpush.msra.mxu0 %v3937
      %4097 = vmatpush.msra.mxu0 %v3936
      %4098 = vmatmul.f32.gmra.mxu0 %v3939
      %v4099 = vpop.f32.mrf.mxu0
      %v4100 = vadd.f32 %v4077, %v4099
      %4101 = vmatmul.f32.gmra.mxu0 %v3942
      %v4102 = vpop.f32.mrf.mxu0
      %v4103 = vadd.f32 %v4080, %v4102
      %4104 = vdwg.mxu0
      %v4105 = vadd.f32 %v3739, %v4100
      %v4106 = vadd.f32 %v3740, %v4103
      %s4107 = scalar_lea.vmem %s3, 3136
      %v4108 = vld [vmem:[%s4107] sm:$0xf]
      %v4109 = vld [vmem:[%s4107 + $0x4] sm:$0xf]
      %v4110 = vld [vmem:[%s4107 + $0x8] sm:$0xf]
      %v4111 = vld [vmem:[%s4107 + $0xc] sm:$0xf]
      %v4112 = vld [vmem:[%s4107 + $0x10] sm:$0xf]
      %v4113 = vld [vmem:[%s4107 + $0x14] sm:$0xf]
      %v4114 = vld [vmem:[%s4107 + $0x18] sm:$0xf]
      %v4115 = vld [vmem:[%s4107 + $0x1c] sm:$0xf]
      %v4116 = vld [vmem:[%s4107 + $0x20] sm:$0xf]
      %v4117 = vld [vmem:[%s4107 + $0x24] sm:$0xf]
      %v4118 = vld [vmem:[%s4107 + $0x28] sm:$0xf]
      %v4119 = vld [vmem:[%s4107 + $0x2c] sm:$0xf]
      %v4120 = vld [vmem:[%s4107 + $0x30] sm:$0xf]
      %v4121 = vld [vmem:[%s4107 + $0x34] sm:$0xf]
      %v4122 = vld [vmem:[%s4107 + $0x38] sm:$0xf]
      %v4123 = vld [vmem:[%s4107 + $0x3c] sm:$0xf]
      %v4124 = vld [vmem:[%s4107 + $0x40] sm:$0xf]
      %v4125 = vld [vmem:[%s4107 + $0x44] sm:$0xf]
      %v4126 = vld [vmem:[%s4107 + $0x48] sm:$0xf]
      %v4127 = vld [vmem:[%s4107 + $0x4c] sm:$0xf]
      %v4128 = vld [vmem:[%s4107 + $0x50] sm:$0xf]
      %v4129 = vld [vmem:[%s4107 + $0x54] sm:$0xf]
      %v4130 = vld [vmem:[%s4107 + $0x58] sm:$0xf]
      %v4131 = vld [vmem:[%s4107 + $0x5c] sm:$0xf]
      %v4132 = vld [vmem:[%s4107 + $0x60] sm:$0xf]
      %v4133 = vld [vmem:[%s4107 + $0x64] sm:$0xf]
      %v4134 = vld [vmem:[%s4107 + $0x68] sm:$0xf]
      %v4135 = vld [vmem:[%s4107 + $0x6c] sm:$0xf]
      %v4136 = vld [vmem:[%s4107 + $0x70] sm:$0xf]
      %v4137 = vld [vmem:[%s4107 + $0x74] sm:$0xf]
      %v4138 = vld [vmem:[%s4107 + $0x78] sm:$0xf]
      %v4139 = vld [vmem:[%s4107 + $0x7c] sm:$0xf]
      %v4140 = vld [vmem:[%s4107 + $0x80] sm:$0xf]
      %v4141 = vld [vmem:[%s4107 + $0x84] sm:$0xf]
      %v4142 = vld [vmem:[%s4107 + $0x88] sm:$0xf]
      %v4143 = vld [vmem:[%s4107 + $0x8c] sm:$0xf]
      %v4144 = vld [vmem:[%s4107 + $0x90] sm:$0xf]
      %v4145 = vld [vmem:[%s4107 + $0x94] sm:$0xf]
      %v4146 = vld [vmem:[%s4107 + $0x98] sm:$0xf]
      %v4147 = vld [vmem:[%s4107 + $0x9c] sm:$0xf]
      %v4148 = vld [vmem:[%s4107 + $0xa0] sm:$0xf]
      %v4149 = vld [vmem:[%s4107 + $0xa4] sm:$0xf]
      %v4150 = vld [vmem:[%s4107 + $0xa8] sm:$0xf]
      %v4151 = vld [vmem:[%s4107 + $0xac] sm:$0xf]
      %v4152 = vld [vmem:[%s4107 + $0xb0] sm:$0xf]
      %v4153 = vld [vmem:[%s4107 + $0xb4] sm:$0xf]
      %v4154 = vld [vmem:[%s4107 + $0xb8] sm:$0xf]
      %v4155 = vld [vmem:[%s4107 + $0xbc] sm:$0xf]
      %v4156 = vld [vmem:[%s4107 + $0xc0] sm:$0xf]
      %v4157 = vld [vmem:[%s4107 + $0xc4] sm:$0xf]
      %v4158 = vld [vmem:[%s4107 + $0xc8] sm:$0xf]
      %v4159 = vld [vmem:[%s4107 + $0xcc] sm:$0xf]
      %v4160 = vld [vmem:[%s4107 + $0xd0] sm:$0xf]
      %v4161 = vld [vmem:[%s4107 + $0xd4] sm:$0xf]
      %v4162 = vld [vmem:[%s4107 + $0xd8] sm:$0xf]
      %v4163 = vld [vmem:[%s4107 + $0xdc] sm:$0xf]
      %v4164 = vld [vmem:[%s4107 + $0xe0] sm:$0xf]
      %v4165 = vld [vmem:[%s4107 + $0xe4] sm:$0xf]
      %v4166 = vld [vmem:[%s4107 + $0xe8] sm:$0xf]
      %v4167 = vld [vmem:[%s4107 + $0xec] sm:$0xf]
      %v4168 = vld [vmem:[%s4107 + $0xf0] sm:$0xf]
      %v4169 = vld [vmem:[%s4107 + $0xf4] sm:$0xf]
      %v4170 = vld [vmem:[%s4107 + $0xf8] sm:$0xf]
      %v4171 = vld [vmem:[%s4107 + $0xfc] sm:$0xf]
      %v4172 = vld [vmem:[%s4107 + $0x100] sm:$0xf]
      %v4173 = vld [vmem:[%s4107 + $0x104] sm:$0xf]
      %v4174 = vld [vmem:[%s4107 + $0x108] sm:$0xf]
      %v4175 = vld [vmem:[%s4107 + $0x10c] sm:$0xf]
      %v4176 = vld [vmem:[%s4107 + $0x110] sm:$0xf]
      %v4177 = vld [vmem:[%s4107 + $0x114] sm:$0xf]
      %v4178 = vld [vmem:[%s4107 + $0x118] sm:$0xf]
      %v4179 = vld [vmem:[%s4107 + $0x11c] sm:$0xf]
      %v4180 = vld [vmem:[%s4107 + $0x120] sm:$0xf]
      %v4181 = vld [vmem:[%s4107 + $0x124] sm:$0xf]
      %v4182 = vld [vmem:[%s4107 + $0x128] sm:$0xf]
      %v4183 = vld [vmem:[%s4107 + $0x12c] sm:$0xf]
      %v4184 = vld [vmem:[%s4107 + $0x130] sm:$0xf]
      %v4185 = vld [vmem:[%s4107 + $0x134] sm:$0xf]
      %v4186 = vld [vmem:[%s4107 + $0x138] sm:$0xf]
      %v4187 = vld [vmem:[%s4107 + $0x13c] sm:$0xf]
      %v4188 = vld [vmem:[%s4107 + $0x140] sm:$0xf]
      %v4189 = vld [vmem:[%s4107 + $0x144] sm:$0xf]
      %v4190 = vld [vmem:[%s4107 + $0x148] sm:$0xf]
      %v4191 = vld [vmem:[%s4107 + $0x14c] sm:$0xf]
      %v4192 = vld [vmem:[%s4107 + $0x150] sm:$0xf]
      %v4193 = vld [vmem:[%s4107 + $0x154] sm:$0xf]
      %v4194 = vld [vmem:[%s4107 + $0x158] sm:$0xf]
      %v4195 = vld [vmem:[%s4107 + $0x15c] sm:$0xf]
      %v4196 = vld [vmem:[%s4107 + $0x160] sm:$0xf]
      %v4197 = vld [vmem:[%s4107 + $0x164] sm:$0xf]
      %v4198 = vld [vmem:[%s4107 + $0x168] sm:$0xf]
      %v4199 = vld [vmem:[%s4107 + $0x16c] sm:$0xf]
      %v4200 = vld [vmem:[%s4107 + $0x170] sm:$0xf]
      %v4201 = vld [vmem:[%s4107 + $0x174] sm:$0xf]
      %v4202 = vld [vmem:[%s4107 + $0x178] sm:$0xf]
      %v4203 = vld [vmem:[%s4107 + $0x17c] sm:$0xf]
      %v4204 = vld [vmem:[%s4107 + $0x180] sm:$0xf]
      %v4205 = vld [vmem:[%s4107 + $0x184] sm:$0xf]
      %v4206 = vunpack.c.l.bf16 %v4108
      %v4207 = vunpack.c.l.bf16 %v4109
      %v4208 = vunpack.c.l.bf16 %v4110
      %v4209 = vunpack.c.l.bf16 %v4111
      %v4210 = vunpack.c.l.bf16 %v4112
      %v4211 = vunpack.c.l.bf16 %v4113
      %v4212 = vunpack.c.l.bf16 %v4114
      %v4213 = vunpack.c.l.bf16 %v4115
      %v4214 = vunpack.c.l.bf16 %v4116
      %v4215 = vunpack.c.l.bf16 %v4117
      %v4216 = vunpack.c.l.bf16 %v4118
      %v4217 = vunpack.c.l.bf16 %v4119
      %v4218 = vunpack.c.l.bf16 %v4120
      %v4219 = vunpack.c.l.bf16 %v4121
      %v4220 = vunpack.c.l.bf16 %v4122
      %v4221 = vunpack.c.l.bf16 %v4123
      %v4222 = vunpack.c.l.bf16 %v4124
      %v4223 = vunpack.c.l.bf16 %v4125
      %v4224 = vunpack.c.l.bf16 %v4126
      %v4225 = vunpack.c.l.bf16 %v4127
      %v4226 = vunpack.c.l.bf16 %v4128
      %v4227 = vunpack.c.l.bf16 %v4129
      %v4228 = vunpack.c.l.bf16 %v4130
      %v4229 = vunpack.c.l.bf16 %v4131
      %v4230 = vunpack.c.l.bf16 %v4132
      %v4231 = vunpack.c.l.bf16 %v4133
      %v4232 = vunpack.c.l.bf16 %v4134
      %v4233 = vunpack.c.l.bf16 %v4135
      %v4234 = vunpack.c.l.bf16 %v4136
      %v4235 = vunpack.c.l.bf16 %v4137
      %v4236 = vunpack.c.l.bf16 %v4138
      %v4237 = vunpack.c.l.bf16 %v4139
      %v4238 = vunpack.c.l.bf16 %v4140
      %v4239 = vunpack.c.l.bf16 %v4141
      %v4240 = vunpack.c.l.bf16 %v4142
      %v4241 = vunpack.c.l.bf16 %v4143
      %v4242 = vunpack.c.l.bf16 %v4144
      %v4243 = vunpack.c.l.bf16 %v4145
      %v4244 = vunpack.c.l.bf16 %v4146
      %v4245 = vunpack.c.l.bf16 %v4147
      %v4246 = vunpack.c.l.bf16 %v4148
      %v4247 = vunpack.c.l.bf16 %v4149
      %v4248 = vunpack.c.l.bf16 %v4150
      %v4249 = vunpack.c.l.bf16 %v4151
      %v4250 = vunpack.c.l.bf16 %v4152
      %v4251 = vunpack.c.l.bf16 %v4153
      %v4252 = vunpack.c.l.bf16 %v4154
      %v4253 = vunpack.c.l.bf16 %v4155
      %v4254 = vunpack.c.l.bf16 %v4156
      %v4255 = vunpack.c.l.bf16 %v4157
      %v4256 = vunpack.c.l.bf16 %v4158
      %v4257 = vunpack.c.l.bf16 %v4159
      %v4258 = vunpack.c.l.bf16 %v4160
      %v4259 = vunpack.c.l.bf16 %v4161
      %v4260 = vunpack.c.l.bf16 %v4162
      %v4261 = vunpack.c.l.bf16 %v4163
      %v4262 = vunpack.c.l.bf16 %v4164
      %v4263 = vunpack.c.l.bf16 %v4165
      %v4264 = vunpack.c.l.bf16 %v4166
      %v4265 = vunpack.c.l.bf16 %v4167
      %v4266 = vunpack.c.l.bf16 %v4168
      %v4267 = vunpack.c.l.bf16 %v4169
      %v4268 = vunpack.c.l.bf16 %v4170
      %v4269 = vunpack.c.l.bf16 %v4171
      %v4270 = vunpack.c.l.bf16 %v4172
      %v4271 = vunpack.c.l.bf16 %v4173
      %v4272 = vunpack.c.l.bf16 %v4174
      %v4273 = vunpack.c.l.bf16 %v4175
      %v4274 = vunpack.c.l.bf16 %v4176
      %v4275 = vunpack.c.l.bf16 %v4177
      %v4276 = vunpack.c.l.bf16 %v4178
      %v4277 = vunpack.c.l.bf16 %v4179
      %v4278 = vunpack.c.l.bf16 %v4180
      %v4279 = vunpack.c.l.bf16 %v4181
      %v4280 = vunpack.c.l.bf16 %v4182
      %v4281 = vunpack.c.l.bf16 %v4183
      %v4282 = vunpack.c.l.bf16 %v4184
      %v4283 = vunpack.c.l.bf16 %v4185
      %v4284 = vunpack.c.l.bf16 %v4186
      %v4285 = vunpack.c.l.bf16 %v4187
      %v4286 = vunpack.c.l.bf16 %v4188
      %v4287 = vunpack.c.l.bf16 %v4189
      %v4288 = vunpack.c.l.bf16 %v4190
      %v4289 = vunpack.c.l.bf16 %v4191
      %v4290 = vunpack.c.l.bf16 %v4192
      %v4291 = vunpack.c.l.bf16 %v4193
      %v4292 = vunpack.c.l.bf16 %v4194
      %v4293 = vunpack.c.l.bf16 %v4195
      %v4294 = vunpack.c.l.bf16 %v4196
      %v4295 = vunpack.c.l.bf16 %v4197
      %v4296 = vunpack.c.l.bf16 %v4198
      %v4297 = vunpack.c.l.bf16 %v4199
      %v4298 = vunpack.c.l.bf16 %v4200
      %v4299 = vunpack.c.l.bf16 %v4201
      %v4300 = vunpack.c.l.bf16 %v4202
      %v4301 = vunpack.c.l.bf16 %v4203
      %v4302 = vunpack.c.l.bf16 %v4204
      %v4303 = vunpack.c.l.bf16 %v4205
      %v4305 = vsel %vm1576, %v1178, 0
      %v4308 = vsel %vm1576, %v1181, 0
      %4310 = vmatpush.msra.mxu0 %v4221
      %4311 = vmatpush.msra.mxu0 %v4220
      %4312 = vmatpush.msra.mxu0 %v4219
      %4313 = vmatpush.msra.mxu0 %v4218
      %4314 = vmatpush.msra.mxu0 %v4217
      %4315 = vmatpush.msra.mxu0 %v4216
      %4316 = vmatpush.msra.mxu0 %v4215
      %4317 = vmatpush.msra.mxu0 %v4214
      %4318 = vmatpush.msra.mxu0 %v4213
      %4319 = vmatpush.msra.mxu0 %v4212
      %4320 = vmatpush.msra.mxu0 %v4211
      %4321 = vmatpush.msra.mxu0 %v4210
      %4322 = vmatpush.msra.mxu0 %v4209
      %4323 = vmatpush.msra.mxu0 %v4208
      %4324 = vmatpush.msra.mxu0 %v4207
      %4325 = vmatpush.msra.mxu0 %v4206
      %4326 = vmatmul.f32.gmra.mxu0 %v752
      %v4327 = vpop.f32.mrf.mxu0
      %v4328 = vadd.f32 0.0, %v4327
      %4329 = vmatmul.f32.gmra.mxu0 %v755
      %v4330 = vpop.f32.mrf.mxu0
      %v4331 = vadd.f32 0.0, %v4330
      %4332 = vdwg.mxu0
      %4333 = vmatpush.msra.mxu0 %v4237
      %4334 = vmatpush.msra.mxu0 %v4236
      %4335 = vmatpush.msra.mxu0 %v4235
      %4336 = vmatpush.msra.mxu0 %v4234
      %4337 = vmatpush.msra.mxu0 %v4233
      %4338 = vmatpush.msra.mxu0 %v4232
      %4339 = vmatpush.msra.mxu0 %v4231
      %4340 = vmatpush.msra.mxu0 %v4230
      %4341 = vmatpush.msra.mxu0 %v4229
      %4342 = vmatpush.msra.mxu0 %v4228
      %4343 = vmatpush.msra.mxu0 %v4227
      %4344 = vmatpush.msra.mxu0 %v4226
      %4345 = vmatpush.msra.mxu0 %v4225
      %4346 = vmatpush.msra.mxu0 %v4224
      %4347 = vmatpush.msra.mxu0 %v4223
      %4348 = vmatpush.msra.mxu0 %v4222
      %4349 = vmatmul.f32.gmra.mxu0 %v823
      %v4350 = vpop.f32.mrf.mxu0
      %v4351 = vadd.f32 %v4328, %v4350
      %4352 = vmatmul.f32.gmra.mxu0 %v826
      %v4353 = vpop.f32.mrf.mxu0
      %v4354 = vadd.f32 %v4331, %v4353
      %4355 = vdwg.mxu0
      %4356 = vmatpush.msra.mxu0 %v4253
      %4357 = vmatpush.msra.mxu0 %v4252
      %4358 = vmatpush.msra.mxu0 %v4251
      %4359 = vmatpush.msra.mxu0 %v4250
      %4360 = vmatpush.msra.mxu0 %v4249
      %4361 = vmatpush.msra.mxu0 %v4248
      %4362 = vmatpush.msra.mxu0 %v4247
      %4363 = vmatpush.msra.mxu0 %v4246
      %4364 = vmatpush.msra.mxu0 %v4245
      %4365 = vmatpush.msra.mxu0 %v4244
      %4366 = vmatpush.msra.mxu0 %v4243
      %4367 = vmatpush.msra.mxu0 %v4242
      %4368 = vmatpush.msra.mxu0 %v4241
      %4369 = vmatpush.msra.mxu0 %v4240
      %4370 = vmatpush.msra.mxu0 %v4239
      %4371 = vmatpush.msra.mxu0 %v4238
      %4372 = vmatmul.f32.gmra.mxu0 %v894
      %v4373 = vpop.f32.mrf.mxu0
      %v4374 = vadd.f32 %v4351, %v4373
      %4375 = vmatmul.f32.gmra.mxu0 %v897
      %v4376 = vpop.f32.mrf.mxu0
      %v4377 = vadd.f32 %v4354, %v4376
      %4378 = vdwg.mxu0
      %4379 = vmatpush.msra.mxu0 %v4269
      %4380 = vmatpush.msra.mxu0 %v4268
      %4381 = vmatpush.msra.mxu0 %v4267
      %4382 = vmatpush.msra.mxu0 %v4266
      %4383 = vmatpush.msra.mxu0 %v4265
      %4384 = vmatpush.msra.mxu0 %v4264
      %4385 = vmatpush.msra.mxu0 %v4263
      %4386 = vmatpush.msra.mxu0 %v4262
      %4387 = vmatpush.msra.mxu0 %v4261
      %4388 = vmatpush.msra.mxu0 %v4260
      %4389 = vmatpush.msra.mxu0 %v4259
      %4390 = vmatpush.msra.mxu0 %v4258
      %4391 = vmatpush.msra.mxu0 %v4257
      %4392 = vmatpush.msra.mxu0 %v4256
      %4393 = vmatpush.msra.mxu0 %v4255
      %4394 = vmatpush.msra.mxu0 %v4254
      %4395 = vmatmul.f32.gmra.mxu0 %v965
      %v4396 = vpop.f32.mrf.mxu0
      %v4397 = vadd.f32 %v4374, %v4396
      %4398 = vmatmul.f32.gmra.mxu0 %v968
      %v4399 = vpop.f32.mrf.mxu0
      %v4400 = vadd.f32 %v4377, %v4399
      %4401 = vdwg.mxu0
      %4402 = vmatpush.msra.mxu0 %v4285
      %4403 = vmatpush.msra.mxu0 %v4284
      %4404 = vmatpush.msra.mxu0 %v4283
      %4405 = vmatpush.msra.mxu0 %v4282
      %4406 = vmatpush.msra.mxu0 %v4281
      %4407 = vmatpush.msra.mxu0 %v4280
      %4408 = vmatpush.msra.mxu0 %v4279
      %4409 = vmatpush.msra.mxu0 %v4278
      %4410 = vmatpush.msra.mxu0 %v4277
      %4411 = vmatpush.msra.mxu0 %v4276
      %4412 = vmatpush.msra.mxu0 %v4275
      %4413 = vmatpush.msra.mxu0 %v4274
      %4414 = vmatpush.msra.mxu0 %v4273
      %4415 = vmatpush.msra.mxu0 %v4272
      %4416 = vmatpush.msra.mxu0 %v4271
      %4417 = vmatpush.msra.mxu0 %v4270
      %4418 = vmatmul.f32.gmra.mxu0 %v1036
      %v4419 = vpop.f32.mrf.mxu0
      %v4420 = vadd.f32 %v4397, %v4419
      %4421 = vmatmul.f32.gmra.mxu0 %v1039
      %v4422 = vpop.f32.mrf.mxu0
      %v4423 = vadd.f32 %v4400, %v4422
      %4424 = vdwg.mxu0
      %4425 = vmatpush.msra.mxu0 %v4301
      %4426 = vmatpush.msra.mxu0 %v4300
      %4427 = vmatpush.msra.mxu0 %v4299
      %4428 = vmatpush.msra.mxu0 %v4298
      %4429 = vmatpush.msra.mxu0 %v4297
      %4430 = vmatpush.msra.mxu0 %v4296
      %4431 = vmatpush.msra.mxu0 %v4295
      %4432 = vmatpush.msra.mxu0 %v4294
      %4433 = vmatpush.msra.mxu0 %v4293
      %4434 = vmatpush.msra.mxu0 %v4292
      %4435 = vmatpush.msra.mxu0 %v4291
      %4436 = vmatpush.msra.mxu0 %v4290
      %4437 = vmatpush.msra.mxu0 %v4289
      %4438 = vmatpush.msra.mxu0 %v4288
      %4439 = vmatpush.msra.mxu0 %v4287
      %4440 = vmatpush.msra.mxu0 %v4286
      %4441 = vmatmul.f32.gmra.mxu0 %v1107
      %v4442 = vpop.f32.mrf.mxu0
      %v4443 = vadd.f32 %v4420, %v4442
      %4444 = vmatmul.f32.gmra.mxu0 %v1110
      %v4445 = vpop.f32.mrf.mxu0
      %v4446 = vadd.f32 %v4423, %v4445
      %4447 = vdwg.mxu0
      %4448 = vmatpush.msra.mxu0 0.0
      %4449 = vmatpush.msra.mxu0 0.0
      %4450 = vmatpush.msra.mxu0 0.0
      %4451 = vmatpush.msra.mxu0 0.0
      %4452 = vmatpush.msra.mxu0 0.0
      %4453 = vmatpush.msra.mxu0 0.0
      %4454 = vmatpush.msra.mxu0 0.0
      %4455 = vmatpush.msra.mxu0 0.0
      %4456 = vmatpush.msra.mxu0 0.0
      %4457 = vmatpush.msra.mxu0 0.0
      %4458 = vmatpush.msra.mxu0 0.0
      %4459 = vmatpush.msra.mxu0 0.0
      %4460 = vmatpush.msra.mxu0 0.0
      %4461 = vmatpush.msra.mxu0 0.0
      %4462 = vmatpush.msra.mxu0 %v4303
      %4463 = vmatpush.msra.mxu0 %v4302
      %4464 = vmatmul.f32.gmra.mxu0 %v4305
      %v4465 = vpop.f32.mrf.mxu0
      %v4466 = vadd.f32 %v4443, %v4465
      %4467 = vmatmul.f32.gmra.mxu0 %v4308
      %v4468 = vpop.f32.mrf.mxu0
      %v4469 = vadd.f32 %v4446, %v4468
      %4470 = vdwg.mxu0
      %v4471 = vadd.f32 %v4105, %v4466
      %v4472 = vadd.f32 %v4106, %v4469
      %v4473 = vld [vmem:[%s2] sm:$0xff]
      %v4474 = vld [vmem:[%s2 + $0x8] sm:$0xff]
      %4476 = vset.pattern.permute.xlu0 0
      %4477 = vperm.xlu0 %4476, %v4473
      %v4478 = vpop.permute.xlu0 %4477
      %4481 = vset.pattern.permute.xlu0 0
      %4482 = vperm.xlu0 %4481, %v4474
      %v4483 = vpop.permute.xlu0 %4482
      %v4485 = vadd.f32 %v4471, %v4478
      %v4486 = vadd.f32 %v4472, %v4483
      %v4487 = vmax.f32 %v4485, 0.0
      %v4488 = vmax.f32 %v4486, 0.0
      %v4489 = vld [vmem:[%s4] sm:$0xf]
      %v4490 = vld [vmem:[%s4 + $0x4] sm:$0xf]
      %v4491 = vld [vmem:[%s4 + $0x8] sm:$0xf]
      %v4492 = vld [vmem:[%s4 + $0xc] sm:$0xf]
      %v4493 = vld [vmem:[%s4 + $0x10] sm:$0xf]
      %v4494 = vld [vmem:[%s4 + $0x14] sm:$0xf]
      %v4495 = vld [vmem:[%s4 + $0x18] sm:$0xf]
      %v4496 = vld [vmem:[%s4 + $0x1c] sm:$0xf]
      %v4497 = vld [vmem:[%s4 + $0x20] sm:$0xf]
      %v4498 = vld [vmem:[%s4 + $0x24] sm:$0xf]
      %v4499 = vld [vmem:[%s4 + $0x28] sm:$0xf]
      %v4500 = vld [vmem:[%s4 + $0x2c] sm:$0xf]
      %v4501 = vld [vmem:[%s4 + $0x30] sm:$0x3]
      %v4502 = vunpack.c.l.bf16 %v4489
      %v4503 = vunpack.c.l.bf16 %v4490
      %v4504 = vunpack.c.l.bf16 %v4491
      %v4505 = vunpack.c.l.bf16 %v4492
      %v4506 = vunpack.c.l.bf16 %v4493
      %v4507 = vunpack.c.l.bf16 %v4494
      %v4508 = vunpack.c.l.bf16 %v4495
      %v4509 = vunpack.c.l.bf16 %v4496
      %v4510 = vunpack.c.l.bf16 %v4497
      %v4511 = vunpack.c.l.bf16 %v4498
      %v4512 = vunpack.c.l.bf16 %v4499
      %v4513 = vunpack.c.l.bf16 %v4500
      %v4514 = vunpack.c.l.bf16 %v4501
      %vm4515 = vcmask 818176
      %v4517 = vsel %vm4515, %v4487, 0
      %v4520 = vsel %vm4515, %v4488, 0
      %vm4522 = vcmask 1043456
      %v4524 = vsel %vm4522, %v4514, 0
      %4526 = vmatpush.msra.mxu0 0.0
      %4527 = vmatpush.msra.mxu0 0.0
      %4528 = vmatpush.msra.mxu0 0.0
      %4529 = vmatpush.msra.mxu0 %v4524
      %4530 = vmatpush.msra.mxu0 %v4513
      %4531 = vmatpush.msra.mxu0 %v4512
      %4532 = vmatpush.msra.mxu0 %v4511
      %4533 = vmatpush.msra.mxu0 %v4510
      %4534 = vmatpush.msra.mxu0 %v4509
      %4535 = vmatpush.msra.mxu0 %v4508
      %4536 = vmatpush.msra.mxu0 %v4507
      %4537 = vmatpush.msra.mxu0 %v4506
      %4538 = vmatpush.msra.mxu0 %v4505
      %4539 = vmatpush.msra.mxu0 %v4504
      %4540 = vmatpush.msra.mxu0 %v4503
      %4541 = vmatpush.msra.mxu0 %v4502
      %4542 = vmatmul.f32.gmra.mxu0 %v4517
      %v4543 = vpop.f32.mrf.mxu0
      %v4544 = vadd.f32 0.0, %v4543
      %4545 = vmatmul.f32.gmra.mxu0 %v4520
      %v4546 = vpop.f32.mrf.mxu0
      %v4547 = vadd.f32 0.0, %v4546
      %4548 = vdwg.mxu0
      %s4549 = scalar_lea.vmem %s4, 52
      %v4550 = vld [vmem:[%s4549] sm:$0xf]
      %v4551 = vld [vmem:[%s4549 + $0x4] sm:$0xf]
      %v4552 = vld [vmem:[%s4549 + $0x8] sm:$0xf]
      %v4553 = vld [vmem:[%s4549 + $0xc] sm:$0xf]
      %v4554 = vld [vmem:[%s4549 + $0x10] sm:$0xf]
      %v4555 = vld [vmem:[%s4549 + $0x14] sm:$0xf]
      %v4556 = vld [vmem:[%s4549 + $0x18] sm:$0xf]
      %v4557 = vld [vmem:[%s4549 + $0x1c] sm:$0xf]
      %v4558 = vld [vmem:[%s4549 + $0x20] sm:$0xf]
      %v4559 = vld [vmem:[%s4549 + $0x24] sm:$0xf]
      %v4560 = vld [vmem:[%s4549 + $0x28] sm:$0xf]
      %v4561 = vld [vmem:[%s4549 + $0x2c] sm:$0xf]
      %v4562 = vld [vmem:[%s4549 + $0x30] sm:$0x3]
      %v4563 = vunpack.c.l.bf16 %v4550
      %v4564 = vunpack.c.l.bf16 %v4551
      %v4565 = vunpack.c.l.bf16 %v4552
      %v4566 = vunpack.c.l.bf16 %v4553
      %v4567 = vunpack.c.l.bf16 %v4554
      %v4568 = vunpack.c.l.bf16 %v4555
      %v4569 = vunpack.c.l.bf16 %v4556
      %v4570 = vunpack.c.l.bf16 %v4557
      %v4571 = vunpack.c.l.bf16 %v4558
      %v4572 = vunpack.c.l.bf16 %v4559
      %v4573 = vunpack.c.l.bf16 %v4560
      %v4574 = vunpack.c.l.bf16 %v4561
      %v4575 = vunpack.c.l.bf16 %v4562
      %v4577 = vsel %vm4522, %v4575, 0
      %4579 = vmatpush.msra.mxu0 0.0
      %4580 = vmatpush.msra.mxu0 0.0
      %4581 = vmatpush.msra.mxu0 0.0
      %4582 = vmatpush.msra.mxu0 %v4577
      %4583 = vmatpush.msra.mxu0 %v4574
      %4584 = vmatpush.msra.mxu0 %v4573
      %4585 = vmatpush.msra.mxu0 %v4572
      %4586 = vmatpush.msra.mxu0 %v4571
      %4587 = vmatpush.msra.mxu0 %v4570
      %4588 = vmatpush.msra.mxu0 %v4569
      %4589 = vmatpush.msra.mxu0 %v4568
      %4590 = vmatpush.msra.mxu0 %v4567
      %4591 = vmatpush.msra.mxu0 %v4566
      %4592 = vmatpush.msra.mxu0 %v4565
      %4593 = vmatpush.msra.mxu0 %v4564
      %4594 = vmatpush.msra.mxu0 %v4563
      %4595 = vmatmul.f32.gmra.mxu0 %v4517
      %v4596 = vpop.f32.mrf.mxu0
      %v4597 = vadd.f32 0.0, %v4596
      %4598 = vmatmul.f32.gmra.mxu0 %v4520
      %v4599 = vpop.f32.mrf.mxu0
      %v4600 = vadd.f32 0.0, %v4599
      %4601 = vdwg.mxu0
      %v4602 = vmax.f32 %v4544, %v4597
      %v4603 = vmax.f32 %v4547, %v4600
      %s4604 = scalar_lea.vmem %s4, 104
      %v4605 = vld [vmem:[%s4604] sm:$0xf]
      %v4606 = vld [vmem:[%s4604 + $0x4] sm:$0xf]
      %v4607 = vld [vmem:[%s4604 + $0x8] sm:$0xf]
      %v4608 = vld [vmem:[%s4604 + $0xc] sm:$0xf]
      %v4609 = vld [vmem:[%s4604 + $0x10] sm:$0xf]
      %v4610 = vld [vmem:[%s4604 + $0x14] sm:$0xf]
      %v4611 = vld [vmem:[%s4604 + $0x18] sm:$0xf]
      %v4612 = vld [vmem:[%s4604 + $0x1c] sm:$0xf]
      %v4613 = vld [vmem:[%s4604 + $0x20] sm:$0xf]
      %v4614 = vld [vmem:[%s4604 + $0x24] sm:$0xf]
      %v4615 = vld [vmem:[%s4604 + $0x28] sm:$0xf]
      %v4616 = vld [vmem:[%s4604 + $0x2c] sm:$0xf]
      %v4617 = vld [vmem:[%s4604 + $0x30] sm:$0x3]
      %v4618 = vunpack.c.l.bf16 %v4605
      %v4619 = vunpack.c.l.bf16 %v4606
      %v4620 = vunpack.c.l.bf16 %v4607
      %v4621 = vunpack.c.l.bf16 %v4608
      %v4622 = vunpack.c.l.bf16 %v4609
      %v4623 = vunpack.c.l.bf16 %v4610
      %v4624 = vunpack.c.l.bf16 %v4611
      %v4625 = vunpack.c.l.bf16 %v4612
      %v4626 = vunpack.c.l.bf16 %v4613
      %v4627 = vunpack.c.l.bf16 %v4614
      %v4628 = vunpack.c.l.bf16 %v4615
      %v4629 = vunpack.c.l.bf16 %v4616
      %v4630 = vunpack.c.l.bf16 %v4617
      %v4632 = vsel %vm4522, %v4630, 0
      %4634 = vmatpush.msra.mxu0 0.0
      %4635 = vmatpush.msra.mxu0 0.0
      %4636 = vmatpush.msra.mxu0 0.0
      %4637 = vmatpush.msra.mxu0 %v4632
      %4638 = vmatpush.msra.mxu0 %v4629
      %4639 = vmatpush.msra.mxu0 %v4628
      %4640 = vmatpush.msra.mxu0 %v4627
      %4641 = vmatpush.msra.mxu0 %v4626
      %4642 = vmatpush.msra.mxu0 %v4625
      %4643 = vmatpush.msra.mxu0 %v4624
      %4644 = vmatpush.msra.mxu0 %v4623
      %4645 = vmatpush.msra.mxu0 %v4622
      %4646 = vmatpush.msra.mxu0 %v4621
      %4647 = vmatpush.msra.mxu0 %v4620
      %4648 = vmatpush.msra.mxu0 %v4619
      %4649 = vmatpush.msra.mxu0 %v4618
      %4650 = vmatmul.f32.gmra.mxu0 %v4517
      %v4651 = vpop.f32.mrf.mxu0
      %v4652 = vadd.f32 0.0, %v4651
      %4653 = vmatmul.f32.gmra.mxu0 %v4520
      %v4654 = vpop.f32.mrf.mxu0
      %v4655 = vadd.f32 0.0, %v4654
      %4656 = vdwg.mxu0
      %v4657 = vmax.f32 %v4602, %v4652
      %v4658 = vmax.f32 %v4603, %v4655
      %s4659 = scalar_lea.vmem %s4, 156
      %v4660 = vld [vmem:[%s4659] sm:$0xf]
      %v4661 = vld [vmem:[%s4659 + $0x4] sm:$0xf]
      %v4662 = vld [vmem:[%s4659 + $0x8] sm:$0xf]
      %v4663 = vld [vmem:[%s4659 + $0xc] sm:$0xf]
      %v4664 = vld [vmem:[%s4659 + $0x10] sm:$0xf]
      %v4665 = vld [vmem:[%s4659 + $0x14] sm:$0xf]
      %v4666 = vld [vmem:[%s4659 + $0x18] sm:$0xf]
      %v4667 = vld [vmem:[%s4659 + $0x1c] sm:$0xf]
      %v4668 = vld [vmem:[%s4659 + $0x20] sm:$0xf]
      %v4669 = vld [vmem:[%s4659 + $0x24] sm:$0xf]
      %v4670 = vld [vmem:[%s4659 + $0x28] sm:$0xf]
      %v4671 = vld [vmem:[%s4659 + $0x2c] sm:$0xf]
      %v4672 = vld [vmem:[%s4659 + $0x30] sm:$0x3]
      %v4673 = vunpack.c.l.bf16 %v4660
      %v4674 = vunpack.c.l.bf16 %v4661
      %v4675 = vunpack.c.l.bf16 %v4662
      %v4676 = vunpack.c.l.bf16 %v4663
      %v4677 = vunpack.c.l.bf16 %v4664
      %v4678 = vunpack.c.l.bf16 %v4665
      %v4679 = vunpack.c.l.bf16 %v4666
      %v4680 = vunpack.c.l.bf16 %v4667
      %v4681 = vunpack.c.l.bf16 %v4668
      %v4682 = vunpack.c.l.bf16 %v4669
      %v4683 = vunpack.c.l.bf16 %v4670
      %v4684 = vunpack.c.l.bf16 %v4671
      %v4685 = vunpack.c.l.bf16 %v4672
      %v4687 = vsel %vm4522, %v4685, 0
      %4689 = vmatpush.msra.mxu0 0.0
      %4690 = vmatpush.msra.mxu0 0.0
      %4691 = vmatpush.msra.mxu0 0.0
      %4692 = vmatpush.msra.mxu0 %v4687
      %4693 = vmatpush.msra.mxu0 %v4684
      %4694 = vmatpush.msra.mxu0 %v4683
      %4695 = vmatpush.msra.mxu0 %v4682
      %4696 = vmatpush.msra.mxu0 %v4681
      %4697 = vmatpush.msra.mxu0 %v4680
      %4698 = vmatpush.msra.mxu0 %v4679
      %4699 = vmatpush.msra.mxu0 %v4678
      %4700 = vmatpush.msra.mxu0 %v4677
      %4701 = vmatpush.msra.mxu0 %v4676
      %4702 = vmatpush.msra.mxu0 %v4675
      %4703 = vmatpush.msra.mxu0 %v4674
      %4704 = vmatpush.msra.mxu0 %v4673
      %4705 = vmatmul.f32.gmra.mxu0 %v4517
      %v4706 = vpop.f32.mrf.mxu0
      %v4707 = vadd.f32 0.0, %v4706
      %4708 = vmatmul.f32.gmra.mxu0 %v4520
      %v4709 = vpop.f32.mrf.mxu0
      %v4710 = vadd.f32 0.0, %v4709
      %4711 = vdwg.mxu0
      %v4712 = vmax.f32 %v4657, %v4707
      %v4713 = vmax.f32 %v4658, %v4710
      %v4714 = vld [vmem:[%s5] sm:$0xff]
      %v4715 = vld [vmem:[%s5 + $0x8] sm:$0xff]
      %v4716 = vld [vmem:[%s5 + $0x10] sm:$0xff]
      %v4717 = vld [vmem:[%s5 + $0x18] sm:$0xff]
      %v4718 = vld [vmem:[%s5 + $0x20] sm:$0xff]
      %v4719 = vld [vmem:[%s5 + $0x28] sm:$0xff]
      %v4720 = vld [vmem:[%s5 + $0x30] sm:$0xff]
      %v4721 = vld [vmem:[%s5 + $0x38] sm:$0xff]
      %v4722 = vld [vmem:[%s5 + $0x40] sm:$0xff]
      %v4724 = vsel %vm1576, %v4714, 0
      %v4727 = vsel %vm1576, %v4715, 0
      %v4730 = vsel %vm1576, %v4716, 0
      %v4733 = vsel %vm1576, %v4717, 0
      %v4736 = vsel %vm1576, %v4718, 0
      %v4739 = vsel %vm1576, %v4719, 0
      %v4742 = vsel %vm1576, %v4720, 0
      %v4745 = vsel %vm1576, %v4721, 0
      %v4748 = vsel %vm1576, %v4722, 0
      %4750 = vmatpush.msra.mxu0 0.0
      %4751 = vmatpush.msra.mxu0 0.0
      %4752 = vmatpush.msra.mxu0 0.0
      %4753 = vmatpush.msra.mxu0 0.0
      %4754 = vmatpush.msra.mxu0 0.0
      %4755 = vmatpush.msra.mxu0 0.0
      %4756 = vmatpush.msra.mxu0 0.0
      %4757 = vmatpush.msra.mxu0 0.0
      %4758 = vmatpush.msra.mxu0 0.0
      %4759 = vmatpush.msra.mxu0 0.0
      %4760 = vmatpush.msra.mxu0 0.0
      %4761 = vmatpush.msra.mxu0 0.0
      %4762 = vmatpush.msra.mxu0 0.0
      %4763 = vmatpush.msra.mxu0 0.0
      %4764 = vmatpush.msra.mxu0 %v4713
      %4765 = vmatpush.msra.mxu0 %v4712
      %4766 = vmatmul.f32.gmra.mxu0 %v4724
      %v4767 = vpop.f32.mrf.mxu0
      %v4768 = vadd.f32 0.0, %v4767
      %4769 = vmatmul.f32.gmra.mxu0 %v4727
      %v4770 = vpop.f32.mrf.mxu0
      %v4771 = vadd.f32 0.0, %v4770
      %4772 = vmatmul.f32.gmra.mxu0 %v4730
      %v4773 = vpop.f32.mrf.mxu0
      %v4774 = vadd.f32 0.0, %v4773
      %4775 = vmatmul.f32.gmra.mxu0 %v4733
      %v4776 = vpop.f32.mrf.mxu0
      %v4777 = vadd.f32 0.0, %v4776
      %4778 = vmatmul.f32.gmra.mxu0 %v4736
      %v4779 = vpop.f32.mrf.mxu0
      %v4780 = vadd.f32 0.0, %v4779
      %4781 = vmatmul.f32.gmra.mxu0 %v4739
      %v4782 = vpop.f32.mrf.mxu0
      %v4783 = vadd.f32 0.0, %v4782
      %4784 = vmatmul.f32.gmra.mxu0 %v4742
      %v4785 = vpop.f32.mrf.mxu0
      %v4786 = vadd.f32 0.0, %v4785
      %4787 = vmatmul.f32.gmra.mxu0 %v4745
      %v4788 = vpop.f32.mrf.mxu0
      %v4789 = vadd.f32 0.0, %v4788
      %4790 = vmatmul.f32.gmra.mxu0 %v4748
      %v4791 = vpop.f32.mrf.mxu0
      %v4792 = vadd.f32 0.0, %v4791
      %4793 = vdwg.mxu0
      %v4794 = vld [vmem:[%s7] sm:$0xf]
      %v4795 = vld [vmem:[%s7 + $0x4] sm:$0xf]
      %v4796 = vld [vmem:[%s7 + $0x8] sm:$0xf]
      %v4797 = vld [vmem:[%s7 + $0xc] sm:$0x1]
      %v4798 = vunpack.c.l.bf16 %v4794
      %v4799 = vunpack.c.l.bf16 %v4795
      %v4800 = vunpack.c.l.bf16 %v4796
      %v4801 = vunpack.c.l.bf16 %v4797
      %s4802 = scalar_lea.vmem %s7, 16
      %v4803 = vld [vmem:[%s4802] sm:$0xf]
      %v4804 = vld [vmem:[%s4802 + $0x4] sm:$0xf]
      %v4805 = vld [vmem:[%s4802 + $0x8] sm:$0xf]
      %v4806 = vld [vmem:[%s4802 + $0xc] sm:$0x1]
      %v4807 = vunpack.c.l.bf16 %v4803
      %v4808 = vunpack.c.l.bf16 %v4804
      %v4809 = vunpack.c.l.bf16 %v4805
      %v4810 = vunpack.c.l.bf16 %v4806
      %vm4811 = vcmask 203776
      %v4813 = vsel %vm4811, %v4771, 0
      %vm4815 = vcmask 1040384
      %v4817 = vsel %vm4815, %v4810, 0
      %4819 = vmatpush.msra.mxu0 0.0
      %4820 = vmatpush.msra.mxu0 0.0
      %4821 = vmatpush.msra.mxu0 0.0
      %4822 = vmatpush.msra.mxu0 0.0
      %4823 = vmatpush.msra.mxu0 0.0
      %4824 = vmatpush.msra.mxu0 0.0
      %4825 = vmatpush.msra.mxu0 0.0
      %4826 = vmatpush.msra.mxu0 0.0
      %4827 = vmatpush.msra.mxu0 0.0
      %4828 = vmatpush.msra.mxu0 0.0
      %4829 = vmatpush.msra.mxu0 0.0
      %4830 = vmatpush.msra.mxu0 0.0
      %4831 = vmatpush.msra.mxu0 %v4817
      %4832 = vmatpush.msra.mxu0 %v4809
      %4833 = vmatpush.msra.mxu0 %v4808
      %4834 = vmatpush.msra.mxu0 %v4807
      %4835 = vmatmul.f32.gmra.mxu0 %v4813
      %v4836 = vpop.f32.mrf.mxu0
      %v4837 = vadd.f32 0.0, %v4836
      %4838 = vdwg.mxu0
      %v4840 = vsel %vm4811, %v4768, 0
      %v4843 = vsel %vm4815, %v4801, 0
      %4845 = vmatpush.msra.mxu0 0.0
      %4846 = vmatpush.msra.mxu0 0.0
      %4847 = vmatpush.msra.mxu0 0.0
      %4848 = vmatpush.msra.mxu0 0.0
      %4849 = vmatpush.msra.mxu0 0.0
      %4850 = vmatpush.msra.mxu0 0.0
      %4851 = vmatpush.msra.mxu0 0.0
      %4852 = vmatpush.msra.mxu0 0.0
      %4853 = vmatpush.msra.mxu0 0.0
      %4854 = vmatpush.msra.mxu0 0.0
      %4855 = vmatpush.msra.mxu0 0.0
      %4856 = vmatpush.msra.mxu0 0.0
      %4857 = vmatpush.msra.mxu0 %v4843
      %4858 = vmatpush.msra.mxu0 %v4800
      %4859 = vmatpush.msra.mxu0 %v4799
      %4860 = vmatpush.msra.mxu0 %v4798
      %4861 = vmatmul.f32.gmra.mxu0 %v4840
      %v4862 = vpop.f32.mrf.mxu0
      %v4863 = vadd.f32 %v4837, %v4862
      %4864 = vdwg.mxu0
      %s4865 = scalar_lea.vmem %s7, 32
      %v4866 = vld [vmem:[%s4865] sm:$0xf]
      %v4867 = vld [vmem:[%s4865 + $0x4] sm:$0xf]
      %v4868 = vld [vmem:[%s4865 + $0x8] sm:$0xf]
      %v4869 = vld [vmem:[%s4865 + $0xc] sm:$0x1]
      %v4870 = vunpack.c.l.bf16 %v4866
      %v4871 = vunpack.c.l.bf16 %v4867
      %v4872 = vunpack.c.l.bf16 %v4868
      %v4873 = vunpack.c.l.bf16 %v4869
      %v4875 = vsel %vm4811, %v4774, 0
      %v4878 = vsel %vm4815, %v4873, 0
      %4880 = vmatpush.msra.mxu0 0.0
      %4881 = vmatpush.msra.mxu0 0.0
      %4882 = vmatpush.msra.mxu0 0.0
      %4883 = vmatpush.msra.mxu0 0.0
      %4884 = vmatpush.msra.mxu0 0.0
      %4885 = vmatpush.msra.mxu0 0.0
      %4886 = vmatpush.msra.mxu0 0.0
      %4887 = vmatpush.msra.mxu0 0.0
      %4888 = vmatpush.msra.mxu0 0.0
      %4889 = vmatpush.msra.mxu0 0.0
      %4890 = vmatpush.msra.mxu0 0.0
      %4891 = vmatpush.msra.mxu0 0.0
      %4892 = vmatpush.msra.mxu0 %v4878
      %4893 = vmatpush.msra.mxu0 %v4872
      %4894 = vmatpush.msra.mxu0 %v4871
      %4895 = vmatpush.msra.mxu0 %v4870
      %4896 = vmatmul.f32.gmra.mxu0 %v4875
      %v4897 = vpop.f32.mrf.mxu0
      %v4898 = vadd.f32 0.0, %v4897
      %4899 = vdwg.mxu0
      %v4900 = vadd.f32 %v4863, %v4898
      %s4901 = scalar_lea.vmem %s7, 48
      %v4902 = vld [vmem:[%s4901] sm:$0xf]
      %v4903 = vld [vmem:[%s4901 + $0x4] sm:$0xf]
      %v4904 = vld [vmem:[%s4901 + $0x8] sm:$0xf]
      %v4905 = vld [vmem:[%s4901 + $0xc] sm:$0x1]
      %v4906 = vunpack.c.l.bf16 %v4902
      %v4907 = vunpack.c.l.bf16 %v4903
      %v4908 = vunpack.c.l.bf16 %v4904
      %v4909 = vunpack.c.l.bf16 %v4905
      %v4911 = vsel %vm4811, %v4777, 0
      %v4914 = vsel %vm4815, %v4909, 0
      %4916 = vmatpush.msra.mxu0 0.0
      %4917 = vmatpush.msra.mxu0 0.0
      %4918 = vmatpush.msra.mxu0 0.0
      %4919 = vmatpush.msra.mxu0 0.0
      %4920 = vmatpush.msra.mxu0 0.0
      %4921 = vmatpush.msra.mxu0 0.0
      %4922 = vmatpush.msra.mxu0 0.0
      %4923 = vmatpush.msra.mxu0 0.0
      %4924 = vmatpush.msra.mxu0 0.0
      %4925 = vmatpush.msra.mxu0 0.0
      %4926 = vmatpush.msra.mxu0 0.0
      %4927 = vmatpush.msra.mxu0 0.0
      %4928 = vmatpush.msra.mxu0 %v4914
      %4929 = vmatpush.msra.mxu0 %v4908
      %4930 = vmatpush.msra.mxu0 %v4907
      %4931 = vmatpush.msra.mxu0 %v4906
      %4932 = vmatmul.f32.gmra.mxu0 %v4911
      %v4933 = vpop.f32.mrf.mxu0
      %v4934 = vadd.f32 0.0, %v4933
      %4935 = vdwg.mxu0
      %v4936 = vadd.f32 %v4900, %v4934
      %s4937 = scalar_lea.vmem %s7, 64
      %v4938 = vld [vmem:[%s4937] sm:$0xf]
      %v4939 = vld [vmem:[%s4937 + $0x4] sm:$0xf]
      %v4940 = vld [vmem:[%s4937 + $0x8] sm:$0xf]
      %v4941 = vld [vmem:[%s4937 + $0xc] sm:$0x1]
      %v4942 = vunpack.c.l.bf16 %v4938
      %v4943 = vunpack.c.l.bf16 %v4939
      %v4944 = vunpack.c.l.bf16 %v4940
      %v4945 = vunpack.c.l.bf16 %v4941
      %v4947 = vsel %vm4811, %v4780, 0
      %v4950 = vsel %vm4815, %v4945, 0
      %4952 = vmatpush.msra.mxu0 0.0
      %4953 = vmatpush.msra.mxu0 0.0
      %4954 = vmatpush.msra.mxu0 0.0
      %4955 = vmatpush.msra.mxu0 0.0
      %4956 = vmatpush.msra.mxu0 0.0
      %4957 = vmatpush.msra.mxu0 0.0
      %4958 = vmatpush.msra.mxu0 0.0
      %4959 = vmatpush.msra.mxu0 0.0
      %4960 = vmatpush.msra.mxu0 0.0
      %4961 = vmatpush.msra.mxu0 0.0
      %4962 = vmatpush.msra.mxu0 0.0
      %4963 = vmatpush.msra.mxu0 0.0
      %4964 = vmatpush.msra.mxu0 %v4950
      %4965 = vmatpush.msra.mxu0 %v4944
      %4966 = vmatpush.msra.mxu0 %v4943
      %4967 = vmatpush.msra.mxu0 %v4942
      %4968 = vmatmul.f32.gmra.mxu0 %v4947
      %v4969 = vpop.f32.mrf.mxu0
      %v4970 = vadd.f32 0.0, %v4969
      %4971 = vdwg.mxu0
      %v4972 = vadd.f32 %v4936, %v4970
      %s4973 = scalar_lea.vmem %s7, 80
      %v4974 = vld [vmem:[%s4973] sm:$0xf]
      %v4975 = vld [vmem:[%s4973 + $0x4] sm:$0xf]
      %v4976 = vld [vmem:[%s4973 + $0x8] sm:$0xf]
      %v4977 = vld [vmem:[%s4973 + $0xc] sm:$0x1]
      %v4978 = vunpack.c.l.bf16 %v4974
      %v4979 = vunpack.c.l.bf16 %v4975
      %v4980 = vunpack.c.l.bf16 %v4976
      %v4981 = vunpack.c.l.bf16 %v4977
      %v4983 = vsel %vm4811, %v4783, 0
      %v4986 = vsel %vm4815, %v4981, 0
      %4988 = vmatpush.msra.mxu0 0.0
      %4989 = vmatpush.msra.mxu0 0.0
      %4990 = vmatpush.msra.mxu0 0.0
      %4991 = vmatpush.msra.mxu0 0.0
      %4992 = vmatpush.msra.mxu0 0.0
      %4993 = vmatpush.msra.mxu0 0.0
      %4994 = vmatpush.msra.mxu0 0.0
      %4995 = vmatpush.msra.mxu0 0.0
      %4996 = vmatpush.msra.mxu0 0.0
      %4997 = vmatpush.msra.mxu0 0.0
      %4998 = vmatpush.msra.mxu0 0.0
      %4999 = vmatpush.msra.mxu0 0.0
      %5000 = vmatpush.msra.mxu0 %v4986
      %5001 = vmatpush.msra.mxu0 %v4980
      %5002 = vmatpush.msra.mxu0 %v4979
      %5003 = vmatpush.msra.mxu0 %v4978
      %5004 = vmatmul.f32.gmra.mxu0 %v4983
      %v5005 = vpop.f32.mrf.mxu0
      %v5006 = vadd.f32 0.0, %v5005
      %5007 = vdwg.mxu0
      %v5008 = vadd.f32 %v4972, %v5006
      %s5009 = scalar_lea.vmem %s7, 96
      %v5010 = vld [vmem:[%s5009] sm:$0xf]
      %v5011 = vld [vmem:[%s5009 + $0x4] sm:$0xf]
      %v5012 = vld [vmem:[%s5009 + $0x8] sm:$0xf]
      %v5013 = vld [vmem:[%s5009 + $0xc] sm:$0x1]
      %v5014 = vunpack.c.l.bf16 %v5010
      %v5015 = vunpack.c.l.bf16 %v5011
      %v5016 = vunpack.c.l.bf16 %v5012
      %v5017 = vunpack.c.l.bf16 %v5013
      %v5019 = vsel %vm4811, %v4786, 0
      %v5022 = vsel %vm4815, %v5017, 0
      %5024 = vmatpush.msra.mxu0 0.0
      %5025 = vmatpush.msra.mxu0 0.0
      %5026 = vmatpush.msra.mxu0 0.0
      %5027 = vmatpush.msra.mxu0 0.0
      %5028 = vmatpush.msra.mxu0 0.0
      %5029 = vmatpush.msra.mxu0 0.0
      %5030 = vmatpush.msra.mxu0 0.0
      %5031 = vmatpush.msra.mxu0 0.0
      %5032 = vmatpush.msra.mxu0 0.0
      %5033 = vmatpush.msra.mxu0 0.0
      %5034 = vmatpush.msra.mxu0 0.0
      %5035 = vmatpush.msra.mxu0 0.0
      %5036 = vmatpush.msra.mxu0 %v5022
      %5037 = vmatpush.msra.mxu0 %v5016
      %5038 = vmatpush.msra.mxu0 %v5015
      %5039 = vmatpush.msra.mxu0 %v5014
      %5040 = vmatmul.f32.gmra.mxu0 %v5019
      %v5041 = vpop.f32.mrf.mxu0
      %v5042 = vadd.f32 0.0, %v5041
      %5043 = vdwg.mxu0
      %v5044 = vadd.f32 %v5008, %v5042
      %s5045 = scalar_lea.vmem %s7, 112
      %v5046 = vld [vmem:[%s5045] sm:$0xf]
      %v5047 = vld [vmem:[%s5045 + $0x4] sm:$0xf]
      %v5048 = vld [vmem:[%s5045 + $0x8] sm:$0xf]
      %v5049 = vld [vmem:[%s5045 + $0xc] sm:$0x1]
      %v5050 = vunpack.c.l.bf16 %v5046
      %v5051 = vunpack.c.l.bf16 %v5047
      %v5052 = vunpack.c.l.bf16 %v5048
      %v5053 = vunpack.c.l.bf16 %v5049
      %v5055 = vsel %vm4811, %v4789, 0
      %v5058 = vsel %vm4815, %v5053, 0
      %5060 = vmatpush.msra.mxu0 0.0
      %5061 = vmatpush.msra.mxu0 0.0
      %5062 = vmatpush.msra.mxu0 0.0
      %5063 = vmatpush.msra.mxu0 0.0
      %5064 = vmatpush.msra.mxu0 0.0
      %5065 = vmatpush.msra.mxu0 0.0
      %5066 = vmatpush.msra.mxu0 0.0
      %5067 = vmatpush.msra.mxu0 0.0
      %5068 = vmatpush.msra.mxu0 0.0
      %5069 = vmatpush.msra.mxu0 0.0
      %5070 = vmatpush.msra.mxu0 0.0
      %5071 = vmatpush.msra.mxu0 0.0
      %5072 = vmatpush.msra.mxu0 %v5058
      %5073 = vmatpush.msra.mxu0 %v5052
      %5074 = vmatpush.msra.mxu0 %v5051
      %5075 = vmatpush.msra.mxu0 %v5050
      %5076 = vmatmul.f32.gmra.mxu0 %v5055
      %v5077 = vpop.f32.mrf.mxu0
      %v5078 = vadd.f32 0.0, %v5077
      %5079 = vdwg.mxu0
      %v5080 = vadd.f32 %v5044, %v5078
      %s5081 = scalar_lea.vmem %s7, 128
      %v5082 = vld [vmem:[%s5081] sm:$0xf]
      %v5083 = vld [vmem:[%s5081 + $0x4] sm:$0xf]
      %v5084 = vld [vmem:[%s5081 + $0x8] sm:$0xf]
      %v5085 = vld [vmem:[%s5081 + $0xc] sm:$0x1]
      %v5086 = vunpack.c.l.bf16 %v5082
      %v5087 = vunpack.c.l.bf16 %v5083
      %v5088 = vunpack.c.l.bf16 %v5084
      %v5089 = vunpack.c.l.bf16 %v5085
      %v5091 = vsel %vm4811, %v4792, 0
      %v5094 = vsel %vm4815, %v5089, 0
      %5096 = vmatpush.msra.mxu0 0.0
      %5097 = vmatpush.msra.mxu0 0.0
      %5098 = vmatpush.msra.mxu0 0.0
      %5099 = vmatpush.msra.mxu0 0.0
      %5100 = vmatpush.msra.mxu0 0.0
      %5101 = vmatpush.msra.mxu0 0.0
      %5102 = vmatpush.msra.mxu0 0.0
      %5103 = vmatpush.msra.mxu0 0.0
      %5104 = vmatpush.msra.mxu0 0.0
      %5105 = vmatpush.msra.mxu0 0.0
      %5106 = vmatpush.msra.mxu0 0.0
      %5107 = vmatpush.msra.mxu0 0.0
      %5108 = vmatpush.msra.mxu0 %v5094
      %5109 = vmatpush.msra.mxu0 %v5088
      %5110 = vmatpush.msra.mxu0 %v5087
      %5111 = vmatpush.msra.mxu0 %v5086
      %5112 = vmatmul.f32.gmra.mxu0 %v5091
      %v5113 = vpop.f32.mrf.mxu0
      %v5114 = vadd.f32 0.0, %v5113
      %5115 = vdwg.mxu0
      %v5116 = vadd.f32 %v5080, %v5114
      %v5117 = vld [vmem:[%s6] sm:$0xff]
      %5119 = vset.pattern.permute.xlu0 0
      %5120 = vperm.xlu0 %5119, %v5117
      %v5121 = vpop.permute.xlu0 %5120
      %v5123 = vadd.f32 %v5116, %v5121
      %v5124 = vmax.f32 %v5123, 0.0
      %v5125 = vld [vmem:[%s8] sm:$0xf]
      %v5126 = vld [vmem:[%s8 + $0x4] sm:$0x1]
      %v5127 = vunpack.c.l.bf16 %v5125
      %v5128 = vunpack.c.l.bf16 %v5126
      %vm5129 = vcmask 72704
      %v5131 = vsel %vm5129, %v5124, 0
      %v5134 = vsel %vm4815, %v5128, 0
      %5136 = vmatpush.msra.mxu0 0.0
      %5137 = vmatpush.msra.mxu0 0.0
      %5138 = vmatpush.msra.mxu0 0.0
      %5139 = vmatpush.msra.mxu0 0.0
      %5140 = vmatpush.msra.mxu0 0.0
      %5141 = vmatpush.msra.mxu0 0.0
      %5142 = vmatpush.msra.mxu0 0.0
      %5143 = vmatpush.msra.mxu0 0.0
      %5144 = vmatpush.msra.mxu0 0.0
      %5145 = vmatpush.msra.mxu0 0.0
      %5146 = vmatpush.msra.mxu0 0.0
      %5147 = vmatpush.msra.mxu0 0.0
      %5148 = vmatpush.msra.mxu0 0.0
      %5149 = vmatpush.msra.mxu0 0.0
      %5150 = vmatpush.msra.mxu0 %v5134
      %5151 = vmatpush.msra.mxu0 %v5127
      %5152 = vmatmul.f32.gmra.mxu0 %v5131
      %v5153 = vpop.f32.mrf.mxu0
      %v5154 = vadd.f32 0.0, %v5153
      %5155 = vdwg.mxu0
      %s5156 = scalar_lea.vmem %s8, 8
      %v5157 = vld [vmem:[%s5156] sm:$0xf]
      %v5158 = vld [vmem:[%s5156 + $0x4] sm:$0x1]
      %v5159 = vunpack.c.l.bf16 %v5157
      %v5160 = vunpack.c.l.bf16 %v5158
      %v5162 = vsel %vm4815, %v5160, 0
      %5164 = vmatpush.msra.mxu0 0.0
      %5165 = vmatpush.msra.mxu0 0.0
      %5166 = vmatpush.msra.mxu0 0.0
      %5167 = vmatpush.msra.mxu0 0.0
      %5168 = vmatpush.msra.mxu0 0.0
      %5169 = vmatpush.msra.mxu0 0.0
      %5170 = vmatpush.msra.mxu0 0.0
      %5171 = vmatpush.msra.mxu0 0.0
      %5172 = vmatpush.msra.mxu0 0.0
      %5173 = vmatpush.msra.mxu0 0.0
      %5174 = vmatpush.msra.mxu0 0.0
      %5175 = vmatpush.msra.mxu0 0.0
      %5176 = vmatpush.msra.mxu0 0.0
      %5177 = vmatpush.msra.mxu0 0.0
      %5178 = vmatpush.msra.mxu0 %v5162
      %5179 = vmatpush.msra.mxu0 %v5159
      %5180 = vmatmul.f32.gmra.mxu0 %v5131
      %v5181 = vpop.f32.mrf.mxu0
      %v5182 = vadd.f32 0.0, %v5181
      %5183 = vdwg.mxu0
      %v5184 = vmax.f32 %v5154, %v5182
      %s5185 = scalar_lea.vmem %s8, 16
      %v5186 = vld [vmem:[%s5185] sm:$0xf]
      %v5187 = vld [vmem:[%s5185 + $0x4] sm:$0x1]
      %v5188 = vunpack.c.l.bf16 %v5186
      %v5189 = vunpack.c.l.bf16 %v5187
      %v5191 = vsel %vm4815, %v5189, 0
      %5193 = vmatpush.msra.mxu0 0.0
      %5194 = vmatpush.msra.mxu0 0.0
      %5195 = vmatpush.msra.mxu0 0.0
      %5196 = vmatpush.msra.mxu0 0.0
      %5197 = vmatpush.msra.mxu0 0.0
      %5198 = vmatpush.msra.mxu0 0.0
      %5199 = vmatpush.msra.mxu0 0.0
      %5200 = vmatpush.msra.mxu0 0.0
      %5201 = vmatpush.msra.mxu0 0.0
      %5202 = vmatpush.msra.mxu0 0.0
      %5203 = vmatpush.msra.mxu0 0.0
      %5204 = vmatpush.msra.mxu0 0.0
      %5205 = vmatpush.msra.mxu0 0.0
      %5206 = vmatpush.msra.mxu0 0.0
      %5207 = vmatpush.msra.mxu0 %v5191
      %5208 = vmatpush.msra.mxu0 %v5188
      %5209 = vmatmul.f32.gmra.mxu0 %v5131
      %v5210 = vpop.f32.mrf.mxu0
      %v5211 = vadd.f32 0.0, %v5210
      %5212 = vdwg.mxu0
      %v5213 = vmax.f32 %v5184, %v5211
      %s5214 = scalar_lea.vmem %s8, 24
      %v5215 = vld [vmem:[%s5214] sm:$0xf]
      %v5216 = vld [vmem:[%s5214 + $0x4] sm:$0x1]
      %v5217 = vunpack.c.l.bf16 %v5215
      %v5218 = vunpack.c.l.bf16 %v5216
      %v5220 = vsel %vm4815, %v5218, 0
      %5222 = vmatpush.msra.mxu0 0.0
      %5223 = vmatpush.msra.mxu0 0.0
      %5224 = vmatpush.msra.mxu0 0.0
      %5225 = vmatpush.msra.mxu0 0.0
      %5226 = vmatpush.msra.mxu0 0.0
      %5227 = vmatpush.msra.mxu0 0.0
      %5228 = vmatpush.msra.mxu0 0.0
      %5229 = vmatpush.msra.mxu0 0.0
      %5230 = vmatpush.msra.mxu0 0.0
      %5231 = vmatpush.msra.mxu0 0.0
      %5232 = vmatpush.msra.mxu0 0.0
      %5233 = vmatpush.msra.mxu0 0.0
      %5234 = vmatpush.msra.mxu0 0.0
      %5235 = vmatpush.msra.mxu0 0.0
      %5236 = vmatpush.msra.mxu0 %v5220
      %5237 = vmatpush.msra.mxu0 %v5217
      %5238 = vmatmul.f32.gmra.mxu0 %v5131
      %v5239 = vpop.f32.mrf.mxu0
      %v5240 = vadd.f32 0.0, %v5239
      %5241 = vdwg.mxu0
      %v5242 = vmax.f32 %v5213, %v5240
      %v5243 = vld [vmem:[%s9] sm:$0xff]
      %v5244 = vld [vmem:[%s9 + $0x8] sm:$0xff]
      %v5245 = vld [vmem:[%s9 + $0x10] sm:$0xff]
      %v5246 = vld [vmem:[%s9 + $0x18] sm:$0xff]
      %v5247 = vld [vmem:[%s9 + $0x20] sm:$0xff]
      %v5248 = vld [vmem:[%s9 + $0x28] sm:$0xff]
      %v5249 = vld [vmem:[%s9 + $0x30] sm:$0xff]
      %v5250 = vld [vmem:[%s9 + $0x38] sm:$0xff]
      %v5251 = vld [vmem:[%s9 + $0x40] sm:$0xff]
      %v5252 = vld [vmem:[%s9 + $0x48] sm:$0xff]
      %v5253 = vld [vmem:[%s9 + $0x50] sm:$0xff]
      %v5254 = vld [vmem:[%s9 + $0x58] sm:$0xff]
      %v5255 = vld [vmem:[%s9 + $0x60] sm:$0xff]
      %v5256 = vld [vmem:[%s9 + $0x68] sm:$0xff]
      %v5257 = vld [vmem:[%s9 + $0x70] sm:$0xff]
      %v5258 = vld [vmem:[%s9 + $0x78] sm:$0xff]
      %v5259 = vld [vmem:[%s9 + $0x80] sm:$0xff]
      %v5260 = vld [vmem:[%s9 + $0x88] sm:$0xff]
      %vm5261 = vcmask 64512
      %v5263 = vsel %vm5261, %v5243, 0
      %v5266 = vsel %vm5261, %v5244, 0
      %v5269 = vsel %vm5261, %v5245, 0
      %v5272 = vsel %vm5261, %v5246, 0
      %v5275 = vsel %vm5261, %v5247, 0
      %v5278 = vsel %vm5261, %v5248, 0
      %v5281 = vsel %vm5261, %v5249, 0
      %v5284 = vsel %vm5261, %v5250, 0
      %v5287 = vsel %vm5261, %v5251, 0
      %v5290 = vsel %vm5261, %v5252, 0
      %v5293 = vsel %vm5261, %v5253, 0
      %v5296 = vsel %vm5261, %v5254, 0
      %v5299 = vsel %vm5261, %v5255, 0
      %v5302 = vsel %vm5261, %v5256, 0
      %v5305 = vsel %vm5261, %v5257, 0
      %v5308 = vsel %vm5261, %v5258, 0
      %v5311 = vsel %vm5261, %v5259, 0
      %v5314 = vsel %vm5261, %v5260, 0
      %5316 = vmatpush.msra.mxu0 0.0
      %5317 = vmatpush.msra.mxu0 0.0
      %5318 = vmatpush.msra.mxu0 0.0
      %5319 = vmatpush.msra.mxu0 0.0
      %5320 = vmatpush.msra.mxu0 0.0
      %5321 = vmatpush.msra.mxu0 0.0
      %5322 = vmatpush.msra.mxu0 0.0
      %5323 = vmatpush.msra.mxu0 0.0
      %5324 = vmatpush.msra.mxu0 0.0
      %5325 = vmatpush.msra.mxu0 0.0
      %5326 = vmatpush.msra.mxu0 0.0
      %5327 = vmatpush.msra.mxu0 0.0
      %5328 = vmatpush.msra.mxu0 0.0
      %5329 = vmatpush.msra.mxu0 0.0
      %5330 = vmatpush.msra.mxu0 0.0
      %5331 = vmatpush.msra.mxu0 %v5242
      %5332 = vmatmul.f32.gmra.mxu0 %v5263
      %v5333 = vpop.f32.mrf.mxu0
      %v5334 = vadd.f32 0.0, %v5333
      %5335 = vmatmul.f32.gmra.mxu0 %v5266
      %v5336 = vpop.f32.mrf.mxu0
      %v5337 = vadd.f32 0.0, %v5336
      %5338 = vmatmul.f32.gmra.mxu0 %v5269
      %v5339 = vpop.f32.mrf.mxu0
      %v5340 = vadd.f32 0.0, %v5339
      %5341 = vmatmul.f32.gmra.mxu0 %v5272
      %v5342 = vpop.f32.mrf.mxu0
      %v5343 = vadd.f32 0.0, %v5342
      %5344 = vmatmul.f32.gmra.mxu0 %v5275
      %v5345 = vpop.f32.mrf.mxu0
      %v5346 = vadd.f32 0.0, %v5345
      %5347 = vmatmul.f32.gmra.mxu0 %v5278
      %v5348 = vpop.f32.mrf.mxu0
      %v5349 = vadd.f32 0.0, %v5348
      %5350 = vmatmul.f32.gmra.mxu0 %v5281
      %v5351 = vpop.f32.mrf.mxu0
      %v5352 = vadd.f32 0.0, %v5351
      %5353 = vmatmul.f32.gmra.mxu0 %v5284
      %v5354 = vpop.f32.mrf.mxu0
      %v5355 = vadd.f32 0.0, %v5354
      %5356 = vmatmul.f32.gmra.mxu0 %v5287
      %v5357 = vpop.f32.mrf.mxu0
      %v5358 = vadd.f32 0.0, %v5357
      %5359 = vmatmul.f32.gmra.mxu0 %v5290
      %v5360 = vpop.f32.mrf.mxu0
      %v5361 = vadd.f32 0.0, %v5360
      %5362 = vmatmul.f32.gmra.mxu0 %v5293
      %v5363 = vpop.f32.mrf.mxu0
      %v5364 = vadd.f32 0.0, %v5363
      %5365 = vmatmul.f32.gmra.mxu0 %v5296
      %v5366 = vpop.f32.mrf.mxu0
      %v5367 = vadd.f32 0.0, %v5366
      %5368 = vmatmul.f32.gmra.mxu0 %v5299
      %v5369 = vpop.f32.mrf.mxu0
      %v5370 = vadd.f32 0.0, %v5369
      %5371 = vmatmul.f32.gmra.mxu0 %v5302
      %v5372 = vpop.f32.mrf.mxu0
      %v5373 = vadd.f32 0.0, %v5372
      %5374 = vmatmul.f32.gmra.mxu0 %v5305
      %v5375 = vpop.f32.mrf.mxu0
      %v5376 = vadd.f32 0.0, %v5375
      %5377 = vmatmul.f32.gmra.mxu0 %v5308
      %v5378 = vpop.f32.mrf.mxu0
      %v5379 = vadd.f32 0.0, %v5378
      %5380 = vmatmul.f32.gmra.mxu0 %v5311
      %v5381 = vpop.f32.mrf.mxu0
      %v5382 = vadd.f32 0.0, %v5381
      %5383 = vmatmul.f32.gmra.mxu0 %v5314
      %v5384 = vpop.f32.mrf.mxu0
      %v5385 = vadd.f32 0.0, %v5384
      %5386 = vdwg.mxu0
      %v5387 = vld [vmem:[%s11] sm:$0x3]
      %v5388 = vunpack.c.l.bf16 %v5387
      %s5389 = scalar_lea.vmem %s11, 2
      %v5390 = vld [vmem:[%s5389] sm:$0x3]
      %v5391 = vunpack.c.l.bf16 %v5390
      %vm5392 = vcmask 31744
      %v5394 = vsel %vm5392, %v5340, 0
      %v5397 = vsel %vm5392, %v5343, 0
      %v5400 = vsel %vm4522, %v5391, 0
      %5402 = vmatpush.msra.mxu0 0.0
      %5403 = vmatpush.msra.mxu0 0.0
      %5404 = vmatpush.msra.mxu0 0.0
      %5405 = vmatpush.msra.mxu0 0.0
      %5406 = vmatpush.msra.mxu0 0.0
      %5407 = vmatpush.msra.mxu0 0.0
      %5408 = vmatpush.msra.mxu0 0.0
      %5409 = vmatpush.msra.mxu0 0.0
      %5410 = vmatpush.msra.mxu0 0.0
      %5411 = vmatpush.msra.mxu0 0.0
      %5412 = vmatpush.msra.mxu0 0.0
      %5413 = vmatpush.msra.mxu0 0.0
      %5414 = vmatpush.msra.mxu0 0.0
      %5415 = vmatpush.msra.mxu0 0.0
      %5416 = vmatpush.msra.mxu0 0.0
      %5417 = vmatpush.msra.mxu0 %v5400
      %5418 = vmatmul.f32.gmra.mxu0 %v5394
      %v5419 = vpop.f32.mrf.mxu0
      %v5420 = vadd.f32 0.0, %v5419
      %5421 = vmatmul.f32.gmra.mxu0 %v5397
      %v5422 = vpop.f32.mrf.mxu0
      %v5423 = vadd.f32 0.0, %v5422
      %5424 = vdwg.mxu0
      %v5426 = vsel %vm5392, %v5334, 0
      %v5429 = vsel %vm5392, %v5337, 0
      %v5432 = vsel %vm4522, %v5388, 0
      %5434 = vmatpush.msra.mxu0 0.0
      %5435 = vmatpush.msra.mxu0 0.0
      %5436 = vmatpush.msra.mxu0 0.0
      %5437 = vmatpush.msra.mxu0 0.0
      %5438 = vmatpush.msra.mxu0 0.0
      %5439 = vmatpush.msra.mxu0 0.0
      %5440 = vmatpush.msra.mxu0 0.0
      %5441 = vmatpush.msra.mxu0 0.0
      %5442 = vmatpush.msra.mxu0 0.0
      %5443 = vmatpush.msra.mxu0 0.0
      %5444 = vmatpush.msra.mxu0 0.0
      %5445 = vmatpush.msra.mxu0 0.0
      %5446 = vmatpush.msra.mxu0 0.0
      %5447 = vmatpush.msra.mxu0 0.0
      %5448 = vmatpush.msra.mxu0 0.0
      %5449 = vmatpush.msra.mxu0 %v5432
      %5450 = vmatmul.f32.gmra.mxu0 %v5426
      %v5451 = vpop.f32.mrf.mxu0
      %v5452 = vadd.f32 %v5420, %v5451
      %5453 = vmatmul.f32.gmra.mxu0 %v5429
      %v5454 = vpop.f32.mrf.mxu0
      %v5455 = vadd.f32 %v5423, %v5454
      %5456 = vdwg.mxu0
      %s5457 = scalar_lea.vmem %s11, 4
      %v5458 = vld [vmem:[%s5457] sm:$0x3]
      %v5459 = vunpack.c.l.bf16 %v5458
      %v5461 = vsel %vm5392, %v5346, 0
      %v5464 = vsel %vm5392, %v5349, 0
      %v5467 = vsel %vm4522, %v5459, 0
      %5469 = vmatpush.msra.mxu0 0.0
      %5470 = vmatpush.msra.mxu0 0.0
      %5471 = vmatpush.msra.mxu0 0.0
      %5472 = vmatpush.msra.mxu0 0.0
      %5473 = vmatpush.msra.mxu0 0.0
      %5474 = vmatpush.msra.mxu0 0.0
      %5475 = vmatpush.msra.mxu0 0.0
      %5476 = vmatpush.msra.mxu0 0.0
      %5477 = vmatpush.msra.mxu0 0.0
      %5478 = vmatpush.msra.mxu0 0.0
      %5479 = vmatpush.msra.mxu0 0.0
      %5480 = vmatpush.msra.mxu0 0.0
      %5481 = vmatpush.msra.mxu0 0.0
      %5482 = vmatpush.msra.mxu0 0.0
      %5483 = vmatpush.msra.mxu0 0.0
      %5484 = vmatpush.msra.mxu0 %v5467
      %5485 = vmatmul.f32.gmra.mxu0 %v5461
      %v5486 = vpop.f32.mrf.mxu0
      %v5487 = vadd.f32 0.0, %v5486
      %5488 = vmatmul.f32.gmra.mxu0 %v5464
      %v5489 = vpop.f32.mrf.mxu0
      %v5490 = vadd.f32 0.0, %v5489
      %5491 = vdwg.mxu0
      %v5492 = vadd.f32 %v5452, %v5487
      %v5493 = vadd.f32 %v5455, %v5490
      %s5494 = scalar_lea.vmem %s11, 6
      %v5495 = vld [vmem:[%s5494] sm:$0x3]
      %v5496 = vunpack.c.l.bf16 %v5495
      %v5498 = vsel %vm5392, %v5352, 0
      %v5501 = vsel %vm5392, %v5355, 0
      %v5504 = vsel %vm4522, %v5496, 0
      %5506 = vmatpush.msra.mxu0 0.0
      %5507 = vmatpush.msra.mxu0 0.0
      %5508 = vmatpush.msra.mxu0 0.0
      %5509 = vmatpush.msra.mxu0 0.0
      %5510 = vmatpush.msra.mxu0 0.0
      %5511 = vmatpush.msra.mxu0 0.0
      %5512 = vmatpush.msra.mxu0 0.0
      %5513 = vmatpush.msra.mxu0 0.0
      %5514 = vmatpush.msra.mxu0 0.0
      %5515 = vmatpush.msra.mxu0 0.0
      %5516 = vmatpush.msra.mxu0 0.0
      %5517 = vmatpush.msra.mxu0 0.0
      %5518 = vmatpush.msra.mxu0 0.0
      %5519 = vmatpush.msra.mxu0 0.0
      %5520 = vmatpush.msra.mxu0 0.0
      %5521 = vmatpush.msra.mxu0 %v5504
      %5522 = vmatmul.f32.gmra.mxu0 %v5498
      %v5523 = vpop.f32.mrf.mxu0
      %v5524 = vadd.f32 0.0, %v5523
      %5525 = vmatmul.f32.gmra.mxu0 %v5501
      %v5526 = vpop.f32.mrf.mxu0
      %v5527 = vadd.f32 0.0, %v5526
      %5528 = vdwg.mxu0
      %v5529 = vadd.f32 %v5492, %v5524
      %v5530 = vadd.f32 %v5493, %v5527
      %s5531 = scalar_lea.vmem %s11, 8
      %v5532 = vld [vmem:[%s5531] sm:$0x3]
      %v5533 = vunpack.c.l.bf16 %v5532
      %v5535 = vsel %vm5392, %v5358, 0
      %v5538 = vsel %vm5392, %v5361, 0
      %v5541 = vsel %vm4522, %v5533, 0
      %5543 = vmatpush.msra.mxu0 0.0
      %5544 = vmatpush.msra.mxu0 0.0
      %5545 = vmatpush.msra.mxu0 0.0
      %5546 = vmatpush.msra.mxu0 0.0
      %5547 = vmatpush.msra.mxu0 0.0
      %5548 = vmatpush.msra.mxu0 0.0
      %5549 = vmatpush.msra.mxu0 0.0
      %5550 = vmatpush.msra.mxu0 0.0
      %5551 = vmatpush.msra.mxu0 0.0
      %5552 = vmatpush.msra.mxu0 0.0
      %5553 = vmatpush.msra.mxu0 0.0
      %5554 = vmatpush.msra.mxu0 0.0
      %5555 = vmatpush.msra.mxu0 0.0
      %5556 = vmatpush.msra.mxu0 0.0
      %5557 = vmatpush.msra.mxu0 0.0
      %5558 = vmatpush.msra.mxu0 %v5541
      %5559 = vmatmul.f32.gmra.mxu0 %v5535
      %v5560 = vpop.f32.mrf.mxu0
      %v5561 = vadd.f32 0.0, %v5560
      %5562 = vmatmul.f32.gmra.mxu0 %v5538
      %v5563 = vpop.f32.mrf.mxu0
      %v5564 = vadd.f32 0.0, %v5563
      %5565 = vdwg.mxu0
      %v5566 = vadd.f32 %v5529, %v5561
      %v5567 = vadd.f32 %v5530, %v5564
      %s5568 = scalar_lea.vmem %s11, 10
      %v5569 = vld [vmem:[%s5568] sm:$0x3]
      %v5570 = vunpack.c.l.bf16 %v5569
      %v5572 = vsel %vm5392, %v5364, 0
      %v5575 = vsel %vm5392, %v5367, 0
      %v5578 = vsel %vm4522, %v5570, 0
      %5580 = vmatpush.msra.mxu0 0.0
      %5581 = vmatpush.msra.mxu0 0.0
      %5582 = vmatpush.msra.mxu0 0.0
      %5583 = vmatpush.msra.mxu0 0.0
      %5584 = vmatpush.msra.mxu0 0.0
      %5585 = vmatpush.msra.mxu0 0.0
      %5586 = vmatpush.msra.mxu0 0.0
      %5587 = vmatpush.msra.mxu0 0.0
      %5588 = vmatpush.msra.mxu0 0.0
      %5589 = vmatpush.msra.mxu0 0.0
      %5590 = vmatpush.msra.mxu0 0.0
      %5591 = vmatpush.msra.mxu0 0.0
      %5592 = vmatpush.msra.mxu0 0.0
      %5593 = vmatpush.msra.mxu0 0.0
      %5594 = vmatpush.msra.mxu0 0.0
      %5595 = vmatpush.msra.mxu0 %v5578
      %5596 = vmatmul.f32.gmra.mxu0 %v5572
      %v5597 = vpop.f32.mrf.mxu0
      %v5598 = vadd.f32 0.0, %v5597
      %5599 = vmatmul.f32.gmra.mxu0 %v5575
      %v5600 = vpop.f32.mrf.mxu0
      %v5601 = vadd.f32 0.0, %v5600
      %5602 = vdwg.mxu0
      %v5603 = vadd.f32 %v5566, %v5598
      %v5604 = vadd.f32 %v5567, %v5601
      %s5605 = scalar_lea.vmem %s11, 12
      %v5606 = vld [vmem:[%s5605] sm:$0x3]
      %v5607 = vunpack.c.l.bf16 %v5606
      %v5609 = vsel %vm5392, %v5370, 0
      %v5612 = vsel %vm5392, %v5373, 0
      %v5615 = vsel %vm4522, %v5607, 0
      %5617 = vmatpush.msra.mxu0 0.0
      %5618 = vmatpush.msra.mxu0 0.0
      %5619 = vmatpush.msra.mxu0 0.0
      %5620 = vmatpush.msra.mxu0 0.0
      %5621 = vmatpush.msra.mxu0 0.0
      %5622 = vmatpush.msra.mxu0 0.0
      %5623 = vmatpush.msra.mxu0 0.0
      %5624 = vmatpush.msra.mxu0 0.0
      %5625 = vmatpush.msra.mxu0 0.0
      %5626 = vmatpush.msra.mxu0 0.0
      %5627 = vmatpush.msra.mxu0 0.0
      %5628 = vmatpush.msra.mxu0 0.0
      %5629 = vmatpush.msra.mxu0 0.0
      %5630 = vmatpush.msra.mxu0 0.0
      %5631 = vmatpush.msra.mxu0 0.0
      %5632 = vmatpush.msra.mxu0 %v5615
      %5633 = vmatmul.f32.gmra.mxu0 %v5609
      %v5634 = vpop.f32.mrf.mxu0
      %v5635 = vadd.f32 0.0, %v5634
      %5636 = vmatmul.f32.gmra.mxu0 %v5612
      %v5637 = vpop.f32.mrf.mxu0
      %v5638 = vadd.f32 0.0, %v5637
      %5639 = vdwg.mxu0
      %v5640 = vadd.f32 %v5603, %v5635
      %v5641 = vadd.f32 %v5604, %v5638
      %s5642 = scalar_lea.vmem %s11, 14
      %v5643 = vld [vmem:[%s5642] sm:$0x3]
      %v5644 = vunpack.c.l.bf16 %v5643
      %v5646 = vsel %vm5392, %v5376, 0
      %v5649 = vsel %vm5392, %v5379, 0
      %v5652 = vsel %vm4522, %v5644, 0
      %5654 = vmatpush.msra.mxu0 0.0
      %5655 = vmatpush.msra.mxu0 0.0
      %5656 = vmatpush.msra.mxu0 0.0
      %5657 = vmatpush.msra.mxu0 0.0
      %5658 = vmatpush.msra.mxu0 0.0
      %5659 = vmatpush.msra.mxu0 0.0
      %5660 = vmatpush.msra.mxu0 0.0
      %5661 = vmatpush.msra.mxu0 0.0
      %5662 = vmatpush.msra.mxu0 0.0
      %5663 = vmatpush.msra.mxu0 0.0
      %5664 = vmatpush.msra.mxu0 0.0
      %5665 = vmatpush.msra.mxu0 0.0
      %5666 = vmatpush.msra.mxu0 0.0
      %5667 = vmatpush.msra.mxu0 0.0
      %5668 = vmatpush.msra.mxu0 0.0
      %5669 = vmatpush.msra.mxu0 %v5652
      %5670 = vmatmul.f32.gmra.mxu0 %v5646
      %v5671 = vpop.f32.mrf.mxu0
      %v5672 = vadd.f32 0.0, %v5671
      %5673 = vmatmul.f32.gmra.mxu0 %v5649
      %v5674 = vpop.f32.mrf.mxu0
      %v5675 = vadd.f32 0.0, %v5674
      %5676 = vdwg.mxu0
      %v5677 = vadd.f32 %v5640, %v5672
      %v5678 = vadd.f32 %v5641, %v5675
      %s5679 = scalar_lea.vmem %s11, 16
      %v5680 = vld [vmem:[%s5679] sm:$0x3]
      %v5681 = vunpack.c.l.bf16 %v5680
      %v5683 = vsel %vm5392, %v5382, 0
      %v5686 = vsel %vm5392, %v5385, 0
      %v5689 = vsel %vm4522, %v5681, 0
      %5691 = vmatpush.msra.mxu0 0.0
      %5692 = vmatpush.msra.mxu0 0.0
      %5693 = vmatpush.msra.mxu0 0.0
      %5694 = vmatpush.msra.mxu0 0.0
      %5695 = vmatpush.msra.mxu0 0.0
      %5696 = vmatpush.msra.mxu0 0.0
      %5697 = vmatpush.msra.mxu0 0.0
      %5698 = vmatpush.msra.mxu0 0.0
      %5699 = vmatpush.msra.mxu0 0.0
      %5700 = vmatpush.msra.mxu0 0.0
      %5701 = vmatpush.msra.mxu0 0.0
      %5702 = vmatpush.msra.mxu0 0.0
      %5703 = vmatpush.msra.mxu0 0.0
      %5704 = vmatpush.msra.mxu0 0.0
      %5705 = vmatpush.msra.mxu0 0.0
      %5706 = vmatpush.msra.mxu0 %v5689
      %5707 = vmatmul.f32.gmra.mxu0 %v5683
      %v5708 = vpop.f32.mrf.mxu0
      %v5709 = vadd.f32 0.0, %v5708
      %5710 = vmatmul.f32.gmra.mxu0 %v5686
      %v5711 = vpop.f32.mrf.mxu0
      %v5712 = vadd.f32 0.0, %v5711
      %5713 = vdwg.mxu0
      %v5714 = vadd.f32 %v5677, %v5709
      %v5715 = vadd.f32 %v5678, %v5712
      %v5716 = vld [vmem:[%s10] sm:$0xff]
      %v5717 = vld [vmem:[%s10 + $0x8] sm:$0xff]
      %5719 = vset.pattern.permute.xlu0 0
      %5720 = vperm.xlu0 %5719, %v5716
      %v5721 = vpop.permute.xlu0 %5720
      %5724 = vset.pattern.permute.xlu0 0
      %5725 = vperm.xlu0 %5724, %v5717
      %v5726 = vpop.permute.xlu0 %5725
      %v5728 = vadd.f32 %v5714, %v5721
      %v5729 = vadd.f32 %v5715, %v5726
      %v5730 = vmax.f32 %v5728, 0.0
      %v5731 = vmax.f32 %v5729, 0.0
      %v5732 = vld [vmem:[%s12] sm:$0xff]
      %v5733 = vld [vmem:[%s12 + $0x8] sm:$0xff]
      %v5734 = vld [vmem:[%s12 + $0x10] sm:$0xff]
      %v5735 = vld [vmem:[%s12 + $0x18] sm:$0xff]
      %v5736 = vld [vmem:[%s12 + $0x20] sm:$0xff]
      %v5737 = vld [vmem:[%s12 + $0x28] sm:$0xff]
      %v5738 = vld [vmem:[%s12 + $0x30] sm:$0xff]
      %v5739 = vld [vmem:[%s12 + $0x38] sm:$0xff]
      %v5740 = vld [vmem:[%s12 + $0x40] sm:$0xff]
      %v5741 = vld [vmem:[%s12 + $0x48] sm:$0xff]
      %v5742 = vld [vmem:[%s12 + $0x50] sm:$0xff]
      %v5743 = vld [vmem:[%s12 + $0x58] sm:$0xff]
      %v5744 = vld [vmem:[%s12 + $0x60] sm:$0xff]
      %v5745 = vld [vmem:[%s12 + $0x68] sm:$0xff]
      %v5746 = vld [vmem:[%s12 + $0x70] sm:$0xff]
      %v5747 = vld [vmem:[%s12 + $0x78] sm:$0xff]
      %v5748 = vld [vmem:[%s12 + $0x80] sm:$0xff]
      %v5749 = vld [vmem:[%s12 + $0x88] sm:$0xff]
      %v5750 = vld [vmem:[%s12 + $0x90] sm:$0xff]
      %v5751 = vld [vmem:[%s12 + $0x98] sm:$0xff]
      %v5752 = vld [vmem:[%s12 + $0xa0] sm:$0xff]
      %v5753 = vld [vmem:[%s12 + $0xa8] sm:$0xff]
      %v5754 = vld [vmem:[%s12 + $0xb0] sm:$0xff]
      %v5755 = vld [vmem:[%s12 + $0xb8] sm:$0xff]
      %v5756 = vld [vmem:[%s12 + $0xc0] sm:$0xff]
      %v5758 = vsel %vm1576, %v5732, 0
      %v5761 = vsel %vm1576, %v5733, 0
      %v5764 = vsel %vm1576, %v5734, 0
      %v5767 = vsel %vm1576, %v5735, 0
      %v5770 = vsel %vm1576, %v5736, 0
      %v5773 = vsel %vm1576, %v5737, 0
      %v5776 = vsel %vm1576, %v5738, 0
      %v5779 = vsel %vm1576, %v5739, 0
      %v5782 = vsel %vm1576, %v5740, 0
      %v5785 = vsel %vm1576, %v5741, 0
      %v5788 = vsel %vm1576, %v5742, 0
      %v5791 = vsel %vm1576, %v5743, 0
      %v5794 = vsel %vm1576, %v5744, 0
      %v5797 = vsel %vm1576, %v5745, 0
      %v5800 = vsel %vm1576, %v5746, 0
      %v5803 = vsel %vm1576, %v5747, 0
      %v5806 = vsel %vm1576, %v5748, 0
      %v5809 = vsel %vm1576, %v5749, 0
      %v5812 = vsel %vm1576, %v5750, 0
      %v5815 = vsel %vm1576, %v5751, 0
      %v5818 = vsel %vm1576, %v5752, 0
      %v5821 = vsel %vm1576, %v5753, 0
      %v5824 = vsel %vm1576, %v5754, 0
      %v5827 = vsel %vm1576, %v5755, 0
      %v5830 = vsel %vm1576, %v5756, 0
      %5832 = vmatpush.msra.mxu0 0.0
      %5833 = vmatpush.msra.mxu0 0.0
      %5834 = vmatpush.msra.mxu0 0.0
      %5835 = vmatpush.msra.mxu0 0.0
      %5836 = vmatpush.msra.mxu0 0.0
      %5837 = vmatpush.msra.mxu0 0.0
      %5838 = vmatpush.msra.mxu0 0.0
      %5839 = vmatpush.msra.mxu0 0.0
      %5840 = vmatpush.msra.mxu0 0.0
      %5841 = vmatpush.msra.mxu0 0.0
      %5842 = vmatpush.msra.mxu0 0.0
      %5843 = vmatpush.msra.mxu0 0.0
      %5844 = vmatpush.msra.mxu0 0.0
      %5845 = vmatpush.msra.mxu0 0.0
      %5846 = vmatpush.msra.mxu0 %v5731
      %5847 = vmatpush.msra.mxu0 %v5730
      %5848 = vmatmul.f32.gmra.mxu0 %v5758
      %v5849 = vpop.f32.mrf.mxu0
      %v5850 = vadd.f32 0.0, %v5849
      %5851 = vmatmul.f32.gmra.mxu0 %v5761
      %v5852 = vpop.f32.mrf.mxu0
      %v5853 = vadd.f32 0.0, %v5852
      %5854 = vmatmul.f32.gmra.mxu0 %v5764
      %v5855 = vpop.f32.mrf.mxu0
      %v5856 = vadd.f32 0.0, %v5855
      %5857 = vmatmul.f32.gmra.mxu0 %v5767
      %v5858 = vpop.f32.mrf.mxu0
      %v5859 = vadd.f32 0.0, %v5858
      %5860 = vmatmul.f32.gmra.mxu0 %v5770
      %v5861 = vpop.f32.mrf.mxu0
      %v5862 = vadd.f32 0.0, %v5861
      %5863 = vmatmul.f32.gmra.mxu0 %v5773
      %v5864 = vpop.f32.mrf.mxu0
      %v5865 = vadd.f32 0.0, %v5864
      %5866 = vmatmul.f32.gmra.mxu0 %v5776
      %v5867 = vpop.f32.mrf.mxu0
      %v5868 = vadd.f32 0.0, %v5867
      %5869 = vmatmul.f32.gmra.mxu0 %v5779
      %v5870 = vpop.f32.mrf.mxu0
      %v5871 = vadd.f32 0.0, %v5870
      %5872 = vmatmul.f32.gmra.mxu0 %v5782
      %v5873 = vpop.f32.mrf.mxu0
      %v5874 = vadd.f32 0.0, %v5873
      %5875 = vmatmul.f32.gmra.mxu0 %v5785
      %v5876 = vpop.f32.mrf.mxu0
      %v5877 = vadd.f32 0.0, %v5876
      %5878 = vmatmul.f32.gmra.mxu0 %v5788
      %v5879 = vpop.f32.mrf.mxu0
      %v5880 = vadd.f32 0.0, %v5879
      %5881 = vmatmul.f32.gmra.mxu0 %v5791
      %v5882 = vpop.f32.mrf.mxu0
      %v5883 = vadd.f32 0.0, %v5882
      %5884 = vmatmul.f32.gmra.mxu0 %v5794
      %v5885 = vpop.f32.mrf.mxu0
      %v5886 = vadd.f32 0.0, %v5885
      %5887 = vmatmul.f32.gmra.mxu0 %v5797
      %v5888 = vpop.f32.mrf.mxu0
      %v5889 = vadd.f32 0.0, %v5888
      %5890 = vmatmul.f32.gmra.mxu0 %v5800
      %v5891 = vpop.f32.mrf.mxu0
      %v5892 = vadd.f32 0.0, %v5891
      %5893 = vmatmul.f32.gmra.mxu0 %v5803
      %v5894 = vpop.f32.mrf.mxu0
      %v5895 = vadd.f32 0.0, %v5894
      %5896 = vmatmul.f32.gmra.mxu0 %v5806
      %v5897 = vpop.f32.mrf.mxu0
      %v5898 = vadd.f32 0.0, %v5897
      %5899 = vmatmul.f32.gmra.mxu0 %v5809
      %v5900 = vpop.f32.mrf.mxu0
      %v5901 = vadd.f32 0.0, %v5900
      %5902 = vmatmul.f32.gmra.mxu0 %v5812
      %v5903 = vpop.f32.mrf.mxu0
      %v5904 = vadd.f32 0.0, %v5903
      %5905 = vmatmul.f32.gmra.mxu0 %v5815
      %v5906 = vpop.f32.mrf.mxu0
      %v5907 = vadd.f32 0.0, %v5906
      %5908 = vmatmul.f32.gmra.mxu0 %v5818
      %v5909 = vpop.f32.mrf.mxu0
      %v5910 = vadd.f32 0.0, %v5909
      %5911 = vmatmul.f32.gmra.mxu0 %v5821
      %v5912 = vpop.f32.mrf.mxu0
      %v5913 = vadd.f32 0.0, %v5912
      %5914 = vmatmul.f32.gmra.mxu0 %v5824
      %v5915 = vpop.f32.mrf.mxu0
      %v5916 = vadd.f32 0.0, %v5915
      %5917 = vmatmul.f32.gmra.mxu0 %v5827
      %v5918 = vpop.f32.mrf.mxu0
      %v5919 = vadd.f32 0.0, %v5918
      %5920 = vmatmul.f32.gmra.mxu0 %v5830
      %v5921 = vpop.f32.mrf.mxu0
      %v5922 = vadd.f32 0.0, %v5921
      %5923 = vdwg.mxu0
      %v5924 = vld [vmem:[%s14] sm:$0xff]
      %v5925 = vld [vmem:[%s14 + $0x8] sm:$0xff]
      %v5926 = vld [vmem:[%s14 + $0x10] sm:$0xff]
      %v5927 = vld [vmem:[%s14 + $0x18] sm:$0x11]
      %v5928 = vunpack.c.l.bf16 %v5924
      %v5929 = vunpack.c.h.bf16 %v5924
      %v5930 = vunpack.c.l.bf16 %v5925
      %v5931 = vunpack.c.h.bf16 %v5925
      %v5932 = vunpack.c.l.bf16 %v5926
      %v5933 = vunpack.c.h.bf16 %v5926
      %v5934 = vunpack.c.l.bf16 %v5927
      %v5935 = vunpack.c.h.bf16 %v5927
      %s5936 = scalar_lea.vmem %s14, 32
      %v5937 = vld [vmem:[%s5936] sm:$0xff]
      %v5938 = vld [vmem:[%s5936 + $0x8] sm:$0xff]
      %v5939 = vld [vmem:[%s5936 + $0x10] sm:$0xff]
      %v5940 = vld [vmem:[%s5936 + $0x18] sm:$0x11]
      %v5941 = vunpack.c.l.bf16 %v5937
      %v5942 = vunpack.c.h.bf16 %v5937
      %v5943 = vunpack.c.l.bf16 %v5938
      %v5944 = vunpack.c.h.bf16 %v5938
      %v5945 = vunpack.c.l.bf16 %v5939
      %v5946 = vunpack.c.h.bf16 %v5939
      %v5947 = vunpack.c.l.bf16 %v5940
      %v5948 = vunpack.c.h.bf16 %v5940
      %v5950 = vsel %vm4811, %v5853, 0
      %v5953 = vsel %vm4815, %v5947, 0
      %v5956 = vsel %vm4815, %v5948, 0
      %5958 = vmatpush.msra.mxu0 0.0
      %5959 = vmatpush.msra.mxu0 0.0
      %5960 = vmatpush.msra.mxu0 0.0
      %5961 = vmatpush.msra.mxu0 0.0
      %5962 = vmatpush.msra.mxu0 0.0
      %5963 = vmatpush.msra.mxu0 0.0
      %5964 = vmatpush.msra.mxu0 0.0
      %5965 = vmatpush.msra.mxu0 0.0
      %5966 = vmatpush.msra.mxu0 0.0
      %5967 = vmatpush.msra.mxu0 0.0
      %5968 = vmatpush.msra.mxu0 0.0
      %5969 = vmatpush.msra.mxu0 0.0
      %5970 = vmatpush.msra.mxu0 %v5953
      %5971 = vmatpush.msra.mxu0 %v5945
      %5972 = vmatpush.msra.mxu0 %v5943
      %5973 = vmatpush.msra.mxu0 %v5941
      %5974 = vmatmul.f32.gmra.mxu0 %v5950
      %v5975 = vpop.f32.mrf.mxu0
      %v5976 = vadd.f32 0.0, %v5975
      %5977 = vdwg.mxu0
      %5978 = vmatpush.msra.mxu0 0.0
      %5979 = vmatpush.msra.mxu0 0.0
      %5980 = vmatpush.msra.mxu0 0.0
      %5981 = vmatpush.msra.mxu0 0.0
      %5982 = vmatpush.msra.mxu0 0.0
      %5983 = vmatpush.msra.mxu0 0.0
      %5984 = vmatpush.msra.mxu0 0.0
      %5985 = vmatpush.msra.mxu0 0.0
      %5986 = vmatpush.msra.mxu0 0.0
      %5987 = vmatpush.msra.mxu0 0.0
      %5988 = vmatpush.msra.mxu0 0.0
      %5989 = vmatpush.msra.mxu0 0.0
      %5990 = vmatpush.msra.mxu0 %v5956
      %5991 = vmatpush.msra.mxu0 %v5946
      %5992 = vmatpush.msra.mxu0 %v5944
      %5993 = vmatpush.msra.mxu0 %v5942
      %5994 = vmatmul.f32.gmra.mxu0 %v5950
      %v5995 = vpop.f32.mrf.mxu0
      %v5996 = vadd.f32 0.0, %v5995
      %5997 = vdwg.mxu0
      %v5999 = vsel %vm4811, %v5850, 0
      %v6002 = vsel %vm4815, %v5934, 0
      %v6005 = vsel %vm4815, %v5935, 0
      %6007 = vmatpush.msra.mxu0 0.0
      %6008 = vmatpush.msra.mxu0 0.0
      %6009 = vmatpush.msra.mxu0 0.0
      %6010 = vmatpush.msra.mxu0 0.0
      %6011 = vmatpush.msra.mxu0 0.0
      %6012 = vmatpush.msra.mxu0 0.0
      %6013 = vmatpush.msra.mxu0 0.0
      %6014 = vmatpush.msra.mxu0 0.0
      %6015 = vmatpush.msra.mxu0 0.0
      %6016 = vmatpush.msra.mxu0 0.0
      %6017 = vmatpush.msra.mxu0 0.0
      %6018 = vmatpush.msra.mxu0 0.0
      %6019 = vmatpush.msra.mxu0 %v6002
      %6020 = vmatpush.msra.mxu0 %v5932
      %6021 = vmatpush.msra.mxu0 %v5930
      %6022 = vmatpush.msra.mxu0 %v5928
      %6023 = vmatmul.f32.gmra.mxu0 %v5999
      %v6024 = vpop.f32.mrf.mxu0
      %v6025 = vadd.f32 %v5976, %v6024
      %6026 = vdwg.mxu0
      %6027 = vmatpush.msra.mxu0 0.0
      %6028 = vmatpush.msra.mxu0 0.0
      %6029 = vmatpush.msra.mxu0 0.0
      %6030 = vmatpush.msra.mxu0 0.0
      %6031 = vmatpush.msra.mxu0 0.0
      %6032 = vmatpush.msra.mxu0 0.0
      %6033 = vmatpush.msra.mxu0 0.0
      %6034 = vmatpush.msra.mxu0 0.0
      %6035 = vmatpush.msra.mxu0 0.0
      %6036 = vmatpush.msra.mxu0 0.0
      %6037 = vmatpush.msra.mxu0 0.0
      %6038 = vmatpush.msra.mxu0 0.0
      %6039 = vmatpush.msra.mxu0 %v6005
      %6040 = vmatpush.msra.mxu0 %v5933
      %6041 = vmatpush.msra.mxu0 %v5931
      %6042 = vmatpush.msra.mxu0 %v5929
      %6043 = vmatmul.f32.gmra.mxu0 %v5999
      %v6044 = vpop.f32.mrf.mxu0
      %v6045 = vadd.f32 %v5996, %v6044
      %6046 = vdwg.mxu0
      %s6047 = scalar_lea.vmem %s14, 64
      %v6048 = vld [vmem:[%s6047] sm:$0xff]
      %v6049 = vld [vmem:[%s6047 + $0x8] sm:$0xff]
      %v6050 = vld [vmem:[%s6047 + $0x10] sm:$0xff]
      %v6051 = vld [vmem:[%s6047 + $0x18] sm:$0x11]
      %v6052 = vunpack.c.l.bf16 %v6048
      %v6053 = vunpack.c.h.bf16 %v6048
      %v6054 = vunpack.c.l.bf16 %v6049
      %v6055 = vunpack.c.h.bf16 %v6049
      %v6056 = vunpack.c.l.bf16 %v6050
      %v6057 = vunpack.c.h.bf16 %v6050
      %v6058 = vunpack.c.l.bf16 %v6051
      %v6059 = vunpack.c.h.bf16 %v6051
      %v6061 = vsel %vm4811, %v5856, 0
      %v6064 = vsel %vm4815, %v6058, 0
      %v6067 = vsel %vm4815, %v6059, 0
      %6069 = vmatpush.msra.mxu0 0.0
      %6070 = vmatpush.msra.mxu0 0.0
      %6071 = vmatpush.msra.mxu0 0.0
      %6072 = vmatpush.msra.mxu0 0.0
      %6073 = vmatpush.msra.mxu0 0.0
      %6074 = vmatpush.msra.mxu0 0.0
      %6075 = vmatpush.msra.mxu0 0.0
      %6076 = vmatpush.msra.mxu0 0.0
      %6077 = vmatpush.msra.mxu0 0.0
      %6078 = vmatpush.msra.mxu0 0.0
      %6079 = vmatpush.msra.mxu0 0.0
      %6080 = vmatpush.msra.mxu0 0.0
      %6081 = vmatpush.msra.mxu0 %v6064
      %6082 = vmatpush.msra.mxu0 %v6056
      %6083 = vmatpush.msra.mxu0 %v6054
      %6084 = vmatpush.msra.mxu0 %v6052
      %6085 = vmatmul.f32.gmra.mxu0 %v6061
      %v6086 = vpop.f32.mrf.mxu0
      %v6087 = vadd.f32 0.0, %v6086
      %6088 = vdwg.mxu0
      %6089 = vmatpush.msra.mxu0 0.0
      %6090 = vmatpush.msra.mxu0 0.0
      %6091 = vmatpush.msra.mxu0 0.0
      %6092 = vmatpush.msra.mxu0 0.0
      %6093 = vmatpush.msra.mxu0 0.0
      %6094 = vmatpush.msra.mxu0 0.0
      %6095 = vmatpush.msra.mxu0 0.0
      %6096 = vmatpush.msra.mxu0 0.0
      %6097 = vmatpush.msra.mxu0 0.0
      %6098 = vmatpush.msra.mxu0 0.0
      %6099 = vmatpush.msra.mxu0 0.0
      %6100 = vmatpush.msra.mxu0 0.0
      %6101 = vmatpush.msra.mxu0 %v6067
      %6102 = vmatpush.msra.mxu0 %v6057
      %6103 = vmatpush.msra.mxu0 %v6055
      %6104 = vmatpush.msra.mxu0 %v6053
      %6105 = vmatmul.f32.gmra.mxu0 %v6061
      %v6106 = vpop.f32.mrf.mxu0
      %v6107 = vadd.f32 0.0, %v6106
      %6108 = vdwg.mxu0
      %v6109 = vadd.f32 %v6025, %v6087
      %v6110 = vadd.f32 %v6045, %v6107
      %s6111 = scalar_lea.vmem %s14, 96
      %v6112 = vld [vmem:[%s6111] sm:$0xff]
      %v6113 = vld [vmem:[%s6111 + $0x8] sm:$0xff]
      %v6114 = vld [vmem:[%s6111 + $0x10] sm:$0xff]
      %v6115 = vld [vmem:[%s6111 + $0x18] sm:$0x11]
      %v6116 = vunpack.c.l.bf16 %v6112
      %v6117 = vunpack.c.h.bf16 %v6112
      %v6118 = vunpack.c.l.bf16 %v6113
      %v6119 = vunpack.c.h.bf16 %v6113
      %v6120 = vunpack.c.l.bf16 %v6114
      %v6121 = vunpack.c.h.bf16 %v6114
      %v6122 = vunpack.c.l.bf16 %v6115
      %v6123 = vunpack.c.h.bf16 %v6115
      %v6125 = vsel %vm4811, %v5859, 0
      %v6128 = vsel %vm4815, %v6122, 0
      %v6131 = vsel %vm4815, %v6123, 0
      %6133 = vmatpush.msra.mxu0 0.0
      %6134 = vmatpush.msra.mxu0 0.0
      %6135 = vmatpush.msra.mxu0 0.0
      %6136 = vmatpush.msra.mxu0 0.0
      %6137 = vmatpush.msra.mxu0 0.0
      %6138 = vmatpush.msra.mxu0 0.0
      %6139 = vmatpush.msra.mxu0 0.0
      %6140 = vmatpush.msra.mxu0 0.0
      %6141 = vmatpush.msra.mxu0 0.0
      %6142 = vmatpush.msra.mxu0 0.0
      %6143 = vmatpush.msra.mxu0 0.0
      %6144 = vmatpush.msra.mxu0 0.0
      %6145 = vmatpush.msra.mxu0 %v6128
      %6146 = vmatpush.msra.mxu0 %v6120
      %6147 = vmatpush.msra.mxu0 %v6118
      %6148 = vmatpush.msra.mxu0 %v6116
      %6149 = vmatmul.f32.gmra.mxu0 %v6125
      %v6150 = vpop.f32.mrf.mxu0
      %v6151 = vadd.f32 0.0, %v6150
      %6152 = vdwg.mxu0
      %6153 = vmatpush.msra.mxu0 0.0
      %6154 = vmatpush.msra.mxu0 0.0
      %6155 = vmatpush.msra.mxu0 0.0
      %6156 = vmatpush.msra.mxu0 0.0
      %6157 = vmatpush.msra.mxu0 0.0
      %6158 = vmatpush.msra.mxu0 0.0
      %6159 = vmatpush.msra.mxu0 0.0
      %6160 = vmatpush.msra.mxu0 0.0
      %6161 = vmatpush.msra.mxu0 0.0
      %6162 = vmatpush.msra.mxu0 0.0
      %6163 = vmatpush.msra.mxu0 0.0
      %6164 = vmatpush.msra.mxu0 0.0
      %6165 = vmatpush.msra.mxu0 %v6131
      %6166 = vmatpush.msra.mxu0 %v6121
      %6167 = vmatpush.msra.mxu0 %v6119
      %6168 = vmatpush.msra.mxu0 %v6117
      %6169 = vmatmul.f32.gmra.mxu0 %v6125
      %v6170 = vpop.f32.mrf.mxu0
      %v6171 = vadd.f32 0.0, %v6170
      %6172 = vdwg.mxu0
      %v6173 = vadd.f32 %v6109, %v6151
      %v6174 = vadd.f32 %v6110, %v6171
      %s6175 = scalar_lea.vmem %s14, 128
      %v6176 = vld [vmem:[%s6175] sm:$0xff]
      %v6177 = vld [vmem:[%s6175 + $0x8] sm:$0xff]
      %v6178 = vld [vmem:[%s6175 + $0x10] sm:$0xff]
      %v6179 = vld [vmem:[%s6175 + $0x18] sm:$0x11]
      %v6180 = vunpack.c.l.bf16 %v6176
      %v6181 = vunpack.c.h.bf16 %v6176
      %v6182 = vunpack.c.l.bf16 %v6177
      %v6183 = vunpack.c.h.bf16 %v6177
      %v6184 = vunpack.c.l.bf16 %v6178
      %v6185 = vunpack.c.h.bf16 %v6178
      %v6186 = vunpack.c.l.bf16 %v6179
      %v6187 = vunpack.c.h.bf16 %v6179
      %v6189 = vsel %vm4811, %v5862, 0
      %v6192 = vsel %vm4815, %v6186, 0
      %v6195 = vsel %vm4815, %v6187, 0
      %6197 = vmatpush.msra.mxu0 0.0
      %6198 = vmatpush.msra.mxu0 0.0
      %6199 = vmatpush.msra.mxu0 0.0
      %6200 = vmatpush.msra.mxu0 0.0
      %6201 = vmatpush.msra.mxu0 0.0
      %6202 = vmatpush.msra.mxu0 0.0
      %6203 = vmatpush.msra.mxu0 0.0
      %6204 = vmatpush.msra.mxu0 0.0
      %6205 = vmatpush.msra.mxu0 0.0
      %6206 = vmatpush.msra.mxu0 0.0
      %6207 = vmatpush.msra.mxu0 0.0
      %6208 = vmatpush.msra.mxu0 0.0
      %6209 = vmatpush.msra.mxu0 %v6192
      %6210 = vmatpush.msra.mxu0 %v6184
      %6211 = vmatpush.msra.mxu0 %v6182
      %6212 = vmatpush.msra.mxu0 %v6180
      %6213 = vmatmul.f32.gmra.mxu0 %v6189
      %v6214 = vpop.f32.mrf.mxu0
      %v6215 = vadd.f32 0.0, %v6214
      %6216 = vdwg.mxu0
      %6217 = vmatpush.msra.mxu0 0.0
      %6218 = vmatpush.msra.mxu0 0.0
      %6219 = vmatpush.msra.mxu0 0.0
      %6220 = vmatpush.msra.mxu0 0.0
      %6221 = vmatpush.msra.mxu0 0.0
      %6222 = vmatpush.msra.mxu0 0.0
      %6223 = vmatpush.msra.mxu0 0.0
      %6224 = vmatpush.msra.mxu0 0.0
      %6225 = vmatpush.msra.mxu0 0.0
      %6226 = vmatpush.msra.mxu0 0.0
      %6227 = vmatpush.msra.mxu0 0.0
      %6228 = vmatpush.msra.mxu0 0.0
      %6229 = vmatpush.msra.mxu0 %v6195
      %6230 = vmatpush.msra.mxu0 %v6185
      %6231 = vmatpush.msra.mxu0 %v6183
      %6232 = vmatpush.msra.mxu0 %v6181
      %6233 = vmatmul.f32.gmra.mxu0 %v6189
      %v6234 = vpop.f32.mrf.mxu0
      %v6235 = vadd.f32 0.0, %v6234
      %6236 = vdwg.mxu0
      %v6237 = vadd.f32 %v6173, %v6215
      %v6238 = vadd.f32 %v6174, %v6235
      %s6239 = scalar_lea.vmem %s14, 160
      %v6240 = vld [vmem:[%s6239] sm:$0xff]
      %v6241 = vld [vmem:[%s6239 + $0x8] sm:$0xff]
      %v6242 = vld [vmem:[%s6239 + $0x10] sm:$0xff]
      %v6243 = vld [vmem:[%s6239 + $0x18] sm:$0x11]
      %v6244 = vunpack.c.l.bf16 %v6240
      %v6245 = vunpack.c.h.bf16 %v6240
      %v6246 = vunpack.c.l.bf16 %v6241
      %v6247 = vunpack.c.h.bf16 %v6241
      %v6248 = vunpack.c.l.bf16 %v6242
      %v6249 = vunpack.c.h.bf16 %v6242
      %v6250 = vunpack.c.l.bf16 %v6243
      %v6251 = vunpack.c.h.bf16 %v6243
      %v6253 = vsel %vm4811, %v5865, 0
      %v6256 = vsel %vm4815, %v6250, 0
      %v6259 = vsel %vm4815, %v6251, 0
      %6261 = vmatpush.msra.mxu0 0.0
      %6262 = vmatpush.msra.mxu0 0.0
      %6263 = vmatpush.msra.mxu0 0.0
      %6264 = vmatpush.msra.mxu0 0.0
      %6265 = vmatpush.msra.mxu0 0.0
      %6266 = vmatpush.msra.mxu0 0.0
      %6267 = vmatpush.msra.mxu0 0.0
      %6268 = vmatpush.msra.mxu0 0.0
      %6269 = vmatpush.msra.mxu0 0.0
      %6270 = vmatpush.msra.mxu0 0.0
      %6271 = vmatpush.msra.mxu0 0.0
      %6272 = vmatpush.msra.mxu0 0.0
      %6273 = vmatpush.msra.mxu0 %v6256
      %6274 = vmatpush.msra.mxu0 %v6248
      %6275 = vmatpush.msra.mxu0 %v6246
      %6276 = vmatpush.msra.mxu0 %v6244
      %6277 = vmatmul.f32.gmra.mxu0 %v6253
      %v6278 = vpop.f32.mrf.mxu0
      %v6279 = vadd.f32 0.0, %v6278
      %6280 = vdwg.mxu0
      %6281 = vmatpush.msra.mxu0 0.0
      %6282 = vmatpush.msra.mxu0 0.0
      %6283 = vmatpush.msra.mxu0 0.0
      %6284 = vmatpush.msra.mxu0 0.0
      %6285 = vmatpush.msra.mxu0 0.0
      %6286 = vmatpush.msra.mxu0 0.0
      %6287 = vmatpush.msra.mxu0 0.0
      %6288 = vmatpush.msra.mxu0 0.0
      %6289 = vmatpush.msra.mxu0 0.0
      %6290 = vmatpush.msra.mxu0 0.0
      %6291 = vmatpush.msra.mxu0 0.0
      %6292 = vmatpush.msra.mxu0 0.0
      %6293 = vmatpush.msra.mxu0 %v6259
      %6294 = vmatpush.msra.mxu0 %v6249
      %6295 = vmatpush.msra.mxu0 %v6247
      %6296 = vmatpush.msra.mxu0 %v6245
      %6297 = vmatmul.f32.gmra.mxu0 %v6253
      %v6298 = vpop.f32.mrf.mxu0
      %v6299 = vadd.f32 0.0, %v6298
      %6300 = vdwg.mxu0
      %v6301 = vadd.f32 %v6237, %v6279
      %v6302 = vadd.f32 %v6238, %v6299
      %s6303 = scalar_lea.vmem %s14, 192
      %v6304 = vld [vmem:[%s6303] sm:$0xff]
      %v6305 = vld [vmem:[%s6303 + $0x8] sm:$0xff]
      %v6306 = vld [vmem:[%s6303 + $0x10] sm:$0xff]
      %v6307 = vld [vmem:[%s6303 + $0x18] sm:$0x11]
      %v6308 = vunpack.c.l.bf16 %v6304
      %v6309 = vunpack.c.h.bf16 %v6304
      %v6310 = vunpack.c.l.bf16 %v6305
      %v6311 = vunpack.c.h.bf16 %v6305
      %v6312 = vunpack.c.l.bf16 %v6306
      %v6313 = vunpack.c.h.bf16 %v6306
      %v6314 = vunpack.c.l.bf16 %v6307
      %v6315 = vunpack.c.h.bf16 %v6307
      %v6317 = vsel %vm4811, %v5868, 0
      %v6320 = vsel %vm4815, %v6314, 0
      %v6323 = vsel %vm4815, %v6315, 0
      %6325 = vmatpush.msra.mxu0 0.0
      %6326 = vmatpush.msra.mxu0 0.0
      %6327 = vmatpush.msra.mxu0 0.0
      %6328 = vmatpush.msra.mxu0 0.0
      %6329 = vmatpush.msra.mxu0 0.0
      %6330 = vmatpush.msra.mxu0 0.0
      %6331 = vmatpush.msra.mxu0 0.0
      %6332 = vmatpush.msra.mxu0 0.0
      %6333 = vmatpush.msra.mxu0 0.0
      %6334 = vmatpush.msra.mxu0 0.0
      %6335 = vmatpush.msra.mxu0 0.0
      %6336 = vmatpush.msra.mxu0 0.0
      %6337 = vmatpush.msra.mxu0 %v6320
      %6338 = vmatpush.msra.mxu0 %v6312
      %6339 = vmatpush.msra.mxu0 %v6310
      %6340 = vmatpush.msra.mxu0 %v6308
      %6341 = vmatmul.f32.gmra.mxu0 %v6317
      %v6342 = vpop.f32.mrf.mxu0
      %v6343 = vadd.f32 0.0, %v6342
      %6344 = vdwg.mxu0
      %6345 = vmatpush.msra.mxu0 0.0
      %6346 = vmatpush.msra.mxu0 0.0
      %6347 = vmatpush.msra.mxu0 0.0
      %6348 = vmatpush.msra.mxu0 0.0
      %6349 = vmatpush.msra.mxu0 0.0
      %6350 = vmatpush.msra.mxu0 0.0
      %6351 = vmatpush.msra.mxu0 0.0
      %6352 = vmatpush.msra.mxu0 0.0
      %6353 = vmatpush.msra.mxu0 0.0
      %6354 = vmatpush.msra.mxu0 0.0
      %6355 = vmatpush.msra.mxu0 0.0
      %6356 = vmatpush.msra.mxu0 0.0
      %6357 = vmatpush.msra.mxu0 %v6323
      %6358 = vmatpush.msra.mxu0 %v6313
      %6359 = vmatpush.msra.mxu0 %v6311
      %6360 = vmatpush.msra.mxu0 %v6309
      %6361 = vmatmul.f32.gmra.mxu0 %v6317
      %v6362 = vpop.f32.mrf.mxu0
      %v6363 = vadd.f32 0.0, %v6362
      %6364 = vdwg.mxu0
      %v6365 = vadd.f32 %v6301, %v6343
      %v6366 = vadd.f32 %v6302, %v6363
      %s6367 = scalar_lea.vmem %s14, 224
      %v6368 = vld [vmem:[%s6367] sm:$0xff]
      %v6369 = vld [vmem:[%s6367 + $0x8] sm:$0xff]
      %v6370 = vld [vmem:[%s6367 + $0x10] sm:$0xff]
      %v6371 = vld [vmem:[%s6367 + $0x18] sm:$0x11]
      %v6372 = vunpack.c.l.bf16 %v6368
      %v6373 = vunpack.c.h.bf16 %v6368
      %v6374 = vunpack.c.l.bf16 %v6369
      %v6375 = vunpack.c.h.bf16 %v6369
      %v6376 = vunpack.c.l.bf16 %v6370
      %v6377 = vunpack.c.h.bf16 %v6370
      %v6378 = vunpack.c.l.bf16 %v6371
      %v6379 = vunpack.c.h.bf16 %v6371
      %v6381 = vsel %vm4811, %v5871, 0
      %v6384 = vsel %vm4815, %v6378, 0
      %v6387 = vsel %vm4815, %v6379, 0
      %6389 = vmatpush.msra.mxu0 0.0
      %6390 = vmatpush.msra.mxu0 0.0
      %6391 = vmatpush.msra.mxu0 0.0
      %6392 = vmatpush.msra.mxu0 0.0
      %6393 = vmatpush.msra.mxu0 0.0
      %6394 = vmatpush.msra.mxu0 0.0
      %6395 = vmatpush.msra.mxu0 0.0
      %6396 = vmatpush.msra.mxu0 0.0
      %6397 = vmatpush.msra.mxu0 0.0
      %6398 = vmatpush.msra.mxu0 0.0
      %6399 = vmatpush.msra.mxu0 0.0
      %6400 = vmatpush.msra.mxu0 0.0
      %6401 = vmatpush.msra.mxu0 %v6384
      %6402 = vmatpush.msra.mxu0 %v6376
      %6403 = vmatpush.msra.mxu0 %v6374
      %6404 = vmatpush.msra.mxu0 %v6372
      %6405 = vmatmul.f32.gmra.mxu0 %v6381
      %v6406 = vpop.f32.mrf.mxu0
      %v6407 = vadd.f32 0.0, %v6406
      %6408 = vdwg.mxu0
      %6409 = vmatpush.msra.mxu0 0.0
      %6410 = vmatpush.msra.mxu0 0.0
      %6411 = vmatpush.msra.mxu0 0.0
      %6412 = vmatpush.msra.mxu0 0.0
      %6413 = vmatpush.msra.mxu0 0.0
      %6414 = vmatpush.msra.mxu0 0.0
      %6415 = vmatpush.msra.mxu0 0.0
      %6416 = vmatpush.msra.mxu0 0.0
      %6417 = vmatpush.msra.mxu0 0.0
      %6418 = vmatpush.msra.mxu0 0.0
      %6419 = vmatpush.msra.mxu0 0.0
      %6420 = vmatpush.msra.mxu0 0.0
      %6421 = vmatpush.msra.mxu0 %v6387
      %6422 = vmatpush.msra.mxu0 %v6377
      %6423 = vmatpush.msra.mxu0 %v6375
      %6424 = vmatpush.msra.mxu0 %v6373
      %6425 = vmatmul.f32.gmra.mxu0 %v6381
      %v6426 = vpop.f32.mrf.mxu0
      %v6427 = vadd.f32 0.0, %v6426
      %6428 = vdwg.mxu0
      %v6429 = vadd.f32 %v6365, %v6407
      %v6430 = vadd.f32 %v6366, %v6427
      %s6431 = scalar_lea.vmem %s14, 256
      %v6432 = vld [vmem:[%s6431] sm:$0xff]
      %v6433 = vld [vmem:[%s6431 + $0x8] sm:$0xff]
      %v6434 = vld [vmem:[%s6431 + $0x10] sm:$0xff]
      %v6435 = vld [vmem:[%s6431 + $0x18] sm:$0x11]
      %v6436 = vunpack.c.l.bf16 %v6432
      %v6437 = vunpack.c.h.bf16 %v6432
      %v6438 = vunpack.c.l.bf16 %v6433
      %v6439 = vunpack.c.h.bf16 %v6433
      %v6440 = vunpack.c.l.bf16 %v6434
      %v6441 = vunpack.c.h.bf16 %v6434
      %v6442 = vunpack.c.l.bf16 %v6435
      %v6443 = vunpack.c.h.bf16 %v6435
      %v6445 = vsel %vm4811, %v5874, 0
      %v6448 = vsel %vm4815, %v6442, 0
      %v6451 = vsel %vm4815, %v6443, 0
      %6453 = vmatpush.msra.mxu0 0.0
      %6454 = vmatpush.msra.mxu0 0.0
      %6455 = vmatpush.msra.mxu0 0.0
      %6456 = vmatpush.msra.mxu0 0.0
      %6457 = vmatpush.msra.mxu0 0.0
      %6458 = vmatpush.msra.mxu0 0.0
      %6459 = vmatpush.msra.mxu0 0.0
      %6460 = vmatpush.msra.mxu0 0.0
      %6461 = vmatpush.msra.mxu0 0.0
      %6462 = vmatpush.msra.mxu0 0.0
      %6463 = vmatpush.msra.mxu0 0.0
      %6464 = vmatpush.msra.mxu0 0.0
      %6465 = vmatpush.msra.mxu0 %v6448
      %6466 = vmatpush.msra.mxu0 %v6440
      %6467 = vmatpush.msra.mxu0 %v6438
      %6468 = vmatpush.msra.mxu0 %v6436
      %6469 = vmatmul.f32.gmra.mxu0 %v6445
      %v6470 = vpop.f32.mrf.mxu0
      %v6471 = vadd.f32 0.0, %v6470
      %6472 = vdwg.mxu0
      %6473 = vmatpush.msra.mxu0 0.0
      %6474 = vmatpush.msra.mxu0 0.0
      %6475 = vmatpush.msra.mxu0 0.0
      %6476 = vmatpush.msra.mxu0 0.0
      %6477 = vmatpush.msra.mxu0 0.0
      %6478 = vmatpush.msra.mxu0 0.0
      %6479 = vmatpush.msra.mxu0 0.0
      %6480 = vmatpush.msra.mxu0 0.0
      %6481 = vmatpush.msra.mxu0 0.0
      %6482 = vmatpush.msra.mxu0 0.0
      %6483 = vmatpush.msra.mxu0 0.0
      %6484 = vmatpush.msra.mxu0 0.0
      %6485 = vmatpush.msra.mxu0 %v6451
      %6486 = vmatpush.msra.mxu0 %v6441
      %6487 = vmatpush.msra.mxu0 %v6439
      %6488 = vmatpush.msra.mxu0 %v6437
      %6489 = vmatmul.f32.gmra.mxu0 %v6445
      %v6490 = vpop.f32.mrf.mxu0
      %v6491 = vadd.f32 0.0, %v6490
      %6492 = vdwg.mxu0
      %v6493 = vadd.f32 %v6429, %v6471
      %v6494 = vadd.f32 %v6430, %v6491
      %s6495 = scalar_lea.vmem %s14, 288
      %v6496 = vld [vmem:[%s6495] sm:$0xff]
      %v6497 = vld [vmem:[%s6495 + $0x8] sm:$0xff]
      %v6498 = vld [vmem:[%s6495 + $0x10] sm:$0xff]
      %v6499 = vld [vmem:[%s6495 + $0x18] sm:$0x11]
      %v6500 = vunpack.c.l.bf16 %v6496
      %v6501 = vunpack.c.h.bf16 %v6496
      %v6502 = vunpack.c.l.bf16 %v6497
      %v6503 = vunpack.c.h.bf16 %v6497
      %v6504 = vunpack.c.l.bf16 %v6498
      %v6505 = vunpack.c.h.bf16 %v6498
      %v6506 = vunpack.c.l.bf16 %v6499
      %v6507 = vunpack.c.h.bf16 %v6499
      %v6509 = vsel %vm4811, %v5877, 0
      %v6512 = vsel %vm4815, %v6506, 0
      %v6515 = vsel %vm4815, %v6507, 0
      %6517 = vmatpush.msra.mxu0 0.0
      %6518 = vmatpush.msra.mxu0 0.0
      %6519 = vmatpush.msra.mxu0 0.0
      %6520 = vmatpush.msra.mxu0 0.0
      %6521 = vmatpush.msra.mxu0 0.0
      %6522 = vmatpush.msra.mxu0 0.0
      %6523 = vmatpush.msra.mxu0 0.0
      %6524 = vmatpush.msra.mxu0 0.0
      %6525 = vmatpush.msra.mxu0 0.0
      %6526 = vmatpush.msra.mxu0 0.0
      %6527 = vmatpush.msra.mxu0 0.0
      %6528 = vmatpush.msra.mxu0 0.0
      %6529 = vmatpush.msra.mxu0 %v6512
      %6530 = vmatpush.msra.mxu0 %v6504
      %6531 = vmatpush.msra.mxu0 %v6502
      %6532 = vmatpush.msra.mxu0 %v6500
      %6533 = vmatmul.f32.gmra.mxu0 %v6509
      %v6534 = vpop.f32.mrf.mxu0
      %v6535 = vadd.f32 0.0, %v6534
      %6536 = vdwg.mxu0
      %6537 = vmatpush.msra.mxu0 0.0
      %6538 = vmatpush.msra.mxu0 0.0
      %6539 = vmatpush.msra.mxu0 0.0
      %6540 = vmatpush.msra.mxu0 0.0
      %6541 = vmatpush.msra.mxu0 0.0
      %6542 = vmatpush.msra.mxu0 0.0
      %6543 = vmatpush.msra.mxu0 0.0
      %6544 = vmatpush.msra.mxu0 0.0
      %6545 = vmatpush.msra.mxu0 0.0
      %6546 = vmatpush.msra.mxu0 0.0
      %6547 = vmatpush.msra.mxu0 0.0
      %6548 = vmatpush.msra.mxu0 0.0
      %6549 = vmatpush.msra.mxu0 %v6515
      %6550 = vmatpush.msra.mxu0 %v6505
      %6551 = vmatpush.msra.mxu0 %v6503
      %6552 = vmatpush.msra.mxu0 %v6501
      %6553 = vmatmul.f32.gmra.mxu0 %v6509
      %v6554 = vpop.f32.mrf.mxu0
      %v6555 = vadd.f32 0.0, %v6554
      %6556 = vdwg.mxu0
      %v6557 = vadd.f32 %v6493, %v6535
      %v6558 = vadd.f32 %v6494, %v6555
      %s6559 = scalar_lea.vmem %s14, 320
      %v6560 = vld [vmem:[%s6559] sm:$0xff]
      %v6561 = vld [vmem:[%s6559 + $0x8] sm:$0xff]
      %v6562 = vld [vmem:[%s6559 + $0x10] sm:$0xff]
      %v6563 = vld [vmem:[%s6559 + $0x18] sm:$0x11]
      %v6564 = vunpack.c.l.bf16 %v6560
      %v6565 = vunpack.c.h.bf16 %v6560
      %v6566 = vunpack.c.l.bf16 %v6561
      %v6567 = vunpack.c.h.bf16 %v6561
      %v6568 = vunpack.c.l.bf16 %v6562
      %v6569 = vunpack.c.h.bf16 %v6562
      %v6570 = vunpack.c.l.bf16 %v6563
      %v6571 = vunpack.c.h.bf16 %v6563
      %v6573 = vsel %vm4811, %v5880, 0
      %v6576 = vsel %vm4815, %v6570, 0
      %v6579 = vsel %vm4815, %v6571, 0
      %6581 = vmatpush.msra.mxu0 0.0
      %6582 = vmatpush.msra.mxu0 0.0
      %6583 = vmatpush.msra.mxu0 0.0
      %6584 = vmatpush.msra.mxu0 0.0
      %6585 = vmatpush.msra.mxu0 0.0
      %6586 = vmatpush.msra.mxu0 0.0
      %6587 = vmatpush.msra.mxu0 0.0
      %6588 = vmatpush.msra.mxu0 0.0
      %6589 = vmatpush.msra.mxu0 0.0
      %6590 = vmatpush.msra.mxu0 0.0
      %6591 = vmatpush.msra.mxu0 0.0
      %6592 = vmatpush.msra.mxu0 0.0
      %6593 = vmatpush.msra.mxu0 %v6576
      %6594 = vmatpush.msra.mxu0 %v6568
      %6595 = vmatpush.msra.mxu0 %v6566
      %6596 = vmatpush.msra.mxu0 %v6564
      %6597 = vmatmul.f32.gmra.mxu0 %v6573
      %v6598 = vpop.f32.mrf.mxu0
      %v6599 = vadd.f32 0.0, %v6598
      %6600 = vdwg.mxu0
      %6601 = vmatpush.msra.mxu0 0.0
      %6602 = vmatpush.msra.mxu0 0.0
      %6603 = vmatpush.msra.mxu0 0.0
      %6604 = vmatpush.msra.mxu0 0.0
      %6605 = vmatpush.msra.mxu0 0.0
      %6606 = vmatpush.msra.mxu0 0.0
      %6607 = vmatpush.msra.mxu0 0.0
      %6608 = vmatpush.msra.mxu0 0.0
      %6609 = vmatpush.msra.mxu0 0.0
      %6610 = vmatpush.msra.mxu0 0.0
      %6611 = vmatpush.msra.mxu0 0.0
      %6612 = vmatpush.msra.mxu0 0.0
      %6613 = vmatpush.msra.mxu0 %v6579
      %6614 = vmatpush.msra.mxu0 %v6569
      %6615 = vmatpush.msra.mxu0 %v6567
      %6616 = vmatpush.msra.mxu0 %v6565
      %6617 = vmatmul.f32.gmra.mxu0 %v6573
      %v6618 = vpop.f32.mrf.mxu0
      %v6619 = vadd.f32 0.0, %v6618
      %6620 = vdwg.mxu0
      %v6621 = vadd.f32 %v6557, %v6599
      %v6622 = vadd.f32 %v6558, %v6619
      %s6623 = scalar_lea.vmem %s14, 352
      %v6624 = vld [vmem:[%s6623] sm:$0xff]
      %v6625 = vld [vmem:[%s6623 + $0x8] sm:$0xff]
      %v6626 = vld [vmem:[%s6623 + $0x10] sm:$0xff]
      %v6627 = vld [vmem:[%s6623 + $0x18] sm:$0x11]
      %v6628 = vunpack.c.l.bf16 %v6624
      %v6629 = vunpack.c.h.bf16 %v6624
      %v6630 = vunpack.c.l.bf16 %v6625
      %v6631 = vunpack.c.h.bf16 %v6625
      %v6632 = vunpack.c.l.bf16 %v6626
      %v6633 = vunpack.c.h.bf16 %v6626
      %v6634 = vunpack.c.l.bf16 %v6627
      %v6635 = vunpack.c.h.bf16 %v6627
      %v6637 = vsel %vm4811, %v5883, 0
      %v6640 = vsel %vm4815, %v6634, 0
      %v6643 = vsel %vm4815, %v6635, 0
      %6645 = vmatpush.msra.mxu0 0.0
      %6646 = vmatpush.msra.mxu0 0.0
      %6647 = vmatpush.msra.mxu0 0.0
      %6648 = vmatpush.msra.mxu0 0.0
      %6649 = vmatpush.msra.mxu0 0.0
      %6650 = vmatpush.msra.mxu0 0.0
      %6651 = vmatpush.msra.mxu0 0.0
      %6652 = vmatpush.msra.mxu0 0.0
      %6653 = vmatpush.msra.mxu0 0.0
      %6654 = vmatpush.msra.mxu0 0.0
      %6655 = vmatpush.msra.mxu0 0.0
      %6656 = vmatpush.msra.mxu0 0.0
      %6657 = vmatpush.msra.mxu0 %v6640
      %6658 = vmatpush.msra.mxu0 %v6632
      %6659 = vmatpush.msra.mxu0 %v6630
      %6660 = vmatpush.msra.mxu0 %v6628
      %6661 = vmatmul.f32.gmra.mxu0 %v6637
      %v6662 = vpop.f32.mrf.mxu0
      %v6663 = vadd.f32 0.0, %v6662
      %6664 = vdwg.mxu0
      %6665 = vmatpush.msra.mxu0 0.0
      %6666 = vmatpush.msra.mxu0 0.0
      %6667 = vmatpush.msra.mxu0 0.0
      %6668 = vmatpush.msra.mxu0 0.0
      %6669 = vmatpush.msra.mxu0 0.0
      %6670 = vmatpush.msra.mxu0 0.0
      %6671 = vmatpush.msra.mxu0 0.0
      %6672 = vmatpush.msra.mxu0 0.0
      %6673 = vmatpush.msra.mxu0 0.0
      %6674 = vmatpush.msra.mxu0 0.0
      %6675 = vmatpush.msra.mxu0 0.0
      %6676 = vmatpush.msra.mxu0 0.0
      %6677 = vmatpush.msra.mxu0 %v6643
      %6678 = vmatpush.msra.mxu0 %v6633
      %6679 = vmatpush.msra.mxu0 %v6631
      %6680 = vmatpush.msra.mxu0 %v6629
      %6681 = vmatmul.f32.gmra.mxu0 %v6637
      %v6682 = vpop.f32.mrf.mxu0
      %v6683 = vadd.f32 0.0, %v6682
      %6684 = vdwg.mxu0
      %v6685 = vadd.f32 %v6621, %v6663
      %v6686 = vadd.f32 %v6622, %v6683
      %s6687 = scalar_lea.vmem %s14, 384
      %v6688 = vld [vmem:[%s6687] sm:$0xff]
      %v6689 = vld [vmem:[%s6687 + $0x8] sm:$0xff]
      %v6690 = vld [vmem:[%s6687 + $0x10] sm:$0xff]
      %v6691 = vld [vmem:[%s6687 + $0x18] sm:$0x11]
      %v6692 = vunpack.c.l.bf16 %v6688
      %v6693 = vunpack.c.h.bf16 %v6688
      %v6694 = vunpack.c.l.bf16 %v6689
      %v6695 = vunpack.c.h.bf16 %v6689
      %v6696 = vunpack.c.l.bf16 %v6690
      %v6697 = vunpack.c.h.bf16 %v6690
      %v6698 = vunpack.c.l.bf16 %v6691
      %v6699 = vunpack.c.h.bf16 %v6691
      %v6701 = vsel %vm4811, %v5886, 0
      %v6704 = vsel %vm4815, %v6698, 0
      %v6707 = vsel %vm4815, %v6699, 0
      %6709 = vmatpush.msra.mxu0 0.0
      %6710 = vmatpush.msra.mxu0 0.0
      %6711 = vmatpush.msra.mxu0 0.0
      %6712 = vmatpush.msra.mxu0 0.0
      %6713 = vmatpush.msra.mxu0 0.0
      %6714 = vmatpush.msra.mxu0 0.0
      %6715 = vmatpush.msra.mxu0 0.0
      %6716 = vmatpush.msra.mxu0 0.0
      %6717 = vmatpush.msra.mxu0 0.0
      %6718 = vmatpush.msra.mxu0 0.0
      %6719 = vmatpush.msra.mxu0 0.0
      %6720 = vmatpush.msra.mxu0 0.0
      %6721 = vmatpush.msra.mxu0 %v6704
      %6722 = vmatpush.msra.mxu0 %v6696
      %6723 = vmatpush.msra.mxu0 %v6694
      %6724 = vmatpush.msra.mxu0 %v6692
      %6725 = vmatmul.f32.gmra.mxu0 %v6701
      %v6726 = vpop.f32.mrf.mxu0
      %v6727 = vadd.f32 0.0, %v6726
      %6728 = vdwg.mxu0
      %6729 = vmatpush.msra.mxu0 0.0
      %6730 = vmatpush.msra.mxu0 0.0
      %6731 = vmatpush.msra.mxu0 0.0
      %6732 = vmatpush.msra.mxu0 0.0
      %6733 = vmatpush.msra.mxu0 0.0
      %6734 = vmatpush.msra.mxu0 0.0
      %6735 = vmatpush.msra.mxu0 0.0
      %6736 = vmatpush.msra.mxu0 0.0
      %6737 = vmatpush.msra.mxu0 0.0
      %6738 = vmatpush.msra.mxu0 0.0
      %6739 = vmatpush.msra.mxu0 0.0
      %6740 = vmatpush.msra.mxu0 0.0
      %6741 = vmatpush.msra.mxu0 %v6707
      %6742 = vmatpush.msra.mxu0 %v6697
      %6743 = vmatpush.msra.mxu0 %v6695
      %6744 = vmatpush.msra.mxu0 %v6693
      %6745 = vmatmul.f32.gmra.mxu0 %v6701
      %v6746 = vpop.f32.mrf.mxu0
      %v6747 = vadd.f32 0.0, %v6746
      %6748 = vdwg.mxu0
      %v6749 = vadd.f32 %v6685, %v6727
      %v6750 = vadd.f32 %v6686, %v6747
      %s6751 = scalar_lea.vmem %s14, 416
      %v6752 = vld [vmem:[%s6751] sm:$0xff]
      %v6753 = vld [vmem:[%s6751 + $0x8] sm:$0xff]
      %v6754 = vld [vmem:[%s6751 + $0x10] sm:$0xff]
      %v6755 = vld [vmem:[%s6751 + $0x18] sm:$0x11]
      %v6756 = vunpack.c.l.bf16 %v6752
      %v6757 = vunpack.c.h.bf16 %v6752
      %v6758 = vunpack.c.l.bf16 %v6753
      %v6759 = vunpack.c.h.bf16 %v6753
      %v6760 = vunpack.c.l.bf16 %v6754
      %v6761 = vunpack.c.h.bf16 %v6754
      %v6762 = vunpack.c.l.bf16 %v6755
      %v6763 = vunpack.c.h.bf16 %v6755
      %v6765 = vsel %vm4811, %v5889, 0
      %v6768 = vsel %vm4815, %v6762, 0
      %v6771 = vsel %vm4815, %v6763, 0
      %6773 = vmatpush.msra.mxu0 0.0
      %6774 = vmatpush.msra.mxu0 0.0
      %6775 = vmatpush.msra.mxu0 0.0
      %6776 = vmatpush.msra.mxu0 0.0
      %6777 = vmatpush.msra.mxu0 0.0
      %6778 = vmatpush.msra.mxu0 0.0
      %6779 = vmatpush.msra.mxu0 0.0
      %6780 = vmatpush.msra.mxu0 0.0
      %6781 = vmatpush.msra.mxu0 0.0
      %6782 = vmatpush.msra.mxu0 0.0
      %6783 = vmatpush.msra.mxu0 0.0
      %6784 = vmatpush.msra.mxu0 0.0
      %6785 = vmatpush.msra.mxu0 %v6768
      %6786 = vmatpush.msra.mxu0 %v6760
      %6787 = vmatpush.msra.mxu0 %v6758
      %6788 = vmatpush.msra.mxu0 %v6756
      %6789 = vmatmul.f32.gmra.mxu0 %v6765
      %v6790 = vpop.f32.mrf.mxu0
      %v6791 = vadd.f32 0.0, %v6790
      %6792 = vdwg.mxu0
      %6793 = vmatpush.msra.mxu0 0.0
      %6794 = vmatpush.msra.mxu0 0.0
      %6795 = vmatpush.msra.mxu0 0.0
      %6796 = vmatpush.msra.mxu0 0.0
      %6797 = vmatpush.msra.mxu0 0.0
      %6798 = vmatpush.msra.mxu0 0.0
      %6799 = vmatpush.msra.mxu0 0.0
      %6800 = vmatpush.msra.mxu0 0.0
      %6801 = vmatpush.msra.mxu0 0.0
      %6802 = vmatpush.msra.mxu0 0.0
      %6803 = vmatpush.msra.mxu0 0.0
      %6804 = vmatpush.msra.mxu0 0.0
      %6805 = vmatpush.msra.mxu0 %v6771
      %6806 = vmatpush.msra.mxu0 %v6761
      %6807 = vmatpush.msra.mxu0 %v6759
      %6808 = vmatpush.msra.mxu0 %v6757
      %6809 = vmatmul.f32.gmra.mxu0 %v6765
      %v6810 = vpop.f32.mrf.mxu0
      %v6811 = vadd.f32 0.0, %v6810
      %6812 = vdwg.mxu0
      %v6813 = vadd.f32 %v6749, %v6791
      %v6814 = vadd.f32 %v6750, %v6811
      %s6815 = scalar_lea.vmem %s14, 448
      %v6816 = vld [vmem:[%s6815] sm:$0xff]
      %v6817 = vld [vmem:[%s6815 + $0x8] sm:$0xff]
      %v6818 = vld [vmem:[%s6815 + $0x10] sm:$0xff]
      %v6819 = vld [vmem:[%s6815 + $0x18] sm:$0x11]
      %v6820 = vunpack.c.l.bf16 %v6816
      %v6821 = vunpack.c.h.bf16 %v6816
      %v6822 = vunpack.c.l.bf16 %v6817
      %v6823 = vunpack.c.h.bf16 %v6817
      %v6824 = vunpack.c.l.bf16 %v6818
      %v6825 = vunpack.c.h.bf16 %v6818
      %v6826 = vunpack.c.l.bf16 %v6819
      %v6827 = vunpack.c.h.bf16 %v6819
      %v6829 = vsel %vm4811, %v5892, 0
      %v6832 = vsel %vm4815, %v6826, 0
      %v6835 = vsel %vm4815, %v6827, 0
      %6837 = vmatpush.msra.mxu0 0.0
      %6838 = vmatpush.msra.mxu0 0.0
      %6839 = vmatpush.msra.mxu0 0.0
      %6840 = vmatpush.msra.mxu0 0.0
      %6841 = vmatpush.msra.mxu0 0.0
      %6842 = vmatpush.msra.mxu0 0.0
      %6843 = vmatpush.msra.mxu0 0.0
      %6844 = vmatpush.msra.mxu0 0.0
      %6845 = vmatpush.msra.mxu0 0.0
      %6846 = vmatpush.msra.mxu0 0.0
      %6847 = vmatpush.msra.mxu0 0.0
      %6848 = vmatpush.msra.mxu0 0.0
      %6849 = vmatpush.msra.mxu0 %v6832
      %6850 = vmatpush.msra.mxu0 %v6824
      %6851 = vmatpush.msra.mxu0 %v6822
      %6852 = vmatpush.msra.mxu0 %v6820
      %6853 = vmatmul.f32.gmra.mxu0 %v6829
      %v6854 = vpop.f32.mrf.mxu0
      %v6855 = vadd.f32 0.0, %v6854
      %6856 = vdwg.mxu0
      %6857 = vmatpush.msra.mxu0 0.0
      %6858 = vmatpush.msra.mxu0 0.0
      %6859 = vmatpush.msra.mxu0 0.0
      %6860 = vmatpush.msra.mxu0 0.0
      %6861 = vmatpush.msra.mxu0 0.0
      %6862 = vmatpush.msra.mxu0 0.0
      %6863 = vmatpush.msra.mxu0 0.0
      %6864 = vmatpush.msra.mxu0 0.0
      %6865 = vmatpush.msra.mxu0 0.0
      %6866 = vmatpush.msra.mxu0 0.0
      %6867 = vmatpush.msra.mxu0 0.0
      %6868 = vmatpush.msra.mxu0 0.0
      %6869 = vmatpush.msra.mxu0 %v6835
      %6870 = vmatpush.msra.mxu0 %v6825
      %6871 = vmatpush.msra.mxu0 %v6823
      %6872 = vmatpush.msra.mxu0 %v6821
      %6873 = vmatmul.f32.gmra.mxu0 %v6829
      %v6874 = vpop.f32.mrf.mxu0
      %v6875 = vadd.f32 0.0, %v6874
      %6876 = vdwg.mxu0
      %v6877 = vadd.f32 %v6813, %v6855
      %v6878 = vadd.f32 %v6814, %v6875
      %s6879 = scalar_lea.vmem %s14, 480
      %v6880 = vld [vmem:[%s6879] sm:$0xff]
      %v6881 = vld [vmem:[%s6879 + $0x8] sm:$0xff]
      %v6882 = vld [vmem:[%s6879 + $0x10] sm:$0xff]
      %v6883 = vld [vmem:[%s6879 + $0x18] sm:$0x11]
      %v6884 = vunpack.c.l.bf16 %v6880
      %v6885 = vunpack.c.h.bf16 %v6880
      %v6886 = vunpack.c.l.bf16 %v6881
      %v6887 = vunpack.c.h.bf16 %v6881
      %v6888 = vunpack.c.l.bf16 %v6882
      %v6889 = vunpack.c.h.bf16 %v6882
      %v6890 = vunpack.c.l.bf16 %v6883
      %v6891 = vunpack.c.h.bf16 %v6883
      %v6893 = vsel %vm4811, %v5895, 0
      %v6896 = vsel %vm4815, %v6890, 0
      %v6899 = vsel %vm4815, %v6891, 0
      %6901 = vmatpush.msra.mxu0 0.0
      %6902 = vmatpush.msra.mxu0 0.0
      %6903 = vmatpush.msra.mxu0 0.0
      %6904 = vmatpush.msra.mxu0 0.0
      %6905 = vmatpush.msra.mxu0 0.0
      %6906 = vmatpush.msra.mxu0 0.0
      %6907 = vmatpush.msra.mxu0 0.0
      %6908 = vmatpush.msra.mxu0 0.0
      %6909 = vmatpush.msra.mxu0 0.0
      %6910 = vmatpush.msra.mxu0 0.0
      %6911 = vmatpush.msra.mxu0 0.0
      %6912 = vmatpush.msra.mxu0 0.0
      %6913 = vmatpush.msra.mxu0 %v6896
      %6914 = vmatpush.msra.mxu0 %v6888
      %6915 = vmatpush.msra.mxu0 %v6886
      %6916 = vmatpush.msra.mxu0 %v6884
      %6917 = vmatmul.f32.gmra.mxu0 %v6893
      %v6918 = vpop.f32.mrf.mxu0
      %v6919 = vadd.f32 0.0, %v6918
      %6920 = vdwg.mxu0
      %6921 = vmatpush.msra.mxu0 0.0
      %6922 = vmatpush.msra.mxu0 0.0
      %6923 = vmatpush.msra.mxu0 0.0
      %6924 = vmatpush.msra.mxu0 0.0
      %6925 = vmatpush.msra.mxu0 0.0
      %6926 = vmatpush.msra.mxu0 0.0
      %6927 = vmatpush.msra.mxu0 0.0
      %6928 = vmatpush.msra.mxu0 0.0
      %6929 = vmatpush.msra.mxu0 0.0
      %6930 = vmatpush.msra.mxu0 0.0
      %6931 = vmatpush.msra.mxu0 0.0
      %6932 = vmatpush.msra.mxu0 0.0
      %6933 = vmatpush.msra.mxu0 %v6899
      %6934 = vmatpush.msra.mxu0 %v6889
      %6935 = vmatpush.msra.mxu0 %v6887
      %6936 = vmatpush.msra.mxu0 %v6885
      %6937 = vmatmul.f32.gmra.mxu0 %v6893
      %v6938 = vpop.f32.mrf.mxu0
      %v6939 = vadd.f32 0.0, %v6938
      %6940 = vdwg.mxu0
      %v6941 = vadd.f32 %v6877, %v6919
      %v6942 = vadd.f32 %v6878, %v6939
      %s6943 = scalar_lea.vmem %s14, 512
      %v6944 = vld [vmem:[%s6943] sm:$0xff]
      %v6945 = vld [vmem:[%s6943 + $0x8] sm:$0xff]
      %v6946 = vld [vmem:[%s6943 + $0x10] sm:$0xff]
      %v6947 = vld [vmem:[%s6943 + $0x18] sm:$0x11]
      %v6948 = vunpack.c.l.bf16 %v6944
      %v6949 = vunpack.c.h.bf16 %v6944
      %v6950 = vunpack.c.l.bf16 %v6945
      %v6951 = vunpack.c.h.bf16 %v6945
      %v6952 = vunpack.c.l.bf16 %v6946
      %v6953 = vunpack.c.h.bf16 %v6946
      %v6954 = vunpack.c.l.bf16 %v6947
      %v6955 = vunpack.c.h.bf16 %v6947
      %v6957 = vsel %vm4811, %v5898, 0
      %v6960 = vsel %vm4815, %v6954, 0
      %v6963 = vsel %vm4815, %v6955, 0
      %6965 = vmatpush.msra.mxu0 0.0
      %6966 = vmatpush.msra.mxu0 0.0
      %6967 = vmatpush.msra.mxu0 0.0
      %6968 = vmatpush.msra.mxu0 0.0
      %6969 = vmatpush.msra.mxu0 0.0
      %6970 = vmatpush.msra.mxu0 0.0
      %6971 = vmatpush.msra.mxu0 0.0
      %6972 = vmatpush.msra.mxu0 0.0
      %6973 = vmatpush.msra.mxu0 0.0
      %6974 = vmatpush.msra.mxu0 0.0
      %6975 = vmatpush.msra.mxu0 0.0
      %6976 = vmatpush.msra.mxu0 0.0
      %6977 = vmatpush.msra.mxu0 %v6960
      %6978 = vmatpush.msra.mxu0 %v6952
      %6979 = vmatpush.msra.mxu0 %v6950
      %6980 = vmatpush.msra.mxu0 %v6948
      %6981 = vmatmul.f32.gmra.mxu0 %v6957
      %v6982 = vpop.f32.mrf.mxu0
      %v6983 = vadd.f32 0.0, %v6982
      %6984 = vdwg.mxu0
      %6985 = vmatpush.msra.mxu0 0.0
      %6986 = vmatpush.msra.mxu0 0.0
      %6987 = vmatpush.msra.mxu0 0.0
      %6988 = vmatpush.msra.mxu0 0.0
      %6989 = vmatpush.msra.mxu0 0.0
      %6990 = vmatpush.msra.mxu0 0.0
      %6991 = vmatpush.msra.mxu0 0.0
      %6992 = vmatpush.msra.mxu0 0.0
      %6993 = vmatpush.msra.mxu0 0.0
      %6994 = vmatpush.msra.mxu0 0.0
      %6995 = vmatpush.msra.mxu0 0.0
      %6996 = vmatpush.msra.mxu0 0.0
      %6997 = vmatpush.msra.mxu0 %v6963
      %6998 = vmatpush.msra.mxu0 %v6953
      %6999 = vmatpush.msra.mxu0 %v6951
      %7000 = vmatpush.msra.mxu0 %v6949
      %7001 = vmatmul.f32.gmra.mxu0 %v6957
      %v7002 = vpop.f32.mrf.mxu0
      %v7003 = vadd.f32 0.0, %v7002
      %7004 = vdwg.mxu0
      %v7005 = vadd.f32 %v6941, %v6983
      %v7006 = vadd.f32 %v6942, %v7003
      %s7007 = scalar_lea.vmem %s14, 544
      %v7008 = vld [vmem:[%s7007] sm:$0xff]
      %v7009 = vld [vmem:[%s7007 + $0x8] sm:$0xff]
      %v7010 = vld [vmem:[%s7007 + $0x10] sm:$0xff]
      %v7011 = vld [vmem:[%s7007 + $0x18] sm:$0x11]
      %v7012 = vunpack.c.l.bf16 %v7008
      %v7013 = vunpack.c.h.bf16 %v7008
      %v7014 = vunpack.c.l.bf16 %v7009
      %v7015 = vunpack.c.h.bf16 %v7009
      %v7016 = vunpack.c.l.bf16 %v7010
      %v7017 = vunpack.c.h.bf16 %v7010
      %v7018 = vunpack.c.l.bf16 %v7011
      %v7019 = vunpack.c.h.bf16 %v7011
      %v7021 = vsel %vm4811, %v5901, 0
      %v7024 = vsel %vm4815, %v7018, 0
      %v7027 = vsel %vm4815, %v7019, 0
      %7029 = vmatpush.msra.mxu0 0.0
      %7030 = vmatpush.msra.mxu0 0.0
      %7031 = vmatpush.msra.mxu0 0.0
      %7032 = vmatpush.msra.mxu0 0.0
      %7033 = vmatpush.msra.mxu0 0.0
      %7034 = vmatpush.msra.mxu0 0.0
      %7035 = vmatpush.msra.mxu0 0.0
      %7036 = vmatpush.msra.mxu0 0.0
      %7037 = vmatpush.msra.mxu0 0.0
      %7038 = vmatpush.msra.mxu0 0.0
      %7039 = vmatpush.msra.mxu0 0.0
      %7040 = vmatpush.msra.mxu0 0.0
      %7041 = vmatpush.msra.mxu0 %v7024
      %7042 = vmatpush.msra.mxu0 %v7016
      %7043 = vmatpush.msra.mxu0 %v7014
      %7044 = vmatpush.msra.mxu0 %v7012
      %7045 = vmatmul.f32.gmra.mxu0 %v7021
      %v7046 = vpop.f32.mrf.mxu0
      %v7047 = vadd.f32 0.0, %v7046
      %7048 = vdwg.mxu0
      %7049 = vmatpush.msra.mxu0 0.0
      %7050 = vmatpush.msra.mxu0 0.0
      %7051 = vmatpush.msra.mxu0 0.0
      %7052 = vmatpush.msra.mxu0 0.0
      %7053 = vmatpush.msra.mxu0 0.0
      %7054 = vmatpush.msra.mxu0 0.0
      %7055 = vmatpush.msra.mxu0 0.0
      %7056 = vmatpush.msra.mxu0 0.0
      %7057 = vmatpush.msra.mxu0 0.0
      %7058 = vmatpush.msra.mxu0 0.0
      %7059 = vmatpush.msra.mxu0 0.0
      %7060 = vmatpush.msra.mxu0 0.0
      %7061 = vmatpush.msra.mxu0 %v7027
      %7062 = vmatpush.msra.mxu0 %v7017
      %7063 = vmatpush.msra.mxu0 %v7015
      %7064 = vmatpush.msra.mxu0 %v7013
      %7065 = vmatmul.f32.gmra.mxu0 %v7021
      %v7066 = vpop.f32.mrf.mxu0
      %v7067 = vadd.f32 0.0, %v7066
      %7068 = vdwg.mxu0
      %v7069 = vadd.f32 %v7005, %v7047
      %v7070 = vadd.f32 %v7006, %v7067
      %s7071 = scalar_lea.vmem %s14, 576
      %v7072 = vld [vmem:[%s7071] sm:$0xff]
      %v7073 = vld [vmem:[%s7071 + $0x8] sm:$0xff]
      %v7074 = vld [vmem:[%s7071 + $0x10] sm:$0xff]
      %v7075 = vld [vmem:[%s7071 + $0x18] sm:$0x11]
      %v7076 = vunpack.c.l.bf16 %v7072
      %v7077 = vunpack.c.h.bf16 %v7072
      %v7078 = vunpack.c.l.bf16 %v7073
      %v7079 = vunpack.c.h.bf16 %v7073
      %v7080 = vunpack.c.l.bf16 %v7074
      %v7081 = vunpack.c.h.bf16 %v7074
      %v7082 = vunpack.c.l.bf16 %v7075
      %v7083 = vunpack.c.h.bf16 %v7075
      %v7085 = vsel %vm4811, %v5904, 0
      %v7088 = vsel %vm4815, %v7082, 0
      %v7091 = vsel %vm4815, %v7083, 0
      %7093 = vmatpush.msra.mxu0 0.0
      %7094 = vmatpush.msra.mxu0 0.0
      %7095 = vmatpush.msra.mxu0 0.0
      %7096 = vmatpush.msra.mxu0 0.0
      %7097 = vmatpush.msra.mxu0 0.0
      %7098 = vmatpush.msra.mxu0 0.0
      %7099 = vmatpush.msra.mxu0 0.0
      %7100 = vmatpush.msra.mxu0 0.0
      %7101 = vmatpush.msra.mxu0 0.0
      %7102 = vmatpush.msra.mxu0 0.0
      %7103 = vmatpush.msra.mxu0 0.0
      %7104 = vmatpush.msra.mxu0 0.0
      %7105 = vmatpush.msra.mxu0 %v7088
      %7106 = vmatpush.msra.mxu0 %v7080
      %7107 = vmatpush.msra.mxu0 %v7078
      %7108 = vmatpush.msra.mxu0 %v7076
      %7109 = vmatmul.f32.gmra.mxu0 %v7085
      %v7110 = vpop.f32.mrf.mxu0
      %v7111 = vadd.f32 0.0, %v7110
      %7112 = vdwg.mxu0
      %7113 = vmatpush.msra.mxu0 0.0
      %7114 = vmatpush.msra.mxu0 0.0
      %7115 = vmatpush.msra.mxu0 0.0
      %7116 = vmatpush.msra.mxu0 0.0
      %7117 = vmatpush.msra.mxu0 0.0
      %7118 = vmatpush.msra.mxu0 0.0
      %7119 = vmatpush.msra.mxu0 0.0
      %7120 = vmatpush.msra.mxu0 0.0
      %7121 = vmatpush.msra.mxu0 0.0
      %7122 = vmatpush.msra.mxu0 0.0
      %7123 = vmatpush.msra.mxu0 0.0
      %7124 = vmatpush.msra.mxu0 0.0
      %7125 = vmatpush.msra.mxu0 %v7091
      %7126 = vmatpush.msra.mxu0 %v7081
      %7127 = vmatpush.msra.mxu0 %v7079
      %7128 = vmatpush.msra.mxu0 %v7077
      %7129 = vmatmul.f32.gmra.mxu0 %v7085
      %v7130 = vpop.f32.mrf.mxu0
      %v7131 = vadd.f32 0.0, %v7130
      %7132 = vdwg.mxu0
      %v7133 = vadd.f32 %v7069, %v7111
      %v7134 = vadd.f32 %v7070, %v7131
      %s7135 = scalar_lea.vmem %s14, 608
      %v7136 = vld [vmem:[%s7135] sm:$0xff]
      %v7137 = vld [vmem:[%s7135 + $0x8] sm:$0xff]
      %v7138 = vld [vmem:[%s7135 + $0x10] sm:$0xff]
      %v7139 = vld [vmem:[%s7135 + $0x18] sm:$0x11]
      %v7140 = vunpack.c.l.bf16 %v7136
      %v7141 = vunpack.c.h.bf16 %v7136
      %v7142 = vunpack.c.l.bf16 %v7137
      %v7143 = vunpack.c.h.bf16 %v7137
      %v7144 = vunpack.c.l.bf16 %v7138
      %v7145 = vunpack.c.h.bf16 %v7138
      %v7146 = vunpack.c.l.bf16 %v7139
      %v7147 = vunpack.c.h.bf16 %v7139
      %v7149 = vsel %vm4811, %v5907, 0
      %v7152 = vsel %vm4815, %v7146, 0
      %v7155 = vsel %vm4815, %v7147, 0
      %7157 = vmatpush.msra.mxu0 0.0
      %7158 = vmatpush.msra.mxu0 0.0
      %7159 = vmatpush.msra.mxu0 0.0
      %7160 = vmatpush.msra.mxu0 0.0
      %7161 = vmatpush.msra.mxu0 0.0
      %7162 = vmatpush.msra.mxu0 0.0
      %7163 = vmatpush.msra.mxu0 0.0
      %7164 = vmatpush.msra.mxu0 0.0
      %7165 = vmatpush.msra.mxu0 0.0
      %7166 = vmatpush.msra.mxu0 0.0
      %7167 = vmatpush.msra.mxu0 0.0
      %7168 = vmatpush.msra.mxu0 0.0
      %7169 = vmatpush.msra.mxu0 %v7152
      %7170 = vmatpush.msra.mxu0 %v7144
      %7171 = vmatpush.msra.mxu0 %v7142
      %7172 = vmatpush.msra.mxu0 %v7140
      %7173 = vmatmul.f32.gmra.mxu0 %v7149
      %v7174 = vpop.f32.mrf.mxu0
      %v7175 = vadd.f32 0.0, %v7174
      %7176 = vdwg.mxu0
      %7177 = vmatpush.msra.mxu0 0.0
      %7178 = vmatpush.msra.mxu0 0.0
      %7179 = vmatpush.msra.mxu0 0.0
      %7180 = vmatpush.msra.mxu0 0.0
      %7181 = vmatpush.msra.mxu0 0.0
      %7182 = vmatpush.msra.mxu0 0.0
      %7183 = vmatpush.msra.mxu0 0.0
      %7184 = vmatpush.msra.mxu0 0.0
      %7185 = vmatpush.msra.mxu0 0.0
      %7186 = vmatpush.msra.mxu0 0.0
      %7187 = vmatpush.msra.mxu0 0.0
      %7188 = vmatpush.msra.mxu0 0.0
      %7189 = vmatpush.msra.mxu0 %v7155
      %7190 = vmatpush.msra.mxu0 %v7145
      %7191 = vmatpush.msra.mxu0 %v7143
      %7192 = vmatpush.msra.mxu0 %v7141
      %7193 = vmatmul.f32.gmra.mxu0 %v7149
      %v7194 = vpop.f32.mrf.mxu0
      %v7195 = vadd.f32 0.0, %v7194
      %7196 = vdwg.mxu0
      %v7197 = vadd.f32 %v7133, %v7175
      %v7198 = vadd.f32 %v7134, %v7195
      %s7199 = scalar_lea.vmem %s14, 640
      %v7200 = vld [vmem:[%s7199] sm:$0xff]
      %v7201 = vld [vmem:[%s7199 + $0x8] sm:$0xff]
      %v7202 = vld [vmem:[%s7199 + $0x10] sm:$0xff]
      %v7203 = vld [vmem:[%s7199 + $0x18] sm:$0x11]
      %v7204 = vunpack.c.l.bf16 %v7200
      %v7205 = vunpack.c.h.bf16 %v7200
      %v7206 = vunpack.c.l.bf16 %v7201
      %v7207 = vunpack.c.h.bf16 %v7201
      %v7208 = vunpack.c.l.bf16 %v7202
      %v7209 = vunpack.c.h.bf16 %v7202
      %v7210 = vunpack.c.l.bf16 %v7203
      %v7211 = vunpack.c.h.bf16 %v7203
      %v7213 = vsel %vm4811, %v5910, 0
      %v7216 = vsel %vm4815, %v7210, 0
      %v7219 = vsel %vm4815, %v7211, 0
      %7221 = vmatpush.msra.mxu0 0.0
      %7222 = vmatpush.msra.mxu0 0.0
      %7223 = vmatpush.msra.mxu0 0.0
      %7224 = vmatpush.msra.mxu0 0.0
      %7225 = vmatpush.msra.mxu0 0.0
      %7226 = vmatpush.msra.mxu0 0.0
      %7227 = vmatpush.msra.mxu0 0.0
      %7228 = vmatpush.msra.mxu0 0.0
      %7229 = vmatpush.msra.mxu0 0.0
      %7230 = vmatpush.msra.mxu0 0.0
      %7231 = vmatpush.msra.mxu0 0.0
      %7232 = vmatpush.msra.mxu0 0.0
      %7233 = vmatpush.msra.mxu0 %v7216
      %7234 = vmatpush.msra.mxu0 %v7208
      %7235 = vmatpush.msra.mxu0 %v7206
      %7236 = vmatpush.msra.mxu0 %v7204
      %7237 = vmatmul.f32.gmra.mxu0 %v7213
      %v7238 = vpop.f32.mrf.mxu0
      %v7239 = vadd.f32 0.0, %v7238
      %7240 = vdwg.mxu0
      %7241 = vmatpush.msra.mxu0 0.0
      %7242 = vmatpush.msra.mxu0 0.0
      %7243 = vmatpush.msra.mxu0 0.0
      %7244 = vmatpush.msra.mxu0 0.0
      %7245 = vmatpush.msra.mxu0 0.0
      %7246 = vmatpush.msra.mxu0 0.0
      %7247 = vmatpush.msra.mxu0 0.0
      %7248 = vmatpush.msra.mxu0 0.0
      %7249 = vmatpush.msra.mxu0 0.0
      %7250 = vmatpush.msra.mxu0 0.0
      %7251 = vmatpush.msra.mxu0 0.0
      %7252 = vmatpush.msra.mxu0 0.0
      %7253 = vmatpush.msra.mxu0 %v7219
      %7254 = vmatpush.msra.mxu0 %v7209
      %7255 = vmatpush.msra.mxu0 %v7207
      %7256 = vmatpush.msra.mxu0 %v7205
      %7257 = vmatmul.f32.gmra.mxu0 %v7213
      %v7258 = vpop.f32.mrf.mxu0
      %v7259 = vadd.f32 0.0, %v7258
      %7260 = vdwg.mxu0
      %v7261 = vadd.f32 %v7197, %v7239
      %v7262 = vadd.f32 %v7198, %v7259
      %s7263 = scalar_lea.vmem %s14, 672
      %v7264 = vld [vmem:[%s7263] sm:$0xff]
      %v7265 = vld [vmem:[%s7263 + $0x8] sm:$0xff]
      %v7266 = vld [vmem:[%s7263 + $0x10] sm:$0xff]
      %v7267 = vld [vmem:[%s7263 + $0x18] sm:$0x11]
      %v7268 = vunpack.c.l.bf16 %v7264
      %v7269 = vunpack.c.h.bf16 %v7264
      %v7270 = vunpack.c.l.bf16 %v7265
      %v7271 = vunpack.c.h.bf16 %v7265
      %v7272 = vunpack.c.l.bf16 %v7266
      %v7273 = vunpack.c.h.bf16 %v7266
      %v7274 = vunpack.c.l.bf16 %v7267
      %v7275 = vunpack.c.h.bf16 %v7267
      %v7277 = vsel %vm4811, %v5913, 0
      %v7280 = vsel %vm4815, %v7274, 0
      %v7283 = vsel %vm4815, %v7275, 0
      %7285 = vmatpush.msra.mxu0 0.0
      %7286 = vmatpush.msra.mxu0 0.0
      %7287 = vmatpush.msra.mxu0 0.0
      %7288 = vmatpush.msra.mxu0 0.0
      %7289 = vmatpush.msra.mxu0 0.0
      %7290 = vmatpush.msra.mxu0 0.0
      %7291 = vmatpush.msra.mxu0 0.0
      %7292 = vmatpush.msra.mxu0 0.0
      %7293 = vmatpush.msra.mxu0 0.0
      %7294 = vmatpush.msra.mxu0 0.0
      %7295 = vmatpush.msra.mxu0 0.0
      %7296 = vmatpush.msra.mxu0 0.0
      %7297 = vmatpush.msra.mxu0 %v7280
      %7298 = vmatpush.msra.mxu0 %v7272
      %7299 = vmatpush.msra.mxu0 %v7270
      %7300 = vmatpush.msra.mxu0 %v7268
      %7301 = vmatmul.f32.gmra.mxu0 %v7277
      %v7302 = vpop.f32.mrf.mxu0
      %v7303 = vadd.f32 0.0, %v7302
      %7304 = vdwg.mxu0
      %7305 = vmatpush.msra.mxu0 0.0
      %7306 = vmatpush.msra.mxu0 0.0
      %7307 = vmatpush.msra.mxu0 0.0
      %7308 = vmatpush.msra.mxu0 0.0
      %7309 = vmatpush.msra.mxu0 0.0
      %7310 = vmatpush.msra.mxu0 0.0
      %7311 = vmatpush.msra.mxu0 0.0
      %7312 = vmatpush.msra.mxu0 0.0
      %7313 = vmatpush.msra.mxu0 0.0
      %7314 = vmatpush.msra.mxu0 0.0
      %7315 = vmatpush.msra.mxu0 0.0
      %7316 = vmatpush.msra.mxu0 0.0
      %7317 = vmatpush.msra.mxu0 %v7283
      %7318 = vmatpush.msra.mxu0 %v7273
      %7319 = vmatpush.msra.mxu0 %v7271
      %7320 = vmatpush.msra.mxu0 %v7269
      %7321 = vmatmul.f32.gmra.mxu0 %v7277
      %v7322 = vpop.f32.mrf.mxu0
      %v7323 = vadd.f32 0.0, %v7322
      %7324 = vdwg.mxu0
      %v7325 = vadd.f32 %v7261, %v7303
      %v7326 = vadd.f32 %v7262, %v7323
      %s7327 = scalar_lea.vmem %s14, 704
      %v7328 = vld [vmem:[%s7327] sm:$0xff]
      %v7329 = vld [vmem:[%s7327 + $0x8] sm:$0xff]
      %v7330 = vld [vmem:[%s7327 + $0x10] sm:$0xff]
      %v7331 = vld [vmem:[%s7327 + $0x18] sm:$0x11]
      %v7332 = vunpack.c.l.bf16 %v7328
      %v7333 = vunpack.c.h.bf16 %v7328
      %v7334 = vunpack.c.l.bf16 %v7329
      %v7335 = vunpack.c.h.bf16 %v7329
      %v7336 = vunpack.c.l.bf16 %v7330
      %v7337 = vunpack.c.h.bf16 %v7330
      %v7338 = vunpack.c.l.bf16 %v7331
      %v7339 = vunpack.c.h.bf16 %v7331
      %v7341 = vsel %vm4811, %v5916, 0
      %v7344 = vsel %vm4815, %v7338, 0
      %v7347 = vsel %vm4815, %v7339, 0
      %7349 = vmatpush.msra.mxu0 0.0
      %7350 = vmatpush.msra.mxu0 0.0
      %7351 = vmatpush.msra.mxu0 0.0
      %7352 = vmatpush.msra.mxu0 0.0
      %7353 = vmatpush.msra.mxu0 0.0
      %7354 = vmatpush.msra.mxu0 0.0
      %7355 = vmatpush.msra.mxu0 0.0
      %7356 = vmatpush.msra.mxu0 0.0
      %7357 = vmatpush.msra.mxu0 0.0
      %7358 = vmatpush.msra.mxu0 0.0
      %7359 = vmatpush.msra.mxu0 0.0
      %7360 = vmatpush.msra.mxu0 0.0
      %7361 = vmatpush.msra.mxu0 %v7344
      %7362 = vmatpush.msra.mxu0 %v7336
      %7363 = vmatpush.msra.mxu0 %v7334
      %7364 = vmatpush.msra.mxu0 %v7332
      %7365 = vmatmul.f32.gmra.mxu0 %v7341
      %v7366 = vpop.f32.mrf.mxu0
      %v7367 = vadd.f32 0.0, %v7366
      %7368 = vdwg.mxu0
      %7369 = vmatpush.msra.mxu0 0.0
      %7370 = vmatpush.msra.mxu0 0.0
      %7371 = vmatpush.msra.mxu0 0.0
      %7372 = vmatpush.msra.mxu0 0.0
      %7373 = vmatpush.msra.mxu0 0.0
      %7374 = vmatpush.msra.mxu0 0.0
      %7375 = vmatpush.msra.mxu0 0.0
      %7376 = vmatpush.msra.mxu0 0.0
      %7377 = vmatpush.msra.mxu0 0.0
      %7378 = vmatpush.msra.mxu0 0.0
      %7379 = vmatpush.msra.mxu0 0.0
      %7380 = vmatpush.msra.mxu0 0.0
      %7381 = vmatpush.msra.mxu0 %v7347
      %7382 = vmatpush.msra.mxu0 %v7337
      %7383 = vmatpush.msra.mxu0 %v7335
      %7384 = vmatpush.msra.mxu0 %v7333
      %7385 = vmatmul.f32.gmra.mxu0 %v7341
      %v7386 = vpop.f32.mrf.mxu0
      %v7387 = vadd.f32 0.0, %v7386
      %7388 = vdwg.mxu0
      %v7389 = vadd.f32 %v7325, %v7367
      %v7390 = vadd.f32 %v7326, %v7387
      %s7391 = scalar_lea.vmem %s14, 736
      %v7392 = vld [vmem:[%s7391] sm:$0xff]
      %v7393 = vld [vmem:[%s7391 + $0x8] sm:$0xff]
      %v7394 = vld [vmem:[%s7391 + $0x10] sm:$0xff]
      %v7395 = vld [vmem:[%s7391 + $0x18] sm:$0x11]
      %v7396 = vunpack.c.l.bf16 %v7392
      %v7397 = vunpack.c.h.bf16 %v7392
      %v7398 = vunpack.c.l.bf16 %v7393
      %v7399 = vunpack.c.h.bf16 %v7393
      %v7400 = vunpack.c.l.bf16 %v7394
      %v7401 = vunpack.c.h.bf16 %v7394
      %v7402 = vunpack.c.l.bf16 %v7395
      %v7403 = vunpack.c.h.bf16 %v7395
      %v7405 = vsel %vm4811, %v5919, 0
      %v7408 = vsel %vm4815, %v7402, 0
      %v7411 = vsel %vm4815, %v7403, 0
      %7413 = vmatpush.msra.mxu0 0.0
      %7414 = vmatpush.msra.mxu0 0.0
      %7415 = vmatpush.msra.mxu0 0.0
      %7416 = vmatpush.msra.mxu0 0.0
      %7417 = vmatpush.msra.mxu0 0.0
      %7418 = vmatpush.msra.mxu0 0.0
      %7419 = vmatpush.msra.mxu0 0.0
      %7420 = vmatpush.msra.mxu0 0.0
      %7421 = vmatpush.msra.mxu0 0.0
      %7422 = vmatpush.msra.mxu0 0.0
      %7423 = vmatpush.msra.mxu0 0.0
      %7424 = vmatpush.msra.mxu0 0.0
      %7425 = vmatpush.msra.mxu0 %v7408
      %7426 = vmatpush.msra.mxu0 %v7400
      %7427 = vmatpush.msra.mxu0 %v7398
      %7428 = vmatpush.msra.mxu0 %v7396
      %7429 = vmatmul.f32.gmra.mxu0 %v7405
      %v7430 = vpop.f32.mrf.mxu0
      %v7431 = vadd.f32 0.0, %v7430
      %7432 = vdwg.mxu0
      %7433 = vmatpush.msra.mxu0 0.0
      %7434 = vmatpush.msra.mxu0 0.0
      %7435 = vmatpush.msra.mxu0 0.0
      %7436 = vmatpush.msra.mxu0 0.0
      %7437 = vmatpush.msra.mxu0 0.0
      %7438 = vmatpush.msra.mxu0 0.0
      %7439 = vmatpush.msra.mxu0 0.0
      %7440 = vmatpush.msra.mxu0 0.0
      %7441 = vmatpush.msra.mxu0 0.0
      %7442 = vmatpush.msra.mxu0 0.0
      %7443 = vmatpush.msra.mxu0 0.0
      %7444 = vmatpush.msra.mxu0 0.0
      %7445 = vmatpush.msra.mxu0 %v7411
      %7446 = vmatpush.msra.mxu0 %v7401
      %7447 = vmatpush.msra.mxu0 %v7399
      %7448 = vmatpush.msra.mxu0 %v7397
      %7449 = vmatmul.f32.gmra.mxu0 %v7405
      %v7450 = vpop.f32.mrf.mxu0
      %v7451 = vadd.f32 0.0, %v7450
      %7452 = vdwg.mxu0
      %v7453 = vadd.f32 %v7389, %v7431
      %v7454 = vadd.f32 %v7390, %v7451
      %s7455 = scalar_lea.vmem %s14, 768
      %v7456 = vld [vmem:[%s7455] sm:$0xff]
      %v7457 = vld [vmem:[%s7455 + $0x8] sm:$0xff]
      %v7458 = vld [vmem:[%s7455 + $0x10] sm:$0xff]
      %v7459 = vld [vmem:[%s7455 + $0x18] sm:$0x11]
      %v7460 = vunpack.c.l.bf16 %v7456
      %v7461 = vunpack.c.h.bf16 %v7456
      %v7462 = vunpack.c.l.bf16 %v7457
      %v7463 = vunpack.c.h.bf16 %v7457
      %v7464 = vunpack.c.l.bf16 %v7458
      %v7465 = vunpack.c.h.bf16 %v7458
      %v7466 = vunpack.c.l.bf16 %v7459
      %v7467 = vunpack.c.h.bf16 %v7459
      %v7469 = vsel %vm4811, %v5922, 0
      %v7472 = vsel %vm4815, %v7466, 0
      %v7475 = vsel %vm4815, %v7467, 0
      %7477 = vmatpush.msra.mxu0 0.0
      %7478 = vmatpush.msra.mxu0 0.0
      %7479 = vmatpush.msra.mxu0 0.0
      %7480 = vmatpush.msra.mxu0 0.0
      %7481 = vmatpush.msra.mxu0 0.0
      %7482 = vmatpush.msra.mxu0 0.0
      %7483 = vmatpush.msra.mxu0 0.0
      %7484 = vmatpush.msra.mxu0 0.0
      %7485 = vmatpush.msra.mxu0 0.0
      %7486 = vmatpush.msra.mxu0 0.0
      %7487 = vmatpush.msra.mxu0 0.0
      %7488 = vmatpush.msra.mxu0 0.0
      %7489 = vmatpush.msra.mxu0 %v7472
      %7490 = vmatpush.msra.mxu0 %v7464
      %7491 = vmatpush.msra.mxu0 %v7462
      %7492 = vmatpush.msra.mxu0 %v7460
      %7493 = vmatmul.f32.gmra.mxu0 %v7469
      %v7494 = vpop.f32.mrf.mxu0
      %v7495 = vadd.f32 0.0, %v7494
      %7496 = vdwg.mxu0
      %7497 = vmatpush.msra.mxu0 0.0
      %7498 = vmatpush.msra.mxu0 0.0
      %7499 = vmatpush.msra.mxu0 0.0
      %7500 = vmatpush.msra.mxu0 0.0
      %7501 = vmatpush.msra.mxu0 0.0
      %7502 = vmatpush.msra.mxu0 0.0
      %7503 = vmatpush.msra.mxu0 0.0
      %7504 = vmatpush.msra.mxu0 0.0
      %7505 = vmatpush.msra.mxu0 0.0
      %7506 = vmatpush.msra.mxu0 0.0
      %7507 = vmatpush.msra.mxu0 0.0
      %7508 = vmatpush.msra.mxu0 0.0
      %7509 = vmatpush.msra.mxu0 %v7475
      %7510 = vmatpush.msra.mxu0 %v7465
      %7511 = vmatpush.msra.mxu0 %v7463
      %7512 = vmatpush.msra.mxu0 %v7461
      %7513 = vmatmul.f32.gmra.mxu0 %v7469
      %v7514 = vpop.f32.mrf.mxu0
      %v7515 = vadd.f32 0.0, %v7514
      %7516 = vdwg.mxu0
      %v7517 = vadd.f32 %v7453, %v7495
      %v7518 = vadd.f32 %v7454, %v7515
      %v7519 = vld [vmem:[%s13] sm:$0xff]
      %7521 = vset.pattern.permute.xlu0 0
      %7522 = vperm.xlu0 %7521, %v7519
      %v7523 = vpop.permute.xlu0 %7522
      %v7525 = vadd.f32 %v7517, %v7523
      %v7526 = vadd.f32 %v7518, %v7523
      %v7527 = vmax.f32 %v7525, 0.0
      %v7528 = vmax.f32 %v7526, 0.0
      %v7529 = vld [vmem:[%s15] sm:$0xff]
      %v7530 = vld [vmem:[%s15 + $0x8] sm:$0xf]
      %v7532 = vsel %vm5261, %v7529, 0
      %v7535 = vsel %vm5261, %v7530, 0
      %7537 = vmatpush.msra.mxu0 0.0
      %7538 = vmatpush.msra.mxu0 0.0
      %7539 = vmatpush.msra.mxu0 0.0
      %7540 = vmatpush.msra.mxu0 0.0
      %7541 = vmatpush.msra.mxu0 0.0
      %7542 = vmatpush.msra.mxu0 0.0
      %7543 = vmatpush.msra.mxu0 0.0
      %7544 = vmatpush.msra.mxu0 0.0
      %7545 = vmatpush.msra.mxu0 0.0
      %7546 = vmatpush.msra.mxu0 0.0
      %7547 = vmatpush.msra.mxu0 0.0
      %7548 = vmatpush.msra.mxu0 0.0
      %7549 = vmatpush.msra.mxu0 0.0
      %7550 = vmatpush.msra.mxu0 0.0
      %7551 = vmatpush.msra.mxu0 0.0
      %7552 = vmatpush.msra.mxu0 %v7527
      %7553 = vmatmul.f32.gmra.mxu0 %v7532
      %v7554 = vpop.f32.mrf.mxu0
      %v7555 = vadd.f32 0.0, %v7554
      %7556 = vmatmul.f32.gmra.mxu0 %v7535
      %v7557 = vpop.f32.mrf.mxu0
      %v7558 = vadd.f32 0.0, %v7557
      %7559 = vdwg.mxu0
      %7560 = vmatpush.msra.mxu0 0.0
      %7561 = vmatpush.msra.mxu0 0.0
      %7562 = vmatpush.msra.mxu0 0.0
      %7563 = vmatpush.msra.mxu0 0.0
      %7564 = vmatpush.msra.mxu0 0.0
      %7565 = vmatpush.msra.mxu0 0.0
      %7566 = vmatpush.msra.mxu0 0.0
      %7567 = vmatpush.msra.mxu0 0.0
      %7568 = vmatpush.msra.mxu0 0.0
      %7569 = vmatpush.msra.mxu0 0.0
      %7570 = vmatpush.msra.mxu0 0.0
      %7571 = vmatpush.msra.mxu0 0.0
      %7572 = vmatpush.msra.mxu0 0.0
      %7573 = vmatpush.msra.mxu0 0.0
      %7574 = vmatpush.msra.mxu0 0.0
      %7575 = vmatpush.msra.mxu0 %v7528
      %7576 = vmatmul.f32.gmra.mxu0 %v7532
      %v7577 = vpop.f32.mrf.mxu0
      %v7578 = vadd.f32 0.0, %v7577
      %7579 = vmatmul.f32.gmra.mxu0 %v7535
      %v7580 = vpop.f32.mrf.mxu0
      %v7581 = vadd.f32 0.0, %v7580
      %7582 = vdwg.mxu0
      %v7583 = vld [vmem:[%s17] sm:$0xff]
      %v7584 = vld [vmem:[%s17 + $0x8] sm:$0xff]
      %v7585 = vld [vmem:[%s17 + $0x10] sm:$0xff]
      %v7586 = vld [vmem:[%s17 + $0x18] sm:$0xf]
      %v7587 = vld [vmem:[%s17 + $0x1c] sm:$0xff]
      %v7588 = vld [vmem:[%s17 + $0x24] sm:$0xff]
      %v7589 = vld [vmem:[%s17 + $0x2c] sm:$0xff]
      %v7590 = vld [vmem:[%s17 + $0x34] sm:$0xf]
      %v7591 = vld [vmem:[%s17 + $0x38] sm:$0xff]
      %v7592 = vld [vmem:[%s17 + $0x40] sm:$0xff]
      %v7593 = vld [vmem:[%s17 + $0x48] sm:$0xff]
      %v7594 = vld [vmem:[%s17 + $0x50] sm:$0xf]
      %v7595 = vld [vmem:[%s17 + $0x54] sm:$0xff]
      %v7596 = vld [vmem:[%s17 + $0x5c] sm:$0xff]
      %v7597 = vld [vmem:[%s17 + $0x64] sm:$0xff]
      %v7598 = vld [vmem:[%s17 + $0x6c] sm:$0xf]
      %v7599 = vld [vmem:[%s17 + $0x70] sm:$0xff]
      %v7600 = vld [vmem:[%s17 + $0x78] sm:$0xff]
      %v7601 = vld [vmem:[%s17 + $0x80] sm:$0xff]
      %v7602 = vld [vmem:[%s17 + $0x88] sm:$0xf]
      %v7603 = vld [vmem:[%s17 + $0x8c] sm:$0xff]
      %v7604 = vld [vmem:[%s17 + $0x94] sm:$0xff]
      %v7605 = vld [vmem:[%s17 + $0x9c] sm:$0xff]
      %v7606 = vld [vmem:[%s17 + $0xa4] sm:$0xf]
      %v7607 = vld [vmem:[%s17 + $0xa8] sm:$0xff]
      %v7608 = vld [vmem:[%s17 + $0xb0] sm:$0xff]
      %v7609 = vld [vmem:[%s17 + $0xb8] sm:$0xff]
      %v7610 = vld [vmem:[%s17 + $0xc0] sm:$0xf]
      %v7611 = vld [vmem:[%s17 + $0xc4] sm:$0xff]
      %v7612 = vld [vmem:[%s17 + $0xcc] sm:$0xff]
      %v7613 = vld [vmem:[%s17 + $0xd4] sm:$0xff]
      %v7614 = vld [vmem:[%s17 + $0xdc] sm:$0xf]
      %v7615 = vld [vmem:[%s17 + $0xe0] sm:$0xff]
      %v7616 = vld [vmem:[%s17 + $0xe8] sm:$0xff]
      %v7617 = vld [vmem:[%s17 + $0xf0] sm:$0xff]
      %v7618 = vld [vmem:[%s17 + $0xf8] sm:$0xf]
      %v7619 = vld [vmem:[%s17 + $0xfc] sm:$0xff]
      %v7620 = vld [vmem:[%s17 + $0x104] sm:$0xff]
      %v7621 = vld [vmem:[%s17 + $0x10c] sm:$0xff]
      %v7622 = vld [vmem:[%s17 + $0x114] sm:$0xf]
      %v7623 = vld [vmem:[%s17 + $0x118] sm:$0xff]
      %v7624 = vld [vmem:[%s17 + $0x120] sm:$0xff]
      %v7625 = vld [vmem:[%s17 + $0x128] sm:$0xff]
      %v7626 = vld [vmem:[%s17 + $0x130] sm:$0xf]
      %v7627 = vld [vmem:[%s17 + $0x134] sm:$0xff]
      %v7628 = vld [vmem:[%s17 + $0x13c] sm:$0xff]
      %v7629 = vld [vmem:[%s17 + $0x144] sm:$0xff]
      %v7630 = vld [vmem:[%s17 + $0x14c] sm:$0xf]
      %v7631 = vld [vmem:[%s17 + $0x150] sm:$0xff]
      %v7632 = vld [vmem:[%s17 + $0x158] sm:$0xff]
      %v7633 = vld [vmem:[%s17 + $0x160] sm:$0xff]
      %v7634 = vld [vmem:[%s17 + $0x168] sm:$0xf]
      %v7635 = vld [vmem:[%s17 + $0x16c] sm:$0xff]
      %v7636 = vld [vmem:[%s17 + $0x174] sm:$0xff]
      %v7637 = vld [vmem:[%s17 + $0x17c] sm:$0xff]
      %v7638 = vld [vmem:[%s17 + $0x184] sm:$0xf]
      %v7639 = vld [vmem:[%s17 + $0x188] sm:$0xff]
      %v7640 = vld [vmem:[%s17 + $0x190] sm:$0xff]
      %v7641 = vld [vmem:[%s17 + $0x198] sm:$0xff]
      %v7642 = vld [vmem:[%s17 + $0x1a0] sm:$0xf]
      %v7643 = vld [vmem:[%s17 + $0x1a4] sm:$0xff]
      %v7644 = vld [vmem:[%s17 + $0x1ac] sm:$0xff]
      %v7645 = vld [vmem:[%s17 + $0x1b4] sm:$0xff]
      %v7646 = vld [vmem:[%s17 + $0x1bc] sm:$0xf]
      %v7647 = vld [vmem:[%s17 + $0x1c0] sm:$0xff]
      %v7648 = vld [vmem:[%s17 + $0x1c8] sm:$0xff]
      %v7649 = vld [vmem:[%s17 + $0x1d0] sm:$0xff]
      %v7650 = vld [vmem:[%s17 + $0x1d8] sm:$0xf]
      %v7651 = vld [vmem:[%s17 + $0x1dc] sm:$0xff]
      %v7652 = vld [vmem:[%s17 + $0x1e4] sm:$0xff]
      %v7653 = vld [vmem:[%s17 + $0x1ec] sm:$0xff]
      %v7654 = vld [vmem:[%s17 + $0x1f4] sm:$0xf]
      %v7655 = vld [vmem:[%s17 + $0x1f8] sm:$0xff]
      %v7656 = vld [vmem:[%s17 + $0x200] sm:$0xff]
      %v7657 = vld [vmem:[%s17 + $0x208] sm:$0xff]
      %v7658 = vld [vmem:[%s17 + $0x210] sm:$0xf]
      %v7659 = vld [vmem:[%s17 + $0x214] sm:$0xff]
      %v7660 = vld [vmem:[%s17 + $0x21c] sm:$0xff]
      %v7661 = vld [vmem:[%s17 + $0x224] sm:$0xff]
      %v7662 = vld [vmem:[%s17 + $0x22c] sm:$0xf]
      %v7663 = vld [vmem:[%s17 + $0x230] sm:$0xff]
      %v7664 = vld [vmem:[%s17 + $0x238] sm:$0xff]
      %v7665 = vld [vmem:[%s17 + $0x240] sm:$0xff]
      %v7666 = vld [vmem:[%s17 + $0x248] sm:$0xf]
      %v7667 = vld [vmem:[%s17 + $0x24c] sm:$0xff]
      %v7668 = vld [vmem:[%s17 + $0x254] sm:$0xff]
      %v7669 = vld [vmem:[%s17 + $0x25c] sm:$0xff]
      %v7670 = vld [vmem:[%s17 + $0x264] sm:$0xf]
      %v7671 = vld [vmem:[%s17 + $0x268] sm:$0xff]
      %v7672 = vld [vmem:[%s17 + $0x270] sm:$0xff]
      %v7673 = vld [vmem:[%s17 + $0x278] sm:$0xff]
      %v7674 = vld [vmem:[%s17 + $0x280] sm:$0xf]
      %v7675 = vld [vmem:[%s17 + $0x284] sm:$0xff]
      %v7676 = vld [vmem:[%s17 + $0x28c] sm:$0xff]
      %v7677 = vld [vmem:[%s17 + $0x294] sm:$0xff]
      %v7678 = vld [vmem:[%s17 + $0x29c] sm:$0xf]
      %v7679 = vld [vmem:[%s17 + $0x2a0] sm:$0xff]
      %v7680 = vld [vmem:[%s17 + $0x2a8] sm:$0xff]
      %v7681 = vld [vmem:[%s17 + $0x2b0] sm:$0xff]
      %v7682 = vld [vmem:[%s17 + $0x2b8] sm:$0xf]
      %v7683 = vld [vmem:[%s17 + $0x2bc] sm:$0xff]
      %v7684 = vld [vmem:[%s17 + $0x2c4] sm:$0xff]
      %v7685 = vld [vmem:[%s17 + $0x2cc] sm:$0xff]
      %v7686 = vld [vmem:[%s17 + $0x2d4] sm:$0xf]
      %v7687 = vld [vmem:[%s17 + $0x2d8] sm:$0xff]
      %v7688 = vld [vmem:[%s17 + $0x2e0] sm:$0xff]
      %v7689 = vld [vmem:[%s17 + $0x2e8] sm:$0xff]
      %v7690 = vld [vmem:[%s17 + $0x2f0] sm:$0xf]
      %v7691 = vld [vmem:[%s17 + $0x2f4] sm:$0xff]
      %v7692 = vld [vmem:[%s17 + $0x2fc] sm:$0xff]
      %v7693 = vld [vmem:[%s17 + $0x304] sm:$0xff]
      %v7694 = vld [vmem:[%s17 + $0x30c] sm:$0xf]
      %v7695 = vld [vmem:[%s17 + $0x310] sm:$0x11]
      %v7696 = vld [vmem:[%s17 + $0x318] sm:$0x11]
      %v7697 = vld [vmem:[%s17 + $0x320] sm:$0x11]
      %v7698 = vld [vmem:[%s17 + $0x328] sm:$0x1]
      %v7699 = vunpack.c.l.bf16 %v7583
      %v7700 = vunpack.c.h.bf16 %v7583
      %v7701 = vunpack.c.l.bf16 %v7584
      %v7702 = vunpack.c.h.bf16 %v7584
      %v7703 = vunpack.c.l.bf16 %v7585
      %v7704 = vunpack.c.h.bf16 %v7585
      %v7705 = vunpack.c.l.bf16 %v7586
      %v7706 = vunpack.c.l.bf16 %v7587
      %v7707 = vunpack.c.h.bf16 %v7587
      %v7708 = vunpack.c.l.bf16 %v7588
      %v7709 = vunpack.c.h.bf16 %v7588
      %v7710 = vunpack.c.l.bf16 %v7589
      %v7711 = vunpack.c.h.bf16 %v7589
      %v7712 = vunpack.c.l.bf16 %v7590
      %v7713 = vunpack.c.l.bf16 %v7591
      %v7714 = vunpack.c.h.bf16 %v7591
      %v7715 = vunpack.c.l.bf16 %v7592
      %v7716 = vunpack.c.h.bf16 %v7592
      %v7717 = vunpack.c.l.bf16 %v7593
      %v7718 = vunpack.c.h.bf16 %v7593
      %v7719 = vunpack.c.l.bf16 %v7594
      %v7720 = vunpack.c.l.bf16 %v7595
      %v7721 = vunpack.c.h.bf16 %v7595
      %v7722 = vunpack.c.l.bf16 %v7596
      %v7723 = vunpack.c.h.bf16 %v7596
      %v7724 = vunpack.c.l.bf16 %v7597
      %v7725 = vunpack.c.h.bf16 %v7597
      %v7726 = vunpack.c.l.bf16 %v7598
      %v7727 = vunpack.c.l.bf16 %v7599
      %v7728 = vunpack.c.h.bf16 %v7599
      %v7729 = vunpack.c.l.bf16 %v7600
      %v7730 = vunpack.c.h.bf16 %v7600
      %v7731 = vunpack.c.l.bf16 %v7601
      %v7732 = vunpack.c.h.bf16 %v7601
      %v7733 = vunpack.c.l.bf16 %v7602
      %v7734 = vunpack.c.l.bf16 %v7603
      %v7735 = vunpack.c.h.bf16 %v7603
      %v7736 = vunpack.c.l.bf16 %v7604
      %v7737 = vunpack.c.h.bf16 %v7604
      %v7738 = vunpack.c.l.bf16 %v7605
      %v7739 = vunpack.c.h.bf16 %v7605
      %v7740 = vunpack.c.l.bf16 %v7606
      %v7741 = vunpack.c.l.bf16 %v7607
      %v7742 = vunpack.c.h.bf16 %v7607
      %v7743 = vunpack.c.l.bf16 %v7608
      %v7744 = vunpack.c.h.bf16 %v7608
      %v7745 = vunpack.c.l.bf16 %v7609
      %v7746 = vunpack.c.h.bf16 %v7609
      %v7747 = vunpack.c.l.bf16 %v7610
      %v7748 = vunpack.c.l.bf16 %v7611
      %v7749 = vunpack.c.h.bf16 %v7611
      %v7750 = vunpack.c.l.bf16 %v7612
      %v7751 = vunpack.c.h.bf16 %v7612
      %v7752 = vunpack.c.l.bf16 %v7613
      %v7753 = vunpack.c.h.bf16 %v7613
      %v7754 = vunpack.c.l.bf16 %v7614
      %v7755 = vunpack.c.l.bf16 %v7615
      %v7756 = vunpack.c.h.bf16 %v7615
      %v7757 = vunpack.c.l.bf16 %v7616
      %v7758 = vunpack.c.h.bf16 %v7616
      %v7759 = vunpack.c.l.bf16 %v7617
      %v7760 = vunpack.c.h.bf16 %v7617
      %v7761 = vunpack.c.l.bf16 %v7618
      %v7762 = vunpack.c.l.bf16 %v7619
      %v7763 = vunpack.c.h.bf16 %v7619
      %v7764 = vunpack.c.l.bf16 %v7620
      %v7765 = vunpack.c.h.bf16 %v7620
      %v7766 = vunpack.c.l.bf16 %v7621
      %v7767 = vunpack.c.h.bf16 %v7621
      %v7768 = vunpack.c.l.bf16 %v7622
      %v7769 = vunpack.c.l.bf16 %v7623
      %v7770 = vunpack.c.h.bf16 %v7623
      %v7771 = vunpack.c.l.bf16 %v7624
      %v7772 = vunpack.c.h.bf16 %v7624
      %v7773 = vunpack.c.l.bf16 %v7625
      %v7774 = vunpack.c.h.bf16 %v7625
      %v7775 = vunpack.c.l.bf16 %v7626
      %v7776 = vunpack.c.l.bf16 %v7627
      %v7777 = vunpack.c.h.bf16 %v7627
      %v7778 = vunpack.c.l.bf16 %v7628
      %v7779 = vunpack.c.h.bf16 %v7628
      %v7780 = vunpack.c.l.bf16 %v7629
      %v7781 = vunpack.c.h.bf16 %v7629
      %v7782 = vunpack.c.l.bf16 %v7630
      %v7783 = vunpack.c.l.bf16 %v7631
      %v7784 = vunpack.c.h.bf16 %v7631
      %v7785 = vunpack.c.l.bf16 %v7632
      %v7786 = vunpack.c.h.bf16 %v7632
      %v7787 = vunpack.c.l.bf16 %v7633
      %v7788 = vunpack.c.h.bf16 %v7633
      %v7789 = vunpack.c.l.bf16 %v7634
      %v7790 = vunpack.c.l.bf16 %v7635
      %v7791 = vunpack.c.h.bf16 %v7635
      %v7792 = vunpack.c.l.bf16 %v7636
      %v7793 = vunpack.c.h.bf16 %v7636
      %v7794 = vunpack.c.l.bf16 %v7637
      %v7795 = vunpack.c.h.bf16 %v7637
      %v7796 = vunpack.c.l.bf16 %v7638
      %v7797 = vunpack.c.l.bf16 %v7639
      %v7798 = vunpack.c.h.bf16 %v7639
      %v7799 = vunpack.c.l.bf16 %v7640
      %v7800 = vunpack.c.h.bf16 %v7640
      %v7801 = vunpack.c.l.bf16 %v7641
      %v7802 = vunpack.c.h.bf16 %v7641
      %v7803 = vunpack.c.l.bf16 %v7642
      %v7804 = vunpack.c.l.bf16 %v7643
      %v7805 = vunpack.c.h.bf16 %v7643
      %v7806 = vunpack.c.l.bf16 %v7644
      %v7807 = vunpack.c.h.bf16 %v7644
      %v7808 = vunpack.c.l.bf16 %v7645
      %v7809 = vunpack.c.h.bf16 %v7645
      %v7810 = vunpack.c.l.bf16 %v7646
      %v7811 = vunpack.c.l.bf16 %v7647
      %v7812 = vunpack.c.h.bf16 %v7647
      %v7813 = vunpack.c.l.bf16 %v7648
      %v7814 = vunpack.c.h.bf16 %v7648
      %v7815 = vunpack.c.l.bf16 %v7649
      %v7816 = vunpack.c.h.bf16 %v7649
      %v7817 = vunpack.c.l.bf16 %v7650
      %v7818 = vunpack.c.l.bf16 %v7651
      %v7819 = vunpack.c.h.bf16 %v7651
      %v7820 = vunpack.c.l.bf16 %v7652
      %v7821 = vunpack.c.h.bf16 %v7652
      %v7822 = vunpack.c.l.bf16 %v7653
      %v7823 = vunpack.c.h.bf16 %v7653
      %v7824 = vunpack.c.l.bf16 %v7654
      %v7825 = vunpack.c.l.bf16 %v7655
      %v7826 = vunpack.c.h.bf16 %v7655
      %v7827 = vunpack.c.l.bf16 %v7656
      %v7828 = vunpack.c.h.bf16 %v7656
      %v7829 = vunpack.c.l.bf16 %v7657
      %v7830 = vunpack.c.h.bf16 %v7657
      %v7831 = vunpack.c.l.bf16 %v7658
      %v7832 = vunpack.c.l.bf16 %v7659
      %v7833 = vunpack.c.h.bf16 %v7659
      %v7834 = vunpack.c.l.bf16 %v7660
      %v7835 = vunpack.c.h.bf16 %v7660
      %v7836 = vunpack.c.l.bf16 %v7661
      %v7837 = vunpack.c.h.bf16 %v7661
      %v7838 = vunpack.c.l.bf16 %v7662
      %v7839 = vunpack.c.l.bf16 %v7663
      %v7840 = vunpack.c.h.bf16 %v7663
      %v7841 = vunpack.c.l.bf16 %v7664
      %v7842 = vunpack.c.h.bf16 %v7664
      %v7843 = vunpack.c.l.bf16 %v7665
      %v7844 = vunpack.c.h.bf16 %v7665
      %v7845 = vunpack.c.l.bf16 %v7666
      %v7846 = vunpack.c.l.bf16 %v7667
      %v7847 = vunpack.c.h.bf16 %v7667
      %v7848 = vunpack.c.l.bf16 %v7668
      %v7849 = vunpack.c.h.bf16 %v7668
      %v7850 = vunpack.c.l.bf16 %v7669
      %v7851 = vunpack.c.h.bf16 %v7669
      %v7852 = vunpack.c.l.bf16 %v7670
      %v7853 = vunpack.c.l.bf16 %v7671
      %v7854 = vunpack.c.h.bf16 %v7671
      %v7855 = vunpack.c.l.bf16 %v7672
      %v7856 = vunpack.c.h.bf16 %v7672
      %v7857 = vunpack.c.l.bf16 %v7673
      %v7858 = vunpack.c.h.bf16 %v7673
      %v7859 = vunpack.c.l.bf16 %v7674
      %v7860 = vunpack.c.l.bf16 %v7675
      %v7861 = vunpack.c.h.bf16 %v7675
      %v7862 = vunpack.c.l.bf16 %v7676
      %v7863 = vunpack.c.h.bf16 %v7676
      %v7864 = vunpack.c.l.bf16 %v7677
      %v7865 = vunpack.c.h.bf16 %v7677
      %v7866 = vunpack.c.l.bf16 %v7678
      %v7867 = vunpack.c.l.bf16 %v7679
      %v7868 = vunpack.c.h.bf16 %v7679
      %v7869 = vunpack.c.l.bf16 %v7680
      %v7870 = vunpack.c.h.bf16 %v7680
      %v7871 = vunpack.c.l.bf16 %v7681
      %v7872 = vunpack.c.h.bf16 %v7681
      %v7873 = vunpack.c.l.bf16 %v7682
      %v7874 = vunpack.c.l.bf16 %v7683
      %v7875 = vunpack.c.h.bf16 %v7683
      %v7876 = vunpack.c.l.bf16 %v7684
      %v7877 = vunpack.c.h.bf16 %v7684
      %v7878 = vunpack.c.l.bf16 %v7685
      %v7879 = vunpack.c.h.bf16 %v7685
      %v7880 = vunpack.c.l.bf16 %v7686
      %v7881 = vunpack.c.l.bf16 %v7687
      %v7882 = vunpack.c.h.bf16 %v7687
      %v7883 = vunpack.c.l.bf16 %v7688
      %v7884 = vunpack.c.h.bf16 %v7688
      %v7885 = vunpack.c.l.bf16 %v7689
      %v7886 = vunpack.c.h.bf16 %v7689
      %v7887 = vunpack.c.l.bf16 %v7690
      %v7888 = vunpack.c.l.bf16 %v7691
      %v7889 = vunpack.c.h.bf16 %v7691
      %v7890 = vunpack.c.l.bf16 %v7692
      %v7891 = vunpack.c.h.bf16 %v7692
      %v7892 = vunpack.c.l.bf16 %v7693
      %v7893 = vunpack.c.h.bf16 %v7693
      %v7894 = vunpack.c.l.bf16 %v7694
      %v7895 = vunpack.c.l.bf16 %v7695
      %v7896 = vunpack.c.h.bf16 %v7695
      %v7897 = vunpack.c.l.bf16 %v7696
      %v7898 = vunpack.c.h.bf16 %v7696
      %v7899 = vunpack.c.l.bf16 %v7697
      %v7900 = vunpack.c.h.bf16 %v7697
      %v7901 = vunpack.c.l.bf16 %v7698
      %s7902 = scalar_lea.vmem %s17, 812
      %v7903 = vld [vmem:[%s7902] sm:$0xff]
      %v7904 = vld [vmem:[%s7902 + $0x8] sm:$0xff]
      %v7905 = vld [vmem:[%s7902 + $0x10] sm:$0xff]
      %v7906 = vld [vmem:[%s7902 + $0x18] sm:$0xf]
      %v7907 = vld [vmem:[%s7902 + $0x1c] sm:$0xff]
      %v7908 = vld [vmem:[%s7902 + $0x24] sm:$0xff]
      %v7909 = vld [vmem:[%s7902 + $0x2c] sm:$0xff]
      %v7910 = vld [vmem:[%s7902 + $0x34] sm:$0xf]
      %v7911 = vld [vmem:[%s7902 + $0x38] sm:$0xff]
      %v7912 = vld [vmem:[%s7902 + $0x40] sm:$0xff]
      %v7913 = vld [vmem:[%s7902 + $0x48] sm:$0xff]
      %v7914 = vld [vmem:[%s7902 + $0x50] sm:$0xf]
      %v7915 = vld [vmem:[%s7902 + $0x54] sm:$0xff]
      %v7916 = vld [vmem:[%s7902 + $0x5c] sm:$0xff]
      %v7917 = vld [vmem:[%s7902 + $0x64] sm:$0xff]
      %v7918 = vld [vmem:[%s7902 + $0x6c] sm:$0xf]
      %v7919 = vld [vmem:[%s7902 + $0x70] sm:$0xff]
      %v7920 = vld [vmem:[%s7902 + $0x78] sm:$0xff]
      %v7921 = vld [vmem:[%s7902 + $0x80] sm:$0xff]
      %v7922 = vld [vmem:[%s7902 + $0x88] sm:$0xf]
      %v7923 = vld [vmem:[%s7902 + $0x8c] sm:$0xff]
      %v7924 = vld [vmem:[%s7902 + $0x94] sm:$0xff]
      %v7925 = vld [vmem:[%s7902 + $0x9c] sm:$0xff]
      %v7926 = vld [vmem:[%s7902 + $0xa4] sm:$0xf]
      %v7927 = vld [vmem:[%s7902 + $0xa8] sm:$0xff]
      %v7928 = vld [vmem:[%s7902 + $0xb0] sm:$0xff]
      %v7929 = vld [vmem:[%s7902 + $0xb8] sm:$0xff]
      %v7930 = vld [vmem:[%s7902 + $0xc0] sm:$0xf]
      %v7931 = vld [vmem:[%s7902 + $0xc4] sm:$0xff]
      %v7932 = vld [vmem:[%s7902 + $0xcc] sm:$0xff]
      %v7933 = vld [vmem:[%s7902 + $0xd4] sm:$0xff]
      %v7934 = vld [vmem:[%s7902 + $0xdc] sm:$0xf]
      %v7935 = vld [vmem:[%s7902 + $0xe0] sm:$0xff]
      %v7936 = vld [vmem:[%s7902 + $0xe8] sm:$0xff]
      %v7937 = vld [vmem:[%s7902 + $0xf0] sm:$0xff]
      %v7938 = vld [vmem:[%s7902 + $0xf8] sm:$0xf]
      %v7939 = vld [vmem:[%s7902 + $0xfc] sm:$0xff]
      %v7940 = vld [vmem:[%s7902 + $0x104] sm:$0xff]
      %v7941 = vld [vmem:[%s7902 + $0x10c] sm:$0xff]
      %v7942 = vld [vmem:[%s7902 + $0x114] sm:$0xf]
      %v7943 = vld [vmem:[%s7902 + $0x118] sm:$0xff]
      %v7944 = vld [vmem:[%s7902 + $0x120] sm:$0xff]
      %v7945 = vld [vmem:[%s7902 + $0x128] sm:$0xff]
      %v7946 = vld [vmem:[%s7902 + $0x130] sm:$0xf]
      %v7947 = vld [vmem:[%s7902 + $0x134] sm:$0xff]
      %v7948 = vld [vmem:[%s7902 + $0x13c] sm:$0xff]
      %v7949 = vld [vmem:[%s7902 + $0x144] sm:$0xff]
      %v7950 = vld [vmem:[%s7902 + $0x14c] sm:$0xf]
      %v7951 = vld [vmem:[%s7902 + $0x150] sm:$0xff]
      %v7952 = vld [vmem:[%s7902 + $0x158] sm:$0xff]
      %v7953 = vld [vmem:[%s7902 + $0x160] sm:$0xff]
      %v7954 = vld [vmem:[%s7902 + $0x168] sm:$0xf]
      %v7955 = vld [vmem:[%s7902 + $0x16c] sm:$0xff]
      %v7956 = vld [vmem:[%s7902 + $0x174] sm:$0xff]
      %v7957 = vld [vmem:[%s7902 + $0x17c] sm:$0xff]
      %v7958 = vld [vmem:[%s7902 + $0x184] sm:$0xf]
      %v7959 = vld [vmem:[%s7902 + $0x188] sm:$0xff]
      %v7960 = vld [vmem:[%s7902 + $0x190] sm:$0xff]
      %v7961 = vld [vmem:[%s7902 + $0x198] sm:$0xff]
      %v7962 = vld [vmem:[%s7902 + $0x1a0] sm:$0xf]
      %v7963 = vld [vmem:[%s7902 + $0x1a4] sm:$0xff]
      %v7964 = vld [vmem:[%s7902 + $0x1ac] sm:$0xff]
      %v7965 = vld [vmem:[%s7902 + $0x1b4] sm:$0xff]
      %v7966 = vld [vmem:[%s7902 + $0x1bc] sm:$0xf]
      %v7967 = vld [vmem:[%s7902 + $0x1c0] sm:$0xff]
      %v7968 = vld [vmem:[%s7902 + $0x1c8] sm:$0xff]
      %v7969 = vld [vmem:[%s7902 + $0x1d0] sm:$0xff]
      %v7970 = vld [vmem:[%s7902 + $0x1d8] sm:$0xf]
      %v7971 = vld [vmem:[%s7902 + $0x1dc] sm:$0xff]
      %v7972 = vld [vmem:[%s7902 + $0x1e4] sm:$0xff]
      %v7973 = vld [vmem:[%s7902 + $0x1ec] sm:$0xff]
      %v7974 = vld [vmem:[%s7902 + $0x1f4] sm:$0xf]
      %v7975 = vld [vmem:[%s7902 + $0x1f8] sm:$0xff]
      %v7976 = vld [vmem:[%s7902 + $0x200] sm:$0xff]
      %v7977 = vld [vmem:[%s7902 + $0x208] sm:$0xff]
      %v7978 = vld [vmem:[%s7902 + $0x210] sm:$0xf]
      %v7979 = vld [vmem:[%s7902 + $0x214] sm:$0xff]
      %v7980 = vld [vmem:[%s7902 + $0x21c] sm:$0xff]
      %v7981 = vld [vmem:[%s7902 + $0x224] sm:$0xff]
      %v7982 = vld [vmem:[%s7902 + $0x22c] sm:$0xf]
      %v7983 = vld [vmem:[%s7902 + $0x230] sm:$0xff]
      %v7984 = vld [vmem:[%s7902 + $0x238] sm:$0xff]
      %v7985 = vld [vmem:[%s7902 + $0x240] sm:$0xff]
      %v7986 = vld [vmem:[%s7902 + $0x248] sm:$0xf]
      %v7987 = vld [vmem:[%s7902 + $0x24c] sm:$0xff]
      %v7988 = vld [vmem:[%s7902 + $0x254] sm:$0xff]
      %v7989 = vld [vmem:[%s7902 + $0x25c] sm:$0xff]
      %v7990 = vld [vmem:[%s7902 + $0x264] sm:$0xf]
      %v7991 = vld [vmem:[%s7902 + $0x268] sm:$0xff]
      %v7992 = vld [vmem:[%s7902 + $0x270] sm:$0xff]
      %v7993 = vld [vmem:[%s7902 + $0x278] sm:$0xff]
      %v7994 = vld [vmem:[%s7902 + $0x280] sm:$0xf]
      %v7995 = vld [vmem:[%s7902 + $0x284] sm:$0xff]
      %v7996 = vld [vmem:[%s7902 + $0x28c] sm:$0xff]
      %v7997 = vld [vmem:[%s7902 + $0x294] sm:$0xff]
      %v7998 = vld [vmem:[%s7902 + $0x29c] sm:$0xf]
      %v7999 = vld [vmem:[%s7902 + $0x2a0] sm:$0xff]
      %v8000 = vld [vmem:[%s7902 + $0x2a8] sm:$0xff]
      %v8001 = vld [vmem:[%s7902 + $0x2b0] sm:$0xff]
      %v8002 = vld [vmem:[%s7902 + $0x2b8] sm:$0xf]
      %v8003 = vld [vmem:[%s7902 + $0x2bc] sm:$0xff]
      %v8004 = vld [vmem:[%s7902 + $0x2c4] sm:$0xff]
      %v8005 = vld [vmem:[%s7902 + $0x2cc] sm:$0xff]
      %v8006 = vld [vmem:[%s7902 + $0x2d4] sm:$0xf]
      %v8007 = vld [vmem:[%s7902 + $0x2d8] sm:$0xff]
      %v8008 = vld [vmem:[%s7902 + $0x2e0] sm:$0xff]
      %v8009 = vld [vmem:[%s7902 + $0x2e8] sm:$0xff]
      %v8010 = vld [vmem:[%s7902 + $0x2f0] sm:$0xf]
      %v8011 = vld [vmem:[%s7902 + $0x2f4] sm:$0xff]
      %v8012 = vld [vmem:[%s7902 + $0x2fc] sm:$0xff]
      %v8013 = vld [vmem:[%s7902 + $0x304] sm:$0xff]
      %v8014 = vld [vmem:[%s7902 + $0x30c] sm:$0xf]
      %v8015 = vld [vmem:[%s7902 + $0x310] sm:$0x11]
      %v8016 = vld [vmem:[%s7902 + $0x318] sm:$0x11]
      %v8017 = vld [vmem:[%s7902 + $0x320] sm:$0x11]
      %v8018 = vld [vmem:[%s7902 + $0x328] sm:$0x1]
      %v8019 = vunpack.c.l.bf16 %v7903
      %v8020 = vunpack.c.h.bf16 %v7903
      %v8021 = vunpack.c.l.bf16 %v7904
      %v8022 = vunpack.c.h.bf16 %v7904
      %v8023 = vunpack.c.l.bf16 %v7905
      %v8024 = vunpack.c.h.bf16 %v7905
      %v8025 = vunpack.c.l.bf16 %v7906
      %v8026 = vunpack.c.l.bf16 %v7907
      %v8027 = vunpack.c.h.bf16 %v7907
      %v8028 = vunpack.c.l.bf16 %v7908
      %v8029 = vunpack.c.h.bf16 %v7908
      %v8030 = vunpack.c.l.bf16 %v7909
      %v8031 = vunpack.c.h.bf16 %v7909
      %v8032 = vunpack.c.l.bf16 %v7910
      %v8033 = vunpack.c.l.bf16 %v7911
      %v8034 = vunpack.c.h.bf16 %v7911
      %v8035 = vunpack.c.l.bf16 %v7912
      %v8036 = vunpack.c.h.bf16 %v7912
      %v8037 = vunpack.c.l.bf16 %v7913
      %v8038 = vunpack.c.h.bf16 %v7913
      %v8039 = vunpack.c.l.bf16 %v7914
      %v8040 = vunpack.c.l.bf16 %v7915
      %v8041 = vunpack.c.h.bf16 %v7915
      %v8042 = vunpack.c.l.bf16 %v7916
      %v8043 = vunpack.c.h.bf16 %v7916
      %v8044 = vunpack.c.l.bf16 %v7917
      %v8045 = vunpack.c.h.bf16 %v7917
      %v8046 = vunpack.c.l.bf16 %v7918
      %v8047 = vunpack.c.l.bf16 %v7919
      %v8048 = vunpack.c.h.bf16 %v7919
      %v8049 = vunpack.c.l.bf16 %v7920
      %v8050 = vunpack.c.h.bf16 %v7920
      %v8051 = vunpack.c.l.bf16 %v7921
      %v8052 = vunpack.c.h.bf16 %v7921
      %v8053 = vunpack.c.l.bf16 %v7922
      %v8054 = vunpack.c.l.bf16 %v7923
      %v8055 = vunpack.c.h.bf16 %v7923
      %v8056 = vunpack.c.l.bf16 %v7924
      %v8057 = vunpack.c.h.bf16 %v7924
      %v8058 = vunpack.c.l.bf16 %v7925
      %v8059 = vunpack.c.h.bf16 %v7925
      %v8060 = vunpack.c.l.bf16 %v7926
      %v8061 = vunpack.c.l.bf16 %v7927
      %v8062 = vunpack.c.h.bf16 %v7927
      %v8063 = vunpack.c.l.bf16 %v7928
      %v8064 = vunpack.c.h.bf16 %v7928
      %v8065 = vunpack.c.l.bf16 %v7929
      %v8066 = vunpack.c.h.bf16 %v7929
      %v8067 = vunpack.c.l.bf16 %v7930
      %v8068 = vunpack.c.l.bf16 %v7931
      %v8069 = vunpack.c.h.bf16 %v7931
      %v8070 = vunpack.c.l.bf16 %v7932
      %v8071 = vunpack.c.h.bf16 %v7932
      %v8072 = vunpack.c.l.bf16 %v7933
      %v8073 = vunpack.c.h.bf16 %v7933
      %v8074 = vunpack.c.l.bf16 %v7934
      %v8075 = vunpack.c.l.bf16 %v7935
      %v8076 = vunpack.c.h.bf16 %v7935
      %v8077 = vunpack.c.l.bf16 %v7936
      %v8078 = vunpack.c.h.bf16 %v7936
      %v8079 = vunpack.c.l.bf16 %v7937
      %v8080 = vunpack.c.h.bf16 %v7937
      %v8081 = vunpack.c.l.bf16 %v7938
      %v8082 = vunpack.c.l.bf16 %v7939
      %v8083 = vunpack.c.h.bf16 %v7939
      %v8084 = vunpack.c.l.bf16 %v7940
      %v8085 = vunpack.c.h.bf16 %v7940
      %v8086 = vunpack.c.l.bf16 %v7941
      %v8087 = vunpack.c.h.bf16 %v7941
      %v8088 = vunpack.c.l.bf16 %v7942
      %v8089 = vunpack.c.l.bf16 %v7943
      %v8090 = vunpack.c.h.bf16 %v7943
      %v8091 = vunpack.c.l.bf16 %v7944
      %v8092 = vunpack.c.h.bf16 %v7944
      %v8093 = vunpack.c.l.bf16 %v7945
      %v8094 = vunpack.c.h.bf16 %v7945
      %v8095 = vunpack.c.l.bf16 %v7946
      %v8096 = vunpack.c.l.bf16 %v7947
      %v8097 = vunpack.c.h.bf16 %v7947
      %v8098 = vunpack.c.l.bf16 %v7948
      %v8099 = vunpack.c.h.bf16 %v7948
      %v8100 = vunpack.c.l.bf16 %v7949
      %v8101 = vunpack.c.h.bf16 %v7949
      %v8102 = vunpack.c.l.bf16 %v7950
      %v8103 = vunpack.c.l.bf16 %v7951
      %v8104 = vunpack.c.h.bf16 %v7951
      %v8105 = vunpack.c.l.bf16 %v7952
      %v8106 = vunpack.c.h.bf16 %v7952
      %v8107 = vunpack.c.l.bf16 %v7953
      %v8108 = vunpack.c.h.bf16 %v7953
      %v8109 = vunpack.c.l.bf16 %v7954
      %v8110 = vunpack.c.l.bf16 %v7955
      %v8111 = vunpack.c.h.bf16 %v7955
      %v8112 = vunpack.c.l.bf16 %v7956
      %v8113 = vunpack.c.h.bf16 %v7956
      %v8114 = vunpack.c.l.bf16 %v7957
      %v8115 = vunpack.c.h.bf16 %v7957
      %v8116 = vunpack.c.l.bf16 %v7958
      %v8117 = vunpack.c.l.bf16 %v7959
      %v8118 = vunpack.c.h.bf16 %v7959
      %v8119 = vunpack.c.l.bf16 %v7960
      %v8120 = vunpack.c.h.bf16 %v7960
      %v8121 = vunpack.c.l.bf16 %v7961
      %v8122 = vunpack.c.h.bf16 %v7961
      %v8123 = vunpack.c.l.bf16 %v7962
      %v8124 = vunpack.c.l.bf16 %v7963
      %v8125 = vunpack.c.h.bf16 %v7963
      %v8126 = vunpack.c.l.bf16 %v7964
      %v8127 = vunpack.c.h.bf16 %v7964
      %v8128 = vunpack.c.l.bf16 %v7965
      %v8129 = vunpack.c.h.bf16 %v7965
      %v8130 = vunpack.c.l.bf16 %v7966
      %v8131 = vunpack.c.l.bf16 %v7967
      %v8132 = vunpack.c.h.bf16 %v7967
      %v8133 = vunpack.c.l.bf16 %v7968
      %v8134 = vunpack.c.h.bf16 %v7968
      %v8135 = vunpack.c.l.bf16 %v7969
      %v8136 = vunpack.c.h.bf16 %v7969
      %v8137 = vunpack.c.l.bf16 %v7970
      %v8138 = vunpack.c.l.bf16 %v7971
      %v8139 = vunpack.c.h.bf16 %v7971
      %v8140 = vunpack.c.l.bf16 %v7972
      %v8141 = vunpack.c.h.bf16 %v7972
      %v8142 = vunpack.c.l.bf16 %v7973
      %v8143 = vunpack.c.h.bf16 %v7973
      %v8144 = vunpack.c.l.bf16 %v7974
      %v8145 = vunpack.c.l.bf16 %v7975
      %v8146 = vunpack.c.h.bf16 %v7975
      %v8147 = vunpack.c.l.bf16 %v7976
      %v8148 = vunpack.c.h.bf16 %v7976
      %v8149 = vunpack.c.l.bf16 %v7977
      %v8150 = vunpack.c.h.bf16 %v7977
      %v8151 = vunpack.c.l.bf16 %v7978
      %v8152 = vunpack.c.l.bf16 %v7979
      %v8153 = vunpack.c.h.bf16 %v7979
      %v8154 = vunpack.c.l.bf16 %v7980
      %v8155 = vunpack.c.h.bf16 %v7980
      %v8156 = vunpack.c.l.bf16 %v7981
      %v8157 = vunpack.c.h.bf16 %v7981
      %v8158 = vunpack.c.l.bf16 %v7982
      %v8159 = vunpack.c.l.bf16 %v7983
      %v8160 = vunpack.c.h.bf16 %v7983
      %v8161 = vunpack.c.l.bf16 %v7984
      %v8162 = vunpack.c.h.bf16 %v7984
      %v8163 = vunpack.c.l.bf16 %v7985
      %v8164 = vunpack.c.h.bf16 %v7985
      %v8165 = vunpack.c.l.bf16 %v7986
      %v8166 = vunpack.c.l.bf16 %v7987
      %v8167 = vunpack.c.h.bf16 %v7987
      %v8168 = vunpack.c.l.bf16 %v7988
      %v8169 = vunpack.c.h.bf16 %v7988
      %v8170 = vunpack.c.l.bf16 %v7989
      %v8171 = vunpack.c.h.bf16 %v7989
      %v8172 = vunpack.c.l.bf16 %v7990
      %v8173 = vunpack.c.l.bf16 %v7991
      %v8174 = vunpack.c.h.bf16 %v7991
      %v8175 = vunpack.c.l.bf16 %v7992
      %v8176 = vunpack.c.h.bf16 %v7992
      %v8177 = vunpack.c.l.bf16 %v7993
      %v8178 = vunpack.c.h.bf16 %v7993
      %v8179 = vunpack.c.l.bf16 %v7994
      %v8180 = vunpack.c.l.bf16 %v7995
      %v8181 = vunpack.c.h.bf16 %v7995
      %v8182 = vunpack.c.l.bf16 %v7996
      %v8183 = vunpack.c.h.bf16 %v7996
      %v8184 = vunpack.c.l.bf16 %v7997
      %v8185 = vunpack.c.h.bf16 %v7997
      %v8186 = vunpack.c.l.bf16 %v7998
      %v8187 = vunpack.c.l.bf16 %v7999
      %v8188 = vunpack.c.h.bf16 %v7999
      %v8189 = vunpack.c.l.bf16 %v8000
      %v8190 = vunpack.c.h.bf16 %v8000
      %v8191 = vunpack.c.l.bf16 %v8001
      %v8192 = vunpack.c.h.bf16 %v8001
      %v8193 = vunpack.c.l.bf16 %v8002
      %v8194 = vunpack.c.l.bf16 %v8003
      %v8195 = vunpack.c.h.bf16 %v8003
      %v8196 = vunpack.c.l.bf16 %v8004
      %v8197 = vunpack.c.h.bf16 %v8004
      %v8198 = vunpack.c.l.bf16 %v8005
      %v8199 = vunpack.c.h.bf16 %v8005
      %v8200 = vunpack.c.l.bf16 %v8006
      %v8201 = vunpack.c.l.bf16 %v8007
      %v8202 = vunpack.c.h.bf16 %v8007
      %v8203 = vunpack.c.l.bf16 %v8008
      %v8204 = vunpack.c.h.bf16 %v8008
      %v8205 = vunpack.c.l.bf16 %v8009
      %v8206 = vunpack.c.h.bf16 %v8009
      %v8207 = vunpack.c.l.bf16 %v8010
      %v8208 = vunpack.c.l.bf16 %v8011
      %v8209 = vunpack.c.h.bf16 %v8011
      %v8210 = vunpack.c.l.bf16 %v8012
      %v8211 = vunpack.c.h.bf16 %v8012
      %v8212 = vunpack.c.l.bf16 %v8013
      %v8213 = vunpack.c.h.bf16 %v8013
      %v8214 = vunpack.c.l.bf16 %v8014
      %v8215 = vunpack.c.l.bf16 %v8015
      %v8216 = vunpack.c.h.bf16 %v8015
      %v8217 = vunpack.c.l.bf16 %v8016
      %v8218 = vunpack.c.h.bf16 %v8016
      %v8219 = vunpack.c.l.bf16 %v8017
      %v8220 = vunpack.c.h.bf16 %v8017
      %v8221 = vunpack.c.l.bf16 %v8018
      %v8224 = vrot.slane %v7555, 3
      %v8225 = vrot.slane %v7578, 3
      %vm8227 = vcmask 793600
      %v8228 = vsel %vm8227, %v8225, 0
      %v8231 = vsel %vm4815, %v8215, 0
      %v8234 = vsel %vm4815, %v8216, 0
      %v8237 = vsel %vm4815, %v8217, 0
      %v8240 = vsel %vm4815, %v8218, 0
      %v8243 = vsel %vm4815, %v8219, 0
      %v8246 = vsel %vm4815, %v8220, 0
      %v8249 = vsel %vm4815, %v8221, 0
      %8251 = vmatpush.msra.mxu0 %v8124
      %8252 = vmatpush.msra.mxu0 %v8117
      %8253 = vmatpush.msra.mxu0 %v8110
      %8254 = vmatpush.msra.mxu0 %v8103
      %8255 = vmatpush.msra.mxu0 %v8096
      %8256 = vmatpush.msra.mxu0 %v8089
      %8257 = vmatpush.msra.mxu0 %v8082
      %8258 = vmatpush.msra.mxu0 %v8075
      %8259 = vmatpush.msra.mxu0 %v8068
      %8260 = vmatpush.msra.mxu0 %v8061
      %8261 = vmatpush.msra.mxu0 %v8054
      %8262 = vmatpush.msra.mxu0 %v8047
      %8263 = vmatpush.msra.mxu0 %v8040
      %8264 = vmatpush.msra.mxu0 %v8033
      %8265 = vmatpush.msra.mxu0 %v8026
      %8266 = vmatpush.msra.mxu0 %v8019
      %8267 = vmatmul.f32.gmra.mxu0 %v8224
      %v8268 = vpop.f32.mrf.mxu0
      %v8269 = vadd.f32 0.0, %v8268
      %8270 = vdwg.mxu0
      %8271 = vmatpush.msra.mxu0 0.0
      %8272 = vmatpush.msra.mxu0 0.0
      %8273 = vmatpush.msra.mxu0 0.0
      %8274 = vmatpush.msra.mxu0 %v8231
      %8275 = vmatpush.msra.mxu0 %v8208
      %8276 = vmatpush.msra.mxu0 %v8201
      %8277 = vmatpush.msra.mxu0 %v8194
      %8278 = vmatpush.msra.mxu0 %v8187
      %8279 = vmatpush.msra.mxu0 %v8180
      %8280 = vmatpush.msra.mxu0 %v8173
      %8281 = vmatpush.msra.mxu0 %v8166
      %8282 = vmatpush.msra.mxu0 %v8159
      %8283 = vmatpush.msra.mxu0 %v8152
      %8284 = vmatpush.msra.mxu0 %v8145
      %8285 = vmatpush.msra.mxu0 %v8138
      %8286 = vmatpush.msra.mxu0 %v8131
      %8287 = vmatmul.f32.gmra.mxu0 %v8228
      %v8288 = vpop.f32.mrf.mxu0
      %v8289 = vadd.f32 %v8269, %v8288
      %8290 = vdwg.mxu0
      %8291 = vmatpush.msra.mxu0 %v8125
      %8292 = vmatpush.msra.mxu0 %v8118
      %8293 = vmatpush.msra.mxu0 %v8111
      %8294 = vmatpush.msra.mxu0 %v8104
      %8295 = vmatpush.msra.mxu0 %v8097
      %8296 = vmatpush.msra.mxu0 %v8090
      %8297 = vmatpush.msra.mxu0 %v8083
      %8298 = vmatpush.msra.mxu0 %v8076
      %8299 = vmatpush.msra.mxu0 %v8069
      %8300 = vmatpush.msra.mxu0 %v8062
      %8301 = vmatpush.msra.mxu0 %v8055
      %8302 = vmatpush.msra.mxu0 %v8048
      %8303 = vmatpush.msra.mxu0 %v8041
      %8304 = vmatpush.msra.mxu0 %v8034
      %8305 = vmatpush.msra.mxu0 %v8027
      %8306 = vmatpush.msra.mxu0 %v8020
      %8307 = vmatmul.f32.gmra.mxu0 %v8224
      %v8308 = vpop.f32.mrf.mxu0
      %v8309 = vadd.f32 0.0, %v8308
      %8310 = vdwg.mxu0
      %8311 = vmatpush.msra.mxu0 0.0
      %8312 = vmatpush.msra.mxu0 0.0
      %8313 = vmatpush.msra.mxu0 0.0
      %8314 = vmatpush.msra.mxu0 %v8234
      %8315 = vmatpush.msra.mxu0 %v8209
      %8316 = vmatpush.msra.mxu0 %v8202
      %8317 = vmatpush.msra.mxu0 %v8195
      %8318 = vmatpush.msra.mxu0 %v8188
      %8319 = vmatpush.msra.mxu0 %v8181
      %8320 = vmatpush.msra.mxu0 %v8174
      %8321 = vmatpush.msra.mxu0 %v8167
      %8322 = vmatpush.msra.mxu0 %v8160
      %8323 = vmatpush.msra.mxu0 %v8153
      %8324 = vmatpush.msra.mxu0 %v8146
      %8325 = vmatpush.msra.mxu0 %v8139
      %8326 = vmatpush.msra.mxu0 %v8132
      %8327 = vmatmul.f32.gmra.mxu0 %v8228
      %v8328 = vpop.f32.mrf.mxu0
      %v8329 = vadd.f32 %v8309, %v8328
      %8330 = vdwg.mxu0
      %8331 = vmatpush.msra.mxu0 %v8126
      %8332 = vmatpush.msra.mxu0 %v8119
      %8333 = vmatpush.msra.mxu0 %v8112
      %8334 = vmatpush.msra.mxu0 %v8105
      %8335 = vmatpush.msra.mxu0 %v8098
      %8336 = vmatpush.msra.mxu0 %v8091
      %8337 = vmatpush.msra.mxu0 %v8084
      %8338 = vmatpush.msra.mxu0 %v8077
      %8339 = vmatpush.msra.mxu0 %v8070
      %8340 = vmatpush.msra.mxu0 %v8063
      %8341 = vmatpush.msra.mxu0 %v8056
      %8342 = vmatpush.msra.mxu0 %v8049
      %8343 = vmatpush.msra.mxu0 %v8042
      %8344 = vmatpush.msra.mxu0 %v8035
      %8345 = vmatpush.msra.mxu0 %v8028
      %8346 = vmatpush.msra.mxu0 %v8021
      %8347 = vmatmul.f32.gmra.mxu0 %v8224
      %v8348 = vpop.f32.mrf.mxu0
      %v8349 = vadd.f32 0.0, %v8348
      %8350 = vdwg.mxu0
      %8351 = vmatpush.msra.mxu0 0.0
      %8352 = vmatpush.msra.mxu0 0.0
      %8353 = vmatpush.msra.mxu0 0.0
      %8354 = vmatpush.msra.mxu0 %v8237
      %8355 = vmatpush.msra.mxu0 %v8210
      %8356 = vmatpush.msra.mxu0 %v8203
      %8357 = vmatpush.msra.mxu0 %v8196
      %8358 = vmatpush.msra.mxu0 %v8189
      %8359 = vmatpush.msra.mxu0 %v8182
      %8360 = vmatpush.msra.mxu0 %v8175
      %8361 = vmatpush.msra.mxu0 %v8168
      %8362 = vmatpush.msra.mxu0 %v8161
      %8363 = vmatpush.msra.mxu0 %v8154
      %8364 = vmatpush.msra.mxu0 %v8147
      %8365 = vmatpush.msra.mxu0 %v8140
      %8366 = vmatpush.msra.mxu0 %v8133
      %8367 = vmatmul.f32.gmra.mxu0 %v8228
      %v8368 = vpop.f32.mrf.mxu0
      %v8369 = vadd.f32 %v8349, %v8368
      %8370 = vdwg.mxu0
      %8371 = vmatpush.msra.mxu0 %v8127
      %8372 = vmatpush.msra.mxu0 %v8120
      %8373 = vmatpush.msra.mxu0 %v8113
      %8374 = vmatpush.msra.mxu0 %v8106
      %8375 = vmatpush.msra.mxu0 %v8099
      %8376 = vmatpush.msra.mxu0 %v8092
      %8377 = vmatpush.msra.mxu0 %v8085
      %8378 = vmatpush.msra.mxu0 %v8078
      %8379 = vmatpush.msra.mxu0 %v8071
      %8380 = vmatpush.msra.mxu0 %v8064
      %8381 = vmatpush.msra.mxu0 %v8057
      %8382 = vmatpush.msra.mxu0 %v8050
      %8383 = vmatpush.msra.mxu0 %v8043
      %8384 = vmatpush.msra.mxu0 %v8036
      %8385 = vmatpush.msra.mxu0 %v8029
      %8386 = vmatpush.msra.mxu0 %v8022
      %8387 = vmatmul.f32.gmra.mxu0 %v8224
      %v8388 = vpop.f32.mrf.mxu0
      %v8389 = vadd.f32 0.0, %v8388
      %8390 = vdwg.mxu0
      %8391 = vmatpush.msra.mxu0 0.0
      %8392 = vmatpush.msra.mxu0 0.0
      %8393 = vmatpush.msra.mxu0 0.0
      %8394 = vmatpush.msra.mxu0 %v8240
      %8395 = vmatpush.msra.mxu0 %v8211
      %8396 = vmatpush.msra.mxu0 %v8204
      %8397 = vmatpush.msra.mxu0 %v8197
      %8398 = vmatpush.msra.mxu0 %v8190
      %8399 = vmatpush.msra.mxu0 %v8183
      %8400 = vmatpush.msra.mxu0 %v8176
      %8401 = vmatpush.msra.mxu0 %v8169
      %8402 = vmatpush.msra.mxu0 %v8162
      %8403 = vmatpush.msra.mxu0 %v8155
      %8404 = vmatpush.msra.mxu0 %v8148
      %8405 = vmatpush.msra.mxu0 %v8141
      %8406 = vmatpush.msra.mxu0 %v8134
      %8407 = vmatmul.f32.gmra.mxu0 %v8228
      %v8408 = vpop.f32.mrf.mxu0
      %v8409 = vadd.f32 %v8389, %v8408
      %8410 = vdwg.mxu0
      %8411 = vmatpush.msra.mxu0 %v8128
      %8412 = vmatpush.msra.mxu0 %v8121
      %8413 = vmatpush.msra.mxu0 %v8114
      %8414 = vmatpush.msra.mxu0 %v8107
      %8415 = vmatpush.msra.mxu0 %v8100
      %8416 = vmatpush.msra.mxu0 %v8093
      %8417 = vmatpush.msra.mxu0 %v8086
      %8418 = vmatpush.msra.mxu0 %v8079
      %8419 = vmatpush.msra.mxu0 %v8072
      %8420 = vmatpush.msra.mxu0 %v8065
      %8421 = vmatpush.msra.mxu0 %v8058
      %8422 = vmatpush.msra.mxu0 %v8051
      %8423 = vmatpush.msra.mxu0 %v8044
      %8424 = vmatpush.msra.mxu0 %v8037
      %8425 = vmatpush.msra.mxu0 %v8030
      %8426 = vmatpush.msra.mxu0 %v8023
      %8427 = vmatmul.f32.gmra.mxu0 %v8224
      %v8428 = vpop.f32.mrf.mxu0
      %v8429 = vadd.f32 0.0, %v8428
      %8430 = vdwg.mxu0
      %8431 = vmatpush.msra.mxu0 0.0
      %8432 = vmatpush.msra.mxu0 0.0
      %8433 = vmatpush.msra.mxu0 0.0
      %8434 = vmatpush.msra.mxu0 %v8243
      %8435 = vmatpush.msra.mxu0 %v8212
      %8436 = vmatpush.msra.mxu0 %v8205
      %8437 = vmatpush.msra.mxu0 %v8198
      %8438 = vmatpush.msra.mxu0 %v8191
      %8439 = vmatpush.msra.mxu0 %v8184
      %8440 = vmatpush.msra.mxu0 %v8177
      %8441 = vmatpush.msra.mxu0 %v8170
      %8442 = vmatpush.msra.mxu0 %v8163
      %8443 = vmatpush.msra.mxu0 %v8156
      %8444 = vmatpush.msra.mxu0 %v8149
      %8445 = vmatpush.msra.mxu0 %v8142
      %8446 = vmatpush.msra.mxu0 %v8135
      %8447 = vmatmul.f32.gmra.mxu0 %v8228
      %v8448 = vpop.f32.mrf.mxu0
      %v8449 = vadd.f32 %v8429, %v8448
      %8450 = vdwg.mxu0
      %8451 = vmatpush.msra.mxu0 %v8129
      %8452 = vmatpush.msra.mxu0 %v8122
      %8453 = vmatpush.msra.mxu0 %v8115
      %8454 = vmatpush.msra.mxu0 %v8108
      %8455 = vmatpush.msra.mxu0 %v8101
      %8456 = vmatpush.msra.mxu0 %v8094
      %8457 = vmatpush.msra.mxu0 %v8087
      %8458 = vmatpush.msra.mxu0 %v8080
      %8459 = vmatpush.msra.mxu0 %v8073
      %8460 = vmatpush.msra.mxu0 %v8066
      %8461 = vmatpush.msra.mxu0 %v8059
      %8462 = vmatpush.msra.mxu0 %v8052
      %8463 = vmatpush.msra.mxu0 %v8045
      %8464 = vmatpush.msra.mxu0 %v8038
      %8465 = vmatpush.msra.mxu0 %v8031
      %8466 = vmatpush.msra.mxu0 %v8024
      %8467 = vmatmul.f32.gmra.mxu0 %v8224
      %v8468 = vpop.f32.mrf.mxu0
      %v8469 = vadd.f32 0.0, %v8468
      %8470 = vdwg.mxu0
      %8471 = vmatpush.msra.mxu0 0.0
      %8472 = vmatpush.msra.mxu0 0.0
      %8473 = vmatpush.msra.mxu0 0.0
      %8474 = vmatpush.msra.mxu0 %v8246
      %8475 = vmatpush.msra.mxu0 %v8213
      %8476 = vmatpush.msra.mxu0 %v8206
      %8477 = vmatpush.msra.mxu0 %v8199
      %8478 = vmatpush.msra.mxu0 %v8192
      %8479 = vmatpush.msra.mxu0 %v8185
      %8480 = vmatpush.msra.mxu0 %v8178
      %8481 = vmatpush.msra.mxu0 %v8171
      %8482 = vmatpush.msra.mxu0 %v8164
      %8483 = vmatpush.msra.mxu0 %v8157
      %8484 = vmatpush.msra.mxu0 %v8150
      %8485 = vmatpush.msra.mxu0 %v8143
      %8486 = vmatpush.msra.mxu0 %v8136
      %8487 = vmatmul.f32.gmra.mxu0 %v8228
      %v8488 = vpop.f32.mrf.mxu0
      %v8489 = vadd.f32 %v8469, %v8488
      %8490 = vdwg.mxu0
      %8491 = vmatpush.msra.mxu0 %v8130
      %8492 = vmatpush.msra.mxu0 %v8123
      %8493 = vmatpush.msra.mxu0 %v8116
      %8494 = vmatpush.msra.mxu0 %v8109
      %8495 = vmatpush.msra.mxu0 %v8102
      %8496 = vmatpush.msra.mxu0 %v8095
      %8497 = vmatpush.msra.mxu0 %v8088
      %8498 = vmatpush.msra.mxu0 %v8081
      %8499 = vmatpush.msra.mxu0 %v8074
      %8500 = vmatpush.msra.mxu0 %v8067
      %8501 = vmatpush.msra.mxu0 %v8060
      %8502 = vmatpush.msra.mxu0 %v8053
      %8503 = vmatpush.msra.mxu0 %v8046
      %8504 = vmatpush.msra.mxu0 %v8039
      %8505 = vmatpush.msra.mxu0 %v8032
      %8506 = vmatpush.msra.mxu0 %v8025
      %8507 = vmatmul.f32.gmra.mxu0 %v8224
      %v8508 = vpop.f32.mrf.mxu0
      %v8509 = vadd.f32 0.0, %v8508
      %8510 = vdwg.mxu0
      %8511 = vmatpush.msra.mxu0 0.0
      %8512 = vmatpush.msra.mxu0 0.0
      %8513 = vmatpush.msra.mxu0 0.0
      %8514 = vmatpush.msra.mxu0 %v8249
      %8515 = vmatpush.msra.mxu0 %v8214
      %8516 = vmatpush.msra.mxu0 %v8207
      %8517 = vmatpush.msra.mxu0 %v8200
      %8518 = vmatpush.msra.mxu0 %v8193
      %8519 = vmatpush.msra.mxu0 %v8186
      %8520 = vmatpush.msra.mxu0 %v8179
      %8521 = vmatpush.msra.mxu0 %v8172
      %8522 = vmatpush.msra.mxu0 %v8165
      %8523 = vmatpush.msra.mxu0 %v8158
      %8524 = vmatpush.msra.mxu0 %v8151
      %8525 = vmatpush.msra.mxu0 %v8144
      %8526 = vmatpush.msra.mxu0 %v8137
      %8527 = vmatmul.f32.gmra.mxu0 %v8228
      %v8528 = vpop.f32.mrf.mxu0
      %v8529 = vadd.f32 %v8509, %v8528
      %8530 = vdwg.mxu0
      %v8531 = vsel %vm8227, %v7578, 0
      %v8534 = vsel %vm4815, %v7895, 0
      %v8537 = vsel %vm4815, %v7896, 0
      %v8540 = vsel %vm4815, %v7897, 0
      %v8543 = vsel %vm4815, %v7898, 0
      %v8546 = vsel %vm4815, %v7899, 0
      %v8549 = vsel %vm4815, %v7900, 0
      %v8552 = vsel %vm4815, %v7901, 0
      %8554 = vmatpush.msra.mxu0 %v7804
      %8555 = vmatpush.msra.mxu0 %v7797
      %8556 = vmatpush.msra.mxu0 %v7790
      %8557 = vmatpush.msra.mxu0 %v7783
      %8558 = vmatpush.msra.mxu0 %v7776
      %8559 = vmatpush.msra.mxu0 %v7769
      %8560 = vmatpush.msra.mxu0 %v7762
      %8561 = vmatpush.msra.mxu0 %v7755
      %8562 = vmatpush.msra.mxu0 %v7748
      %8563 = vmatpush.msra.mxu0 %v7741
      %8564 = vmatpush.msra.mxu0 %v7734
      %8565 = vmatpush.msra.mxu0 %v7727
      %8566 = vmatpush.msra.mxu0 %v7720
      %8567 = vmatpush.msra.mxu0 %v7713
      %8568 = vmatpush.msra.mxu0 %v7706
      %8569 = vmatpush.msra.mxu0 %v7699
      %8570 = vmatmul.f32.gmra.mxu0 %v7555
      %v8571 = vpop.f32.mrf.mxu0
      %v8572 = vadd.f32 %v8289, %v8571
      %8573 = vdwg.mxu0
      %8574 = vmatpush.msra.mxu0 0.0
      %8575 = vmatpush.msra.mxu0 0.0
      %8576 = vmatpush.msra.mxu0 0.0
      %8577 = vmatpush.msra.mxu0 %v8534
      %8578 = vmatpush.msra.mxu0 %v7888
      %8579 = vmatpush.msra.mxu0 %v7881
      %8580 = vmatpush.msra.mxu0 %v7874
      %8581 = vmatpush.msra.mxu0 %v7867
      %8582 = vmatpush.msra.mxu0 %v7860
      %8583 = vmatpush.msra.mxu0 %v7853
      %8584 = vmatpush.msra.mxu0 %v7846
      %8585 = vmatpush.msra.mxu0 %v7839
      %8586 = vmatpush.msra.mxu0 %v7832
      %8587 = vmatpush.msra.mxu0 %v7825
      %8588 = vmatpush.msra.mxu0 %v7818
      %8589 = vmatpush.msra.mxu0 %v7811
      %8590 = vmatmul.f32.gmra.mxu0 %v8531
      %v8591 = vpop.f32.mrf.mxu0
      %v8592 = vadd.f32 %v8572, %v8591
      %8593 = vdwg.mxu0
      %8594 = vmatpush.msra.mxu0 %v7805
      %8595 = vmatpush.msra.mxu0 %v7798
      %8596 = vmatpush.msra.mxu0 %v7791
      %8597 = vmatpush.msra.mxu0 %v7784
      %8598 = vmatpush.msra.mxu0 %v7777
      %8599 = vmatpush.msra.mxu0 %v7770
      %8600 = vmatpush.msra.mxu0 %v7763
      %8601 = vmatpush.msra.mxu0 %v7756
      %8602 = vmatpush.msra.mxu0 %v7749
      %8603 = vmatpush.msra.mxu0 %v7742
      %8604 = vmatpush.msra.mxu0 %v7735
      %8605 = vmatpush.msra.mxu0 %v7728
      %8606 = vmatpush.msra.mxu0 %v7721
      %8607 = vmatpush.msra.mxu0 %v7714
      %8608 = vmatpush.msra.mxu0 %v7707
      %8609 = vmatpush.msra.mxu0 %v7700
      %8610 = vmatmul.f32.gmra.mxu0 %v7555
      %v8611 = vpop.f32.mrf.mxu0
      %v8612 = vadd.f32 %v8329, %v8611
      %8613 = vdwg.mxu0
      %8614 = vmatpush.msra.mxu0 0.0
      %8615 = vmatpush.msra.mxu0 0.0
      %8616 = vmatpush.msra.mxu0 0.0
      %8617 = vmatpush.msra.mxu0 %v8537
      %8618 = vmatpush.msra.mxu0 %v7889
      %8619 = vmatpush.msra.mxu0 %v7882
      %8620 = vmatpush.msra.mxu0 %v7875
      %8621 = vmatpush.msra.mxu0 %v7868
      %8622 = vmatpush.msra.mxu0 %v7861
      %8623 = vmatpush.msra.mxu0 %v7854
      %8624 = vmatpush.msra.mxu0 %v7847
      %8625 = vmatpush.msra.mxu0 %v7840
      %8626 = vmatpush.msra.mxu0 %v7833
      %8627 = vmatpush.msra.mxu0 %v7826
      %8628 = vmatpush.msra.mxu0 %v7819
      %8629 = vmatpush.msra.mxu0 %v7812
      %8630 = vmatmul.f32.gmra.mxu0 %v8531
      %v8631 = vpop.f32.mrf.mxu0
      %v8632 = vadd.f32 %v8612, %v8631
      %8633 = vdwg.mxu0
      %8634 = vmatpush.msra.mxu0 %v7806
      %8635 = vmatpush.msra.mxu0 %v7799
      %8636 = vmatpush.msra.mxu0 %v7792
      %8637 = vmatpush.msra.mxu0 %v7785
      %8638 = vmatpush.msra.mxu0 %v7778
      %8639 = vmatpush.msra.mxu0 %v7771
      %8640 = vmatpush.msra.mxu0 %v7764
      %8641 = vmatpush.msra.mxu0 %v7757
      %8642 = vmatpush.msra.mxu0 %v7750
      %8643 = vmatpush.msra.mxu0 %v7743
      %8644 = vmatpush.msra.mxu0 %v7736
      %8645 = vmatpush.msra.mxu0 %v7729
      %8646 = vmatpush.msra.mxu0 %v7722
      %8647 = vmatpush.msra.mxu0 %v7715
      %8648 = vmatpush.msra.mxu0 %v7708
      %8649 = vmatpush.msra.mxu0 %v7701
      %8650 = vmatmul.f32.gmra.mxu0 %v7555
      %v8651 = vpop.f32.mrf.mxu0
      %v8652 = vadd.f32 %v8369, %v8651
      %8653 = vdwg.mxu0
      %8654 = vmatpush.msra.mxu0 0.0
      %8655 = vmatpush.msra.mxu0 0.0
      %8656 = vmatpush.msra.mxu0 0.0
      %8657 = vmatpush.msra.mxu0 %v8540
      %8658 = vmatpush.msra.mxu0 %v7890
      %8659 = vmatpush.msra.mxu0 %v7883
      %8660 = vmatpush.msra.mxu0 %v7876
      %8661 = vmatpush.msra.mxu0 %v7869
      %8662 = vmatpush.msra.mxu0 %v7862
      %8663 = vmatpush.msra.mxu0 %v7855
      %8664 = vmatpush.msra.mxu0 %v7848
      %8665 = vmatpush.msra.mxu0 %v7841
      %8666 = vmatpush.msra.mxu0 %v7834
      %8667 = vmatpush.msra.mxu0 %v7827
      %8668 = vmatpush.msra.mxu0 %v7820
      %8669 = vmatpush.msra.mxu0 %v7813
      %8670 = vmatmul.f32.gmra.mxu0 %v8531
      %v8671 = vpop.f32.mrf.mxu0
      %v8672 = vadd.f32 %v8652, %v8671
      %8673 = vdwg.mxu0
      %8674 = vmatpush.msra.mxu0 %v7807
      %8675 = vmatpush.msra.mxu0 %v7800
      %8676 = vmatpush.msra.mxu0 %v7793
      %8677 = vmatpush.msra.mxu0 %v7786
      %8678 = vmatpush.msra.mxu0 %v7779
      %8679 = vmatpush.msra.mxu0 %v7772
      %8680 = vmatpush.msra.mxu0 %v7765
      %8681 = vmatpush.msra.mxu0 %v7758
      %8682 = vmatpush.msra.mxu0 %v7751
      %8683 = vmatpush.msra.mxu0 %v7744
      %8684 = vmatpush.msra.mxu0 %v7737
      %8685 = vmatpush.msra.mxu0 %v7730
      %8686 = vmatpush.msra.mxu0 %v7723
      %8687 = vmatpush.msra.mxu0 %v7716
      %8688 = vmatpush.msra.mxu0 %v7709
      %8689 = vmatpush.msra.mxu0 %v7702
      %8690 = vmatmul.f32.gmra.mxu0 %v7555
      %v8691 = vpop.f32.mrf.mxu0
      %v8692 = vadd.f32 %v8409, %v8691
      %8693 = vdwg.mxu0
      %8694 = vmatpush.msra.mxu0 0.0
      %8695 = vmatpush.msra.mxu0 0.0
      %8696 = vmatpush.msra.mxu0 0.0
      %8697 = vmatpush.msra.mxu0 %v8543
      %8698 = vmatpush.msra.mxu0 %v7891
      %8699 = vmatpush.msra.mxu0 %v7884
      %8700 = vmatpush.msra.mxu0 %v7877
      %8701 = vmatpush.msra.mxu0 %v7870
      %8702 = vmatpush.msra.mxu0 %v7863
      %8703 = vmatpush.msra.mxu0 %v7856
      %8704 = vmatpush.msra.mxu0 %v7849
      %8705 = vmatpush.msra.mxu0 %v7842
      %8706 = vmatpush.msra.mxu0 %v7835
      %8707 = vmatpush.msra.mxu0 %v7828
      %8708 = vmatpush.msra.mxu0 %v7821
      %8709 = vmatpush.msra.mxu0 %v7814
      %8710 = vmatmul.f32.gmra.mxu0 %v8531
      %v8711 = vpop.f32.mrf.mxu0
      %v8712 = vadd.f32 %v8692, %v8711
      %8713 = vdwg.mxu0
      %8714 = vmatpush.msra.mxu0 %v7808
      %8715 = vmatpush.msra.mxu0 %v7801
      %8716 = vmatpush.msra.mxu0 %v7794
      %8717 = vmatpush.msra.mxu0 %v7787
      %8718 = vmatpush.msra.mxu0 %v7780
      %8719 = vmatpush.msra.mxu0 %v7773
      %8720 = vmatpush.msra.mxu0 %v7766
      %8721 = vmatpush.msra.mxu0 %v7759
      %8722 = vmatpush.msra.mxu0 %v7752
      %8723 = vmatpush.msra.mxu0 %v7745
      %8724 = vmatpush.msra.mxu0 %v7738
      %8725 = vmatpush.msra.mxu0 %v7731
      %8726 = vmatpush.msra.mxu0 %v7724
      %8727 = vmatpush.msra.mxu0 %v7717
      %8728 = vmatpush.msra.mxu0 %v7710
      %8729 = vmatpush.msra.mxu0 %v7703
      %8730 = vmatmul.f32.gmra.mxu0 %v7555
      %v8731 = vpop.f32.mrf.mxu0
      %v8732 = vadd.f32 %v8449, %v8731
      %8733 = vdwg.mxu0
      %8734 = vmatpush.msra.mxu0 0.0
      %8735 = vmatpush.msra.mxu0 0.0
      %8736 = vmatpush.msra.mxu0 0.0
      %8737 = vmatpush.msra.mxu0 %v8546
      %8738 = vmatpush.msra.mxu0 %v7892
      %8739 = vmatpush.msra.mxu0 %v7885
      %8740 = vmatpush.msra.mxu0 %v7878
      %8741 = vmatpush.msra.mxu0 %v7871
      %8742 = vmatpush.msra.mxu0 %v7864
      %8743 = vmatpush.msra.mxu0 %v7857
      %8744 = vmatpush.msra.mxu0 %v7850
      %8745 = vmatpush.msra.mxu0 %v7843
      %8746 = vmatpush.msra.mxu0 %v7836
      %8747 = vmatpush.msra.mxu0 %v7829
      %8748 = vmatpush.msra.mxu0 %v7822
      %8749 = vmatpush.msra.mxu0 %v7815
      %8750 = vmatmul.f32.gmra.mxu0 %v8531
      %v8751 = vpop.f32.mrf.mxu0
      %v8752 = vadd.f32 %v8732, %v8751
      %8753 = vdwg.mxu0
      %8754 = vmatpush.msra.mxu0 %v7809
      %8755 = vmatpush.msra.mxu0 %v7802
      %8756 = vmatpush.msra.mxu0 %v7795
      %8757 = vmatpush.msra.mxu0 %v7788
      %8758 = vmatpush.msra.mxu0 %v7781
      %8759 = vmatpush.msra.mxu0 %v7774
      %8760 = vmatpush.msra.mxu0 %v7767
      %8761 = vmatpush.msra.mxu0 %v7760
      %8762 = vmatpush.msra.mxu0 %v7753
      %8763 = vmatpush.msra.mxu0 %v7746
      %8764 = vmatpush.msra.mxu0 %v7739
      %8765 = vmatpush.msra.mxu0 %v7732
      %8766 = vmatpush.msra.mxu0 %v7725
      %8767 = vmatpush.msra.mxu0 %v7718
      %8768 = vmatpush.msra.mxu0 %v7711
      %8769 = vmatpush.msra.mxu0 %v7704
      %8770 = vmatmul.f32.gmra.mxu0 %v7555
      %v8771 = vpop.f32.mrf.mxu0
      %v8772 = vadd.f32 %v8489, %v8771
      %8773 = vdwg.mxu0
      %8774 = vmatpush.msra.mxu0 0.0
      %8775 = vmatpush.msra.mxu0 0.0
      %8776 = vmatpush.msra.mxu0 0.0
      %8777 = vmatpush.msra.mxu0 %v8549
      %8778 = vmatpush.msra.mxu0 %v7893
      %8779 = vmatpush.msra.mxu0 %v7886
      %8780 = vmatpush.msra.mxu0 %v7879
      %8781 = vmatpush.msra.mxu0 %v7872
      %8782 = vmatpush.msra.mxu0 %v7865
      %8783 = vmatpush.msra.mxu0 %v7858
      %8784 = vmatpush.msra.mxu0 %v7851
      %8785 = vmatpush.msra.mxu0 %v7844
      %8786 = vmatpush.msra.mxu0 %v7837
      %8787 = vmatpush.msra.mxu0 %v7830
      %8788 = vmatpush.msra.mxu0 %v7823
      %8789 = vmatpush.msra.mxu0 %v7816
      %8790 = vmatmul.f32.gmra.mxu0 %v8531
      %v8791 = vpop.f32.mrf.mxu0
      %v8792 = vadd.f32 %v8772, %v8791
      %8793 = vdwg.mxu0
      %8794 = vmatpush.msra.mxu0 %v7810
      %8795 = vmatpush.msra.mxu0 %v7803
      %8796 = vmatpush.msra.mxu0 %v7796
      %8797 = vmatpush.msra.mxu0 %v7789
      %8798 = vmatpush.msra.mxu0 %v7782
      %8799 = vmatpush.msra.mxu0 %v7775
      %8800 = vmatpush.msra.mxu0 %v7768
      %8801 = vmatpush.msra.mxu0 %v7761
      %8802 = vmatpush.msra.mxu0 %v7754
      %8803 = vmatpush.msra.mxu0 %v7747
      %8804 = vmatpush.msra.mxu0 %v7740
      %8805 = vmatpush.msra.mxu0 %v7733
      %8806 = vmatpush.msra.mxu0 %v7726
      %8807 = vmatpush.msra.mxu0 %v7719
      %8808 = vmatpush.msra.mxu0 %v7712
      %8809 = vmatpush.msra.mxu0 %v7705
      %8810 = vmatmul.f32.gmra.mxu0 %v7555
      %v8811 = vpop.f32.mrf.mxu0
      %v8812 = vadd.f32 %v8529, %v8811
      %8813 = vdwg.mxu0
      %8814 = vmatpush.msra.mxu0 0.0
      %8815 = vmatpush.msra.mxu0 0.0
      %8816 = vmatpush.msra.mxu0 0.0
      %8817 = vmatpush.msra.mxu0 %v8552
      %8818 = vmatpush.msra.mxu0 %v7894
      %8819 = vmatpush.msra.mxu0 %v7887
      %8820 = vmatpush.msra.mxu0 %v7880
      %8821 = vmatpush.msra.mxu0 %v7873
      %8822 = vmatpush.msra.mxu0 %v7866
      %8823 = vmatpush.msra.mxu0 %v7859
      %8824 = vmatpush.msra.mxu0 %v7852
      %8825 = vmatpush.msra.mxu0 %v7845
      %8826 = vmatpush.msra.mxu0 %v7838
      %8827 = vmatpush.msra.mxu0 %v7831
      %8828 = vmatpush.msra.mxu0 %v7824
      %8829 = vmatpush.msra.mxu0 %v7817
      %8830 = vmatmul.f32.gmra.mxu0 %v8531
      %v8831 = vpop.f32.mrf.mxu0
      %v8832 = vadd.f32 %v8812, %v8831
      %8833 = vdwg.mxu0
      %s8834 = scalar_lea.vmem %s17, 1624
      %v8835 = vld [vmem:[%s8834] sm:$0xff]
      %v8836 = vld [vmem:[%s8834 + $0x8] sm:$0xff]
      %v8837 = vld [vmem:[%s8834 + $0x10] sm:$0xff]
      %v8838 = vld [vmem:[%s8834 + $0x18] sm:$0xf]
      %v8839 = vld [vmem:[%s8834 + $0x1c] sm:$0xff]
      %v8840 = vld [vmem:[%s8834 + $0x24] sm:$0xff]
      %v8841 = vld [vmem:[%s8834 + $0x2c] sm:$0xff]
      %v8842 = vld [vmem:[%s8834 + $0x34] sm:$0xf]
      %v8843 = vld [vmem:[%s8834 + $0x38] sm:$0xff]
      %v8844 = vld [vmem:[%s8834 + $0x40] sm:$0xff]
      %v8845 = vld [vmem:[%s8834 + $0x48] sm:$0xff]
      %v8846 = vld [vmem:[%s8834 + $0x50] sm:$0xf]
      %v8847 = vld [vmem:[%s8834 + $0x54] sm:$0xff]
      %v8848 = vld [vmem:[%s8834 + $0x5c] sm:$0xff]
      %v8849 = vld [vmem:[%s8834 + $0x64] sm:$0xff]
      %v8850 = vld [vmem:[%s8834 + $0x6c] sm:$0xf]
      %v8851 = vld [vmem:[%s8834 + $0x70] sm:$0xff]
      %v8852 = vld [vmem:[%s8834 + $0x78] sm:$0xff]
      %v8853 = vld [vmem:[%s8834 + $0x80] sm:$0xff]
      %v8854 = vld [vmem:[%s8834 + $0x88] sm:$0xf]
      %v8855 = vld [vmem:[%s8834 + $0x8c] sm:$0xff]
      %v8856 = vld [vmem:[%s8834 + $0x94] sm:$0xff]
      %v8857 = vld [vmem:[%s8834 + $0x9c] sm:$0xff]
      %v8858 = vld [vmem:[%s8834 + $0xa4] sm:$0xf]
      %v8859 = vld [vmem:[%s8834 + $0xa8] sm:$0xff]
      %v8860 = vld [vmem:[%s8834 + $0xb0] sm:$0xff]
      %v8861 = vld [vmem:[%s8834 + $0xb8] sm:$0xff]
      %v8862 = vld [vmem:[%s8834 + $0xc0] sm:$0xf]
      %v8863 = vld [vmem:[%s8834 + $0xc4] sm:$0xff]
      %v8864 = vld [vmem:[%s8834 + $0xcc] sm:$0xff]
      %v8865 = vld [vmem:[%s8834 + $0xd4] sm:$0xff]
      %v8866 = vld [vmem:[%s8834 + $0xdc] sm:$0xf]
      %v8867 = vld [vmem:[%s8834 + $0xe0] sm:$0xff]
      %v8868 = vld [vmem:[%s8834 + $0xe8] sm:$0xff]
      %v8869 = vld [vmem:[%s8834 + $0xf0] sm:$0xff]
      %v8870 = vld [vmem:[%s8834 + $0xf8] sm:$0xf]
      %v8871 = vld [vmem:[%s8834 + $0xfc] sm:$0xff]
      %v8872 = vld [vmem:[%s8834 + $0x104] sm:$0xff]
      %v8873 = vld [vmem:[%s8834 + $0x10c] sm:$0xff]
      %v8874 = vld [vmem:[%s8834 + $0x114] sm:$0xf]
      %v8875 = vld [vmem:[%s8834 + $0x118] sm:$0xff]
      %v8876 = vld [vmem:[%s8834 + $0x120] sm:$0xff]
      %v8877 = vld [vmem:[%s8834 + $0x128] sm:$0xff]
      %v8878 = vld [vmem:[%s8834 + $0x130] sm:$0xf]
      %v8879 = vld [vmem:[%s8834 + $0x134] sm:$0xff]
      %v8880 = vld [vmem:[%s8834 + $0x13c] sm:$0xff]
      %v8881 = vld [vmem:[%s8834 + $0x144] sm:$0xff]
      %v8882 = vld [vmem:[%s8834 + $0x14c] sm:$0xf]
      %v8883 = vld [vmem:[%s8834 + $0x150] sm:$0xff]
      %v8884 = vld [vmem:[%s8834 + $0x158] sm:$0xff]
      %v8885 = vld [vmem:[%s8834 + $0x160] sm:$0xff]
      %v8886 = vld [vmem:[%s8834 + $0x168] sm:$0xf]
      %v8887 = vld [vmem:[%s8834 + $0x16c] sm:$0xff]
      %v8888 = vld [vmem:[%s8834 + $0x174] sm:$0xff]
      %v8889 = vld [vmem:[%s8834 + $0x17c] sm:$0xff]
      %v8890 = vld [vmem:[%s8834 + $0x184] sm:$0xf]
      %v8891 = vld [vmem:[%s8834 + $0x188] sm:$0xff]
      %v8892 = vld [vmem:[%s8834 + $0x190] sm:$0xff]
      %v8893 = vld [vmem:[%s8834 + $0x198] sm:$0xff]
      %v8894 = vld [vmem:[%s8834 + $0x1a0] sm:$0xf]
      %v8895 = vld [vmem:[%s8834 + $0x1a4] sm:$0xff]
      %v8896 = vld [vmem:[%s8834 + $0x1ac] sm:$0xff]
      %v8897 = vld [vmem:[%s8834 + $0x1b4] sm:$0xff]
      %v8898 = vld [vmem:[%s8834 + $0x1bc] sm:$0xf]
      %v8899 = vld [vmem:[%s8834 + $0x1c0] sm:$0xff]
      %v8900 = vld [vmem:[%s8834 + $0x1c8] sm:$0xff]
      %v8901 = vld [vmem:[%s8834 + $0x1d0] sm:$0xff]
      %v8902 = vld [vmem:[%s8834 + $0x1d8] sm:$0xf]
      %v8903 = vld [vmem:[%s8834 + $0x1dc] sm:$0xff]
      %v8904 = vld [vmem:[%s8834 + $0x1e4] sm:$0xff]
      %v8905 = vld [vmem:[%s8834 + $0x1ec] sm:$0xff]
      %v8906 = vld [vmem:[%s8834 + $0x1f4] sm:$0xf]
      %v8907 = vld [vmem:[%s8834 + $0x1f8] sm:$0xff]
      %v8908 = vld [vmem:[%s8834 + $0x200] sm:$0xff]
      %v8909 = vld [vmem:[%s8834 + $0x208] sm:$0xff]
      %v8910 = vld [vmem:[%s8834 + $0x210] sm:$0xf]
      %v8911 = vld [vmem:[%s8834 + $0x214] sm:$0xff]
      %v8912 = vld [vmem:[%s8834 + $0x21c] sm:$0xff]
      %v8913 = vld [vmem:[%s8834 + $0x224] sm:$0xff]
      %v8914 = vld [vmem:[%s8834 + $0x22c] sm:$0xf]
      %v8915 = vld [vmem:[%s8834 + $0x230] sm:$0xff]
      %v8916 = vld [vmem:[%s8834 + $0x238] sm:$0xff]
      %v8917 = vld [vmem:[%s8834 + $0x240] sm:$0xff]
      %v8918 = vld [vmem:[%s8834 + $0x248] sm:$0xf]
      %v8919 = vld [vmem:[%s8834 + $0x24c] sm:$0xff]
      %v8920 = vld [vmem:[%s8834 + $0x254] sm:$0xff]
      %v8921 = vld [vmem:[%s8834 + $0x25c] sm:$0xff]
      %v8922 = vld [vmem:[%s8834 + $0x264] sm:$0xf]
      %v8923 = vld [vmem:[%s8834 + $0x268] sm:$0xff]
      %v8924 = vld [vmem:[%s8834 + $0x270] sm:$0xff]
      %v8925 = vld [vmem:[%s8834 + $0x278] sm:$0xff]
      %v8926 = vld [vmem:[%s8834 + $0x280] sm:$0xf]
      %v8927 = vld [vmem:[%s8834 + $0x284] sm:$0xff]
      %v8928 = vld [vmem:[%s8834 + $0x28c] sm:$0xff]
      %v8929 = vld [vmem:[%s8834 + $0x294] sm:$0xff]
      %v8930 = vld [vmem:[%s8834 + $0x29c] sm:$0xf]
      %v8931 = vld [vmem:[%s8834 + $0x2a0] sm:$0xff]
      %v8932 = vld [vmem:[%s8834 + $0x2a8] sm:$0xff]
      %v8933 = vld [vmem:[%s8834 + $0x2b0] sm:$0xff]
      %v8934 = vld [vmem:[%s8834 + $0x2b8] sm:$0xf]
      %v8935 = vld [vmem:[%s8834 + $0x2bc] sm:$0xff]
      %v8936 = vld [vmem:[%s8834 + $0x2c4] sm:$0xff]
      %v8937 = vld [vmem:[%s8834 + $0x2cc] sm:$0xff]
      %v8938 = vld [vmem:[%s8834 + $0x2d4] sm:$0xf]
      %v8939 = vld [vmem:[%s8834 + $0x2d8] sm:$0xff]
      %v8940 = vld [vmem:[%s8834 + $0x2e0] sm:$0xff]
      %v8941 = vld [vmem:[%s8834 + $0x2e8] sm:$0xff]
      %v8942 = vld [vmem:[%s8834 + $0x2f0] sm:$0xf]
      %v8943 = vld [vmem:[%s8834 + $0x2f4] sm:$0xff]
      %v8944 = vld [vmem:[%s8834 + $0x2fc] sm:$0xff]
      %v8945 = vld [vmem:[%s8834 + $0x304] sm:$0xff]
      %v8946 = vld [vmem:[%s8834 + $0x30c] sm:$0xf]
      %v8947 = vld [vmem:[%s8834 + $0x310] sm:$0x11]
      %v8948 = vld [vmem:[%s8834 + $0x318] sm:$0x11]
      %v8949 = vld [vmem:[%s8834 + $0x320] sm:$0x11]
      %v8950 = vld [vmem:[%s8834 + $0x328] sm:$0x1]
      %v8951 = vunpack.c.l.bf16 %v8835
      %v8952 = vunpack.c.h.bf16 %v8835
      %v8953 = vunpack.c.l.bf16 %v8836
      %v8954 = vunpack.c.h.bf16 %v8836
      %v8955 = vunpack.c.l.bf16 %v8837
      %v8956 = vunpack.c.h.bf16 %v8837
      %v8957 = vunpack.c.l.bf16 %v8838
      %v8958 = vunpack.c.l.bf16 %v8839
      %v8959 = vunpack.c.h.bf16 %v8839
      %v8960 = vunpack.c.l.bf16 %v8840
      %v8961 = vunpack.c.h.bf16 %v8840
      %v8962 = vunpack.c.l.bf16 %v8841
      %v8963 = vunpack.c.h.bf16 %v8841
      %v8964 = vunpack.c.l.bf16 %v8842
      %v8965 = vunpack.c.l.bf16 %v8843
      %v8966 = vunpack.c.h.bf16 %v8843
      %v8967 = vunpack.c.l.bf16 %v8844
      %v8968 = vunpack.c.h.bf16 %v8844
      %v8969 = vunpack.c.l.bf16 %v8845
      %v8970 = vunpack.c.h.bf16 %v8845
      %v8971 = vunpack.c.l.bf16 %v8846
      %v8972 = vunpack.c.l.bf16 %v8847
      %v8973 = vunpack.c.h.bf16 %v8847
      %v8974 = vunpack.c.l.bf16 %v8848
      %v8975 = vunpack.c.h.bf16 %v8848
      %v8976 = vunpack.c.l.bf16 %v8849
      %v8977 = vunpack.c.h.bf16 %v8849
      %v8978 = vunpack.c.l.bf16 %v8850
      %v8979 = vunpack.c.l.bf16 %v8851
      %v8980 = vunpack.c.h.bf16 %v8851
      %v8981 = vunpack.c.l.bf16 %v8852
      %v8982 = vunpack.c.h.bf16 %v8852
      %v8983 = vunpack.c.l.bf16 %v8853
      %v8984 = vunpack.c.h.bf16 %v8853
      %v8985 = vunpack.c.l.bf16 %v8854
      %v8986 = vunpack.c.l.bf16 %v8855
      %v8987 = vunpack.c.h.bf16 %v8855
      %v8988 = vunpack.c.l.bf16 %v8856
      %v8989 = vunpack.c.h.bf16 %v8856
      %v8990 = vunpack.c.l.bf16 %v8857
      %v8991 = vunpack.c.h.bf16 %v8857
      %v8992 = vunpack.c.l.bf16 %v8858
      %v8993 = vunpack.c.l.bf16 %v8859
      %v8994 = vunpack.c.h.bf16 %v8859
      %v8995 = vunpack.c.l.bf16 %v8860
      %v8996 = vunpack.c.h.bf16 %v8860
      %v8997 = vunpack.c.l.bf16 %v8861
      %v8998 = vunpack.c.h.bf16 %v8861
      %v8999 = vunpack.c.l.bf16 %v8862
      %v9000 = vunpack.c.l.bf16 %v8863
      %v9001 = vunpack.c.h.bf16 %v8863
      %v9002 = vunpack.c.l.bf16 %v8864
      %v9003 = vunpack.c.h.bf16 %v8864
      %v9004 = vunpack.c.l.bf16 %v8865
      %v9005 = vunpack.c.h.bf16 %v8865
      %v9006 = vunpack.c.l.bf16 %v8866
      %v9007 = vunpack.c.l.bf16 %v8867
      %v9008 = vunpack.c.h.bf16 %v8867
      %v9009 = vunpack.c.l.bf16 %v8868
      %v9010 = vunpack.c.h.bf16 %v8868
      %v9011 = vunpack.c.l.bf16 %v8869
      %v9012 = vunpack.c.h.bf16 %v8869
      %v9013 = vunpack.c.l.bf16 %v8870
      %v9014 = vunpack.c.l.bf16 %v8871
      %v9015 = vunpack.c.h.bf16 %v8871
      %v9016 = vunpack.c.l.bf16 %v8872
      %v9017 = vunpack.c.h.bf16 %v8872
      %v9018 = vunpack.c.l.bf16 %v8873
      %v9019 = vunpack.c.h.bf16 %v8873
      %v9020 = vunpack.c.l.bf16 %v8874
      %v9021 = vunpack.c.l.bf16 %v8875
      %v9022 = vunpack.c.h.bf16 %v8875
      %v9023 = vunpack.c.l.bf16 %v8876
      %v9024 = vunpack.c.h.bf16 %v8876
      %v9025 = vunpack.c.l.bf16 %v8877
      %v9026 = vunpack.c.h.bf16 %v8877
      %v9027 = vunpack.c.l.bf16 %v8878
      %v9028 = vunpack.c.l.bf16 %v8879
      %v9029 = vunpack.c.h.bf16 %v8879
      %v9030 = vunpack.c.l.bf16 %v8880
      %v9031 = vunpack.c.h.bf16 %v8880
      %v9032 = vunpack.c.l.bf16 %v8881
      %v9033 = vunpack.c.h.bf16 %v8881
      %v9034 = vunpack.c.l.bf16 %v8882
      %v9035 = vunpack.c.l.bf16 %v8883
      %v9036 = vunpack.c.h.bf16 %v8883
      %v9037 = vunpack.c.l.bf16 %v8884
      %v9038 = vunpack.c.h.bf16 %v8884
      %v9039 = vunpack.c.l.bf16 %v8885
      %v9040 = vunpack.c.h.bf16 %v8885
      %v9041 = vunpack.c.l.bf16 %v8886
      %v9042 = vunpack.c.l.bf16 %v8887
      %v9043 = vunpack.c.h.bf16 %v8887
      %v9044 = vunpack.c.l.bf16 %v8888
      %v9045 = vunpack.c.h.bf16 %v8888
      %v9046 = vunpack.c.l.bf16 %v8889
      %v9047 = vunpack.c.h.bf16 %v8889
      %v9048 = vunpack.c.l.bf16 %v8890
      %v9049 = vunpack.c.l.bf16 %v8891
      %v9050 = vunpack.c.h.bf16 %v8891
      %v9051 = vunpack.c.l.bf16 %v8892
      %v9052 = vunpack.c.h.bf16 %v8892
      %v9053 = vunpack.c.l.bf16 %v8893
      %v9054 = vunpack.c.h.bf16 %v8893
      %v9055 = vunpack.c.l.bf16 %v8894
      %v9056 = vunpack.c.l.bf16 %v8895
      %v9057 = vunpack.c.h.bf16 %v8895
      %v9058 = vunpack.c.l.bf16 %v8896
      %v9059 = vunpack.c.h.bf16 %v8896
      %v9060 = vunpack.c.l.bf16 %v8897
      %v9061 = vunpack.c.h.bf16 %v8897
      %v9062 = vunpack.c.l.bf16 %v8898
      %v9063 = vunpack.c.l.bf16 %v8899
      %v9064 = vunpack.c.h.bf16 %v8899
      %v9065 = vunpack.c.l.bf16 %v8900
      %v9066 = vunpack.c.h.bf16 %v8900
      %v9067 = vunpack.c.l.bf16 %v8901
      %v9068 = vunpack.c.h.bf16 %v8901
      %v9069 = vunpack.c.l.bf16 %v8902
      %v9070 = vunpack.c.l.bf16 %v8903
      %v9071 = vunpack.c.h.bf16 %v8903
      %v9072 = vunpack.c.l.bf16 %v8904
      %v9073 = vunpack.c.h.bf16 %v8904
      %v9074 = vunpack.c.l.bf16 %v8905
      %v9075 = vunpack.c.h.bf16 %v8905
      %v9076 = vunpack.c.l.bf16 %v8906
      %v9077 = vunpack.c.l.bf16 %v8907
      %v9078 = vunpack.c.h.bf16 %v8907
      %v9079 = vunpack.c.l.bf16 %v8908
      %v9080 = vunpack.c.h.bf16 %v8908
      %v9081 = vunpack.c.l.bf16 %v8909
      %v9082 = vunpack.c.h.bf16 %v8909
      %v9083 = vunpack.c.l.bf16 %v8910
      %v9084 = vunpack.c.l.bf16 %v8911
      %v9085 = vunpack.c.h.bf16 %v8911
      %v9086 = vunpack.c.l.bf16 %v8912
      %v9087 = vunpack.c.h.bf16 %v8912
      %v9088 = vunpack.c.l.bf16 %v8913
      %v9089 = vunpack.c.h.bf16 %v8913
      %v9090 = vunpack.c.l.bf16 %v8914
      %v9091 = vunpack.c.l.bf16 %v8915
      %v9092 = vunpack.c.h.bf16 %v8915
      %v9093 = vunpack.c.l.bf16 %v8916
      %v9094 = vunpack.c.h.bf16 %v8916
      %v9095 = vunpack.c.l.bf16 %v8917
      %v9096 = vunpack.c.h.bf16 %v8917
      %v9097 = vunpack.c.l.bf16 %v8918
      %v9098 = vunpack.c.l.bf16 %v8919
      %v9099 = vunpack.c.h.bf16 %v8919
      %v9100 = vunpack.c.l.bf16 %v8920
      %v9101 = vunpack.c.h.bf16 %v8920
      %v9102 = vunpack.c.l.bf16 %v8921
      %v9103 = vunpack.c.h.bf16 %v8921
      %v9104 = vunpack.c.l.bf16 %v8922
      %v9105 = vunpack.c.l.bf16 %v8923
      %v9106 = vunpack.c.h.bf16 %v8923
      %v9107 = vunpack.c.l.bf16 %v8924
      %v9108 = vunpack.c.h.bf16 %v8924
      %v9109 = vunpack.c.l.bf16 %v8925
      %v9110 = vunpack.c.h.bf16 %v8925
      %v9111 = vunpack.c.l.bf16 %v8926
      %v9112 = vunpack.c.l.bf16 %v8927
      %v9113 = vunpack.c.h.bf16 %v8927
      %v9114 = vunpack.c.l.bf16 %v8928
      %v9115 = vunpack.c.h.bf16 %v8928
      %v9116 = vunpack.c.l.bf16 %v8929
      %v9117 = vunpack.c.h.bf16 %v8929
      %v9118 = vunpack.c.l.bf16 %v8930
      %v9119 = vunpack.c.l.bf16 %v8931
      %v9120 = vunpack.c.h.bf16 %v8931
      %v9121 = vunpack.c.l.bf16 %v8932
      %v9122 = vunpack.c.h.bf16 %v8932
      %v9123 = vunpack.c.l.bf16 %v8933
      %v9124 = vunpack.c.h.bf16 %v8933
      %v9125 = vunpack.c.l.bf16 %v8934
      %v9126 = vunpack.c.l.bf16 %v8935
      %v9127 = vunpack.c.h.bf16 %v8935
      %v9128 = vunpack.c.l.bf16 %v8936
      %v9129 = vunpack.c.h.bf16 %v8936
      %v9130 = vunpack.c.l.bf16 %v8937
      %v9131 = vunpack.c.h.bf16 %v8937
      %v9132 = vunpack.c.l.bf16 %v8938
      %v9133 = vunpack.c.l.bf16 %v8939
      %v9134 = vunpack.c.h.bf16 %v8939
      %v9135 = vunpack.c.l.bf16 %v8940
      %v9136 = vunpack.c.h.bf16 %v8940
      %v9137 = vunpack.c.l.bf16 %v8941
      %v9138 = vunpack.c.h.bf16 %v8941
      %v9139 = vunpack.c.l.bf16 %v8942
      %v9140 = vunpack.c.l.bf16 %v8943
      %v9141 = vunpack.c.h.bf16 %v8943
      %v9142 = vunpack.c.l.bf16 %v8944
      %v9143 = vunpack.c.h.bf16 %v8944
      %v9144 = vunpack.c.l.bf16 %v8945
      %v9145 = vunpack.c.h.bf16 %v8945
      %v9146 = vunpack.c.l.bf16 %v8946
      %v9147 = vunpack.c.l.bf16 %v8947
      %v9148 = vunpack.c.h.bf16 %v8947
      %v9149 = vunpack.c.l.bf16 %v8948
      %v9150 = vunpack.c.h.bf16 %v8948
      %v9151 = vunpack.c.l.bf16 %v8949
      %v9152 = vunpack.c.h.bf16 %v8949
      %v9153 = vunpack.c.l.bf16 %v8950
      %vm9156 = vcmask 1041408
      %v9157 = vrot.slane %v7555, 6
      %v9158 = vrot.slane %v7558, 6
      %v9159 = vsel %vm9156, %v9157, %v9158
      %v9160 = vrot.slane %v7578, 6
      %v9161 = vrot.slane %v7581, 6
      %v9162 = vsel %vm9156, %v9160, %v9161
      %v9164 = vsel %vm8227, %v9162, 0
      %v9167 = vsel %vm4815, %v9147, 0
      %v9170 = vsel %vm4815, %v9148, 0
      %v9173 = vsel %vm4815, %v9149, 0
      %v9176 = vsel %vm4815, %v9150, 0
      %v9179 = vsel %vm4815, %v9151, 0
      %v9182 = vsel %vm4815, %v9152, 0
      %v9185 = vsel %vm4815, %v9153, 0
      %9187 = vmatpush.msra.mxu0 %v9056
      %9188 = vmatpush.msra.mxu0 %v9049
      %9189 = vmatpush.msra.mxu0 %v9042
      %9190 = vmatpush.msra.mxu0 %v9035
      %9191 = vmatpush.msra.mxu0 %v9028
      %9192 = vmatpush.msra.mxu0 %v9021
      %9193 = vmatpush.msra.mxu0 %v9014
      %9194 = vmatpush.msra.mxu0 %v9007
      %9195 = vmatpush.msra.mxu0 %v9000
      %9196 = vmatpush.msra.mxu0 %v8993
      %9197 = vmatpush.msra.mxu0 %v8986
      %9198 = vmatpush.msra.mxu0 %v8979
      %9199 = vmatpush.msra.mxu0 %v8972
      %9200 = vmatpush.msra.mxu0 %v8965
      %9201 = vmatpush.msra.mxu0 %v8958
      %9202 = vmatpush.msra.mxu0 %v8951
      %9203 = vmatmul.f32.gmra.mxu0 %v9159
      %v9204 = vpop.f32.mrf.mxu0
      %v9205 = vadd.f32 0.0, %v9204
      %9206 = vdwg.mxu0
      %9207 = vmatpush.msra.mxu0 0.0
      %9208 = vmatpush.msra.mxu0 0.0
      %9209 = vmatpush.msra.mxu0 0.0
      %9210 = vmatpush.msra.mxu0 %v9167
      %9211 = vmatpush.msra.mxu0 %v9140
      %9212 = vmatpush.msra.mxu0 %v9133
      %9213 = vmatpush.msra.mxu0 %v9126
      %9214 = vmatpush.msra.mxu0 %v9119
      %9215 = vmatpush.msra.mxu0 %v9112
      %9216 = vmatpush.msra.mxu0 %v9105
      %9217 = vmatpush.msra.mxu0 %v9098
      %9218 = vmatpush.msra.mxu0 %v9091
      %9219 = vmatpush.msra.mxu0 %v9084
      %9220 = vmatpush.msra.mxu0 %v9077
      %9221 = vmatpush.msra.mxu0 %v9070
      %9222 = vmatpush.msra.mxu0 %v9063
      %9223 = vmatmul.f32.gmra.mxu0 %v9164
      %v9224 = vpop.f32.mrf.mxu0
      %v9225 = vadd.f32 %v9205, %v9224
      %9226 = vdwg.mxu0
      %9227 = vmatpush.msra.mxu0 %v9057
      %9228 = vmatpush.msra.mxu0 %v9050
      %9229 = vmatpush.msra.mxu0 %v9043
      %9230 = vmatpush.msra.mxu0 %v9036
      %9231 = vmatpush.msra.mxu0 %v9029
      %9232 = vmatpush.msra.mxu0 %v9022
      %9233 = vmatpush.msra.mxu0 %v9015
      %9234 = vmatpush.msra.mxu0 %v9008
      %9235 = vmatpush.msra.mxu0 %v9001
      %9236 = vmatpush.msra.mxu0 %v8994
      %9237 = vmatpush.msra.mxu0 %v8987
      %9238 = vmatpush.msra.mxu0 %v8980
      %9239 = vmatpush.msra.mxu0 %v8973
      %9240 = vmatpush.msra.mxu0 %v8966
      %9241 = vmatpush.msra.mxu0 %v8959
      %9242 = vmatpush.msra.mxu0 %v8952
      %9243 = vmatmul.f32.gmra.mxu0 %v9159
      %v9244 = vpop.f32.mrf.mxu0
      %v9245 = vadd.f32 0.0, %v9244
      %9246 = vdwg.mxu0
      %9247 = vmatpush.msra.mxu0 0.0
      %9248 = vmatpush.msra.mxu0 0.0
      %9249 = vmatpush.msra.mxu0 0.0
      %9250 = vmatpush.msra.mxu0 %v9170
      %9251 = vmatpush.msra.mxu0 %v9141
      %9252 = vmatpush.msra.mxu0 %v9134
      %9253 = vmatpush.msra.mxu0 %v9127
      %9254 = vmatpush.msra.mxu0 %v9120
      %9255 = vmatpush.msra.mxu0 %v9113
      %9256 = vmatpush.msra.mxu0 %v9106
      %9257 = vmatpush.msra.mxu0 %v9099
      %9258 = vmatpush.msra.mxu0 %v9092
      %9259 = vmatpush.msra.mxu0 %v9085
      %9260 = vmatpush.msra.mxu0 %v9078
      %9261 = vmatpush.msra.mxu0 %v9071
      %9262 = vmatpush.msra.mxu0 %v9064
      %9263 = vmatmul.f32.gmra.mxu0 %v9164
      %v9264 = vpop.f32.mrf.mxu0
      %v9265 = vadd.f32 %v9245, %v9264
      %9266 = vdwg.mxu0
      %9267 = vmatpush.msra.mxu0 %v9058
      %9268 = vmatpush.msra.mxu0 %v9051
      %9269 = vmatpush.msra.mxu0 %v9044
      %9270 = vmatpush.msra.mxu0 %v9037
      %9271 = vmatpush.msra.mxu0 %v9030
      %9272 = vmatpush.msra.mxu0 %v9023
      %9273 = vmatpush.msra.mxu0 %v9016
      %9274 = vmatpush.msra.mxu0 %v9009
      %9275 = vmatpush.msra.mxu0 %v9002
      %9276 = vmatpush.msra.mxu0 %v8995
      %9277 = vmatpush.msra.mxu0 %v8988
      %9278 = vmatpush.msra.mxu0 %v8981
      %9279 = vmatpush.msra.mxu0 %v8974
      %9280 = vmatpush.msra.mxu0 %v8967
      %9281 = vmatpush.msra.mxu0 %v8960
      %9282 = vmatpush.msra.mxu0 %v8953
      %9283 = vmatmul.f32.gmra.mxu0 %v9159
      %v9284 = vpop.f32.mrf.mxu0
      %v9285 = vadd.f32 0.0, %v9284
      %9286 = vdwg.mxu0
      %9287 = vmatpush.msra.mxu0 0.0
      %9288 = vmatpush.msra.mxu0 0.0
      %9289 = vmatpush.msra.mxu0 0.0
      %9290 = vmatpush.msra.mxu0 %v9173
      %9291 = vmatpush.msra.mxu0 %v9142
      %9292 = vmatpush.msra.mxu0 %v9135
      %9293 = vmatpush.msra.mxu0 %v9128
      %9294 = vmatpush.msra.mxu0 %v9121
      %9295 = vmatpush.msra.mxu0 %v9114
      %9296 = vmatpush.msra.mxu0 %v9107
      %9297 = vmatpush.msra.mxu0 %v9100
      %9298 = vmatpush.msra.mxu0 %v9093
      %9299 = vmatpush.msra.mxu0 %v9086
      %9300 = vmatpush.msra.mxu0 %v9079
      %9301 = vmatpush.msra.mxu0 %v9072
      %9302 = vmatpush.msra.mxu0 %v9065
      %9303 = vmatmul.f32.gmra.mxu0 %v9164
      %v9304 = vpop.f32.mrf.mxu0
      %v9305 = vadd.f32 %v9285, %v9304
      %9306 = vdwg.mxu0
      %9307 = vmatpush.msra.mxu0 %v9059
      %9308 = vmatpush.msra.mxu0 %v9052
      %9309 = vmatpush.msra.mxu0 %v9045
      %9310 = vmatpush.msra.mxu0 %v9038
      %9311 = vmatpush.msra.mxu0 %v9031
      %9312 = vmatpush.msra.mxu0 %v9024
      %9313 = vmatpush.msra.mxu0 %v9017
      %9314 = vmatpush.msra.mxu0 %v9010
      %9315 = vmatpush.msra.mxu0 %v9003
      %9316 = vmatpush.msra.mxu0 %v8996
      %9317 = vmatpush.msra.mxu0 %v8989
      %9318 = vmatpush.msra.mxu0 %v8982
      %9319 = vmatpush.msra.mxu0 %v8975
      %9320 = vmatpush.msra.mxu0 %v8968
      %9321 = vmatpush.msra.mxu0 %v8961
      %9322 = vmatpush.msra.mxu0 %v8954
      %9323 = vmatmul.f32.gmra.mxu0 %v9159
      %v9324 = vpop.f32.mrf.mxu0
      %v9325 = vadd.f32 0.0, %v9324
      %9326 = vdwg.mxu0
      %9327 = vmatpush.msra.mxu0 0.0
      %9328 = vmatpush.msra.mxu0 0.0
      %9329 = vmatpush.msra.mxu0 0.0
      %9330 = vmatpush.msra.mxu0 %v9176
      %9331 = vmatpush.msra.mxu0 %v9143
      %9332 = vmatpush.msra.mxu0 %v9136
      %9333 = vmatpush.msra.mxu0 %v9129
      %9334 = vmatpush.msra.mxu0 %v9122
      %9335 = vmatpush.msra.mxu0 %v9115
      %9336 = vmatpush.msra.mxu0 %v9108
      %9337 = vmatpush.msra.mxu0 %v9101
      %9338 = vmatpush.msra.mxu0 %v9094
      %9339 = vmatpush.msra.mxu0 %v9087
      %9340 = vmatpush.msra.mxu0 %v9080
      %9341 = vmatpush.msra.mxu0 %v9073
      %9342 = vmatpush.msra.mxu0 %v9066
      %9343 = vmatmul.f32.gmra.mxu0 %v9164
      %v9344 = vpop.f32.mrf.mxu0
      %v9345 = vadd.f32 %v9325, %v9344
      %9346 = vdwg.mxu0
      %9347 = vmatpush.msra.mxu0 %v9060
      %9348 = vmatpush.msra.mxu0 %v9053
      %9349 = vmatpush.msra.mxu0 %v9046
      %9350 = vmatpush.msra.mxu0 %v9039
      %9351 = vmatpush.msra.mxu0 %v9032
      %9352 = vmatpush.msra.mxu0 %v9025
      %9353 = vmatpush.msra.mxu0 %v9018
      %9354 = vmatpush.msra.mxu0 %v9011
      %9355 = vmatpush.msra.mxu0 %v9004
      %9356 = vmatpush.msra.mxu0 %v8997
      %9357 = vmatpush.msra.mxu0 %v8990
      %9358 = vmatpush.msra.mxu0 %v8983
      %9359 = vmatpush.msra.mxu0 %v8976
      %9360 = vmatpush.msra.mxu0 %v8969
      %9361 = vmatpush.msra.mxu0 %v8962
      %9362 = vmatpush.msra.mxu0 %v8955
      %9363 = vmatmul.f32.gmra.mxu0 %v9159
      %v9364 = vpop.f32.mrf.mxu0
      %v9365 = vadd.f32 0.0, %v9364
      %9366 = vdwg.mxu0
      %9367 = vmatpush.msra.mxu0 0.0
      %9368 = vmatpush.msra.mxu0 0.0
      %9369 = vmatpush.msra.mxu0 0.0
      %9370 = vmatpush.msra.mxu0 %v9179
      %9371 = vmatpush.msra.mxu0 %v9144
      %9372 = vmatpush.msra.mxu0 %v9137
      %9373 = vmatpush.msra.mxu0 %v9130
      %9374 = vmatpush.msra.mxu0 %v9123
      %9375 = vmatpush.msra.mxu0 %v9116
      %9376 = vmatpush.msra.mxu0 %v9109
      %9377 = vmatpush.msra.mxu0 %v9102
      %9378 = vmatpush.msra.mxu0 %v9095
      %9379 = vmatpush.msra.mxu0 %v9088
      %9380 = vmatpush.msra.mxu0 %v9081
      %9381 = vmatpush.msra.mxu0 %v9074
      %9382 = vmatpush.msra.mxu0 %v9067
      %9383 = vmatmul.f32.gmra.mxu0 %v9164
      %v9384 = vpop.f32.mrf.mxu0
      %v9385 = vadd.f32 %v9365, %v9384
      %9386 = vdwg.mxu0
      %9387 = vmatpush.msra.mxu0 %v9061
      %9388 = vmatpush.msra.mxu0 %v9054
      %9389 = vmatpush.msra.mxu0 %v9047
      %9390 = vmatpush.msra.mxu0 %v9040
      %9391 = vmatpush.msra.mxu0 %v9033
      %9392 = vmatpush.msra.mxu0 %v9026
      %9393 = vmatpush.msra.mxu0 %v9019
      %9394 = vmatpush.msra.mxu0 %v9012
      %9395 = vmatpush.msra.mxu0 %v9005
      %9396 = vmatpush.msra.mxu0 %v8998
      %9397 = vmatpush.msra.mxu0 %v8991
      %9398 = vmatpush.msra.mxu0 %v8984
      %9399 = vmatpush.msra.mxu0 %v8977
      %9400 = vmatpush.msra.mxu0 %v8970
      %9401 = vmatpush.msra.mxu0 %v8963
      %9402 = vmatpush.msra.mxu0 %v8956
      %9403 = vmatmul.f32.gmra.mxu0 %v9159
      %v9404 = vpop.f32.mrf.mxu0
      %v9405 = vadd.f32 0.0, %v9404
      %9406 = vdwg.mxu0
      %9407 = vmatpush.msra.mxu0 0.0
      %9408 = vmatpush.msra.mxu0 0.0
      %9409 = vmatpush.msra.mxu0 0.0
      %9410 = vmatpush.msra.mxu0 %v9182
      %9411 = vmatpush.msra.mxu0 %v9145
      %9412 = vmatpush.msra.mxu0 %v9138
      %9413 = vmatpush.msra.mxu0 %v9131
      %9414 = vmatpush.msra.mxu0 %v9124
      %9415 = vmatpush.msra.mxu0 %v9117
      %9416 = vmatpush.msra.mxu0 %v9110
      %9417 = vmatpush.msra.mxu0 %v9103
      %9418 = vmatpush.msra.mxu0 %v9096
      %9419 = vmatpush.msra.mxu0 %v9089
      %9420 = vmatpush.msra.mxu0 %v9082
      %9421 = vmatpush.msra.mxu0 %v9075
      %9422 = vmatpush.msra.mxu0 %v9068
      %9423 = vmatmul.f32.gmra.mxu0 %v9164
      %v9424 = vpop.f32.mrf.mxu0
      %v9425 = vadd.f32 %v9405, %v9424
      %9426 = vdwg.mxu0
      %9427 = vmatpush.msra.mxu0 %v9062
      %9428 = vmatpush.msra.mxu0 %v9055
      %9429 = vmatpush.msra.mxu0 %v9048
      %9430 = vmatpush.msra.mxu0 %v9041
      %9431 = vmatpush.msra.mxu0 %v9034
      %9432 = vmatpush.msra.mxu0 %v9027
      %9433 = vmatpush.msra.mxu0 %v9020
      %9434 = vmatpush.msra.mxu0 %v9013
      %9435 = vmatpush.msra.mxu0 %v9006
      %9436 = vmatpush.msra.mxu0 %v8999
      %9437 = vmatpush.msra.mxu0 %v8992
      %9438 = vmatpush.msra.mxu0 %v8985
      %9439 = vmatpush.msra.mxu0 %v8978
      %9440 = vmatpush.msra.mxu0 %v8971
      %9441 = vmatpush.msra.mxu0 %v8964
      %9442 = vmatpush.msra.mxu0 %v8957
      %9443 = vmatmul.f32.gmra.mxu0 %v9159
      %v9444 = vpop.f32.mrf.mxu0
      %v9445 = vadd.f32 0.0, %v9444
      %9446 = vdwg.mxu0
      %9447 = vmatpush.msra.mxu0 0.0
      %9448 = vmatpush.msra.mxu0 0.0
      %9449 = vmatpush.msra.mxu0 0.0
      %9450 = vmatpush.msra.mxu0 %v9185
      %9451 = vmatpush.msra.mxu0 %v9146
      %9452 = vmatpush.msra.mxu0 %v9139
      %9453 = vmatpush.msra.mxu0 %v9132
      %9454 = vmatpush.msra.mxu0 %v9125
      %9455 = vmatpush.msra.mxu0 %v9118
      %9456 = vmatpush.msra.mxu0 %v9111
      %9457 = vmatpush.msra.mxu0 %v9104
      %9458 = vmatpush.msra.mxu0 %v9097
      %9459 = vmatpush.msra.mxu0 %v9090
      %9460 = vmatpush.msra.mxu0 %v9083
      %9461 = vmatpush.msra.mxu0 %v9076
      %9462 = vmatpush.msra.mxu0 %v9069
      %9463 = vmatmul.f32.gmra.mxu0 %v9164
      %v9464 = vpop.f32.mrf.mxu0
      %v9465 = vadd.f32 %v9445, %v9464
      %9466 = vdwg.mxu0
      %v9467 = vadd.f32 %v8592, %v9225
      %v9468 = vadd.f32 %v8632, %v9265
      %v9469 = vadd.f32 %v8672, %v9305
      %v9470 = vadd.f32 %v8712, %v9345
      %v9471 = vadd.f32 %v8752, %v9385
      %v9472 = vadd.f32 %v8792, %v9425
      %v9473 = vadd.f32 %v8832, %v9465
      %s9474 = scalar_lea.vmem %s17, 2436
      %v9475 = vld [vmem:[%s9474] sm:$0xff]
      %v9476 = vld [vmem:[%s9474 + $0x8] sm:$0xff]
      %v9477 = vld [vmem:[%s9474 + $0x10] sm:$0xff]
      %v9478 = vld [vmem:[%s9474 + $0x18] sm:$0xf]
      %v9479 = vld [vmem:[%s9474 + $0x1c] sm:$0xff]
      %v9480 = vld [vmem:[%s9474 + $0x24] sm:$0xff]
      %v9481 = vld [vmem:[%s9474 + $0x2c] sm:$0xff]
      %v9482 = vld [vmem:[%s9474 + $0x34] sm:$0xf]
      %v9483 = vld [vmem:[%s9474 + $0x38] sm:$0xff]
      %v9484 = vld [vmem:[%s9474 + $0x40] sm:$0xff]
      %v9485 = vld [vmem:[%s9474 + $0x48] sm:$0xff]
      %v9486 = vld [vmem:[%s9474 + $0x50] sm:$0xf]
      %v9487 = vld [vmem:[%s9474 + $0x54] sm:$0xff]
      %v9488 = vld [vmem:[%s9474 + $0x5c] sm:$0xff]
      %v9489 = vld [vmem:[%s9474 + $0x64] sm:$0xff]
      %v9490 = vld [vmem:[%s9474 + $0x6c] sm:$0xf]
      %v9491 = vld [vmem:[%s9474 + $0x70] sm:$0xff]
      %v9492 = vld [vmem:[%s9474 + $0x78] sm:$0xff]
      %v9493 = vld [vmem:[%s9474 + $0x80] sm:$0xff]
      %v9494 = vld [vmem:[%s9474 + $0x88] sm:$0xf]
      %v9495 = vld [vmem:[%s9474 + $0x8c] sm:$0xff]
      %v9496 = vld [vmem:[%s9474 + $0x94] sm:$0xff]
      %v9497 = vld [vmem:[%s9474 + $0x9c] sm:$0xff]
      %v9498 = vld [vmem:[%s9474 + $0xa4] sm:$0xf]
      %v9499 = vld [vmem:[%s9474 + $0xa8] sm:$0xff]
      %v9500 = vld [vmem:[%s9474 + $0xb0] sm:$0xff]
      %v9501 = vld [vmem:[%s9474 + $0xb8] sm:$0xff]
      %v9502 = vld [vmem:[%s9474 + $0xc0] sm:$0xf]
      %v9503 = vld [vmem:[%s9474 + $0xc4] sm:$0xff]
      %v9504 = vld [vmem:[%s9474 + $0xcc] sm:$0xff]
      %v9505 = vld [vmem:[%s9474 + $0xd4] sm:$0xff]
      %v9506 = vld [vmem:[%s9474 + $0xdc] sm:$0xf]
      %v9507 = vld [vmem:[%s9474 + $0xe0] sm:$0xff]
      %v9508 = vld [vmem:[%s9474 + $0xe8] sm:$0xff]
      %v9509 = vld [vmem:[%s9474 + $0xf0] sm:$0xff]
      %v9510 = vld [vmem:[%s9474 + $0xf8] sm:$0xf]
      %v9511 = vld [vmem:[%s9474 + $0xfc] sm:$0xff]
      %v9512 = vld [vmem:[%s9474 + $0x104] sm:$0xff]
      %v9513 = vld [vmem:[%s9474 + $0x10c] sm:$0xff]
      %v9514 = vld [vmem:[%s9474 + $0x114] sm:$0xf]
      %v9515 = vld [vmem:[%s9474 + $0x118] sm:$0xff]
      %v9516 = vld [vmem:[%s9474 + $0x120] sm:$0xff]
      %v9517 = vld [vmem:[%s9474 + $0x128] sm:$0xff]
      %v9518 = vld [vmem:[%s9474 + $0x130] sm:$0xf]
      %v9519 = vld [vmem:[%s9474 + $0x134] sm:$0xff]
      %v9520 = vld [vmem:[%s9474 + $0x13c] sm:$0xff]
      %v9521 = vld [vmem:[%s9474 + $0x144] sm:$0xff]
      %v9522 = vld [vmem:[%s9474 + $0x14c] sm:$0xf]
      %v9523 = vld [vmem:[%s9474 + $0x150] sm:$0xff]
      %v9524 = vld [vmem:[%s9474 + $0x158] sm:$0xff]
      %v9525 = vld [vmem:[%s9474 + $0x160] sm:$0xff]
      %v9526 = vld [vmem:[%s9474 + $0x168] sm:$0xf]
      %v9527 = vld [vmem:[%s9474 + $0x16c] sm:$0xff]
      %v9528 = vld [vmem:[%s9474 + $0x174] sm:$0xff]
      %v9529 = vld [vmem:[%s9474 + $0x17c] sm:$0xff]
      %v9530 = vld [vmem:[%s9474 + $0x184] sm:$0xf]
      %v9531 = vld [vmem:[%s9474 + $0x188] sm:$0xff]
      %v9532 = vld [vmem:[%s9474 + $0x190] sm:$0xff]
      %v9533 = vld [vmem:[%s9474 + $0x198] sm:$0xff]
      %v9534 = vld [vmem:[%s9474 + $0x1a0] sm:$0xf]
      %v9535 = vld [vmem:[%s9474 + $0x1a4] sm:$0xff]
      %v9536 = vld [vmem:[%s9474 + $0x1ac] sm:$0xff]
      %v9537 = vld [vmem:[%s9474 + $0x1b4] sm:$0xff]
      %v9538 = vld [vmem:[%s9474 + $0x1bc] sm:$0xf]
      %v9539 = vld [vmem:[%s9474 + $0x1c0] sm:$0xff]
      %v9540 = vld [vmem:[%s9474 + $0x1c8] sm:$0xff]
      %v9541 = vld [vmem:[%s9474 + $0x1d0] sm:$0xff]
      %v9542 = vld [vmem:[%s9474 + $0x1d8] sm:$0xf]
      %v9543 = vld [vmem:[%s9474 + $0x1dc] sm:$0xff]
      %v9544 = vld [vmem:[%s9474 + $0x1e4] sm:$0xff]
      %v9545 = vld [vmem:[%s9474 + $0x1ec] sm:$0xff]
      %v9546 = vld [vmem:[%s9474 + $0x1f4] sm:$0xf]
      %v9547 = vld [vmem:[%s9474 + $0x1f8] sm:$0xff]
      %v9548 = vld [vmem:[%s9474 + $0x200] sm:$0xff]
      %v9549 = vld [vmem:[%s9474 + $0x208] sm:$0xff]
      %v9550 = vld [vmem:[%s9474 + $0x210] sm:$0xf]
      %v9551 = vld [vmem:[%s9474 + $0x214] sm:$0xff]
      %v9552 = vld [vmem:[%s9474 + $0x21c] sm:$0xff]
      %v9553 = vld [vmem:[%s9474 + $0x224] sm:$0xff]
      %v9554 = vld [vmem:[%s9474 + $0x22c] sm:$0xf]
      %v9555 = vld [vmem:[%s9474 + $0x230] sm:$0xff]
      %v9556 = vld [vmem:[%s9474 + $0x238] sm:$0xff]
      %v9557 = vld [vmem:[%s9474 + $0x240] sm:$0xff]
      %v9558 = vld [vmem:[%s9474 + $0x248] sm:$0xf]
      %v9559 = vld [vmem:[%s9474 + $0x24c] sm:$0xff]
      %v9560 = vld [vmem:[%s9474 + $0x254] sm:$0xff]
      %v9561 = vld [vmem:[%s9474 + $0x25c] sm:$0xff]
      %v9562 = vld [vmem:[%s9474 + $0x264] sm:$0xf]
      %v9563 = vld [vmem:[%s9474 + $0x268] sm:$0xff]
      %v9564 = vld [vmem:[%s9474 + $0x270] sm:$0xff]
      %v9565 = vld [vmem:[%s9474 + $0x278] sm:$0xff]
      %v9566 = vld [vmem:[%s9474 + $0x280] sm:$0xf]
      %v9567 = vld [vmem:[%s9474 + $0x284] sm:$0xff]
      %v9568 = vld [vmem:[%s9474 + $0x28c] sm:$0xff]
      %v9569 = vld [vmem:[%s9474 + $0x294] sm:$0xff]
      %v9570 = vld [vmem:[%s9474 + $0x29c] sm:$0xf]
      %v9571 = vld [vmem:[%s9474 + $0x2a0] sm:$0xff]
      %v9572 = vld [vmem:[%s9474 + $0x2a8] sm:$0xff]
      %v9573 = vld [vmem:[%s9474 + $0x2b0] sm:$0xff]
      %v9574 = vld [vmem:[%s9474 + $0x2b8] sm:$0xf]
      %v9575 = vld [vmem:[%s9474 + $0x2bc] sm:$0xff]
      %v9576 = vld [vmem:[%s9474 + $0x2c4] sm:$0xff]
      %v9577 = vld [vmem:[%s9474 + $0x2cc] sm:$0xff]
      %v9578 = vld [vmem:[%s9474 + $0x2d4] sm:$0xf]
      %v9579 = vld [vmem:[%s9474 + $0x2d8] sm:$0xff]
      %v9580 = vld [vmem:[%s9474 + $0x2e0] sm:$0xff]
      %v9581 = vld [vmem:[%s9474 + $0x2e8] sm:$0xff]
      %v9582 = vld [vmem:[%s9474 + $0x2f0] sm:$0xf]
      %v9583 = vld [vmem:[%s9474 + $0x2f4] sm:$0xff]
      %v9584 = vld [vmem:[%s9474 + $0x2fc] sm:$0xff]
      %v9585 = vld [vmem:[%s9474 + $0x304] sm:$0xff]
      %v9586 = vld [vmem:[%s9474 + $0x30c] sm:$0xf]
      %v9587 = vld [vmem:[%s9474 + $0x310] sm:$0x11]
      %v9588 = vld [vmem:[%s9474 + $0x318] sm:$0x11]
      %v9589 = vld [vmem:[%s9474 + $0x320] sm:$0x11]
      %v9590 = vld [vmem:[%s9474 + $0x328] sm:$0x1]
      %v9591 = vunpack.c.l.bf16 %v9475
      %v9592 = vunpack.c.h.bf16 %v9475
      %v9593 = vunpack.c.l.bf16 %v9476
      %v9594 = vunpack.c.h.bf16 %v9476
      %v9595 = vunpack.c.l.bf16 %v9477
      %v9596 = vunpack.c.h.bf16 %v9477
      %v9597 = vunpack.c.l.bf16 %v9478
      %v9598 = vunpack.c.l.bf16 %v9479
      %v9599 = vunpack.c.h.bf16 %v9479
      %v9600 = vunpack.c.l.bf16 %v9480
      %v9601 = vunpack.c.h.bf16 %v9480
      %v9602 = vunpack.c.l.bf16 %v9481
      %v9603 = vunpack.c.h.bf16 %v9481
      %v9604 = vunpack.c.l.bf16 %v9482
      %v9605 = vunpack.c.l.bf16 %v9483
      %v9606 = vunpack.c.h.bf16 %v9483
      %v9607 = vunpack.c.l.bf16 %v9484
      %v9608 = vunpack.c.h.bf16 %v9484
      %v9609 = vunpack.c.l.bf16 %v9485
      %v9610 = vunpack.c.h.bf16 %v9485
      %v9611 = vunpack.c.l.bf16 %v9486
      %v9612 = vunpack.c.l.bf16 %v9487
      %v9613 = vunpack.c.h.bf16 %v9487
      %v9614 = vunpack.c.l.bf16 %v9488
      %v9615 = vunpack.c.h.bf16 %v9488
      %v9616 = vunpack.c.l.bf16 %v9489
      %v9617 = vunpack.c.h.bf16 %v9489
      %v9618 = vunpack.c.l.bf16 %v9490
      %v9619 = vunpack.c.l.bf16 %v9491
      %v9620 = vunpack.c.h.bf16 %v9491
      %v9621 = vunpack.c.l.bf16 %v9492
      %v9622 = vunpack.c.h.bf16 %v9492
      %v9623 = vunpack.c.l.bf16 %v9493
      %v9624 = vunpack.c.h.bf16 %v9493
      %v9625 = vunpack.c.l.bf16 %v9494
      %v9626 = vunpack.c.l.bf16 %v9495
      %v9627 = vunpack.c.h.bf16 %v9495
      %v9628 = vunpack.c.l.bf16 %v9496
      %v9629 = vunpack.c.h.bf16 %v9496
      %v9630 = vunpack.c.l.bf16 %v9497
      %v9631 = vunpack.c.h.bf16 %v9497
      %v9632 = vunpack.c.l.bf16 %v9498
      %v9633 = vunpack.c.l.bf16 %v9499
      %v9634 = vunpack.c.h.bf16 %v9499
      %v9635 = vunpack.c.l.bf16 %v9500
      %v9636 = vunpack.c.h.bf16 %v9500
      %v9637 = vunpack.c.l.bf16 %v9501
      %v9638 = vunpack.c.h.bf16 %v9501
      %v9639 = vunpack.c.l.bf16 %v9502
      %v9640 = vunpack.c.l.bf16 %v9503
      %v9641 = vunpack.c.h.bf16 %v9503
      %v9642 = vunpack.c.l.bf16 %v9504
      %v9643 = vunpack.c.h.bf16 %v9504
      %v9644 = vunpack.c.l.bf16 %v9505
      %v9645 = vunpack.c.h.bf16 %v9505
      %v9646 = vunpack.c.l.bf16 %v9506
      %v9647 = vunpack.c.l.bf16 %v9507
      %v9648 = vunpack.c.h.bf16 %v9507
      %v9649 = vunpack.c.l.bf16 %v9508
      %v9650 = vunpack.c.h.bf16 %v9508
      %v9651 = vunpack.c.l.bf16 %v9509
      %v9652 = vunpack.c.h.bf16 %v9509
      %v9653 = vunpack.c.l.bf16 %v9510
      %v9654 = vunpack.c.l.bf16 %v9511
      %v9655 = vunpack.c.h.bf16 %v9511
      %v9656 = vunpack.c.l.bf16 %v9512
      %v9657 = vunpack.c.h.bf16 %v9512
      %v9658 = vunpack.c.l.bf16 %v9513
      %v9659 = vunpack.c.h.bf16 %v9513
      %v9660 = vunpack.c.l.bf16 %v9514
      %v9661 = vunpack.c.l.bf16 %v9515
      %v9662 = vunpack.c.h.bf16 %v9515
      %v9663 = vunpack.c.l.bf16 %v9516
      %v9664 = vunpack.c.h.bf16 %v9516
      %v9665 = vunpack.c.l.bf16 %v9517
      %v9666 = vunpack.c.h.bf16 %v9517
      %v9667 = vunpack.c.l.bf16 %v9518
      %v9668 = vunpack.c.l.bf16 %v9519
      %v9669 = vunpack.c.h.bf16 %v9519
      %v9670 = vunpack.c.l.bf16 %v9520
      %v9671 = vunpack.c.h.bf16 %v9520
      %v9672 = vunpack.c.l.bf16 %v9521
      %v9673 = vunpack.c.h.bf16 %v9521
      %v9674 = vunpack.c.l.bf16 %v9522
      %v9675 = vunpack.c.l.bf16 %v9523
      %v9676 = vunpack.c.h.bf16 %v9523
      %v9677 = vunpack.c.l.bf16 %v9524
      %v9678 = vunpack.c.h.bf16 %v9524
      %v9679 = vunpack.c.l.bf16 %v9525
      %v9680 = vunpack.c.h.bf16 %v9525
      %v9681 = vunpack.c.l.bf16 %v9526
      %v9682 = vunpack.c.l.bf16 %v9527
      %v9683 = vunpack.c.h.bf16 %v9527
      %v9684 = vunpack.c.l.bf16 %v9528
      %v9685 = vunpack.c.h.bf16 %v9528
      %v9686 = vunpack.c.l.bf16 %v9529
      %v9687 = vunpack.c.h.bf16 %v9529
      %v9688 = vunpack.c.l.bf16 %v9530
      %v9689 = vunpack.c.l.bf16 %v9531
      %v9690 = vunpack.c.h.bf16 %v9531
      %v9691 = vunpack.c.l.bf16 %v9532
      %v9692 = vunpack.c.h.bf16 %v9532
      %v9693 = vunpack.c.l.bf16 %v9533
      %v9694 = vunpack.c.h.bf16 %v9533
      %v9695 = vunpack.c.l.bf16 %v9534
      %v9696 = vunpack.c.l.bf16 %v9535
      %v9697 = vunpack.c.h.bf16 %v9535
      %v9698 = vunpack.c.l.bf16 %v9536
      %v9699 = vunpack.c.h.bf16 %v9536
      %v9700 = vunpack.c.l.bf16 %v9537
      %v9701 = vunpack.c.h.bf16 %v9537
      %v9702 = vunpack.c.l.bf16 %v9538
      %v9703 = vunpack.c.l.bf16 %v9539
      %v9704 = vunpack.c.h.bf16 %v9539
      %v9705 = vunpack.c.l.bf16 %v9540
      %v9706 = vunpack.c.h.bf16 %v9540
      %v9707 = vunpack.c.l.bf16 %v9541
      %v9708 = vunpack.c.h.bf16 %v9541
      %v9709 = vunpack.c.l.bf16 %v9542
      %v9710 = vunpack.c.l.bf16 %v9543
      %v9711 = vunpack.c.h.bf16 %v9543
      %v9712 = vunpack.c.l.bf16 %v9544
      %v9713 = vunpack.c.h.bf16 %v9544
      %v9714 = vunpack.c.l.bf16 %v9545
      %v9715 = vunpack.c.h.bf16 %v9545
      %v9716 = vunpack.c.l.bf16 %v9546
      %v9717 = vunpack.c.l.bf16 %v9547
      %v9718 = vunpack.c.h.bf16 %v9547
      %v9719 = vunpack.c.l.bf16 %v9548
      %v9720 = vunpack.c.h.bf16 %v9548
      %v9721 = vunpack.c.l.bf16 %v9549
      %v9722 = vunpack.c.h.bf16 %v9549
      %v9723 = vunpack.c.l.bf16 %v9550
      %v9724 = vunpack.c.l.bf16 %v9551
      %v9725 = vunpack.c.h.bf16 %v9551
      %v9726 = vunpack.c.l.bf16 %v9552
      %v9727 = vunpack.c.h.bf16 %v9552
      %v9728 = vunpack.c.l.bf16 %v9553
      %v9729 = vunpack.c.h.bf16 %v9553
      %v9730 = vunpack.c.l.bf16 %v9554
      %v9731 = vunpack.c.l.bf16 %v9555
      %v9732 = vunpack.c.h.bf16 %v9555
      %v9733 = vunpack.c.l.bf16 %v9556
      %v9734 = vunpack.c.h.bf16 %v9556
      %v9735 = vunpack.c.l.bf16 %v9557
      %v9736 = vunpack.c.h.bf16 %v9557
      %v9737 = vunpack.c.l.bf16 %v9558
      %v9738 = vunpack.c.l.bf16 %v9559
      %v9739 = vunpack.c.h.bf16 %v9559
      %v9740 = vunpack.c.l.bf16 %v9560
      %v9741 = vunpack.c.h.bf16 %v9560
      %v9742 = vunpack.c.l.bf16 %v9561
      %v9743 = vunpack.c.h.bf16 %v9561
      %v9744 = vunpack.c.l.bf16 %v9562
      %v9745 = vunpack.c.l.bf16 %v9563
      %v9746 = vunpack.c.h.bf16 %v9563
      %v9747 = vunpack.c.l.bf16 %v9564
      %v9748 = vunpack.c.h.bf16 %v9564
      %v9749 = vunpack.c.l.bf16 %v9565
      %v9750 = vunpack.c.h.bf16 %v9565
      %v9751 = vunpack.c.l.bf16 %v9566
      %v9752 = vunpack.c.l.bf16 %v9567
      %v9753 = vunpack.c.h.bf16 %v9567
      %v9754 = vunpack.c.l.bf16 %v9568
      %v9755 = vunpack.c.h.bf16 %v9568
      %v9756 = vunpack.c.l.bf16 %v9569
      %v9757 = vunpack.c.h.bf16 %v9569
      %v9758 = vunpack.c.l.bf16 %v9570
      %v9759 = vunpack.c.l.bf16 %v9571
      %v9760 = vunpack.c.h.bf16 %v9571
      %v9761 = vunpack.c.l.bf16 %v9572
      %v9762 = vunpack.c.h.bf16 %v9572
      %v9763 = vunpack.c.l.bf16 %v9573
      %v9764 = vunpack.c.h.bf16 %v9573
      %v9765 = vunpack.c.l.bf16 %v9574
      %v9766 = vunpack.c.l.bf16 %v9575
      %v9767 = vunpack.c.h.bf16 %v9575
      %v9768 = vunpack.c.l.bf16 %v9576
      %v9769 = vunpack.c.h.bf16 %v9576
      %v9770 = vunpack.c.l.bf16 %v9577
      %v9771 = vunpack.c.h.bf16 %v9577
      %v9772 = vunpack.c.l.bf16 %v9578
      %v9773 = vunpack.c.l.bf16 %v9579
      %v9774 = vunpack.c.h.bf16 %v9579
      %v9775 = vunpack.c.l.bf16 %v9580
      %v9776 = vunpack.c.h.bf16 %v9580
      %v9777 = vunpack.c.l.bf16 %v9581
      %v9778 = vunpack.c.h.bf16 %v9581
      %v9779 = vunpack.c.l.bf16 %v9582
      %v9780 = vunpack.c.l.bf16 %v9583
      %v9781 = vunpack.c.h.bf16 %v9583
      %v9782 = vunpack.c.l.bf16 %v9584
      %v9783 = vunpack.c.h.bf16 %v9584
      %v9784 = vunpack.c.l.bf16 %v9585
      %v9785 = vunpack.c.h.bf16 %v9585
      %v9786 = vunpack.c.l.bf16 %v9586
      %v9787 = vunpack.c.l.bf16 %v9587
      %v9788 = vunpack.c.h.bf16 %v9587
      %v9789 = vunpack.c.l.bf16 %v9588
      %v9790 = vunpack.c.h.bf16 %v9588
      %v9791 = vunpack.c.l.bf16 %v9589
      %v9792 = vunpack.c.h.bf16 %v9589
      %v9793 = vunpack.c.l.bf16 %v9590
      %v9794 = vrot.slane %v7558, 1
      %v9795 = vrot.slane %v7581, 1
      %v9797 = vsel %vm8227, %v9795, 0
      %v9800 = vsel %vm4815, %v9787, 0
      %v9803 = vsel %vm4815, %v9788, 0
      %v9806 = vsel %vm4815, %v9789, 0
      %v9809 = vsel %vm4815, %v9790, 0
      %v9812 = vsel %vm4815, %v9791, 0
      %v9815 = vsel %vm4815, %v9792, 0
      %v9818 = vsel %vm4815, %v9793, 0
      %9820 = vmatpush.msra.mxu0 %v9696
      %9821 = vmatpush.msra.mxu0 %v9689
      %9822 = vmatpush.msra.mxu0 %v9682
      %9823 = vmatpush.msra.mxu0 %v9675
      %9824 = vmatpush.msra.mxu0 %v9668
      %9825 = vmatpush.msra.mxu0 %v9661
      %9826 = vmatpush.msra.mxu0 %v9654
      %9827 = vmatpush.msra.mxu0 %v9647
      %9828 = vmatpush.msra.mxu0 %v9640
      %9829 = vmatpush.msra.mxu0 %v9633
      %9830 = vmatpush.msra.mxu0 %v9626
      %9831 = vmatpush.msra.mxu0 %v9619
      %9832 = vmatpush.msra.mxu0 %v9612
      %9833 = vmatpush.msra.mxu0 %v9605
      %9834 = vmatpush.msra.mxu0 %v9598
      %9835 = vmatpush.msra.mxu0 %v9591
      %9836 = vmatmul.f32.gmra.mxu0 %v9794
      %v9837 = vpop.f32.mrf.mxu0
      %v9838 = vadd.f32 0.0, %v9837
      %9839 = vdwg.mxu0
      %9840 = vmatpush.msra.mxu0 0.0
      %9841 = vmatpush.msra.mxu0 0.0
      %9842 = vmatpush.msra.mxu0 0.0
      %9843 = vmatpush.msra.mxu0 %v9800
      %9844 = vmatpush.msra.mxu0 %v9780
      %9845 = vmatpush.msra.mxu0 %v9773
      %9846 = vmatpush.msra.mxu0 %v9766
      %9847 = vmatpush.msra.mxu0 %v9759
      %9848 = vmatpush.msra.mxu0 %v9752
      %9849 = vmatpush.msra.mxu0 %v9745
      %9850 = vmatpush.msra.mxu0 %v9738
      %9851 = vmatpush.msra.mxu0 %v9731
      %9852 = vmatpush.msra.mxu0 %v9724
      %9853 = vmatpush.msra.mxu0 %v9717
      %9854 = vmatpush.msra.mxu0 %v9710
      %9855 = vmatpush.msra.mxu0 %v9703
      %9856 = vmatmul.f32.gmra.mxu0 %v9797
      %v9857 = vpop.f32.mrf.mxu0
      %v9858 = vadd.f32 %v9838, %v9857
      %9859 = vdwg.mxu0
      %9860 = vmatpush.msra.mxu0 %v9697
      %9861 = vmatpush.msra.mxu0 %v9690
      %9862 = vmatpush.msra.mxu0 %v9683
      %9863 = vmatpush.msra.mxu0 %v9676
      %9864 = vmatpush.msra.mxu0 %v9669
      %9865 = vmatpush.msra.mxu0 %v9662
      %9866 = vmatpush.msra.mxu0 %v9655
      %9867 = vmatpush.msra.mxu0 %v9648
      %9868 = vmatpush.msra.mxu0 %v9641
      %9869 = vmatpush.msra.mxu0 %v9634
      %9870 = vmatpush.msra.mxu0 %v9627
      %9871 = vmatpush.msra.mxu0 %v9620
      %9872 = vmatpush.msra.mxu0 %v9613
      %9873 = vmatpush.msra.mxu0 %v9606
      %9874 = vmatpush.msra.mxu0 %v9599
      %9875 = vmatpush.msra.mxu0 %v9592
      %9876 = vmatmul.f32.gmra.mxu0 %v9794
      %v9877 = vpop.f32.mrf.mxu0
      %v9878 = vadd.f32 0.0, %v9877
      %9879 = vdwg.mxu0
      %9880 = vmatpush.msra.mxu0 0.0
      %9881 = vmatpush.msra.mxu0 0.0
      %9882 = vmatpush.msra.mxu0 0.0
      %9883 = vmatpush.msra.mxu0 %v9803
      %9884 = vmatpush.msra.mxu0 %v9781
      %9885 = vmatpush.msra.mxu0 %v9774
      %9886 = vmatpush.msra.mxu0 %v9767
      %9887 = vmatpush.msra.mxu0 %v9760
      %9888 = vmatpush.msra.mxu0 %v9753
      %9889 = vmatpush.msra.mxu0 %v9746
      %9890 = vmatpush.msra.mxu0 %v9739
      %9891 = vmatpush.msra.mxu0 %v9732
      %9892 = vmatpush.msra.mxu0 %v9725
      %9893 = vmatpush.msra.mxu0 %v9718
      %9894 = vmatpush.msra.mxu0 %v9711
      %9895 = vmatpush.msra.mxu0 %v9704
      %9896 = vmatmul.f32.gmra.mxu0 %v9797
      %v9897 = vpop.f32.mrf.mxu0
      %v9898 = vadd.f32 %v9878, %v9897
      %9899 = vdwg.mxu0
      %9900 = vmatpush.msra.mxu0 %v9698
      %9901 = vmatpush.msra.mxu0 %v9691
      %9902 = vmatpush.msra.mxu0 %v9684
      %9903 = vmatpush.msra.mxu0 %v9677
      %9904 = vmatpush.msra.mxu0 %v9670
      %9905 = vmatpush.msra.mxu0 %v9663
      %9906 = vmatpush.msra.mxu0 %v9656
      %9907 = vmatpush.msra.mxu0 %v9649
      %9908 = vmatpush.msra.mxu0 %v9642
      %9909 = vmatpush.msra.mxu0 %v9635
      %9910 = vmatpush.msra.mxu0 %v9628
      %9911 = vmatpush.msra.mxu0 %v9621
      %9912 = vmatpush.msra.mxu0 %v9614
      %9913 = vmatpush.msra.mxu0 %v9607
      %9914 = vmatpush.msra.mxu0 %v9600
      %9915 = vmatpush.msra.mxu0 %v9593
      %9916 = vmatmul.f32.gmra.mxu0 %v9794
      %v9917 = vpop.f32.mrf.mxu0
      %v9918 = vadd.f32 0.0, %v9917
      %9919 = vdwg.mxu0
      %9920 = vmatpush.msra.mxu0 0.0
      %9921 = vmatpush.msra.mxu0 0.0
      %9922 = vmatpush.msra.mxu0 0.0
      %9923 = vmatpush.msra.mxu0 %v9806
      %9924 = vmatpush.msra.mxu0 %v9782
      %9925 = vmatpush.msra.mxu0 %v9775
      %9926 = vmatpush.msra.mxu0 %v9768
      %9927 = vmatpush.msra.mxu0 %v9761
      %9928 = vmatpush.msra.mxu0 %v9754
      %9929 = vmatpush.msra.mxu0 %v9747
      %9930 = vmatpush.msra.mxu0 %v9740
      %9931 = vmatpush.msra.mxu0 %v9733
      %9932 = vmatpush.msra.mxu0 %v9726
      %9933 = vmatpush.msra.mxu0 %v9719
      %9934 = vmatpush.msra.mxu0 %v9712
      %9935 = vmatpush.msra.mxu0 %v9705
      %9936 = vmatmul.f32.gmra.mxu0 %v9797
      %v9937 = vpop.f32.mrf.mxu0
      %v9938 = vadd.f32 %v9918, %v9937
      %9939 = vdwg.mxu0
      %9940 = vmatpush.msra.mxu0 %v9699
      %9941 = vmatpush.msra.mxu0 %v9692
      %9942 = vmatpush.msra.mxu0 %v9685
      %9943 = vmatpush.msra.mxu0 %v9678
      %9944 = vmatpush.msra.mxu0 %v9671
      %9945 = vmatpush.msra.mxu0 %v9664
      %9946 = vmatpush.msra.mxu0 %v9657
      %9947 = vmatpush.msra.mxu0 %v9650
      %9948 = vmatpush.msra.mxu0 %v9643
      %9949 = vmatpush.msra.mxu0 %v9636
      %9950 = vmatpush.msra.mxu0 %v9629
      %9951 = vmatpush.msra.mxu0 %v9622
      %9952 = vmatpush.msra.mxu0 %v9615
      %9953 = vmatpush.msra.mxu0 %v9608
      %9954 = vmatpush.msra.mxu0 %v9601
      %9955 = vmatpush.msra.mxu0 %v9594
      %9956 = vmatmul.f32.gmra.mxu0 %v9794
      %v9957 = vpop.f32.mrf.mxu0
      %v9958 = vadd.f32 0.0, %v9957
      %9959 = vdwg.mxu0
      %9960 = vmatpush.msra.mxu0 0.0
      %9961 = vmatpush.msra.mxu0 0.0
      %9962 = vmatpush.msra.mxu0 0.0
      %9963 = vmatpush.msra.mxu0 %v9809
      %9964 = vmatpush.msra.mxu0 %v9783
      %9965 = vmatpush.msra.mxu0 %v9776
      %9966 = vmatpush.msra.mxu0 %v9769
      %9967 = vmatpush.msra.mxu0 %v9762
      %9968 = vmatpush.msra.mxu0 %v9755
      %9969 = vmatpush.msra.mxu0 %v9748
      %9970 = vmatpush.msra.mxu0 %v9741
      %9971 = vmatpush.msra.mxu0 %v9734
      %9972 = vmatpush.msra.mxu0 %v9727
      %9973 = vmatpush.msra.mxu0 %v9720
      %9974 = vmatpush.msra.mxu0 %v9713
      %9975 = vmatpush.msra.mxu0 %v9706
      %9976 = vmatmul.f32.gmra.mxu0 %v9797
      %v9977 = vpop.f32.mrf.mxu0
      %v9978 = vadd.f32 %v9958, %v9977
      %9979 = vdwg.mxu0
      %9980 = vmatpush.msra.mxu0 %v9700
      %9981 = vmatpush.msra.mxu0 %v9693
      %9982 = vmatpush.msra.mxu0 %v9686
      %9983 = vmatpush.msra.mxu0 %v9679
      %9984 = vmatpush.msra.mxu0 %v9672
      %9985 = vmatpush.msra.mxu0 %v9665
      %9986 = vmatpush.msra.mxu0 %v9658
      %9987 = vmatpush.msra.mxu0 %v9651
      %9988 = vmatpush.msra.mxu0 %v9644
      %9989 = vmatpush.msra.mxu0 %v9637
      %9990 = vmatpush.msra.mxu0 %v9630
      %9991 = vmatpush.msra.mxu0 %v9623
      %9992 = vmatpush.msra.mxu0 %v9616
      %9993 = vmatpush.msra.mxu0 %v9609
      %9994 = vmatpush.msra.mxu0 %v9602
      %9995 = vmatpush.msra.mxu0 %v9595
      %9996 = vmatmul.f32.gmra.mxu0 %v9794
      %v9997 = vpop.f32.mrf.mxu0
      %v9998 = vadd.f32 0.0, %v9997
      %9999 = vdwg.mxu0
      %10000 = vmatpush.msra.mxu0 0.0
      %10001 = vmatpush.msra.mxu0 0.0
      %10002 = vmatpush.msra.mxu0 0.0
      %10003 = vmatpush.msra.mxu0 %v9812
      %10004 = vmatpush.msra.mxu0 %v9784
      %10005 = vmatpush.msra.mxu0 %v9777
      %10006 = vmatpush.msra.mxu0 %v9770
      %10007 = vmatpush.msra.mxu0 %v9763
      %10008 = vmatpush.msra.mxu0 %v9756
      %10009 = vmatpush.msra.mxu0 %v9749
      %10010 = vmatpush.msra.mxu0 %v9742
      %10011 = vmatpush.msra.mxu0 %v9735
      %10012 = vmatpush.msra.mxu0 %v9728
      %10013 = vmatpush.msra.mxu0 %v9721
      %10014 = vmatpush.msra.mxu0 %v9714
      %10015 = vmatpush.msra.mxu0 %v9707
      %10016 = vmatmul.f32.gmra.mxu0 %v9797
      %v10017 = vpop.f32.mrf.mxu0
      %v10018 = vadd.f32 %v9998, %v10017
      %10019 = vdwg.mxu0
      %10020 = vmatpush.msra.mxu0 %v9701
      %10021 = vmatpush.msra.mxu0 %v9694
      %10022 = vmatpush.msra.mxu0 %v9687
      %10023 = vmatpush.msra.mxu0 %v9680
      %10024 = vmatpush.msra.mxu0 %v9673
      %10025 = vmatpush.msra.mxu0 %v9666
      %10026 = vmatpush.msra.mxu0 %v9659
      %10027 = vmatpush.msra.mxu0 %v9652
      %10028 = vmatpush.msra.mxu0 %v9645
      %10029 = vmatpush.msra.mxu0 %v9638
      %10030 = vmatpush.msra.mxu0 %v9631
      %10031 = vmatpush.msra.mxu0 %v9624
      %10032 = vmatpush.msra.mxu0 %v9617
      %10033 = vmatpush.msra.mxu0 %v9610
      %10034 = vmatpush.msra.mxu0 %v9603
      %10035 = vmatpush.msra.mxu0 %v9596
      %10036 = vmatmul.f32.gmra.mxu0 %v9794
      %v10037 = vpop.f32.mrf.mxu0
      %v10038 = vadd.f32 0.0, %v10037
      %10039 = vdwg.mxu0
      %10040 = vmatpush.msra.mxu0 0.0
      %10041 = vmatpush.msra.mxu0 0.0
      %10042 = vmatpush.msra.mxu0 0.0
      %10043 = vmatpush.msra.mxu0 %v9815
      %10044 = vmatpush.msra.mxu0 %v9785
      %10045 = vmatpush.msra.mxu0 %v9778
      %10046 = vmatpush.msra.mxu0 %v9771
      %10047 = vmatpush.msra.mxu0 %v9764
      %10048 = vmatpush.msra.mxu0 %v9757
      %10049 = vmatpush.msra.mxu0 %v9750
      %10050 = vmatpush.msra.mxu0 %v9743
      %10051 = vmatpush.msra.mxu0 %v9736
      %10052 = vmatpush.msra.mxu0 %v9729
      %10053 = vmatpush.msra.mxu0 %v9722
      %10054 = vmatpush.msra.mxu0 %v9715
      %10055 = vmatpush.msra.mxu0 %v9708
      %10056 = vmatmul.f32.gmra.mxu0 %v9797
      %v10057 = vpop.f32.mrf.mxu0
      %v10058 = vadd.f32 %v10038, %v10057
      %10059 = vdwg.mxu0
      %10060 = vmatpush.msra.mxu0 %v9702
      %10061 = vmatpush.msra.mxu0 %v9695
      %10062 = vmatpush.msra.mxu0 %v9688
      %10063 = vmatpush.msra.mxu0 %v9681
      %10064 = vmatpush.msra.mxu0 %v9674
      %10065 = vmatpush.msra.mxu0 %v9667
      %10066 = vmatpush.msra.mxu0 %v9660
      %10067 = vmatpush.msra.mxu0 %v9653
      %10068 = vmatpush.msra.mxu0 %v9646
      %10069 = vmatpush.msra.mxu0 %v9639
      %10070 = vmatpush.msra.mxu0 %v9632
      %10071 = vmatpush.msra.mxu0 %v9625
      %10072 = vmatpush.msra.mxu0 %v9618
      %10073 = vmatpush.msra.mxu0 %v9611
      %10074 = vmatpush.msra.mxu0 %v9604
      %10075 = vmatpush.msra.mxu0 %v9597
      %10076 = vmatmul.f32.gmra.mxu0 %v9794
      %v10077 = vpop.f32.mrf.mxu0
      %v10078 = vadd.f32 0.0, %v10077
      %10079 = vdwg.mxu0
      %10080 = vmatpush.msra.mxu0 0.0
      %10081 = vmatpush.msra.mxu0 0.0
      %10082 = vmatpush.msra.mxu0 0.0
      %10083 = vmatpush.msra.mxu0 %v9818
      %10084 = vmatpush.msra.mxu0 %v9786
      %10085 = vmatpush.msra.mxu0 %v9779
      %10086 = vmatpush.msra.mxu0 %v9772
      %10087 = vmatpush.msra.mxu0 %v9765
      %10088 = vmatpush.msra.mxu0 %v9758
      %10089 = vmatpush.msra.mxu0 %v9751
      %10090 = vmatpush.msra.mxu0 %v9744
      %10091 = vmatpush.msra.mxu0 %v9737
      %10092 = vmatpush.msra.mxu0 %v9730
      %10093 = vmatpush.msra.mxu0 %v9723
      %10094 = vmatpush.msra.mxu0 %v9716
      %10095 = vmatpush.msra.mxu0 %v9709
      %10096 = vmatmul.f32.gmra.mxu0 %v9797
      %v10097 = vpop.f32.mrf.mxu0
      %v10098 = vadd.f32 %v10078, %v10097
      %10099 = vdwg.mxu0
      %v10100 = vadd.f32 %v9467, %v9858
      %v10101 = vadd.f32 %v9468, %v9898
      %v10102 = vadd.f32 %v9469, %v9938
      %v10103 = vadd.f32 %v9470, %v9978
      %v10104 = vadd.f32 %v9471, %v10018
      %v10105 = vadd.f32 %v9472, %v10058
      %v10106 = vadd.f32 %v9473, %v10098
      %v10107 = vld [vmem:[%s16] sm:$0x7]
      %10109 = vset.pattern.permute.xlu0 0
      %10110 = vperm.xlu0 %10109, %v10107
      %v10111 = vpop.permute.xlu0 %10110
      %v10113 = vadd.f32 %v10100, %v10111
      %v10114 = vadd.f32 %v10101, %v10111
      %v10115 = vadd.f32 %v10102, %v10111
      %v10116 = vadd.f32 %v10103, %v10111
      %v10117 = vadd.f32 %v10104, %v10111
      %v10118 = vadd.f32 %v10105, %v10111
      %v10119 = vadd.f32 %v10106, %v10111
      %v10120 = vtanh.pop %v10113
      %v10121 = vtanh.pop %v10114
      %v10122 = vtanh.pop %v10115
      %v10123 = vtanh.pop %v10116
      %v10124 = vtanh.pop %v10117
      %v10125 = vtanh.pop %v10118
      %v10126 = vtanh.pop %v10119
      %v10133 = vrot.slane %v10121, 4
      %v10134 = vrot.slane %v10123, 4
      %v10135 = vrot.slane %v10125, 4
      %v10136 = vsel %vm4522, %v10120, %v10133
      %v10137 = vsel %vm4522, %v10122, %v10134
      %v10138 = vsel %vm4522, %v10124, %v10135
      %10142 = vst [vmem:[%s575] sm:$0x77] %v10136
      %10143 = vst [vmem:[%s575 + $0x8] sm:$0x77] %v10137
      %10144 = vst [vmem:[%s575 + $0x10] sm:$0x77] %v10138
      %vm10145 = vcmask 124928
      %10146 = vst.msk [vmem:[%s575 + $0x18] sm:$0x7] %vm10145, %v10126
      %p10147 = scmp.lt.s32.totalorder %s29, 1
      %s10148 = scalar_select %p10147, %s29, 1
      %s10149 = smul.addr %s10148, 7
      %s10150 = smul.addr %s10149, 4
      %s10151 = scalar_lea.vmem %s18, %s10150
      // Predicated region
      $region93: #{autoencoder_forward.1} parent=91 // pred_check
        %p10152 = pneg %p430
      $region94: #{autoencoder_forward.1} parent=91 // pred_check_branch
        %10154 = sbr.rel (%p10152) target = $region96
      $region95: #{autoencoder_forward.1} parent=91 // pred_region
        _
      $region96: #{autoencoder_forward.1} parent=91 // pred_fallthru
        _
    $region92: #{autoencoder_forward.1} parent=5 // pred_fallthru
      _
    %p10155 = scmp.le.s32.totalorder 2, %s24
    // Predicated region
    $region97: #{autoencoder_forward.1} parent=5 // pred_check
      %p10156 = pneg %p10155
    $region98: #{autoencoder_forward.1} parent=5 // pred_check_branch
      %10158 = sbr.rel (%p10156) target = $region100
    $region99: #{autoencoder_forward.1} parent=5 // pred_region
      %s10159 = ssub.s32 %s24, 2
      // Predicated region
      $region101: #{autoencoder_forward.1} parent=99 // pred_check
        %p10160 = pneg %p436
      $region102: #{autoencoder_forward.1} parent=99 // pred_check_branch
        %10162 = sbr.rel (%p10160) target = $region104
      $region103: #{autoencoder_forward.1} parent=99 // pred_region
        %p10163 = scmp.lt.s32.totalorder %s30, 1
        %s10164 = scalar_select %p10163, %s30, 1
        %s10165 = smul.addr %s10164, 7
        %s10166 = smul.addr %s10165, 4
        %s10167 = scalar_lea.vmem %s18, %s10166
      $region104: #{autoencoder_forward.1} parent=99 // pred_fallthru
        _
    $region100: #{autoencoder_forward.1} parent=5 // pred_fallthru
      _
  $region6: #{autoencoder_forward.1} parent=0 // loop_footer
    %s28 = sadd.s32 1, %s24
  $region7: #{autoencoder_forward.1} parent=0 // loop_footer_branch
    %23 = sbr.rel target = $region3
  $region8: #{autoencoder_forward.1} parent=0 // loop_exit
    _

</llo_original>
